<compile_context>
chip_gen: v7x
topology: tpu7x:2x2x1
jax: 0.10.0
libtpu: 0.0.40
codegen_flags: <defaults>
</compile_context>

<pallas_src>
import functools

import jax
import jax.numpy as jnp
from jax.experimental import pallas as pl
from jax.experimental.pallas import tpu as pltpu


# ----------------------------------------------------------------------------
# Hardware query (generation-aware tiling / VMEM limits)
# ----------------------------------------------------------------------------
_HW_CACHE = None


def _tpu_hw_info():
    """Best-effort (vmem_capacity_bytes, tensorcores_per_chip) with safe defaults."""
    global _HW_CACHE
    if _HW_CACHE is not None:
        return _HW_CACHE
    vmem = 64 * 1024 * 1024          # conservative default (v7x per-TC VMEM)
    cores = 1
    try:
        info = pltpu.get_tpu_info()
        for name in ("vmem_capacity_bytes", "vmem_bytes", "vmem_size_bytes"):
            v = getattr(info, name, None)
            if v:
                vmem = int(v)
                break
        for name in ("num_tensorcores", "tensorcore_count", "num_cores",
                     "cores_per_chip"):
            c = getattr(info, name, None)
            if c:
                cores = int(c)
                break
    except Exception:
        pass
    try:
        kind = jax.devices()[0].device_kind.lower()
        if "v7" in kind:
            cores = max(cores, 2)
    except Exception:
        pass
    _HW_CACHE = (vmem, cores)
    return _HW_CACHE


def _round_up(x, m):
    return (x + m - 1) // m * m


def _vmem_limit(footprint, vmem_cap):
    limit = max(int(footprint) + (4 << 20), 16 << 20)
    limit = min(limit, int(vmem_cap * 0.6))
    return max(limit, int(footprint) + (1 << 20))


def _pick_tm(M, per_row_bytes, fixed_bytes, vmem_budget, cap, min_tiles):
    """Largest M tile fitting the VMEM budget; prefers a divisor of M (no pad /
    slice round trips) and >= min_tiles tiles on multi-TC chips."""
    hard = (vmem_budget - fixed_bytes) // max(per_row_bytes, 1)
    hard = max(8, min(hard, cap, M))
    if min_tiles > 1 and M >= 8 * min_tiles:
        hard = min(hard, max(8, M // min_tiles))
    if M <= hard:
        return M
    t = (hard // 8) * 8
    while t >= 8:
        if M % t == 0:
            return t
        t -= 8
    return max(8, (hard // 8) * 8)       # fallback: caller pads M


# ----------------------------------------------------------------------------
# Kernel 1: fused (optionally K-tiled) matmul + bias (+ residual) (+ ReLU)
#           (BN scale is pre-folded into the weight columns.)
# ----------------------------------------------------------------------------
def _mm_bias_kernel(x_ref, w_ref, b_ref, o_ref, acc_ref, *, relu):
    @pl.when(pl.program_id(1) == 0)
    def _():
        acc_ref[...] = jnp.zeros_like(acc_ref)

    acc_ref[...] += jnp.dot(x_ref[...], w_ref[...],
                            preferred_element_type=jnp.float32)

    @pl.when(pl.program_id(1) == pl.num_programs(1) - 1)
    def _():
        y = acc_ref[...] + b_ref[...]
        if relu:
            y = jnp.maximum(y, 0.0)
        o_ref[...] = y.astype(o_ref.dtype)


def _mm_bias_res_kernel(x_ref, w_ref, b_ref, r_ref, o_ref, acc_ref, *, relu):
    @pl.when(pl.program_id(1) == 0)
    def _():
        acc_ref[...] = jnp.zeros_like(acc_ref)

    acc_ref[...] += jnp.dot(x_ref[...], w_ref[...],
                            preferred_element_type=jnp.float32)

    @pl.when(pl.program_id(1) == pl.num_programs(1) - 1)
    def _():
        y = acc_ref[...] + b_ref[...] + r_ref[...].astype(jnp.float32)
        if relu:
            y = jnp.maximum(y, 0.0)
        o_ref[...] = y.astype(o_ref.dtype)


def fused_matmul(x, w, bias, residual=None, relu=True, out_dtype=jnp.bfloat16):
    """out = maybe_relu(x @ w + bias [+ residual]); bf16 MXU, f32 accumulate."""
    M, K = x.shape
    K2, N = w.shape
    assert K == K2
    vmem_cap, num_cores = _tpu_hw_info()

    xb = x.astype(jnp.bfloat16)
    wb = w.astype(jnp.bfloat16)
    b2 = bias.astype(jnp.float32).reshape(1, N)
    rb = residual.astype(jnp.bfloat16) if residual is not None else None

    # K is tiled only when the full weight cannot comfortably stay VMEM
    # resident; otherwise the weight block index is constant over the M grid so
    # it is DMA'd once and reused by every M tile (no per-tile re-streaming).
    if 2 * K * N <= min(vmem_cap // 6, 12 << 20):
        tk = K
    else:
        tk = 512
        kp = _round_up(K, tk)
        if kp != K:
            xb = jnp.pad(xb, ((0, 0), (0, kp - K)))
            wb = jnp.pad(wb, ((0, kp - K), (0, 0)))
            K = kp
        # TODO(synk): request pl.Buffered(3) on the weight stream here if
        # profiling shows exposed weight DMA on v5e.
    kt = K // tk

    out_isz = jnp.dtype(out_dtype).itemsize
    per_row = (2 * tk * 2                       # x tile, double buffered
               + 2 * N * out_isz                # out tile, double buffered
               + N * 4                          # f32 accumulator scratch
               + (2 * N * 2 if rb is not None else 0))
    fixed = 2 * tk * N * 2 + 4 * N              # weight tiles + bias
    cap = 512 if num_cores > 1 else 1024
    tm = _pick_tm(M, per_row, fixed, int(vmem_cap * 0.35), cap, num_cores)

    m_pad = _round_up(M, tm)
    if m_pad != M:                  # rare fallback; common path has no pad/slice
        xb = jnp.pad(xb, ((0, m_pad - M), (0, 0)))
        if rb is not None:
            rb = jnp.pad(rb, ((0, m_pad - M), (0, 0)))
    mt = m_pad // tm

    x_spec = pl.BlockSpec((tm, tk), lambda i, k: (i, k))
    w_spec = pl.BlockSpec((tk, N), lambda i, k: (k, 0))
    b_spec = pl.BlockSpec((1, N), lambda i, k: (0, 0))
    o_spec = pl.BlockSpec((tm, N), lambda i, k: (i, 0))
    scratch = [pltpu.VMEM((tm, N), jnp.float32)]

    if rb is None:
        kernel = functools.partial(_mm_bias_kernel, relu=relu)
        in_specs = [x_spec, w_spec, b_spec]
        args = (xb, wb, b2)
        res_bytes = 0
    else:
        kernel = functools.partial(_mm_bias_res_kernel, relu=relu)
        in_specs = [x_spec, w_spec, b_spec,
                    pl.BlockSpec((tm, N), lambda i, k: (i, 0))]
        args = (xb, wb, b2, rb)
        res_bytes = m_pad * N * 2

    footprint = fixed + per_row * tm
    cost = pl.CostEstimate(
        flops=int(2 * m_pad * K * N), transcendentals=0,
        bytes_accessed=int(m_pad * K * 2 + K * N * 2 * (mt if kt > 1 else 1)
                           + m_pad * N * out_isz + res_bytes + N * 4))

    out = pl.pallas_call(
        kernel,
        out_shape=jax.ShapeDtypeStruct((m_pad, N), out_dtype),
        grid_spec=pltpu.PrefetchScalarGridSpec(
            num_scalar_prefetch=0,
            grid=(mt, kt),
            in_specs=in_specs,
            out_specs=o_spec,
            scratch_shapes=scratch),
        compiler_params=pltpu.CompilerParams(
            dimension_semantics=("parallel", "arbitrary"),
            vmem_limit_bytes=_vmem_limit(footprint, vmem_cap)),
        cost_estimate=cost,
    )(*args)
    return out if m_pad == M else out[:M]


# ----------------------------------------------------------------------------
# Kernel 2: fused 3x3 conv + BN bias + ReLU with the im2col folded into the
#           kernel.  Input arrives as stride*stride spatial "phases" of the
#           padded NHWC activation (a free view when stride==1), so every
#           kernel tap is a static, contiguous window of one phase; all taps
#           are accumulated in-kernel into an f32 accumulator.
# ----------------------------------------------------------------------------
def _conv3x3_kernel(x_ref, w_ref, b_ref, o_ref, *, taps, stride, oh, ow, relu):
    c = x_ref.shape[-1]
    acc = None
    for t, (p, q, dy, dx) in enumerate(taps):
        win = x_ref[p * stride + q, 0, dy:dy + oh, dx:dx + ow, :]   # (oh, ow, c)
        part = jnp.dot(win.reshape(oh * ow, c), w_ref[t],
                       preferred_element_type=jnp.float32)
        acc = part if acc is None else acc + part
    y = acc + b_ref[...]
    if relu:
        y = jnp.maximum(y, 0.0)
    o_ref[0] = y.reshape(oh, ow, y.shape[-1]).astype(o_ref.dtype)


def conv3x3_bn(x, w_oihw, bn, stride=1, padding=1, relu=True,
               out_dtype=jnp.bfloat16, eps=1e-5):
    """3x3 Conv2d(bias=False) + BN(eval) [+ ReLU], NHWC in/out, fused kernel."""
    B, H, W, C = x.shape
    OC, _, KH, KW = w_oihw.shape
    s = stride
    OH = (H + 2 * padding - KH) // s + 1
    OW = (W + 2 * padding - KW) // s + 1
    PH = OH + (KH - 1) // s
    PW = OW + (KW - 1) // s

    xp = jnp.pad(x.astype(jnp.bfloat16),
                 ((0, 0), (padding, padding), (padding, padding), (0, 0)))
    if s == 1:
        xph = xp[None]                                     # (1, B, PH, PW, C)
    else:
        # Phase decomposition: tap (di, dj) reads phase (di % s, dj % s) at
        # element offset (di // s, dj // s) -> contiguous windows, no im2col.
        phases = []
        for p in range(s):
            for q in range(s):
                ph = xp[:, p::s, q::s, :][:, :PH, :PW, :]
                dh, dw = PH - ph.shape[1], PW - ph.shape[2]
                if dh or dw:
                    ph = jnp.pad(ph, ((0, 0), (0, dh), (0, dw), (0, 0)))
                phases.append(ph)
        xph = jnp.stack(phases, axis=0)                    # (s*s, B, PH, PW, C)

    scale, bias = fold_bn(bn, eps)
    w2 = ((w_oihw * scale[:, None, None, None])
          .transpose(2, 3, 1, 0).reshape(KH * KW, C, OC).astype(jnp.bfloat16))
    b2 = bias.astype(jnp.float32).reshape(1, OC)
    taps = tuple((di % s, dj % s, di // s, dj // s)
                 for di in range(KH) for dj in range(KW))

    vmem_cap, _ = _tpu_hw_info()
    out_isz = jnp.dtype(out_dtype).itemsize
    block_in = s * s * PH * PW * C * 2
    w_bytes = KH * KW * C * OC * 2
    block_out = OH * OW * OC * out_isz
    footprint = (2 * block_in + 2 * w_bytes + 2 * block_out
                 + OH * OW * OC * 4 + 2 * OH * OW * C * 2 + OC * 4)
    # TODO(synk): tile the OH axis (with a tap halo) for very large spatial
    # extents instead of one full image per grid step.
    cost = pl.CostEstimate(
        flops=int(2 * B * OH * OW * KH * KW * C * OC), transcendentals=0,
        bytes_accessed=int(B * block_in + w_bytes + B * block_out + OC * 4))

    return pl.pallas_call(
        functools.partial(_conv3x3_kernel, taps=taps, stride=s,
                          oh=OH, ow=OW, relu=relu),
        out_shape=jax.ShapeDtypeStruct((B, OH, OW, OC), out_dtype),
        grid_spec=pltpu.PrefetchScalarGridSpec(
            num_scalar_prefetch=0,
            grid=(B,),
            in_specs=[
                pl.BlockSpec((s * s, 1, PH, PW, C), lambda b: (0, b, 0, 0, 0)),
                pl.BlockSpec((KH * KW, C, OC), lambda b: (0, 0, 0)),
                pl.BlockSpec((1, OC), lambda b: (0, 0)),
            ],
            out_specs=pl.BlockSpec((1, OH, OW, OC), lambda b: (b, 0, 0, 0))),
        compiler_params=pltpu.CompilerParams(
            dimension_semantics=("parallel",),
            vmem_limit_bytes=_vmem_limit(footprint, vmem_cap)),
        cost_estimate=cost,
    )(xph, w2, b2)


# ----------------------------------------------------------------------------
# JAX glue: folded BN, 1x1 conv wrapper, Bottleneck block
# ----------------------------------------------------------------------------
def fold_bn(bn, eps=1e-5):
    gamma, beta, mean, var = bn
    s = gamma / jnp.sqrt(var + eps)
    return s, beta - mean * s


def conv1x1_bn(x, w_oihw, bn, stride=1, relu=True, residual=None,
               out_dtype=jnp.bfloat16, eps=1e-5):
    """1x1 Conv2d(bias=False) + BN(eval) [+ residual] [+ ReLU], NHWC in/out."""
    if stride > 1:
        x = x[:, ::stride, ::stride, :]
    B, H, W, C = x.shape
    OC = w_oihw.shape[0]
    scale, bias = fold_bn(bn, eps)
    w2 = (w_oihw.reshape(OC, C) * scale[:, None]).T        # BN scale folded, (C, OC)
    x2 = x.reshape(B * H * W, C)
    r2 = residual.reshape(B * H * W, OC) if residual is not None else None
    out = fused_matmul(x2, w2, bias, residual=r2, relu=relu, out_dtype=out_dtype)
    return out.reshape(B, H, W, OC)


EXPANSION = 4


def bottleneck_block_nhwc(p, x, out_dtype=jnp.bfloat16):
    """One Bottleneck block (expansion=4). x: NHWC bf16 activations."""
    eps = p.get('eps', 1e-5)
    if p['shortcut'] is not None:
        sc_w, sc_bn = p['shortcut']
        shortcut = conv1x1_bn(x, sc_w, sc_bn, stride=p['stride'], relu=False, eps=eps)
    else:
        shortcut = x
    # TODO(synk): when a projection shortcut exists with stride==1, fuse it with
    # conv1 by concatenating weight columns (single X read, wider MXU N fill).
    out = conv1x1_bn(x, p['conv1_w'], p['bn1'], relu=True, eps=eps)
    out = conv3x3_bn(out, p['conv2_w'], p['bn2'], stride=p['stride'], relu=True, eps=eps)
    # conv3: 1x1 conv + BN + residual add + ReLU fully fused in one kernel
    out = conv1x1_bn(out, p['conv3_w'], p['bn3'], relu=True,
                     residual=shortcut, out_dtype=out_dtype, eps=eps)
    return out


def bottleneck_forward(blocks, x_nchw):
    """PyTorch-facing wrapper: NCHW f32 in/out, NHWC bf16 internally."""
    x = x_nchw.transpose(0, 2, 3, 1).astype(jnp.bfloat16)
    for i, p in enumerate(blocks):
        last = (i == len(blocks) - 1)
        x = bottleneck_block_nhwc(
            p, x, out_dtype=jnp.float32 if last else jnp.bfloat16)
    return x.transpose(0, 3, 1, 2)


# ----------------------------------------------------------------------------
# Deterministic parameter init (Bottleneck, expansion = 4, eval-mode BN)
# ----------------------------------------------------------------------------
def _init_conv(key, oc, ic, kh, kw):
    fan_in = ic * kh * kw
    return jax.random.normal(key, (oc, ic, kh, kw), jnp.float32) * (2.0 / fan_in) ** 0.5


def _init_bn(key, c):
    k1, k2, k3, k4 = jax.random.split(key, 4)
    gamma = jax.random.uniform(k1, (c,), jnp.float32, 0.5, 1.5)
    beta = jax.random.normal(k2, (c,), jnp.float32) * 0.1
    mean = jax.random.normal(k3, (c,), jnp.float32) * 0.1
    var = jax.random.uniform(k4, (c,), jnp.float32, 0.5, 1.5)
    return gamma, beta, mean, var


def init_bottleneck(key, in_planes, planes, stride=1):
    keys = iter(jax.random.split(key, 16))
    p = {
        'stride': stride,
        'eps': 1e-5,
        'conv1_w': _init_conv(next(keys), planes, in_planes, 1, 1),
        'bn1': _init_bn(next(keys), planes),
        'conv2_w': _init_conv(next(keys), planes, planes, 3, 3),
        'bn2': _init_bn(next(keys), planes),
        'conv3_w': _init_conv(next(keys), EXPANSION * planes, planes, 1, 1),
        'bn3': _init_bn(next(keys), EXPANSION * planes),
        'shortcut': None,
    }
    if stride != 1 or in_planes != EXPANSION * planes:
        p['shortcut'] = (
            _init_conv(next(keys), EXPANSION * planes, in_planes, 1, 1),
            _init_bn(next(keys), EXPANSION * planes),
        )
    return p


# ----------------------------------------------------------------------------
if __name__ == "__main__":
    key = jax.random.PRNGKey(0)
    k1, k2, kx = jax.random.split(key, 3)

    # Two chained Bottleneck blocks: one with a strided projection shortcut
    # (exercises the strided 3x3 phase path + projection matmul), one with an
    # identity shortcut — covers every branch of forward().
    blocks = [
        init_bottleneck(k1, in_planes=16, planes=16, stride=2),   # 16 -> 64 ch, /2
        init_bottleneck(k2, in_planes=64, planes=16, stride=1),   # identity shortcut
    ]
    x = jax.random.normal(kx, (2, 16, 16, 16), jnp.float32)       # NCHW

    forward = jax.jit(functools.partial(bottleneck_forward, blocks))
    out = forward(x)
    jax.block_until_ready(out)
    assert out.shape == (2, 64, 8, 8)
    print("KERNEL_OK")
</pallas_src>

<mosaic_0001>
module attributes {stable_mosaic.version = 11 : i64} {
  func.func @_mm_bias_kernel(%arg0: i32, %arg1: i32, %arg2: memref<128x16xbf16, #tpu.memory_space<vmem>>, %arg3: memref<16x64xbf16, #tpu.memory_space<vmem>>, %arg4: memref<1x64xf32, #tpu.memory_space<vmem>>, %arg5: memref<128x64xbf16, #tpu.memory_space<vmem>>, %arg6: memref<128x64xf32, #tpu.memory_space<vmem>>) attributes {dimension_semantics = [#tpu.dimension_semantics<parallel>, #tpu.dimension_semantics<arbitrary>], iteration_bounds = array<i64: 1, 1>, scalar_prefetch = 0 : i64, scratch_operands = 1 : i64, tpu.core_type = #tpu.core_type<tc>, window_params = [{transform_indices = @transform_0, window_bounds = array<i64: 128, 16>}, {transform_indices = @transform_1, window_bounds = array<i64: 16, 64>}, {pipeline_mode = #tpu.pipeline_mode<synchronous>, transform_indices = @transform_2, window_bounds = array<i64: 1, 64>}, {transform_indices = @transform_3, window_bounds = array<i64: 128, 64>}]} {
    %c0_i32 = arith.constant 0 : i32
    %0 = arith.cmpi eq, %arg1, %c0_i32 : i32
    %1 = arith.extui %0 : i1 to i32
    %c0_i32_0 = arith.constant 0 : i32
    %2 = arith.cmpi ne, %1, %c0_i32_0 : i32
    scf.if %2 {
      %cst_10 = arith.constant 0.000000e+00 : f32
      %12 = vector.broadcast %cst_10 : f32 to vector<128x64xf32>
      %c0_11 = arith.constant 0 : index
      %c0_12 = arith.constant 0 : index
      %13 = vector.load %arg6[%c0_11, %c0_12] : memref<128x64xf32, #tpu.memory_space<vmem>>, vector<128x64xf32>
      tpu.vector_store %arg6[%c0_11, %c0_12], %12 {strides = array<i32>} : memref<128x64xf32, #tpu.memory_space<vmem>>, vector<128x64xf32>,
    } else {
    }
    %c0 = arith.constant 0 : index
    %c0_1 = arith.constant 0 : index
    %3 = vector.load %arg6[%c0, %c0_1] : memref<128x64xf32, #tpu.memory_space<vmem>>, vector<128x64xf32>
    %c0_2 = arith.constant 0 : index
    %c0_3 = arith.constant 0 : index
    %4 = vector.load %arg2[%c0_2, %c0_3] : memref<128x16xbf16, #tpu.memory_space<vmem>>, vector<128x16xbf16>
    %c0_4 = arith.constant 0 : index
    %c0_5 = arith.constant 0 : index
    %5 = vector.load %arg3[%c0_4, %c0_5] : memref<16x64xbf16, #tpu.memory_space<vmem>>, vector<16x64xbf16>
    %cst = arith.constant dense<0.000000e+00> : vector<128x64xf32>
    %6 = tpu.matmul %4, %5, %cst {dimension_numbers = #tpu.dot_dimension_numbers<[1], [0], [0], [1], [0, 0, 1, 1], [], []>} : vector<128x16xbf16>, vector<16x64xbf16>, vector<128x64xf32> -> vector<128x64xf32>
    %7 = arith.addf %3, %6 : vector<128x64xf32>
    %c0_6 = arith.constant 0 : index
    %c0_7 = arith.constant 0 : index
    %8 = vector.load %arg6[%c0_6, %c0_7] : memref<128x64xf32, #tpu.memory_space<vmem>>, vector<128x64xf32>
    tpu.vector_store %arg6[%c0_6, %c0_7], %7 {strides = array<i32>} : memref<128x64xf32, #tpu.memory_space<vmem>>, vector<128x64xf32>,
    %c0_i32_8 = arith.constant 0 : i32
    %9 = arith.cmpi eq, %arg1, %c0_i32_8 : i32
    %10 = arith.extui %9 : i1 to i32
    %c0_i32_9 = arith.constant 0 : i32
    %11 = arith.cmpi ne, %10, %c0_i32_9 : i32
    scf.if %11 {
      %c0_10 = arith.constant 0 : index
      %c0_11 = arith.constant 0 : index
      %12 = vector.load %arg6[%c0_10, %c0_11] : memref<128x64xf32, #tpu.memory_space<vmem>>, vector<128x64xf32>
      %c0_12 = arith.constant 0 : index
      %c0_13 = arith.constant 0 : index
      %13 = vector.load %arg4[%c0_12, %c0_13] : memref<1x64xf32, #tpu.memory_space<vmem>>, vector<1x64xf32>
      %14 = vector.broadcast %13 : vector<1x64xf32> to vector<128x64xf32>
      %15 = arith.addf %12, %14 : vector<128x64xf32>
      %16 = arith.truncf %15 : vector<128x64xf32> to vector<128x64xbf16>
      %c0_14 = arith.constant 0 : index
      %c0_15 = arith.constant 0 : index
      %17 = vector.load %arg5[%c0_14, %c0_15] : memref<128x64xbf16, #tpu.memory_space<vmem>>, vector<128x64xbf16>
      tpu.vector_store %arg5[%c0_14, %c0_15], %16 {strides = array<i32>} : memref<128x64xbf16, #tpu.memory_space<vmem>>, vector<128x64xbf16>,
    } else {
    }
    return
  }
  func.func @transform_0(%arg0: i32, %arg1: i32) -> (i32, i32) {
    %c0_i32 = arith.constant 0 : i32
    return %arg0, %arg1 : i32, i32
  }
  func.func @transform_1(%arg0: i32, %arg1: i32) -> (i32, i32) {
    %c0_i32 = arith.constant 0 : i32
    %c0_i32_0 = arith.constant 0 : i32
    return %arg1, %c0_i32 : i32, i32
  }
  func.func @transform_2(%arg0: i32, %arg1: i32) -> (i32, i32) {
    %c0_i32 = arith.constant 0 : i32
    %c0_i32_0 = arith.constant 0 : i32
    %c0_i32_1 = arith.constant 0 : i32
    return %c0_i32, %c0_i32_0 : i32, i32
  }
  func.func @transform_3(%arg0: i32, %arg1: i32) -> (i32, i32) {
    %c0_i32 = arith.constant 0 : i32
    %c0_i32_0 = arith.constant 0 : i32
    return %arg0, %c0_i32 : i32, i32
  }
}

module attributes {stable_mosaic.version = 11 : i64} {
  func.func @_mm_bias_kernel(%arg0: i32, %arg1: i32, %arg2: memref<512x16xbf16, #tpu.memory_space<vmem>>, %arg3: memref<16x16xbf16, #tpu.memory_space<vmem>>, %arg4: memref<1x16xf32, #tpu.memory_space<vmem>>, %arg5: memref<512x16xbf16, #tpu.memory_space<vmem>>, %arg6: memref<512x16xf32, #tpu.memory_space<vmem>>) attributes {dimension_semantics = [#tpu.dimension_semantics<parallel>, #tpu.dimension_semantics<arbitrary>], iteration_bounds = array<i64: 1, 1>, scalar_prefetch = 0 : i64, scratch_operands = 1 : i64, tpu.core_type = #tpu.core_type<tc>, window_params = [{transform_indices = @transform_0, window_bounds = array<i64: 512, 16>}, {transform_indices = @transform_1, window_bounds = array<i64: 16, 16>}, {pipeline_mode = #tpu.pipeline_mode<synchronous>, transform_indices = @transform_2, window_bounds = array<i64: 1, 16>}, {transform_indices = @transform_3, window_bounds = array<i64: 512, 16>}]} {
    %c0_i32 = arith.constant 0 : i32
    %0 = arith.cmpi eq, %arg1, %c0_i32 : i32
    %1 = arith.extui %0 : i1 to i32
    %c0_i32_0 = arith.constant 0 : i32
    %2 = arith.cmpi ne, %1, %c0_i32_0 : i32
    scf.if %2 {
      %cst_10 = arith.constant 0.000000e+00 : f32
      %12 = vector.broadcast %cst_10 : f32 to vector<512x16xf32>
      %c0_11 = arith.constant 0 : index
      %c0_12 = arith.constant 0 : index
      %13 = vector.load %arg6[%c0_11, %c0_12] : memref<512x16xf32, #tpu.memory_space<vmem>>, vector<512x16xf32>
      tpu.vector_store %arg6[%c0_11, %c0_12], %12 {strides = array<i32>} : memref<512x16xf32, #tpu.memory_space<vmem>>, vector<512x16xf32>,
    } else {
    }
    %c0 = arith.constant 0 : index
    %c0_1 = arith.constant 0 : index
    %3 = vector.load %arg6[%c0, %c0_1] : memref<512x16xf32, #tpu.memory_space<vmem>>, vector<512x16xf32>
    %c0_2 = arith.constant 0 : index
    %c0_3 = arith.constant 0 : index
    %4 = vector.load %arg2[%c0_2, %c0_3] : memref<512x16xbf16, #tpu.memory_space<vmem>>, vector<512x16xbf16>
    %c0_4 = arith.constant 0 : index
    %c0_5 = arith.constant 0 : index
    %5 = vector.load %arg3[%c0_4, %c0_5] : memref<16x16xbf16, #tpu.memory_space<vmem>>, vector<16x16xbf16>
    %cst = arith.constant dense<0.000000e+00> : vector<512x16xf32>
    %6 = tpu.matmul %4, %5, %cst {dimension_numbers = #tpu.dot_dimension_numbers<[1], [0], [0], [1], [0, 0, 1, 1], [], []>} : vector<512x16xbf16>, vector<16x16xbf16>, vector<512x16xf32> -> vector<512x16xf32>
    %7 = arith.addf %3, %6 : vector<512x16xf32>
    %c0_6 = arith.constant 0 : index
    %c0_7 = arith.constant 0 : index
    %8 = vector.load %arg6[%c0_6, %c0_7] : memref<512x16xf32, #tpu.memory_space<vmem>>, vector<512x16xf32>
    tpu.vector_store %arg6[%c0_6, %c0_7], %7 {strides = array<i32>} : memref<512x16xf32, #tpu.memory_space<vmem>>, vector<512x16xf32>,
    %c0_i32_8 = arith.constant 0 : i32
    %9 = arith.cmpi eq, %arg1, %c0_i32_8 : i32
    %10 = arith.extui %9 : i1 to i32
    %c0_i32_9 = arith.constant 0 : i32
    %11 = arith.cmpi ne, %10, %c0_i32_9 : i32
    scf.if %11 {
      %c0_10 = arith.constant 0 : index
      %c0_11 = arith.constant 0 : index
      %12 = vector.load %arg6[%c0_10, %c0_11] : memref<512x16xf32, #tpu.memory_space<vmem>>, vector<512x16xf32>
      %c0_12 = arith.constant 0 : index
      %c0_13 = arith.constant 0 : index
      %13 = vector.load %arg4[%c0_12, %c0_13] : memref<1x16xf32, #tpu.memory_space<vmem>>, vector<1x16xf32>
      %14 = vector.broadcast %13 : vector<1x16xf32> to vector<512x16xf32>
      %15 = arith.addf %12, %14 : vector<512x16xf32>
      %cst_14 = arith.constant 0.000000e+00 : f32
      %16 = vector.broadcast %cst_14 : f32 to vector<512x16xf32>
      %17 = arith.maximumf %15, %16 : vector<512x16xf32>
      %18 = arith.truncf %17 : vector<512x16xf32> to vector<512x16xbf16>
      %c0_15 = arith.constant 0 : index
      %c0_16 = arith.constant 0 : index
      %19 = vector.load %arg5[%c0_15, %c0_16] : memref<512x16xbf16, #tpu.memory_space<vmem>>, vector<512x16xbf16>
      tpu.vector_store %arg5[%c0_15, %c0_16], %18 {strides = array<i32>} : memref<512x16xbf16, #tpu.memory_space<vmem>>, vector<512x16xbf16>,
    } else {
    }
    return
  }
  func.func @transform_0(%arg0: i32, %arg1: i32) -> (i32, i32) {
    %c0_i32 = arith.constant 0 : i32
    return %arg0, %arg1 : i32, i32
  }
  func.func @transform_1(%arg0: i32, %arg1: i32) -> (i32, i32) {
    %c0_i32 = arith.constant 0 : i32
    %c0_i32_0 = arith.constant 0 : i32
    return %arg1, %c0_i32 : i32, i32
  }
  func.func @transform_2(%arg0: i32, %arg1: i32) -> (i32, i32) {
    %c0_i32 = arith.constant 0 : i32
    %c0_i32_0 = arith.constant 0 : i32
    %c0_i32_1 = arith.constant 0 : i32
    return %c0_i32, %c0_i32_0 : i32, i32
  }
  func.func @transform_3(%arg0: i32, %arg1: i32) -> (i32, i32) {
    %c0_i32 = arith.constant 0 : i32
    %c0_i32_0 = arith.constant 0 : i32
    return %arg0, %c0_i32 : i32, i32
  }
}

module attributes {stable_mosaic.version = 11 : i64} {
  func.func @_mm_bias_res_kernel(%arg0: i32, %arg1: i32, %arg2: memref<128x16xbf16, #tpu.memory_space<vmem>>, %arg3: memref<16x64xbf16, #tpu.memory_space<vmem>>, %arg4: memref<1x64xf32, #tpu.memory_space<vmem>>, %arg5: memref<128x64xbf16, #tpu.memory_space<vmem>>, %arg6: memref<128x64xbf16, #tpu.memory_space<vmem>>, %arg7: memref<128x64xf32, #tpu.memory_space<vmem>>) attributes {dimension_semantics = [#tpu.dimension_semantics<parallel>, #tpu.dimension_semantics<arbitrary>], iteration_bounds = array<i64: 1, 1>, scalar_prefetch = 0 : i64, scratch_operands = 1 : i64, tpu.core_type = #tpu.core_type<tc>, window_params = [{transform_indices = @transform_0, window_bounds = array<i64: 128, 16>}, {transform_indices = @transform_1, window_bounds = array<i64: 16, 64>}, {pipeline_mode = #tpu.pipeline_mode<synchronous>, transform_indices = @transform_2, window_bounds = array<i64: 1, 64>}, {transform_indices = @transform_3, window_bounds = array<i64: 128, 64>}, {transform_indices = @transform_4, window_bounds = array<i64: 128, 64>}]} {
    %c0_i32 = arith.constant 0 : i32
    %0 = arith.cmpi eq, %arg1, %c0_i32 : i32
    %1 = arith.extui %0 : i1 to i32
    %c0_i32_0 = arith.constant 0 : i32
    %2 = arith.cmpi ne, %1, %c0_i32_0 : i32
    scf.if %2 {
      %cst_10 = arith.constant 0.000000e+00 : f32
      %12 = vector.broadcast %cst_10 : f32 to vector<128x64xf32>
      %c0_11 = arith.constant 0 : index
      %c0_12 = arith.constant 0 : index
      %13 = vector.load %arg7[%c0_11, %c0_12] : memref<128x64xf32, #tpu.memory_space<vmem>>, vector<128x64xf32>
      tpu.vector_store %arg7[%c0_11, %c0_12], %12 {strides = array<i32>} : memref<128x64xf32, #tpu.memory_space<vmem>>, vector<128x64xf32>,
    } else {
    }
    %c0 = arith.constant 0 : index
    %c0_1 = arith.constant 0 : index
    %3 = vector.load %arg7[%c0, %c0_1] : memref<128x64xf32, #tpu.memory_space<vmem>>, vector<128x64xf32>
    %c0_2 = arith.constant 0 : index
    %c0_3 = arith.constant 0 : index
    %4 = vector.load %arg2[%c0_2, %c0_3] : memref<128x16xbf16, #tpu.memory_space<vmem>>, vector<128x16xbf16>
    %c0_4 = arith.constant 0 : index
    %c0_5 = arith.constant 0 : index
    %5 = vector.load %arg3[%c0_4, %c0_5] : memref<16x64xbf16, #tpu.memory_space<vmem>>, vector<16x64xbf16>
    %cst = arith.constant dense<0.000000e+00> : vector<128x64xf32>
    %6 = tpu.matmul %4, %5, %cst {dimension_numbers = #tpu.dot_dimension_numbers<[1], [0], [0], [1], [0, 0, 1, 1], [], []>} : vector<128x16xbf16>, vector<16x64xbf16>, vector<128x64xf32> -> vector<128x64xf32>
    %7 = arith.addf %3, %6 : vector<128x64xf32>
    %c0_6 = arith.constant 0 : index
    %c0_7 = arith.constant 0 : index
    %8 = vector.load %arg7[%c0_6, %c0_7] : memref<128x64xf32, #tpu.memory_space<vmem>>, vector<128x64xf32>
    tpu.vector_store %arg7[%c0_6, %c0_7], %7 {strides = array<i32>} : memref<128x64xf32, #tpu.memory_space<vmem>>, vector<128x64xf32>,
    %c0_i32_8 = arith.constant 0 : i32
    %9 = arith.cmpi eq, %arg1, %c0_i32_8 : i32
    %10 = arith.extui %9 : i1 to i32
    %c0_i32_9 = arith.constant 0 : i32
    %11 = arith.cmpi ne, %10, %c0_i32_9 : i32
    scf.if %11 {
      %c0_10 = arith.constant 0 : index
      %c0_11 = arith.constant 0 : index
      %12 = vector.load %arg7[%c0_10, %c0_11] : memref<128x64xf32, #tpu.memory_space<vmem>>, vector<128x64xf32>
      %c0_12 = arith.constant 0 : index
      %c0_13 = arith.constant 0 : index
      %13 = vector.load %arg4[%c0_12, %c0_13] : memref<1x64xf32, #tpu.memory_space<vmem>>, vector<1x64xf32>
      %14 = vector.broadcast %13 : vector<1x64xf32> to vector<128x64xf32>
      %15 = arith.addf %12, %14 : vector<128x64xf32>
      %c0_14 = arith.constant 0 : index
      %c0_15 = arith.constant 0 : index
      %16 = vector.load %arg5[%c0_14, %c0_15] : memref<128x64xbf16, #tpu.memory_space<vmem>>, vector<128x64xbf16>
      %17 = arith.extf %16 : vector<128x64xbf16> to vector<128x64xf32>
      %18 = arith.addf %15, %17 : vector<128x64xf32>
      %cst_16 = arith.constant 0.000000e+00 : f32
      %19 = vector.broadcast %cst_16 : f32 to vector<128x64xf32>
      %20 = arith.maximumf %18, %19 : vector<128x64xf32>
      %21 = arith.truncf %20 : vector<128x64xf32> to vector<128x64xbf16>
      %c0_17 = arith.constant 0 : index
      %c0_18 = arith.constant 0 : index
      %22 = vector.load %arg6[%c0_17, %c0_18] : memref<128x64xbf16, #tpu.memory_space<vmem>>, vector<128x64xbf16>
      tpu.vector_store %arg6[%c0_17, %c0_18], %21 {strides = array<i32>} : memref<128x64xbf16, #tpu.memory_space<vmem>>, vector<128x64xbf16>,
    } else {
    }
    return
  }
  func.func @transform_0(%arg0: i32, %arg1: i32) -> (i32, i32) {
    %c0_i32 = arith.constant 0 : i32
    return %arg0, %arg1 : i32, i32
  }
  func.func @transform_1(%arg0: i32, %arg1: i32) -> (i32, i32) {
    %c0_i32 = arith.constant 0 : i32
    %c0_i32_0 = arith.constant 0 : i32
    return %arg1, %c0_i32 : i32, i32
  }
  func.func @transform_2(%arg0: i32, %arg1: i32) -> (i32, i32) {
    %c0_i32 = arith.constant 0 : i32
    %c0_i32_0 = arith.constant 0 : i32
    %c0_i32_1 = arith.constant 0 : i32
    return %c0_i32, %c0_i32_0 : i32, i32
  }
  func.func @transform_3(%arg0: i32, %arg1: i32) -> (i32, i32) {
    %c0_i32 = arith.constant 0 : i32
    %c0_i32_0 = arith.constant 0 : i32
    return %arg0, %c0_i32 : i32, i32
  }
  func.func @transform_4(%arg0: i32, %arg1: i32) -> (i32, i32) {
    %c0_i32 = arith.constant 0 : i32
    %c0_i32_0 = arith.constant 0 : i32
    return %arg0, %c0_i32 : i32, i32
  }
}

module attributes {stable_mosaic.version = 11 : i64} {
  func.func @_conv3x3_kernel(%arg0: i32, %arg1: memref<4x1x9x9x16xbf16, #tpu.memory_space<vmem>>, %arg2: memref<9x16x16xbf16, #tpu.memory_space<vmem>>, %arg3: memref<1x16xf32, #tpu.memory_space<vmem>>, %arg4: memref<1x8x8x16xbf16, #tpu.memory_space<vmem>>) attributes {dimension_semantics = [#tpu.dimension_semantics<parallel>], iteration_bounds = array<i64: 2>, scalar_prefetch = 0 : i64, scratch_operands = 0 : i64, tpu.core_type = #tpu.core_type<tc>, window_params = [{transform_indices = @transform_0, window_bounds = array<i64: 4, 1, 9, 9, 16>}, {pipeline_mode = #tpu.pipeline_mode<synchronous>, transform_indices = @transform_1, window_bounds = array<i64: 9, 16, 16>}, {pipeline_mode = #tpu.pipeline_mode<synchronous>, transform_indices = @transform_2, window_bounds = array<i64: 1, 16>}, {transform_indices = @transform_3, window_bounds = array<i64: 1, 8, 8, 16>}]} {
    %c0 = arith.constant 0 : index
    %c0_0 = arith.constant 0 : index
    %c0_1 = arith.constant 0 : index
    %c0_2 = arith.constant 0 : index
    %c0_3 = arith.constant 0 : index
    %0 = vector.load %arg1[%c0, %c0_0, %c0_1, %c0_2, %c0_3] : memref<4x1x9x9x16xbf16, #tpu.memory_space<vmem>>, vector<1x1x8x8x16xbf16>
    %1 = vector.shape_cast %0 : vector<1x1x8x8x16xbf16> to vector<8x8x16xbf16>
    %2 = vector.shape_cast %1 : vector<8x8x16xbf16> to vector<64x16xbf16>
    %c0_4 = arith.constant 0 : index
    %c0_5 = arith.constant 0 : index
    %c0_6 = arith.constant 0 : index
    %3 = vector.load %arg2[%c0_4, %c0_5, %c0_6] : memref<9x16x16xbf16, #tpu.memory_space<vmem>>, vector<1x16x16xbf16>
    %4 = vector.shape_cast %3 : vector<1x16x16xbf16> to vector<16x16xbf16>
    %cst = arith.constant dense<0.000000e+00> : vector<64x16xf32>
    %5 = tpu.matmul %2, %4, %cst {dimension_numbers = #tpu.dot_dimension_numbers<[1], [0], [0], [1], [0, 0, 1, 1], [], []>} : vector<64x16xbf16>, vector<16x16xbf16>, vector<64x16xf32> -> vector<64x16xf32>
    %c1 = arith.constant 1 : index
    %c0_7 = arith.constant 0 : index
    %c0_8 = arith.constant 0 : index
    %c0_9 = arith.constant 0 : index
    %c0_10 = arith.constant 0 : index
    %6 = vector.load %arg1[%c1, %c0_7, %c0_8, %c0_9, %c0_10] : memref<4x1x9x9x16xbf16, #tpu.memory_space<vmem>>, vector<1x1x8x8x16xbf16>
    %7 = vector.shape_cast %6 : vector<1x1x8x8x16xbf16> to vector<8x8x16xbf16>
    %8 = vector.shape_cast %7 : vector<8x8x16xbf16> to vector<64x16xbf16>
    %c1_11 = arith.constant 1 : index
    %c0_12 = arith.constant 0 : index
    %c0_13 = arith.constant 0 : index
    %9 = vector.load %arg2[%c1_11, %c0_12, %c0_13] : memref<9x16x16xbf16, #tpu.memory_space<vmem>>, vector<1x16x16xbf16>
    %10 = vector.shape_cast %9 : vector<1x16x16xbf16> to vector<16x16xbf16>
    %cst_14 = arith.constant dense<0.000000e+00> : vector<64x16xf32>
    %11 = tpu.matmul %8, %10, %cst_14 {dimension_numbers = #tpu.dot_dimension_numbers<[1], [0], [0], [1], [0, 0, 1, 1], [], []>} : vector<64x16xbf16>, vector<16x16xbf16>, vector<64x16xf32> -> vector<64x16xf32>
    %12 = arith.addf %5, %11 : vector<64x16xf32>
    %c0_15 = arith.constant 0 : index
    %c0_16 = arith.constant 0 : index
    %c0_17 = arith.constant 0 : index
    %c1_18 = arith.constant 1 : index
    %c0_19 = arith.constant 0 : index
    %13 = vector.load %arg1[%c0_15, %c0_16, %c0_17, %c1_18, %c0_19] : memref<4x1x9x9x16xbf16, #tpu.memory_space<vmem>>, vector<1x1x8x8x16xbf16>
    %14 = vector.shape_cast %13 : vector<1x1x8x8x16xbf16> to vector<8x8x16xbf16>
    %15 = vector.shape_cast %14 : vector<8x8x16xbf16> to vector<64x16xbf16>
    %c2 = arith.constant 2 : index
    %c0_20 = arith.constant 0 : index
    %c0_21 = arith.constant 0 : index
    %16 = vector.load %arg2[%c2, %c0_20, %c0_21] : memref<9x16x16xbf16, #tpu.memory_space<vmem>>, vector<1x16x16xbf16>
    %17 = vector.shape_cast %16 : vector<1x16x16xbf16> to vector<16x16xbf16>
    %cst_22 = arith.constant dense<0.000000e+00> : vector<64x16xf32>
    %18 = tpu.matmul %15, %17, %cst_22 {dimension_numbers = #tpu.dot_dimension_numbers<[1], [0], [0], [1], [0, 0, 1, 1], [], []>} : vector<64x16xbf16>, vector<16x16xbf16>, vector<64x16xf32> -> vector<64x16xf32>
    %19 = arith.addf %12, %18 : vector<64x16xf32>
    %c2_23 = arith.constant 2 : index
    %c0_24 = arith.constant 0 : index
    %c0_25 = arith.constant 0 : index
    %c0_26 = arith.constant 0 : index
    %c0_27 = arith.constant 0 : index
    %20 = vector.load %arg1[%c2_23, %c0_24, %c0_25, %c0_26, %c0_27] : memref<4x1x9x9x16xbf16, #tpu.memory_space<vmem>>, vector<1x1x8x8x16xbf16>
    %21 = vector.shape_cast %20 : vector<1x1x8x8x16xbf16> to vector<8x8x16xbf16>
    %22 = vector.shape_cast %21 : vector<8x8x16xbf16> to vector<64x16xbf16>
    %c3 = arith.constant 3 : index
    %c0_28 = arith.constant 0 : index
    %c0_29 = arith.constant 0 : index
    %23 = vector.load %arg2[%c3, %c0_28, %c0_29] : memref<9x16x16xbf16, #tpu.memory_space<vmem>>, vector<1x16x16xbf16>
    %24 = vector.shape_cast %23 : vector<1x16x16xbf16> to vector<16x16xbf16>
    %cst_30 = arith.constant dense<0.000000e+00> : vector<64x16xf32>
    %25 = tpu.matmul %22, %24, %cst_30 {dimension_numbers = #tpu.dot_dimension_numbers<[1], [0], [0], [1], [0, 0, 1, 1], [], []>} : vector<64x16xbf16>, vector<16x16xbf16>, vector<64x16xf32> -> vector<64x16xf32>
    %26 = arith.addf %19, %25 : vector<64x16xf32>
    %c3_31 = arith.constant 3 : index
    %c0_32 = arith.constant 0 : index
    %c0_33 = arith.constant 0 : index
    %c0_34 = arith.constant 0 : index
    %c0_35 = arith.constant 0 : index
    %27 = vector.load %arg1[%c3_31, %c0_32, %c0_33, %c0_34, %c0_35] : memref<4x1x9x9x16xbf16, #tpu.memory_space<vmem>>, vector<1x1x8x8x16xbf16>
    %28 = vector.shape_cast %27 : vector<1x1x8x8x16xbf16> to vector<8x8x16xbf16>
    %29 = vector.shape_cast %28 : vector<8x8x16xbf16> to vector<64x16xbf16>
    %c4 = arith.constant 4 : index
    %c0_36 = arith.constant 0 : index
    %c0_37 = arith.constant 0 : index
    %30 = vector.load %arg2[%c4, %c0_36, %c0_37] : memref<9x16x16xbf16, #tpu.memory_space<vmem>>, vector<1x16x16xbf16>
    %31 = vector.shape_cast %30 : vector<1x16x16xbf16> to vector<16x16xbf16>
    %cst_38 = arith.constant dense<0.000000e+00> : vector<64x16xf32>
    %32 = tpu.matmul %29, %31, %cst_38 {dimension_numbers = #tpu.dot_dimension_numbers<[1], [0], [0], [1], [0, 0, 1, 1], [], []>} : vector<64x16xbf16>, vector<16x16xbf16>, vector<64x16xf32> -> vector<64x16xf32>
    %33 = arith.addf %26, %32 : vector<64x16xf32>
    %c2_39 = arith.constant 2 : index
    %c0_40 = arith.constant 0 : index
    %c0_41 = arith.constant 0 : index
    %c1_42 = arith.constant 1 : index
    %c0_43 = arith.constant 0 : index
    %34 = vector.load %arg1[%c2_39, %c0_40, %c0_41, %c1_42, %c0_43] : memref<4x1x9x9x16xbf16, #tpu.memory_space<vmem>>, vector<1x1x8x8x16xbf16>
    %35 = vector.shape_cast %34 : vector<1x1x8x8x16xbf16> to vector<8x8x16xbf16>
    %36 = vector.shape_cast %35 : vector<8x8x16xbf16> to vector<64x16xbf16>
    %c5 = arith.constant 5 : index
    %c0_44 = arith.constant 0 : index
    %c0_45 = arith.constant 0 : index
    %37 = vector.load %arg2[%c5, %c0_44, %c0_45] : memref<9x16x16xbf16, #tpu.memory_space<vmem>>, vector<1x16x16xbf16>
    %38 = vector.shape_cast %37 : vector<1x16x16xbf16> to vector<16x16xbf16>
    %cst_46 = arith.constant dense<0.000000e+00> : vector<64x16xf32>
    %39 = tpu.matmul %36, %38, %cst_46 {dimension_numbers = #tpu.dot_dimension_numbers<[1], [0], [0], [1], [0, 0, 1, 1], [], []>} : vector<64x16xbf16>, vector<16x16xbf16>, vector<64x16xf32> -> vector<64x16xf32>
    %40 = arith.addf %33, %39 : vector<64x16xf32>
    %c0_47 = arith.constant 0 : index
    %c0_48 = arith.constant 0 : index
    %c1_49 = arith.constant 1 : index
    %c0_50 = arith.constant 0 : index
    %c0_51 = arith.constant 0 : index
    %41 = vector.load %arg1[%c0_47, %c0_48, %c1_49, %c0_50, %c0_51] : memref<4x1x9x9x16xbf16, #tpu.memory_space<vmem>>, vector<1x1x8x8x16xbf16>
    %42 = vector.shape_cast %41 : vector<1x1x8x8x16xbf16> to vector<8x8x16xbf16>
    %43 = vector.shape_cast %42 : vector<8x8x16xbf16> to vector<64x16xbf16>
    %c6 = arith.constant 6 : index
    %c0_52 = arith.constant 0 : index
    %c0_53 = arith.constant 0 : index
    %44 = vector.load %arg2[%c6, %c0_52, %c0_53] : memref<9x16x16xbf16, #tpu.memory_space<vmem>>, vector<1x16x16xbf16>
    %45 = vector.shape_cast %44 : vector<1x16x16xbf16> to vector<16x16xbf16>
    %cst_54 = arith.constant dense<0.000000e+00> : vector<64x16xf32>
    %46 = tpu.matmul %43, %45, %cst_54 {dimension_numbers = #tpu.dot_dimension_numbers<[1], [0], [0], [1], [0, 0, 1, 1], [], []>} : vector<64x16xbf16>, vector<16x16xbf16>, vector<64x16xf32> -> vector<64x16xf32>
    %47 = arith.addf %40, %46 : vector<64x16xf32>
    %c1_55 = arith.constant 1 : index
    %c0_56 = arith.constant 0 : index
    %c1_57 = arith.constant 1 : index
    %c0_58 = arith.constant 0 : index
    %c0_59 = arith.constant 0 : index
    %48 = vector.load %arg1[%c1_55, %c0_56, %c1_57, %c0_58, %c0_59] : memref<4x1x9x9x16xbf16, #tpu.memory_space<vmem>>, vector<1x1x8x8x16xbf16>
    %49 = vector.shape_cast %48 : vector<1x1x8x8x16xbf16> to vector<8x8x16xbf16>
    %50 = vector.shape_cast %49 : vector<8x8x16xbf16> to vector<64x16xbf16>
    %c7 = arith.constant 7 : index
    %c0_60 = arith.constant 0 : index
    %c0_61 = arith.constant 0 : index
    %51 = vector.load %arg2[%c7, %c0_60, %c0_61] : memref<9x16x16xbf16, #tpu.memory_space<vmem>>, vector<1x16x16xbf16>
    %52 = vector.shape_cast %51 : vector<1x16x16xbf16> to vector<16x16xbf16>
    %cst_62 = arith.constant dense<0.000000e+00> : vector<64x16xf32>
    %53 = tpu.matmul %50, %52, %cst_62 {dimension_numbers = #tpu.dot_dimension_numbers<[1], [0], [0], [1], [0, 0, 1, 1], [], []>} : vector<64x16xbf16>, vector<16x16xbf16>, vector<64x16xf32> -> vector<64x16xf32>
    %54 = arith.addf %47, %53 : vector<64x16xf32>
    %c0_63 = arith.constant 0 : index
    %c0_64 = arith.constant 0 : index
    %c1_65 = arith.constant 1 : index
    %c1_66 = arith.constant 1 : index
    %c0_67 = arith.constant 0 : index
    %55 = vector.load %arg1[%c0_63, %c0_64, %c1_65, %c1_66, %c0_67] : memref<4x1x9x9x16xbf16, #tpu.memory_space<vmem>>, vector<1x1x8x8x16xbf16>
    %56 = vector.shape_cast %55 : vector<1x1x8x8x16xbf16> to vector<8x8x16xbf16>
    %57 = vector.shape_cast %56 : vector<8x8x16xbf16> to vector<64x16xbf16>
    %c8 = arith.constant 8 : index
    %c0_68 = arith.constant 0 : index
    %c0_69 = arith.constant 0 : index
    %58 = vector.load %arg2[%c8, %c0_68, %c0_69] : memref<9x16x16xbf16, #tpu.memory_space<vmem>>, vector<1x16x16xbf16>
    %59 = vector.shape_cast %58 : vector<1x16x16xbf16> to vector<16x16xbf16>
    %cst_70 = arith.constant dense<0.000000e+00> : vector<64x16xf32>
    %60 = tpu.matmul %57, %59, %cst_70 {dimension_numbers = #tpu.dot_dimension_numbers<[1], [0], [0], [1], [0, 0, 1, 1], [], []>} : vector<64x16xbf16>, vector<16x16xbf16>, vector<64x16xf32> -> vector<64x16xf32>
    %61 = arith.addf %54, %60 : vector<64x16xf32>
    %c0_71 = arith.constant 0 : index
    %c0_72 = arith.constant 0 : index
    %62 = vector.load %arg3[%c0_71, %c0_72] : memref<1x16xf32, #tpu.memory_space<vmem>>, vector<1x16xf32>
    %63 = vector.broadcast %62 : vector<1x16xf32> to vector<64x16xf32>
    %64 = arith.addf %61, %63 : vector<64x16xf32>
    %cst_73 = arith.constant 0.000000e+00 : f32
    %65 = vector.broadcast %cst_73 : f32 to vector<64x16xf32>
    %66 = arith.maximumf %64, %65 : vector<64x16xf32>
    %67 = vector.shape_cast %66 : vector<64x16xf32> to vector<8x8x16xf32>
    %68 = arith.truncf %67 : vector<8x8x16xf32> to vector<8x8x16xbf16>
    %c0_74 = arith.constant 0 : index
    %c0_75 = arith.constant 0 : index
    %c0_76 = arith.constant 0 : index
    %c0_77 = arith.constant 0 : index
    %69 = vector.load %arg4[%c0_74, %c0_75, %c0_76, %c0_77] : memref<1x8x8x16xbf16, #tpu.memory_space<vmem>>, vector<1x8x8x16xbf16>
    %70 = vector.shape_cast %69 : vector<1x8x8x16xbf16> to vector<8x8x16xbf16>
    %71 = vector.shape_cast %68 : vector<8x8x16xbf16> to vector<1x8x8x16xbf16>
    tpu.vector_store %arg4[%c0_74, %c0_75, %c0_76, %c0_77], %71 {strides = array<i32>} : memref<1x8x8x16xbf16, #tpu.memory_space<vmem>>, vector<1x8x8x16xbf16>,
    return
  }
  func.func @transform_0(%arg0: i32) -> (i32, i32, i32, i32, i32) {
    %c0_i32 = arith.constant 0 : i32
    %c0_i32_0 = arith.constant 0 : i32
    %c0_i32_1 = arith.constant 0 : i32
    %c0_i32_2 = arith.constant 0 : i32
    %c0_i32_3 = arith.constant 0 : i32
    return %c0_i32, %arg0, %c0_i32_0, %c0_i32_1, %c0_i32_2 : i32, i32, i32, i32, i32
  }
  func.func @transform_1(%arg0: i32) -> (i32, i32, i32) {
    %c0_i32 = arith.constant 0 : i32
    %c0_i32_0 = arith.constant 0 : i32
    %c0_i32_1 = arith.constant 0 : i32
    %c0_i32_2 = arith.constant 0 : i32
    return %c0_i32, %c0_i32_0, %c0_i32_1 : i32, i32, i32
  }
  func.func @transform_2(%arg0: i32) -> (i32, i32) {
    %c0_i32 = arith.constant 0 : i32
    %c0_i32_0 = arith.constant 0 : i32
    %c0_i32_1 = arith.constant 0 : i32
    return %c0_i32, %c0_i32_0 : i32, i32
  }
  func.func @transform_3(%arg0: i32) -> (i32, i32, i32, i32) {
    %c0_i32 = arith.constant 0 : i32
    %c0_i32_0 = arith.constant 0 : i32
    %c0_i32_1 = arith.constant 0 : i32
    %c0_i32_2 = arith.constant 0 : i32
    return %arg0, %c0_i32, %c0_i32_0, %c0_i32_1 : i32, i32, i32, i32
  }
}

module attributes {stable_mosaic.version = 11 : i64} {
  func.func @_mm_bias_kernel(%arg0: i32, %arg1: i32, %arg2: memref<128x64xbf16, #tpu.memory_space<vmem>>, %arg3: memref<64x16xbf16, #tpu.memory_space<vmem>>, %arg4: memref<1x16xf32, #tpu.memory_space<vmem>>, %arg5: memref<128x16xbf16, #tpu.memory_space<vmem>>, %arg6: memref<128x16xf32, #tpu.memory_space<vmem>>) attributes {dimension_semantics = [#tpu.dimension_semantics<parallel>, #tpu.dimension_semantics<arbitrary>], iteration_bounds = array<i64: 1, 1>, scalar_prefetch = 0 : i64, scratch_operands = 1 : i64, tpu.core_type = #tpu.core_type<tc>, window_params = [{transform_indices = @transform_0, window_bounds = array<i64: 128, 64>}, {transform_indices = @transform_1, window_bounds = array<i64: 64, 16>}, {pipeline_mode = #tpu.pipeline_mode<synchronous>, transform_indices = @transform_2, window_bounds = array<i64: 1, 16>}, {transform_indices = @transform_3, window_bounds = array<i64: 128, 16>}]} {
    %c0_i32 = arith.constant 0 : i32
    %0 = arith.cmpi eq, %arg1, %c0_i32 : i32
    %1 = arith.extui %0 : i1 to i32
    %c0_i32_0 = arith.constant 0 : i32
    %2 = arith.cmpi ne, %1, %c0_i32_0 : i32
    scf.if %2 {
      %cst_10 = arith.constant 0.000000e+00 : f32
      %12 = vector.broadcast %cst_10 : f32 to vector<128x16xf32>
      %c0_11 = arith.constant 0 : index
      %c0_12 = arith.constant 0 : index
      %13 = vector.load %arg6[%c0_11, %c0_12] : memref<128x16xf32, #tpu.memory_space<vmem>>, vector<128x16xf32>
      tpu.vector_store %arg6[%c0_11, %c0_12], %12 {strides = array<i32>} : memref<128x16xf32, #tpu.memory_space<vmem>>, vector<128x16xf32>,
    } else {
    }
    %c0 = arith.constant 0 : index
    %c0_1 = arith.constant 0 : index
    %3 = vector.load %arg6[%c0, %c0_1] : memref<128x16xf32, #tpu.memory_space<vmem>>, vector<128x16xf32>
    %c0_2 = arith.constant 0 : index
    %c0_3 = arith.constant 0 : index
    %4 = vector.load %arg2[%c0_2, %c0_3] : memref<128x64xbf16, #tpu.memory_space<vmem>>, vector<128x64xbf16>
    %c0_4 = arith.constant 0 : index
    %c0_5 = arith.constant 0 : index
    %5 = vector.load %arg3[%c0_4, %c0_5] : memref<64x16xbf16, #tpu.memory_space<vmem>>, vector<64x16xbf16>
    %cst = arith.constant dense<0.000000e+00> : vector<128x16xf32>
    %6 = tpu.matmul %4, %5, %cst {dimension_numbers = #tpu.dot_dimension_numbers<[1], [0], [0], [1], [0, 0, 1, 1], [], []>} : vector<128x64xbf16>, vector<64x16xbf16>, vector<128x16xf32> -> vector<128x16xf32>
    %7 = arith.addf %3, %6 : vector<128x16xf32>
    %c0_6 = arith.constant 0 : index
    %c0_7 = arith.constant 0 : index
    %8 = vector.load %arg6[%c0_6, %c0_7] : memref<128x16xf32, #tpu.memory_space<vmem>>, vector<128x16xf32>
    tpu.vector_store %arg6[%c0_6, %c0_7], %7 {strides = array<i32>} : memref<128x16xf32, #tpu.memory_space<vmem>>, vector<128x16xf32>,
    %c0_i32_8 = arith.constant 0 : i32
    %9 = arith.cmpi eq, %arg1, %c0_i32_8 : i32
    %10 = arith.extui %9 : i1 to i32
    %c0_i32_9 = arith.constant 0 : i32
    %11 = arith.cmpi ne, %10, %c0_i32_9 : i32
    scf.if %11 {
      %c0_10 = arith.constant 0 : index
      %c0_11 = arith.constant 0 : index
      %12 = vector.load %arg6[%c0_10, %c0_11] : memref<128x16xf32, #tpu.memory_space<vmem>>, vector<128x16xf32>
      %c0_12 = arith.constant 0 : index
      %c0_13 = arith.constant 0 : index
      %13 = vector.load %arg4[%c0_12, %c0_13] : memref<1x16xf32, #tpu.memory_space<vmem>>, vector<1x16xf32>
      %14 = vector.broadcast %13 : vector<1x16xf32> to vector<128x16xf32>
      %15 = arith.addf %12, %14 : vector<128x16xf32>
      %cst_14 = arith.constant 0.000000e+00 : f32
      %16 = vector.broadcast %cst_14 : f32 to vector<128x16xf32>
      %17 = arith.maximumf %15, %16 : vector<128x16xf32>
      %18 = arith.truncf %17 : vector<128x16xf32> to vector<128x16xbf16>
      %c0_15 = arith.constant 0 : index
      %c0_16 = arith.constant 0 : index
      %19 = vector.load %arg5[%c0_15, %c0_16] : memref<128x16xbf16, #tpu.memory_space<vmem>>, vector<128x16xbf16>
      tpu.vector_store %arg5[%c0_15, %c0_16], %18 {strides = array<i32>} : memref<128x16xbf16, #tpu.memory_space<vmem>>, vector<128x16xbf16>,
    } else {
    }
    return
  }
  func.func @transform_0(%arg0: i32, %arg1: i32) -> (i32, i32) {
    %c0_i32 = arith.constant 0 : i32
    return %arg0, %arg1 : i32, i32
  }
  func.func @transform_1(%arg0: i32, %arg1: i32) -> (i32, i32) {
    %c0_i32 = arith.constant 0 : i32
    %c0_i32_0 = arith.constant 0 : i32
    return %arg1, %c0_i32 : i32, i32
  }
  func.func @transform_2(%arg0: i32, %arg1: i32) -> (i32, i32) {
    %c0_i32 = arith.constant 0 : i32
    %c0_i32_0 = arith.constant 0 : i32
    %c0_i32_1 = arith.constant 0 : i32
    return %c0_i32, %c0_i32_0 : i32, i32
  }
  func.func @transform_3(%arg0: i32, %arg1: i32) -> (i32, i32) {
    %c0_i32 = arith.constant 0 : i32
    %c0_i32_0 = arith.constant 0 : i32
    return %arg0, %c0_i32 : i32, i32
  }
}

module attributes {stable_mosaic.version = 11 : i64} {
  func.func @_conv3x3_kernel(%arg0: i32, %arg1: memref<1x1x10x10x16xbf16, #tpu.memory_space<vmem>>, %arg2: memref<9x16x16xbf16, #tpu.memory_space<vmem>>, %arg3: memref<1x16xf32, #tpu.memory_space<vmem>>, %arg4: memref<1x8x8x16xbf16, #tpu.memory_space<vmem>>) attributes {dimension_semantics = [#tpu.dimension_semantics<parallel>], iteration_bounds = array<i64: 2>, scalar_prefetch = 0 : i64, scratch_operands = 0 : i64, tpu.core_type = #tpu.core_type<tc>, window_params = [{transform_indices = @transform_0, window_bounds = array<i64: 1, 1, 10, 10, 16>}, {pipeline_mode = #tpu.pipeline_mode<synchronous>, transform_indices = @transform_1, window_bounds = array<i64: 9, 16, 16>}, {pipeline_mode = #tpu.pipeline_mode<synchronous>, transform_indices = @transform_2, window_bounds = array<i64: 1, 16>}, {transform_indices = @transform_3, window_bounds = array<i64: 1, 8, 8, 16>}]} {
    %c0 = arith.constant 0 : index
    %c0_0 = arith.constant 0 : index
    %c0_1 = arith.constant 0 : index
    %c0_2 = arith.constant 0 : index
    %c0_3 = arith.constant 0 : index
    %0 = vector.load %arg1[%c0, %c0_0, %c0_1, %c0_2, %c0_3] : memref<1x1x10x10x16xbf16, #tpu.memory_space<vmem>>, vector<1x1x8x8x16xbf16>
    %1 = vector.shape_cast %0 : vector<1x1x8x8x16xbf16> to vector<8x8x16xbf16>
    %2 = vector.shape_cast %1 : vector<8x8x16xbf16> to vector<64x16xbf16>
    %c0_4 = arith.constant 0 : index
    %c0_5 = arith.constant 0 : index
    %c0_6 = arith.constant 0 : index
    %3 = vector.load %arg2[%c0_4, %c0_5, %c0_6] : memref<9x16x16xbf16, #tpu.memory_space<vmem>>, vector<1x16x16xbf16>
    %4 = vector.shape_cast %3 : vector<1x16x16xbf16> to vector<16x16xbf16>
    %cst = arith.constant dense<0.000000e+00> : vector<64x16xf32>
    %5 = tpu.matmul %2, %4, %cst {dimension_numbers = #tpu.dot_dimension_numbers<[1], [0], [0], [1], [0, 0, 1, 1], [], []>} : vector<64x16xbf16>, vector<16x16xbf16>, vector<64x16xf32> -> vector<64x16xf32>
    %c0_7 = arith.constant 0 : index
    %c0_8 = arith.constant 0 : index
    %c0_9 = arith.constant 0 : index
    %c1 = arith.constant 1 : index
    %c0_10 = arith.constant 0 : index
    %6 = vector.load %arg1[%c0_7, %c0_8, %c0_9, %c1, %c0_10] : memref<1x1x10x10x16xbf16, #tpu.memory_space<vmem>>, vector<1x1x8x8x16xbf16>
    %7 = vector.shape_cast %6 : vector<1x1x8x8x16xbf16> to vector<8x8x16xbf16>
    %8 = vector.shape_cast %7 : vector<8x8x16xbf16> to vector<64x16xbf16>
    %c1_11 = arith.constant 1 : index
    %c0_12 = arith.constant 0 : index
    %c0_13 = arith.constant 0 : index
    %9 = vector.load %arg2[%c1_11, %c0_12, %c0_13] : memref<9x16x16xbf16, #tpu.memory_space<vmem>>, vector<1x16x16xbf16>
    %10 = vector.shape_cast %9 : vector<1x16x16xbf16> to vector<16x16xbf16>
    %cst_14 = arith.constant dense<0.000000e+00> : vector<64x16xf32>
    %11 = tpu.matmul %8, %10, %cst_14 {dimension_numbers = #tpu.dot_dimension_numbers<[1], [0], [0], [1], [0, 0, 1, 1], [], []>} : vector<64x16xbf16>, vector<16x16xbf16>, vector<64x16xf32> -> vector<64x16xf32>
    %12 = arith.addf %5, %11 : vector<64x16xf32>
    %c0_15 = arith.constant 0 : index
    %c0_16 = arith.constant 0 : index
    %c0_17 = arith.constant 0 : index
    %c2 = arith.constant 2 : index
    %c0_18 = arith.constant 0 : index
    %13 = vector.load %arg1[%c0_15, %c0_16, %c0_17, %c2, %c0_18] : memref<1x1x10x10x16xbf16, #tpu.memory_space<vmem>>, vector<1x1x8x8x16xbf16>
    %14 = vector.shape_cast %13 : vector<1x1x8x8x16xbf16> to vector<8x8x16xbf16>
    %15 = vector.shape_cast %14 : vector<8x8x16xbf16> to vector<64x16xbf16>
    %c2_19 = arith.constant 2 : index
    %c0_20 = arith.constant 0 : index
    %c0_21 = arith.constant 0 : index
    %16 = vector.load %arg2[%c2_19, %c0_20, %c0_21] : memref<9x16x16xbf16, #tpu.memory_space<vmem>>, vector<1x16x16xbf16>
    %17 = vector.shape_cast %16 : vector<1x16x16xbf16> to vector<16x16xbf16>
    %cst_22 = arith.constant dense<0.000000e+00> : vector<64x16xf32>
    %18 = tpu.matmul %15, %17, %cst_22 {dimension_numbers = #tpu.dot_dimension_numbers<[1], [0], [0], [1], [0, 0, 1, 1], [], []>} : vector<64x16xbf16>, vector<16x16xbf16>, vector<64x16xf32> -> vector<64x16xf32>
    %19 = arith.addf %12, %18 : vector<64x16xf32>
    %c0_23 = arith.constant 0 : index
    %c0_24 = arith.constant 0 : index
    %c1_25 = arith.constant 1 : index
    %c0_26 = arith.constant 0 : index
    %c0_27 = arith.constant 0 : index
    %20 = vector.load %arg1[%c0_23, %c0_24, %c1_25, %c0_26, %c0_27] : memref<1x1x10x10x16xbf16, #tpu.memory_space<vmem>>, vector<1x1x8x8x16xbf16>
    %21 = vector.shape_cast %20 : vector<1x1x8x8x16xbf16> to vector<8x8x16xbf16>
    %22 = vector.shape_cast %21 : vector<8x8x16xbf16> to vector<64x16xbf16>
    %c3 = arith.constant 3 : index
    %c0_28 = arith.constant 0 : index
    %c0_29 = arith.constant 0 : index
    %23 = vector.load %arg2[%c3, %c0_28, %c0_29] : memref<9x16x16xbf16, #tpu.memory_space<vmem>>, vector<1x16x16xbf16>
    %24 = vector.shape_cast %23 : vector<1x16x16xbf16> to vector<16x16xbf16>
    %cst_30 = arith.constant dense<0.000000e+00> : vector<64x16xf32>
    %25 = tpu.matmul %22, %24, %cst_30 {dimension_numbers = #tpu.dot_dimension_numbers<[1], [0], [0], [1], [0, 0, 1, 1], [], []>} : vector<64x16xbf16>, vector<16x16xbf16>, vector<64x16xf32> -> vector<64x16xf32>
    %26 = arith.addf %19, %25 : vector<64x16xf32>
    %c0_31 = arith.constant 0 : index
    %c0_32 = arith.constant 0 : index
    %c1_33 = arith.constant 1 : index
    %c1_34 = arith.constant 1 : index
    %c0_35 = arith.constant 0 : index
    %27 = vector.load %arg1[%c0_31, %c0_32, %c1_33, %c1_34, %c0_35] : memref<1x1x10x10x16xbf16, #tpu.memory_space<vmem>>, vector<1x1x8x8x16xbf16>
    %28 = vector.shape_cast %27 : vector<1x1x8x8x16xbf16> to vector<8x8x16xbf16>
    %29 = vector.shape_cast %28 : vector<8x8x16xbf16> to vector<64x16xbf16>
    %c4 = arith.constant 4 : index
    %c0_36 = arith.constant 0 : index
    %c0_37 = arith.constant 0 : index
    %30 = vector.load %arg2[%c4, %c0_36, %c0_37] : memref<9x16x16xbf16, #tpu.memory_space<vmem>>, vector<1x16x16xbf16>
    %31 = vector.shape_cast %30 : vector<1x16x16xbf16> to vector<16x16xbf16>
    %cst_38 = arith.constant dense<0.000000e+00> : vector<64x16xf32>
    %32 = tpu.matmul %29, %31, %cst_38 {dimension_numbers = #tpu.dot_dimension_numbers<[1], [0], [0], [1], [0, 0, 1, 1], [], []>} : vector<64x16xbf16>, vector<16x16xbf16>, vector<64x16xf32> -> vector<64x16xf32>
    %33 = arith.addf %26, %32 : vector<64x16xf32>
    %c0_39 = arith.constant 0 : index
    %c0_40 = arith.constant 0 : index
    %c1_41 = arith.constant 1 : index
    %c2_42 = arith.constant 2 : index
    %c0_43 = arith.constant 0 : index
    %34 = vector.load %arg1[%c0_39, %c0_40, %c1_41, %c2_42, %c0_43] : memref<1x1x10x10x16xbf16, #tpu.memory_space<vmem>>, vector<1x1x8x8x16xbf16>
    %35 = vector.shape_cast %34 : vector<1x1x8x8x16xbf16> to vector<8x8x16xbf16>
    %36 = vector.shape_cast %35 : vector<8x8x16xbf16> to vector<64x16xbf16>
    %c5 = arith.constant 5 : index
    %c0_44 = arith.constant 0 : index
    %c0_45 = arith.constant 0 : index
    %37 = vector.load %arg2[%c5, %c0_44, %c0_45] : memref<9x16x16xbf16, #tpu.memory_space<vmem>>, vector<1x16x16xbf16>
    %38 = vector.shape_cast %37 : vector<1x16x16xbf16> to vector<16x16xbf16>
    %cst_46 = arith.constant dense<0.000000e+00> : vector<64x16xf32>
    %39 = tpu.matmul %36, %38, %cst_46 {dimension_numbers = #tpu.dot_dimension_numbers<[1], [0], [0], [1], [0, 0, 1, 1], [], []>} : vector<64x16xbf16>, vector<16x16xbf16>, vector<64x16xf32> -> vector<64x16xf32>
    %40 = arith.addf %33, %39 : vector<64x16xf32>
    %c0_47 = arith.constant 0 : index
    %c0_48 = arith.constant 0 : index
    %c2_49 = arith.constant 2 : index
    %c0_50 = arith.constant 0 : index
    %c0_51 = arith.constant 0 : index
    %41 = vector.load %arg1[%c0_47, %c0_48, %c2_49, %c0_50, %c0_51] : memref<1x1x10x10x16xbf16, #tpu.memory_space<vmem>>, vector<1x1x8x8x16xbf16>
    %42 = vector.shape_cast %41 : vector<1x1x8x8x16xbf16> to vector<8x8x16xbf16>
    %43 = vector.shape_cast %42 : vector<8x8x16xbf16> to vector<64x16xbf16>
    %c6 = arith.constant 6 : index
    %c0_52 = arith.constant 0 : index
    %c0_53 = arith.constant 0 : index
    %44 = vector.load %arg2[%c6, %c0_52, %c0_53] : memref<9x16x16xbf16, #tpu.memory_space<vmem>>, vector<1x16x16xbf16>
    %45 = vector.shape_cast %44 : vector<1x16x16xbf16> to vector<16x16xbf16>
    %cst_54 = arith.constant dense<0.000000e+00> : vector<64x16xf32>
    %46 = tpu.matmul %43, %45, %cst_54 {dimension_numbers = #tpu.dot_dimension_numbers<[1], [0], [0], [1], [0, 0, 1, 1], [], []>} : vector<64x16xbf16>, vector<16x16xbf16>, vector<64x16xf32> -> vector<64x16xf32>
    %47 = arith.addf %40, %46 : vector<64x16xf32>
    %c0_55 = arith.constant 0 : index
    %c0_56 = arith.constant 0 : index
    %c2_57 = arith.constant 2 : index
    %c1_58 = arith.constant 1 : index
    %c0_59 = arith.constant 0 : index
    %48 = vector.load %arg1[%c0_55, %c0_56, %c2_57, %c1_58, %c0_59] : memref<1x1x10x10x16xbf16, #tpu.memory_space<vmem>>, vector<1x1x8x8x16xbf16>
    %49 = vector.shape_cast %48 : vector<1x1x8x8x16xbf16> to vector<8x8x16xbf16>
    %50 = vector.shape_cast %49 : vector<8x8x16xbf16> to vector<64x16xbf16>
    %c7 = arith.constant 7 : index
    %c0_60 = arith.constant 0 : index
    %c0_61 = arith.constant 0 : index
    %51 = vector.load %arg2[%c7, %c0_60, %c0_61] : memref<9x16x16xbf16, #tpu.memory_space<vmem>>, vector<1x16x16xbf16>
    %52 = vector.shape_cast %51 : vector<1x16x16xbf16> to vector<16x16xbf16>
    %cst_62 = arith.constant dense<0.000000e+00> : vector<64x16xf32>
    %53 = tpu.matmul %50, %52, %cst_62 {dimension_numbers = #tpu.dot_dimension_numbers<[1], [0], [0], [1], [0, 0, 1, 1], [], []>} : vector<64x16xbf16>, vector<16x16xbf16>, vector<64x16xf32> -> vector<64x16xf32>
    %54 = arith.addf %47, %53 : vector<64x16xf32>
    %c0_63 = arith.constant 0 : index
    %c0_64 = arith.constant 0 : index
    %c2_65 = arith.constant 2 : index
    %c2_66 = arith.constant 2 : index
    %c0_67 = arith.constant 0 : index
    %55 = vector.load %arg1[%c0_63, %c0_64, %c2_65, %c2_66, %c0_67] : memref<1x1x10x10x16xbf16, #tpu.memory_space<vmem>>, vector<1x1x8x8x16xbf16>
    %56 = vector.shape_cast %55 : vector<1x1x8x8x16xbf16> to vector<8x8x16xbf16>
    %57 = vector.shape_cast %56 : vector<8x8x16xbf16> to vector<64x16xbf16>
    %c8 = arith.constant 8 : index
    %c0_68 = arith.constant 0 : index
    %c0_69 = arith.constant 0 : index
    %58 = vector.load %arg2[%c8, %c0_68, %c0_69] : memref<9x16x16xbf16, #tpu.memory_space<vmem>>, vector<1x16x16xbf16>
    %59 = vector.shape_cast %58 : vector<1x16x16xbf16> to vector<16x16xbf16>
    %cst_70 = arith.constant dense<0.000000e+00> : vector<64x16xf32>
    %60 = tpu.matmul %57, %59, %cst_70 {dimension_numbers = #tpu.dot_dimension_numbers<[1], [0], [0], [1], [0, 0, 1, 1], [], []>} : vector<64x16xbf16>, vector<16x16xbf16>, vector<64x16xf32> -> vector<64x16xf32>
    %61 = arith.addf %54, %60 : vector<64x16xf32>
    %c0_71 = arith.constant 0 : index
    %c0_72 = arith.constant 0 : index
    %62 = vector.load %arg3[%c0_71, %c0_72] : memref<1x16xf32, #tpu.memory_space<vmem>>, vector<1x16xf32>
    %63 = vector.broadcast %62 : vector<1x16xf32> to vector<64x16xf32>
    %64 = arith.addf %61, %63 : vector<64x16xf32>
    %cst_73 = arith.constant 0.000000e+00 : f32
    %65 = vector.broadcast %cst_73 : f32 to vector<64x16xf32>
    %66 = arith.maximumf %64, %65 : vector<64x16xf32>
    %67 = vector.shape_cast %66 : vector<64x16xf32> to vector<8x8x16xf32>
    %68 = arith.truncf %67 : vector<8x8x16xf32> to vector<8x8x16xbf16>
    %c0_74 = arith.constant 0 : index
    %c0_75 = arith.constant 0 : index
    %c0_76 = arith.constant 0 : index
    %c0_77 = arith.constant 0 : index
    %69 = vector.load %arg4[%c0_74, %c0_75, %c0_76, %c0_77] : memref<1x8x8x16xbf16, #tpu.memory_space<vmem>>, vector<1x8x8x16xbf16>
    %70 = vector.shape_cast %69 : vector<1x8x8x16xbf16> to vector<8x8x16xbf16>
    %71 = vector.shape_cast %68 : vector<8x8x16xbf16> to vector<1x8x8x16xbf16>
    tpu.vector_store %arg4[%c0_74, %c0_75, %c0_76, %c0_77], %71 {strides = array<i32>} : memref<1x8x8x16xbf16, #tpu.memory_space<vmem>>, vector<1x8x8x16xbf16>,
    return
  }
  func.func @transform_0(%arg0: i32) -> (i32, i32, i32, i32, i32) {
    %c0_i32 = arith.constant 0 : i32
    %c0_i32_0 = arith.constant 0 : i32
    %c0_i32_1 = arith.constant 0 : i32
    %c0_i32_2 = arith.constant 0 : i32
    %c0_i32_3 = arith.constant 0 : i32
    return %c0_i32, %arg0, %c0_i32_0, %c0_i32_1, %c0_i32_2 : i32, i32, i32, i32, i32
  }
  func.func @transform_1(%arg0: i32) -> (i32, i32, i32) {
    %c0_i32 = arith.constant 0 : i32
    %c0_i32_0 = arith.constant 0 : i32
    %c0_i32_1 = arith.constant 0 : i32
    %c0_i32_2 = arith.constant 0 : i32
    return %c0_i32, %c0_i32_0, %c0_i32_1 : i32, i32, i32
  }
  func.func @transform_2(%arg0: i32) -> (i32, i32) {
    %c0_i32 = arith.constant 0 : i32
    %c0_i32_0 = arith.constant 0 : i32
    %c0_i32_1 = arith.constant 0 : i32
    return %c0_i32, %c0_i32_0 : i32, i32
  }
  func.func @transform_3(%arg0: i32) -> (i32, i32, i32, i32) {
    %c0_i32 = arith.constant 0 : i32
    %c0_i32_0 = arith.constant 0 : i32
    %c0_i32_1 = arith.constant 0 : i32
    %c0_i32_2 = arith.constant 0 : i32
    return %arg0, %c0_i32, %c0_i32_0, %c0_i32_1 : i32, i32, i32, i32
  }
}

module attributes {stable_mosaic.version = 11 : i64} {
  func.func @_mm_bias_res_kernel(%arg0: i32, %arg1: i32, %arg2: memref<128x16xbf16, #tpu.memory_space<vmem>>, %arg3: memref<16x64xbf16, #tpu.memory_space<vmem>>, %arg4: memref<1x64xf32, #tpu.memory_space<vmem>>, %arg5: memref<128x64xbf16, #tpu.memory_space<vmem>>, %arg6: memref<128x64xf32, #tpu.memory_space<vmem>>, %arg7: memref<128x64xf32, #tpu.memory_space<vmem>>) attributes {dimension_semantics = [#tpu.dimension_semantics<parallel>, #tpu.dimension_semantics<arbitrary>], iteration_bounds = array<i64: 1, 1>, scalar_prefetch = 0 : i64, scratch_operands = 1 : i64, tpu.core_type = #tpu.core_type<tc>, window_params = [{transform_indices = @transform_0, window_bounds = array<i64: 128, 16>}, {transform_indices = @transform_1, window_bounds = array<i64: 16, 64>}, {pipeline_mode = #tpu.pipeline_mode<synchronous>, transform_indices = @transform_2, window_bounds = array<i64: 1, 64>}, {transform_indices = @transform_3, window_bounds = array<i64: 128, 64>}, {transform_indices = @transform_4, window_bounds = array<i64: 128, 64>}]} {
    %c0_i32 = arith.constant 0 : i32
    %0 = arith.cmpi eq, %arg1, %c0_i32 : i32
    %1 = arith.extui %0 : i1 to i32
    %c0_i32_0 = arith.constant 0 : i32
    %2 = arith.cmpi ne, %1, %c0_i32_0 : i32
    scf.if %2 {
      %cst_10 = arith.constant 0.000000e+00 : f32
      %12 = vector.broadcast %cst_10 : f32 to vector<128x64xf32>
      %c0_11 = arith.constant 0 : index
      %c0_12 = arith.constant 0 : index
      %13 = vector.load %arg7[%c0_11, %c0_12] : memref<128x64xf32, #tpu.memory_space<vmem>>, vector<128x64xf32>
      tpu.vector_store %arg7[%c0_11, %c0_12], %12 {strides = array<i32>} : memref<128x64xf32, #tpu.memory_space<vmem>>, vector<128x64xf32>,
    } else {
    }
    %c0 = arith.constant 0 : index
    %c0_1 = arith.constant 0 : index
    %3 = vector.load %arg7[%c0, %c0_1] : memref<128x64xf32, #tpu.memory_space<vmem>>, vector<128x64xf32>
    %c0_2 = arith.constant 0 : index
    %c0_3 = arith.constant 0 : index
    %4 = vector.load %arg2[%c0_2, %c0_3] : memref<128x16xbf16, #tpu.memory_space<vmem>>, vector<128x16xbf16>
    %c0_4 = arith.constant 0 : index
    %c0_5 = arith.constant 0 : index
    %5 = vector.load %arg3[%c0_4, %c0_5] : memref<16x64xbf16, #tpu.memory_space<vmem>>, vector<16x64xbf16>
    %cst = arith.constant dense<0.000000e+00> : vector<128x64xf32>
    %6 = tpu.matmul %4, %5, %cst {dimension_numbers = #tpu.dot_dimension_numbers<[1], [0], [0], [1], [0, 0, 1, 1], [], []>} : vector<128x16xbf16>, vector<16x64xbf16>, vector<128x64xf32> -> vector<128x64xf32>
    %7 = arith.addf %3, %6 : vector<128x64xf32>
    %c0_6 = arith.constant 0 : index
    %c0_7 = arith.constant 0 : index
    %8 = vector.load %arg7[%c0_6, %c0_7] : memref<128x64xf32, #tpu.memory_space<vmem>>, vector<128x64xf32>
    tpu.vector_store %arg7[%c0_6, %c0_7], %7 {strides = array<i32>} : memref<128x64xf32, #tpu.memory_space<vmem>>, vector<128x64xf32>,
    %c0_i32_8 = arith.constant 0 : i32
    %9 = arith.cmpi eq, %arg1, %c0_i32_8 : i32
    %10 = arith.extui %9 : i1 to i32
    %c0_i32_9 = arith.constant 0 : i32
    %11 = arith.cmpi ne, %10, %c0_i32_9 : i32
    scf.if %11 {
      %c0_10 = arith.constant 0 : index
      %c0_11 = arith.constant 0 : index
      %12 = vector.load %arg7[%c0_10, %c0_11] : memref<128x64xf32, #tpu.memory_space<vmem>>, vector<128x64xf32>
      %c0_12 = arith.constant 0 : index
      %c0_13 = arith.constant 0 : index
      %13 = vector.load %arg4[%c0_12, %c0_13] : memref<1x64xf32, #tpu.memory_space<vmem>>, vector<1x64xf32>
      %14 = vector.broadcast %13 : vector<1x64xf32> to vector<128x64xf32>
      %15 = arith.addf %12, %14 : vector<128x64xf32>
      %c0_14 = arith.constant 0 : index
      %c0_15 = arith.constant 0 : index
      %16 = vector.load %arg5[%c0_14, %c0_15] : memref<128x64xbf16, #tpu.memory_space<vmem>>, vector<128x64xbf16>
      %17 = arith.extf %16 : vector<128x64xbf16> to vector<128x64xf32>
      %18 = arith.addf %15, %17 : vector<128x64xf32>
      %cst_16 = arith.constant 0.000000e+00 : f32
      %19 = vector.broadcast %cst_16 : f32 to vector<128x64xf32>
      %20 = arith.maximumf %18, %19 : vector<128x64xf32>
      %c0_17 = arith.constant 0 : index
      %c0_18 = arith.constant 0 : index
      %21 = vector.load %arg6[%c0_17, %c0_18] : memref<128x64xf32, #tpu.memory_space<vmem>>, vector<128x64xf32>
      tpu.vector_store %arg6[%c0_17, %c0_18], %20 {strides = array<i32>} : memref<128x64xf32, #tpu.memory_space<vmem>>, vector<128x64xf32>,
    } else {
    }
    return
  }
  func.func @transform_0(%arg0: i32, %arg1: i32) -> (i32, i32) {
    %c0_i32 = arith.constant 0 : i32
    return %arg0, %arg1 : i32, i32
  }
  func.func @transform_1(%arg0: i32, %arg1: i32) -> (i32, i32) {
    %c0_i32 = arith.constant 0 : i32
    %c0_i32_0 = arith.constant 0 : i32
    return %arg1, %c0_i32 : i32, i32
  }
  func.func @transform_2(%arg0: i32, %arg1: i32) -> (i32, i32) {
    %c0_i32 = arith.constant 0 : i32
    %c0_i32_0 = arith.constant 0 : i32
    %c0_i32_1 = arith.constant 0 : i32
    return %c0_i32, %c0_i32_0 : i32, i32
  }
  func.func @transform_3(%arg0: i32, %arg1: i32) -> (i32, i32) {
    %c0_i32 = arith.constant 0 : i32
    %c0_i32_0 = arith.constant 0 : i32
    return %arg0, %c0_i32 : i32, i32
  }
  func.func @transform_4(%arg0: i32, %arg1: i32) -> (i32, i32) {
    %c0_i32 = arith.constant 0 : i32
    %c0_i32_0 = arith.constant 0 : i32
    return %arg0, %c0_i32 : i32, i32
  }
}

</mosaic_0001>

<llo_original>
// kernel: bottleneck_forward.7
$region0: #{bottleneck_forward.7}
  #allocation0 [shape = 'u32[]', space=smem, size = 0x4, offset = 0x4, fixed_abs, tag = 'smem constant byte address 0x4 - core index']
  #allocation1 [shape = 'u32[144,128]{1,0:T(1,128)}', space=vmem, size = 0x12000, scoped, tag = 'internal scratch']
  #allocation2 [shape = 'f32[128,64]{1,0:T(8,128)}', space=vmem, size = 0x10000, scoped, tag = 'scratch operand']
  %s0 = inlined_call_operand.vmem [shape: bf16[128,16], index: 0, kind: input, shape index: {}]
  %s1 = inlined_call_operand.vmem [shape: bf16[16,64], index: 1, kind: input, shape index: {}]
  %s2 = inlined_call_operand.vmem [shape: f32[1,64], index: 2, kind: input, shape index: {}]
  %s3 = inlined_call_operand.vmem [shape: bf16[128,64], index: 3, kind: output, shape index: {}]
  %s4 = sld [smem:[#allocation0]]
  $region30: #{bottleneck_forward.7} parent=0
    _
  %s6 = ssub.s32 1, %s4
  %s7 = scalar_select 0, %s6, %s4
  // Predicated region
  $region2: #{bottleneck_forward.7} parent=0 // pred_check
    _
  $region3: #{bottleneck_forward.7} parent=0 // pred_check_branch
    %9 = sbr.rel (0) target = $region5
  $region4: #{bottleneck_forward.7} parent=0 // pred_region
    _
  $region5: #{bottleneck_forward.7} parent=0 // pred_fallthru
    _
  // Predicated region
  $region6: #{bottleneck_forward.7} parent=0 // pred_check
    _
  $region7: #{bottleneck_forward.7} parent=0 // pred_check_branch
    %11 = sbr.rel (0) target = $region9
  $region8: #{bottleneck_forward.7} parent=0 // pred_region
    _
  $region9: #{bottleneck_forward.7} parent=0 // pred_fallthru
    _
  // Predicated region
  $region10: #{bottleneck_forward.7} parent=0 // pred_check
    _
  $region11: #{bottleneck_forward.7} parent=0 // pred_check_branch
    %13 = sbr.rel (0) target = $region13
  $region12: #{bottleneck_forward.7} parent=0 // pred_region
    _
  $region13: #{bottleneck_forward.7} parent=0 // pred_fallthru
    _
  %p15 = scmp.eq.s32.totalorder 0, 0
  // Predicated region
  $region14: #{bottleneck_forward.7} parent=0 // pred_check
    %p16 = pneg %p15
  $region15: #{bottleneck_forward.7} parent=0 // pred_check_branch
    %18 = sbr.rel (%p16) target = $region17
  $region16: #{bottleneck_forward.7} parent=0 // pred_region
    %vm19 = vcmask 523264
    %20 = vst.msk [vmem:[#allocation2] sm:$0xff] %vm19, 0.0
    %21 = vst.msk [vmem:[#allocation2 + $0x8] sm:$0xff] %vm19, 0.0
    %22 = vst.msk [vmem:[#allocation2 + $0x10] sm:$0xff] %vm19, 0.0
    %23 = vst.msk [vmem:[#allocation2 + $0x18] sm:$0xff] %vm19, 0.0
    %24 = vst.msk [vmem:[#allocation2 + $0x20] sm:$0xff] %vm19, 0.0
    %25 = vst.msk [vmem:[#allocation2 + $0x28] sm:$0xff] %vm19, 0.0
    %26 = vst.msk [vmem:[#allocation2 + $0x30] sm:$0xff] %vm19, 0.0
    %27 = vst.msk [vmem:[#allocation2 + $0x38] sm:$0xff] %vm19, 0.0
    %28 = vst.msk [vmem:[#allocation2 + $0x40] sm:$0xff] %vm19, 0.0
    %29 = vst.msk [vmem:[#allocation2 + $0x48] sm:$0xff] %vm19, 0.0
    %30 = vst.msk [vmem:[#allocation2 + $0x50] sm:$0xff] %vm19, 0.0
    %31 = vst.msk [vmem:[#allocation2 + $0x58] sm:$0xff] %vm19, 0.0
    %32 = vst.msk [vmem:[#allocation2 + $0x60] sm:$0xff] %vm19, 0.0
    %33 = vst.msk [vmem:[#allocation2 + $0x68] sm:$0xff] %vm19, 0.0
    %34 = vst.msk [vmem:[#allocation2 + $0x70] sm:$0xff] %vm19, 0.0
    %35 = vst.msk [vmem:[#allocation2 + $0x78] sm:$0xff] %vm19, 0.0
  $region17: #{bottleneck_forward.7} parent=0 // pred_fallthru
    _
  %v36 = vld [vmem:[#allocation2] sm:$0xff]
  %v37 = vld [vmem:[#allocation2 + $0x8] sm:$0xff]
  %v38 = vld [vmem:[#allocation2 + $0x10] sm:$0xff]
  %v39 = vld [vmem:[#allocation2 + $0x18] sm:$0xff]
  %v40 = vld [vmem:[#allocation2 + $0x20] sm:$0xff]
  %v41 = vld [vmem:[#allocation2 + $0x28] sm:$0xff]
  %v42 = vld [vmem:[#allocation2 + $0x30] sm:$0xff]
  %v43 = vld [vmem:[#allocation2 + $0x38] sm:$0xff]
  %v44 = vld [vmem:[#allocation2 + $0x40] sm:$0xff]
  %v45 = vld [vmem:[#allocation2 + $0x48] sm:$0xff]
  %v46 = vld [vmem:[#allocation2 + $0x50] sm:$0xff]
  %v47 = vld [vmem:[#allocation2 + $0x58] sm:$0xff]
  %v48 = vld [vmem:[#allocation2 + $0x60] sm:$0xff]
  %v49 = vld [vmem:[#allocation2 + $0x68] sm:$0xff]
  %v50 = vld [vmem:[#allocation2 + $0x70] sm:$0xff]
  %v51 = vld [vmem:[#allocation2 + $0x78] sm:$0xff]
  %v52 = vld [vmem:[%s0] sm:$0xf]
  %v53 = vld [vmem:[%s0 + $0x4] sm:$0xf]
  %v54 = vld [vmem:[%s0 + $0x8] sm:$0xf]
  %v55 = vld [vmem:[%s0 + $0xc] sm:$0xf]
  %v56 = vld [vmem:[%s0 + $0x10] sm:$0xf]
  %v57 = vld [vmem:[%s0 + $0x14] sm:$0xf]
  %v58 = vld [vmem:[%s0 + $0x18] sm:$0xf]
  %v59 = vld [vmem:[%s0 + $0x1c] sm:$0xf]
  %v60 = vld [vmem:[%s0 + $0x20] sm:$0xf]
  %v61 = vld [vmem:[%s0 + $0x24] sm:$0xf]
  %v62 = vld [vmem:[%s0 + $0x28] sm:$0xf]
  %v63 = vld [vmem:[%s0 + $0x2c] sm:$0xf]
  %v64 = vld [vmem:[%s0 + $0x30] sm:$0xf]
  %v65 = vld [vmem:[%s0 + $0x34] sm:$0xf]
  %v66 = vld [vmem:[%s0 + $0x38] sm:$0xf]
  %v67 = vld [vmem:[%s0 + $0x3c] sm:$0xf]
  %v68 = vld [vmem:[%s1] sm:$0xf]
  %v69 = vld [vmem:[%s1 + $0x4] sm:$0xf]
  %v86 = vunpack.c.l.b16 %v52
  %v87 = vunpack.c.l.b16 %v53
  %v88 = vunpack.c.l.b16 %v54
  %v89 = vunpack.c.l.b16 %v55
  %v90 = vunpack.c.l.b16 %v56
  %v91 = vunpack.c.l.b16 %v57
  %v92 = vunpack.c.l.b16 %v58
  %v93 = vunpack.c.l.b16 %v59
  %v94 = vunpack.c.l.b16 %v60
  %v95 = vunpack.c.l.b16 %v61
  %v96 = vunpack.c.l.b16 %v62
  %v97 = vunpack.c.l.b16 %v63
  %v98 = vunpack.c.l.b16 %v64
  %v99 = vunpack.c.l.b16 %v65
  %v100 = vunpack.c.l.b16 %v66
  %v101 = vunpack.c.l.b16 %v67
  %v102 = vpack.c.b16 %v87, %v86
  %v103 = vpack.c.b16 %v89, %v88
  %v104 = vpack.c.b16 %v91, %v90
  %v105 = vpack.c.b16 %v93, %v92
  %v106 = vpack.c.b16 %v95, %v94
  %v107 = vpack.c.b16 %v97, %v96
  %v108 = vpack.c.b16 %v99, %v98
  %v109 = vpack.c.b16 %v101, %v100
  %v112 = vunpack.c.l.b16 %v68
  %v113 = vunpack.c.l.b16 %v69
  %v114 = vpack.c.b16 %v113, %v112
  %vm116 = vcmask 130048
  %v118 = vsel %vm116, %v102, 0
  %v121 = vsel %vm116, %v103, 0
  %v124 = vsel %vm116, %v104, 0
  %v127 = vsel %vm116, %v105, 0
  %v130 = vsel %vm116, %v106, 0
  %v133 = vsel %vm116, %v107, 0
  %v136 = vsel %vm116, %v108, 0
  %v139 = vsel %vm116, %v109, 0
  %141 = vmatprep.subr.bf16.mxu0 0
  %142 = vmatpush1.bf16.msra.mxu0 %v114
  %143 = vmatprep.subr.bf16.mxu0 0
  %144 = vmatpush1.bf16.msra.mxu0 0
  %145 = vmatprep.subr.bf16.mxu0 0
  %146 = vmatpush1.bf16.msra.mxu0 0
  %147 = vmatprep.subr.bf16.mxu0 0
  %148 = vmatpush1.bf16.msra.mxu0 0
  %149 = vmatprep.subr.bf16.mxu0 0
  %150 = vmatpush1.bf16.msra.mxu0 0
  %151 = vmatprep.subr.bf16.mxu0 0
  %152 = vmatpush1.bf16.msra.mxu0 0
  %153 = vmatprep.subr.bf16.mxu0 0
  %154 = vmatpush1.bf16.msra.mxu0 0
  %155 = vmatprep.subr.bf16.mxu0 0
  %156 = vmatpush1.bf16.msra.mxu0 0
  %157 = vmatprep.subr.bf16.mxu0 0
  %158 = vmatpush1.bf16.msra.mxu0 0
  %159 = vmatprep.subr.bf16.mxu0 0
  %160 = vmatpush1.bf16.msra.mxu0 0
  %161 = vmatprep.subr.bf16.mxu0 0
  %162 = vmatpush1.bf16.msra.mxu0 0
  %163 = vmatprep.subr.bf16.mxu0 0
  %164 = vmatpush1.bf16.msra.mxu0 0
  %165 = vmatprep.subr.bf16.mxu0 0
  %166 = vmatpush1.bf16.msra.mxu0 0
  %167 = vmatprep.subr.bf16.mxu0 0
  %168 = vmatpush1.bf16.msra.mxu0 0
  %169 = vmatprep.subr.bf16.mxu0 0
  %170 = vmatpush1.bf16.msra.mxu0 0
  %171 = vmatprep.subr.bf16.mxu0 0
  %172 = vmatpush1.bf16.msra.mxu0 0
  %173 = vmatprep.mubr.bf16.mxu0 0
  %174 = vmatmul.mubr.bf16.gmra.mrb[0].mxu0 %v118
  %v175 = vpop.f32.mrb[0].mxu0
  %v176 = vadd.f32 0.0, %v175
  %v177 = vpop.f32.mrb[0].mxu0
  %v178 = vpop.f32.mrb[0].mxu0
  %v179 = vadd.f32 0.0, %v178
  %v180 = vpop.f32.mrb[0].mxu0
  %181 = vmatprep.mubr.bf16.mxu0 0
  %182 = vmatmul.mubr.bf16.gmra.mrb[0].mxu0 %v121
  %v183 = vpop.f32.mrb[0].mxu0
  %v184 = vadd.f32 0.0, %v183
  %v185 = vpop.f32.mrb[0].mxu0
  %v186 = vpop.f32.mrb[0].mxu0
  %v187 = vadd.f32 0.0, %v186
  %v188 = vpop.f32.mrb[0].mxu0
  %189 = vmatprep.mubr.bf16.mxu0 0
  %190 = vmatmul.mubr.bf16.gmra.mrb[0].mxu0 %v124
  %v191 = vpop.f32.mrb[0].mxu0
  %v192 = vadd.f32 0.0, %v191
  %v193 = vpop.f32.mrb[0].mxu0
  %v194 = vpop.f32.mrb[0].mxu0
  %v195 = vadd.f32 0.0, %v194
  %v196 = vpop.f32.mrb[0].mxu0
  %197 = vmatprep.mubr.bf16.mxu0 0
  %198 = vmatmul.mubr.bf16.gmra.mrb[0].mxu0 %v127
  %v199 = vpop.f32.mrb[0].mxu0
  %v200 = vadd.f32 0.0, %v199
  %v201 = vpop.f32.mrb[0].mxu0
  %v202 = vpop.f32.mrb[0].mxu0
  %v203 = vadd.f32 0.0, %v202
  %v204 = vpop.f32.mrb[0].mxu0
  %205 = vmatprep.mubr.bf16.mxu0 0
  %206 = vmatmul.mubr.bf16.gmra.mrb[0].mxu0 %v130
  %v207 = vpop.f32.mrb[0].mxu0
  %v208 = vadd.f32 0.0, %v207
  %v209 = vpop.f32.mrb[0].mxu0
  %v210 = vpop.f32.mrb[0].mxu0
  %v211 = vadd.f32 0.0, %v210
  %v212 = vpop.f32.mrb[0].mxu0
  %213 = vmatprep.mubr.bf16.mxu0 0
  %214 = vmatmul.mubr.bf16.gmra.mrb[0].mxu0 %v133
  %v215 = vpop.f32.mrb[0].mxu0
  %v216 = vadd.f32 0.0, %v215
  %v217 = vpop.f32.mrb[0].mxu0
  %v218 = vpop.f32.mrb[0].mxu0
  %v219 = vadd.f32 0.0, %v218
  %v220 = vpop.f32.mrb[0].mxu0
  %221 = vmatprep.mubr.bf16.mxu0 0
  %222 = vmatmul.mubr.bf16.gmra.mrb[0].mxu0 %v136
  %v223 = vpop.f32.mrb[0].mxu0
  %v224 = vadd.f32 0.0, %v223
  %v225 = vpop.f32.mrb[0].mxu0
  %v226 = vpop.f32.mrb[0].mxu0
  %v227 = vadd.f32 0.0, %v226
  %v228 = vpop.f32.mrb[0].mxu0
  %229 = vmatprep.mubr.bf16.mxu0 0
  %230 = vmatmul.mubr.bf16.gmra.mrb[0].mxu0 %v139
  %v231 = vpop.f32.mrb[0].mxu0
  %v232 = vadd.f32 0.0, %v231
  %v233 = vpop.f32.mrb[0].mxu0
  %v234 = vpop.f32.mrb[0].mxu0
  %v235 = vadd.f32 0.0, %v234
  %v236 = vpop.f32.mrb[0].mxu0
  %237 = vdwg.mxu0
  %v238 = vadd.f32 %v36, %v176
  %v239 = vadd.f32 %v37, %v179
  %v240 = vadd.f32 %v38, %v184
  %v241 = vadd.f32 %v39, %v187
  %v242 = vadd.f32 %v40, %v192
  %v243 = vadd.f32 %v41, %v195
  %v244 = vadd.f32 %v42, %v200
  %v245 = vadd.f32 %v43, %v203
  %v246 = vadd.f32 %v44, %v208
  %v247 = vadd.f32 %v45, %v211
  %v248 = vadd.f32 %v46, %v216
  %v249 = vadd.f32 %v47, %v219
  %v250 = vadd.f32 %v48, %v224
  %v251 = vadd.f32 %v49, %v227
  %v252 = vadd.f32 %v50, %v232
  %v253 = vadd.f32 %v51, %v235
  %vm254 = vcmask 523264
  %255 = vst.msk [vmem:[#allocation2] sm:$0xff] %vm254, %v238
  %256 = vst.msk [vmem:[#allocation2 + $0x8] sm:$0xff] %vm254, %v239
  %257 = vst.msk [vmem:[#allocation2 + $0x10] sm:$0xff] %vm254, %v240
  %258 = vst.msk [vmem:[#allocation2 + $0x18] sm:$0xff] %vm254, %v241
  %259 = vst.msk [vmem:[#allocation2 + $0x20] sm:$0xff] %vm254, %v242
  %260 = vst.msk [vmem:[#allocation2 + $0x28] sm:$0xff] %vm254, %v243
  %261 = vst.msk [vmem:[#allocation2 + $0x30] sm:$0xff] %vm254, %v244
  %262 = vst.msk [vmem:[#allocation2 + $0x38] sm:$0xff] %vm254, %v245
  %263 = vst.msk [vmem:[#allocation2 + $0x40] sm:$0xff] %vm254, %v246
  %264 = vst.msk [vmem:[#allocation2 + $0x48] sm:$0xff] %vm254, %v247
  %265 = vst.msk [vmem:[#allocation2 + $0x50] sm:$0xff] %vm254, %v248
  %266 = vst.msk [vmem:[#allocation2 + $0x58] sm:$0xff] %vm254, %v249
  %267 = vst.msk [vmem:[#allocation2 + $0x60] sm:$0xff] %vm254, %v250
  %268 = vst.msk [vmem:[#allocation2 + $0x68] sm:$0xff] %vm254, %v251
  %269 = vst.msk [vmem:[#allocation2 + $0x70] sm:$0xff] %vm254, %v252
  %270 = vst.msk [vmem:[#allocation2 + $0x78] sm:$0xff] %vm254, %v253
  // Predicated region
  $region18: #{bottleneck_forward.7} parent=0 // pred_check
    %p271 = pneg %p15
  $region19: #{bottleneck_forward.7} parent=0 // pred_check_branch
    %273 = sbr.rel (%p271) target = $region21
  $region20: #{bottleneck_forward.7} parent=0 // pred_region
    %v274 = vld [vmem:[#allocation2] sm:$0xff]
    %v275 = vld [vmem:[#allocation2 + $0x8] sm:$0xff]
    %v276 = vld [vmem:[#allocation2 + $0x10] sm:$0xff]
    %v277 = vld [vmem:[#allocation2 + $0x18] sm:$0xff]
    %v278 = vld [vmem:[#allocation2 + $0x20] sm:$0xff]
    %v279 = vld [vmem:[#allocation2 + $0x28] sm:$0xff]
    %v280 = vld [vmem:[#allocation2 + $0x30] sm:$0xff]
    %v281 = vld [vmem:[#allocation2 + $0x38] sm:$0xff]
    %v282 = vld [vmem:[#allocation2 + $0x40] sm:$0xff]
    %v283 = vld [vmem:[#allocation2 + $0x48] sm:$0xff]
    %v284 = vld [vmem:[#allocation2 + $0x50] sm:$0xff]
    %v285 = vld [vmem:[#allocation2 + $0x58] sm:$0xff]
    %v286 = vld [vmem:[#allocation2 + $0x60] sm:$0xff]
    %v287 = vld [vmem:[#allocation2 + $0x68] sm:$0xff]
    %v288 = vld [vmem:[#allocation2 + $0x70] sm:$0xff]
    %v289 = vld [vmem:[#allocation2 + $0x78] sm:$0xff]
    %v290 = vld [vmem:[%s2] sm:$0x1]
    %v292 = vlaneseq
    %v293 = vshrl.u32 %v292, 7
    %v294 = vsub.s32 0, %v293
    %v295 = vrot.slane %v290, %v294
    %v297 = vadd.f32 %v274, %v295
    %v298 = vadd.f32 %v275, %v295
    %v299 = vadd.f32 %v276, %v295
    %v300 = vadd.f32 %v277, %v295
    %v301 = vadd.f32 %v278, %v295
    %v302 = vadd.f32 %v279, %v295
    %v303 = vadd.f32 %v280, %v295
    %v304 = vadd.f32 %v281, %v295
    %v305 = vadd.f32 %v282, %v295
    %v306 = vadd.f32 %v283, %v295
    %v307 = vadd.f32 %v284, %v295
    %v308 = vadd.f32 %v285, %v295
    %v309 = vadd.f32 %v286, %v295
    %v310 = vadd.f32 %v287, %v295
    %v311 = vadd.f32 %v288, %v295
    %v312 = vadd.f32 %v289, %v295
    %v313 = vpack.c.bf16 %v298, %v297
    %v314 = vpack.c.bf16 %v300, %v299
    %v315 = vpack.c.bf16 %v302, %v301
    %v316 = vpack.c.bf16 %v304, %v303
    %v317 = vpack.c.bf16 %v306, %v305
    %v318 = vpack.c.bf16 %v308, %v307
    %v319 = vpack.c.bf16 %v310, %v309
    %v320 = vpack.c.bf16 %v312, %v311
    %v329 = vunpack.c.l.b16 %v313
    %v330 = vunpack.c.h.b16 %v313
    %v331 = vunpack.c.l.b16 %v314
    %v332 = vunpack.c.h.b16 %v314
    %v333 = vunpack.c.l.b16 %v315
    %v334 = vunpack.c.h.b16 %v315
    %v335 = vunpack.c.l.b16 %v316
    %v336 = vunpack.c.h.b16 %v316
    %v337 = vunpack.c.l.b16 %v317
    %v338 = vunpack.c.h.b16 %v317
    %v339 = vunpack.c.l.b16 %v318
    %v340 = vunpack.c.h.b16 %v318
    %v341 = vunpack.c.l.b16 %v319
    %v342 = vunpack.c.h.b16 %v319
    %v343 = vunpack.c.l.b16 %v320
    %v344 = vunpack.c.h.b16 %v320
    %v345 = vpack.c.b16 %v329, %v329
    %v346 = vpack.c.b16 %v330, %v330
    %v347 = vpack.c.b16 %v331, %v331
    %v348 = vpack.c.b16 %v332, %v332
    %v349 = vpack.c.b16 %v333, %v333
    %v350 = vpack.c.b16 %v334, %v334
    %v351 = vpack.c.b16 %v335, %v335
    %v352 = vpack.c.b16 %v336, %v336
    %v353 = vpack.c.b16 %v337, %v337
    %v354 = vpack.c.b16 %v338, %v338
    %v355 = vpack.c.b16 %v339, %v339
    %v356 = vpack.c.b16 %v340, %v340
    %v357 = vpack.c.b16 %v341, %v341
    %v358 = vpack.c.b16 %v342, %v342
    %v359 = vpack.c.b16 %v343, %v343
    %v360 = vpack.c.b16 %v344, %v344
    %vm377 = vcmask 519168
    %378 = vst.msk [vmem:[%s3] sm:$0xf] %vm377, %v345
    %379 = vst.msk [vmem:[%s3 + $0x4] sm:$0xf] %vm377, %v346
    %380 = vst.msk [vmem:[%s3 + $0x8] sm:$0xf] %vm377, %v347
    %381 = vst.msk [vmem:[%s3 + $0xc] sm:$0xf] %vm377, %v348
    %382 = vst.msk [vmem:[%s3 + $0x10] sm:$0xf] %vm377, %v349
    %383 = vst.msk [vmem:[%s3 + $0x14] sm:$0xf] %vm377, %v350
    %384 = vst.msk [vmem:[%s3 + $0x18] sm:$0xf] %vm377, %v351
    %385 = vst.msk [vmem:[%s3 + $0x1c] sm:$0xf] %vm377, %v352
    %386 = vst.msk [vmem:[%s3 + $0x20] sm:$0xf] %vm377, %v353
    %387 = vst.msk [vmem:[%s3 + $0x24] sm:$0xf] %vm377, %v354
    %388 = vst.msk [vmem:[%s3 + $0x28] sm:$0xf] %vm377, %v355
    %389 = vst.msk [vmem:[%s3 + $0x2c] sm:$0xf] %vm377, %v356
    %390 = vst.msk [vmem:[%s3 + $0x30] sm:$0xf] %vm377, %v357
    %391 = vst.msk [vmem:[%s3 + $0x34] sm:$0xf] %vm377, %v358
    %392 = vst.msk [vmem:[%s3 + $0x38] sm:$0xf] %vm377, %v359
    %393 = vst.msk [vmem:[%s3 + $0x3c] sm:$0xf] %vm377, %v360
  $region21: #{bottleneck_forward.7} parent=0 // pred_fallthru
    _
  // Predicated region
  $region22: #{bottleneck_forward.7} parent=0 // pred_check
    _
  $region23: #{bottleneck_forward.7} parent=0 // pred_check_branch
    %395 = sbr.rel (0) target = $region25
  $region24: #{bottleneck_forward.7} parent=0 // pred_region
    _
  $region25: #{bottleneck_forward.7} parent=0 // pred_fallthru
    _
  // Predicated region
  $region26: #{bottleneck_forward.7} parent=0 // pred_check
    _
  $region27: #{bottleneck_forward.7} parent=0 // pred_check_branch
    %397 = sbr.rel (0) target = $region29
  $region28: #{bottleneck_forward.7} parent=0 // pred_region
    _
  $region29: #{bottleneck_forward.7} parent=0 // pred_fallthru
    _

// kernel: bottleneck_forward.8
$region0: #{bottleneck_forward.8}
  #allocation0 [shape = 'u32[]', space=smem, size = 0x4, offset = 0x4, fixed_abs, tag = 'smem constant byte address 0x4 - core index']
  #allocation1 [shape = 'u32[144,128]{1,0:T(1,128)}', space=vmem, size = 0x12000, scoped, tag = 'internal scratch']
  #allocation2 [shape = 'f32[512,16]{1,0:T(8,128)}', space=vmem, size = 0x40000, scoped, tag = 'scratch operand']
  %s0 = inlined_call_operand.vmem [shape: bf16[512,16], index: 0, kind: input, shape index: {}]
  %s1 = inlined_call_operand.vmem [shape: bf16[16,16], index: 1, kind: input, shape index: {}]
  %s2 = inlined_call_operand.vmem [shape: f32[1,16], index: 2, kind: input, shape index: {}]
  %s3 = inlined_call_operand.vmem [shape: bf16[512,16], index: 3, kind: output, shape index: {}]
  %s4 = sld [smem:[#allocation0]]
  $region30: #{bottleneck_forward.8} parent=0
    _
  %s6 = ssub.s32 1, %s4
  %s7 = scalar_select 0, %s6, %s4
  // Predicated region
  $region2: #{bottleneck_forward.8} parent=0 // pred_check
    _
  $region3: #{bottleneck_forward.8} parent=0 // pred_check_branch
    %9 = sbr.rel (0) target = $region5
  $region4: #{bottleneck_forward.8} parent=0 // pred_region
    _
  $region5: #{bottleneck_forward.8} parent=0 // pred_fallthru
    _
  // Predicated region
  $region6: #{bottleneck_forward.8} parent=0 // pred_check
    _
  $region7: #{bottleneck_forward.8} parent=0 // pred_check_branch
    %11 = sbr.rel (0) target = $region9
  $region8: #{bottleneck_forward.8} parent=0 // pred_region
    _
  $region9: #{bottleneck_forward.8} parent=0 // pred_fallthru
    _
  // Predicated region
  $region10: #{bottleneck_forward.8} parent=0 // pred_check
    _
  $region11: #{bottleneck_forward.8} parent=0 // pred_check_branch
    %13 = sbr.rel (0) target = $region13
  $region12: #{bottleneck_forward.8} parent=0 // pred_region
    _
  $region13: #{bottleneck_forward.8} parent=0 // pred_fallthru
    _
  %p15 = scmp.eq.s32.totalorder 0, 0
  // Predicated region
  $region14: #{bottleneck_forward.8} parent=0 // pred_check
    %p16 = pneg %p15
  $region15: #{bottleneck_forward.8} parent=0 // pred_check_branch
    %18 = sbr.rel (%p16) target = $region17
  $region16: #{bottleneck_forward.8} parent=0 // pred_region
    %vm19 = vcmask 130048
    %20 = vst.msk [vmem:[#allocation2] sm:$0xff] %vm19, 0.0
    %21 = vst.msk [vmem:[#allocation2 + $0x8] sm:$0xff] %vm19, 0.0
    %22 = vst.msk [vmem:[#allocation2 + $0x10] sm:$0xff] %vm19, 0.0
    %23 = vst.msk [vmem:[#allocation2 + $0x18] sm:$0xff] %vm19, 0.0
    %24 = vst.msk [vmem:[#allocation2 + $0x20] sm:$0xff] %vm19, 0.0
    %25 = vst.msk [vmem:[#allocation2 + $0x28] sm:$0xff] %vm19, 0.0
    %26 = vst.msk [vmem:[#allocation2 + $0x30] sm:$0xff] %vm19, 0.0
    %27 = vst.msk [vmem:[#allocation2 + $0x38] sm:$0xff] %vm19, 0.0
    %28 = vst.msk [vmem:[#allocation2 + $0x40] sm:$0xff] %vm19, 0.0
    %29 = vst.msk [vmem:[#allocation2 + $0x48] sm:$0xff] %vm19, 0.0
    %30 = vst.msk [vmem:[#allocation2 + $0x50] sm:$0xff] %vm19, 0.0
    %31 = vst.msk [vmem:[#allocation2 + $0x58] sm:$0xff] %vm19, 0.0
    %32 = vst.msk [vmem:[#allocation2 + $0x60] sm:$0xff] %vm19, 0.0
    %33 = vst.msk [vmem:[#allocation2 + $0x68] sm:$0xff] %vm19, 0.0
    %34 = vst.msk [vmem:[#allocation2 + $0x70] sm:$0xff] %vm19, 0.0
    %35 = vst.msk [vmem:[#allocation2 + $0x78] sm:$0xff] %vm19, 0.0
    %36 = vst.msk [vmem:[#allocation2 + $0x80] sm:$0xff] %vm19, 0.0
    %37 = vst.msk [vmem:[#allocation2 + $0x88] sm:$0xff] %vm19, 0.0
    %38 = vst.msk [vmem:[#allocation2 + $0x90] sm:$0xff] %vm19, 0.0
    %39 = vst.msk [vmem:[#allocation2 + $0x98] sm:$0xff] %vm19, 0.0
    %40 = vst.msk [vmem:[#allocation2 + $0xa0] sm:$0xff] %vm19, 0.0
    %41 = vst.msk [vmem:[#allocation2 + $0xa8] sm:$0xff] %vm19, 0.0
    %42 = vst.msk [vmem:[#allocation2 + $0xb0] sm:$0xff] %vm19, 0.0
    %43 = vst.msk [vmem:[#allocation2 + $0xb8] sm:$0xff] %vm19, 0.0
    %44 = vst.msk [vmem:[#allocation2 + $0xc0] sm:$0xff] %vm19, 0.0
    %45 = vst.msk [vmem:[#allocation2 + $0xc8] sm:$0xff] %vm19, 0.0
    %46 = vst.msk [vmem:[#allocation2 + $0xd0] sm:$0xff] %vm19, 0.0
    %47 = vst.msk [vmem:[#allocation2 + $0xd8] sm:$0xff] %vm19, 0.0
    %48 = vst.msk [vmem:[#allocation2 + $0xe0] sm:$0xff] %vm19, 0.0
    %49 = vst.msk [vmem:[#allocation2 + $0xe8] sm:$0xff] %vm19, 0.0
    %50 = vst.msk [vmem:[#allocation2 + $0xf0] sm:$0xff] %vm19, 0.0
    %51 = vst.msk [vmem:[#allocation2 + $0xf8] sm:$0xff] %vm19, 0.0
    %52 = vst.msk [vmem:[#allocation2 + $0x100] sm:$0xff] %vm19, 0.0
    %53 = vst.msk [vmem:[#allocation2 + $0x108] sm:$0xff] %vm19, 0.0
    %54 = vst.msk [vmem:[#allocation2 + $0x110] sm:$0xff] %vm19, 0.0
    %55 = vst.msk [vmem:[#allocation2 + $0x118] sm:$0xff] %vm19, 0.0
    %56 = vst.msk [vmem:[#allocation2 + $0x120] sm:$0xff] %vm19, 0.0
    %57 = vst.msk [vmem:[#allocation2 + $0x128] sm:$0xff] %vm19, 0.0
    %58 = vst.msk [vmem:[#allocation2 + $0x130] sm:$0xff] %vm19, 0.0
    %59 = vst.msk [vmem:[#allocation2 + $0x138] sm:$0xff] %vm19, 0.0
    %60 = vst.msk [vmem:[#allocation2 + $0x140] sm:$0xff] %vm19, 0.0
    %61 = vst.msk [vmem:[#allocation2 + $0x148] sm:$0xff] %vm19, 0.0
    %62 = vst.msk [vmem:[#allocation2 + $0x150] sm:$0xff] %vm19, 0.0
    %63 = vst.msk [vmem:[#allocation2 + $0x158] sm:$0xff] %vm19, 0.0
    %64 = vst.msk [vmem:[#allocation2 + $0x160] sm:$0xff] %vm19, 0.0
    %65 = vst.msk [vmem:[#allocation2 + $0x168] sm:$0xff] %vm19, 0.0
    %66 = vst.msk [vmem:[#allocation2 + $0x170] sm:$0xff] %vm19, 0.0
    %67 = vst.msk [vmem:[#allocation2 + $0x178] sm:$0xff] %vm19, 0.0
    %68 = vst.msk [vmem:[#allocation2 + $0x180] sm:$0xff] %vm19, 0.0
    %69 = vst.msk [vmem:[#allocation2 + $0x188] sm:$0xff] %vm19, 0.0
    %70 = vst.msk [vmem:[#allocation2 + $0x190] sm:$0xff] %vm19, 0.0
    %71 = vst.msk [vmem:[#allocation2 + $0x198] sm:$0xff] %vm19, 0.0
    %72 = vst.msk [vmem:[#allocation2 + $0x1a0] sm:$0xff] %vm19, 0.0
    %73 = vst.msk [vmem:[#allocation2 + $0x1a8] sm:$0xff] %vm19, 0.0
    %74 = vst.msk [vmem:[#allocation2 + $0x1b0] sm:$0xff] %vm19, 0.0
    %75 = vst.msk [vmem:[#allocation2 + $0x1b8] sm:$0xff] %vm19, 0.0
    %76 = vst.msk [vmem:[#allocation2 + $0x1c0] sm:$0xff] %vm19, 0.0
    %77 = vst.msk [vmem:[#allocation2 + $0x1c8] sm:$0xff] %vm19, 0.0
    %78 = vst.msk [vmem:[#allocation2 + $0x1d0] sm:$0xff] %vm19, 0.0
    %79 = vst.msk [vmem:[#allocation2 + $0x1d8] sm:$0xff] %vm19, 0.0
    %80 = vst.msk [vmem:[#allocation2 + $0x1e0] sm:$0xff] %vm19, 0.0
    %81 = vst.msk [vmem:[#allocation2 + $0x1e8] sm:$0xff] %vm19, 0.0
    %82 = vst.msk [vmem:[#allocation2 + $0x1f0] sm:$0xff] %vm19, 0.0
    %83 = vst.msk [vmem:[#allocation2 + $0x1f8] sm:$0xff] %vm19, 0.0
  $region17: #{bottleneck_forward.8} parent=0 // pred_fallthru
    _
  %v84 = vld [vmem:[#allocation2] sm:$0xff]
  %v85 = vld [vmem:[#allocation2 + $0x8] sm:$0xff]
  %v86 = vld [vmem:[#allocation2 + $0x10] sm:$0xff]
  %v87 = vld [vmem:[#allocation2 + $0x18] sm:$0xff]
  %v88 = vld [vmem:[#allocation2 + $0x20] sm:$0xff]
  %v89 = vld [vmem:[#allocation2 + $0x28] sm:$0xff]
  %v90 = vld [vmem:[#allocation2 + $0x30] sm:$0xff]
  %v91 = vld [vmem:[#allocation2 + $0x38] sm:$0xff]
  %v92 = vld [vmem:[#allocation2 + $0x40] sm:$0xff]
  %v93 = vld [vmem:[#allocation2 + $0x48] sm:$0xff]
  %v94 = vld [vmem:[#allocation2 + $0x50] sm:$0xff]
  %v95 = vld [vmem:[#allocation2 + $0x58] sm:$0xff]
  %v96 = vld [vmem:[#allocation2 + $0x60] sm:$0xff]
  %v97 = vld [vmem:[#allocation2 + $0x68] sm:$0xff]
  %v98 = vld [vmem:[#allocation2 + $0x70] sm:$0xff]
  %v99 = vld [vmem:[#allocation2 + $0x78] sm:$0xff]
  %v100 = vld [vmem:[#allocation2 + $0x80] sm:$0xff]
  %v101 = vld [vmem:[#allocation2 + $0x88] sm:$0xff]
  %v102 = vld [vmem:[#allocation2 + $0x90] sm:$0xff]
  %v103 = vld [vmem:[#allocation2 + $0x98] sm:$0xff]
  %v104 = vld [vmem:[#allocation2 + $0xa0] sm:$0xff]
  %v105 = vld [vmem:[#allocation2 + $0xa8] sm:$0xff]
  %v106 = vld [vmem:[#allocation2 + $0xb0] sm:$0xff]
  %v107 = vld [vmem:[#allocation2 + $0xb8] sm:$0xff]
  %v108 = vld [vmem:[#allocation2 + $0xc0] sm:$0xff]
  %v109 = vld [vmem:[#allocation2 + $0xc8] sm:$0xff]
  %v110 = vld [vmem:[#allocation2 + $0xd0] sm:$0xff]
  %v111 = vld [vmem:[#allocation2 + $0xd8] sm:$0xff]
  %v112 = vld [vmem:[#allocation2 + $0xe0] sm:$0xff]
  %v113 = vld [vmem:[#allocation2 + $0xe8] sm:$0xff]
  %v114 = vld [vmem:[#allocation2 + $0xf0] sm:$0xff]
  %v115 = vld [vmem:[#allocation2 + $0xf8] sm:$0xff]
  %v116 = vld [vmem:[#allocation2 + $0x100] sm:$0xff]
  %v117 = vld [vmem:[#allocation2 + $0x108] sm:$0xff]
  %v118 = vld [vmem:[#allocation2 + $0x110] sm:$0xff]
  %v119 = vld [vmem:[#allocation2 + $0x118] sm:$0xff]
  %v120 = vld [vmem:[#allocation2 + $0x120] sm:$0xff]
  %v121 = vld [vmem:[#allocation2 + $0x128] sm:$0xff]
  %v122 = vld [vmem:[#allocation2 + $0x130] sm:$0xff]
  %v123 = vld [vmem:[#allocation2 + $0x138] sm:$0xff]
  %v124 = vld [vmem:[#allocation2 + $0x140] sm:$0xff]
  %v125 = vld [vmem:[#allocation2 + $0x148] sm:$0xff]
  %v126 = vld [vmem:[#allocation2 + $0x150] sm:$0xff]
  %v127 = vld [vmem:[#allocation2 + $0x158] sm:$0xff]
  %v128 = vld [vmem:[#allocation2 + $0x160] sm:$0xff]
  %v129 = vld [vmem:[#allocation2 + $0x168] sm:$0xff]
  %v130 = vld [vmem:[#allocation2 + $0x170] sm:$0xff]
  %v131 = vld [vmem:[#allocation2 + $0x178] sm:$0xff]
  %v132 = vld [vmem:[#allocation2 + $0x180] sm:$0xff]
  %v133 = vld [vmem:[#allocation2 + $0x188] sm:$0xff]
  %v134 = vld [vmem:[#allocation2 + $0x190] sm:$0xff]
  %v135 = vld [vmem:[#allocation2 + $0x198] sm:$0xff]
  %v136 = vld [vmem:[#allocation2 + $0x1a0] sm:$0xff]
  %v137 = vld [vmem:[#allocation2 + $0x1a8] sm:$0xff]
  %v138 = vld [vmem:[#allocation2 + $0x1b0] sm:$0xff]
  %v139 = vld [vmem:[#allocation2 + $0x1b8] sm:$0xff]
  %v140 = vld [vmem:[#allocation2 + $0x1c0] sm:$0xff]
  %v141 = vld [vmem:[#allocation2 + $0x1c8] sm:$0xff]
  %v142 = vld [vmem:[#allocation2 + $0x1d0] sm:$0xff]
  %v143 = vld [vmem:[#allocation2 + $0x1d8] sm:$0xff]
  %v144 = vld [vmem:[#allocation2 + $0x1e0] sm:$0xff]
  %v145 = vld [vmem:[#allocation2 + $0x1e8] sm:$0xff]
  %v146 = vld [vmem:[#allocation2 + $0x1f0] sm:$0xff]
  %v147 = vld [vmem:[#allocation2 + $0x1f8] sm:$0xff]
  %v148 = vld [vmem:[%s0] sm:$0xf]
  %v149 = vld [vmem:[%s0 + $0x4] sm:$0xf]
  %v150 = vld [vmem:[%s0 + $0x8] sm:$0xf]
  %v151 = vld [vmem:[%s0 + $0xc] sm:$0xf]
  %v152 = vld [vmem:[%s0 + $0x10] sm:$0xf]
  %v153 = vld [vmem:[%s0 + $0x14] sm:$0xf]
  %v154 = vld [vmem:[%s0 + $0x18] sm:$0xf]
  %v155 = vld [vmem:[%s0 + $0x1c] sm:$0xf]
  %v156 = vld [vmem:[%s0 + $0x20] sm:$0xf]
  %v157 = vld [vmem:[%s0 + $0x24] sm:$0xf]
  %v158 = vld [vmem:[%s0 + $0x28] sm:$0xf]
  %v159 = vld [vmem:[%s0 + $0x2c] sm:$0xf]
  %v160 = vld [vmem:[%s0 + $0x30] sm:$0xf]
  %v161 = vld [vmem:[%s0 + $0x34] sm:$0xf]
  %v162 = vld [vmem:[%s0 + $0x38] sm:$0xf]
  %v163 = vld [vmem:[%s0 + $0x3c] sm:$0xf]
  %v164 = vld [vmem:[%s0 + $0x40] sm:$0xf]
  %v165 = vld [vmem:[%s0 + $0x44] sm:$0xf]
  %v166 = vld [vmem:[%s0 + $0x48] sm:$0xf]
  %v167 = vld [vmem:[%s0 + $0x4c] sm:$0xf]
  %v168 = vld [vmem:[%s0 + $0x50] sm:$0xf]
  %v169 = vld [vmem:[%s0 + $0x54] sm:$0xf]
  %v170 = vld [vmem:[%s0 + $0x58] sm:$0xf]
  %v171 = vld [vmem:[%s0 + $0x5c] sm:$0xf]
  %v172 = vld [vmem:[%s0 + $0x60] sm:$0xf]
  %v173 = vld [vmem:[%s0 + $0x64] sm:$0xf]
  %v174 = vld [vmem:[%s0 + $0x68] sm:$0xf]
  %v175 = vld [vmem:[%s0 + $0x6c] sm:$0xf]
  %v176 = vld [vmem:[%s0 + $0x70] sm:$0xf]
  %v177 = vld [vmem:[%s0 + $0x74] sm:$0xf]
  %v178 = vld [vmem:[%s0 + $0x78] sm:$0xf]
  %v179 = vld [vmem:[%s0 + $0x7c] sm:$0xf]
  %v180 = vld [vmem:[%s0 + $0x80] sm:$0xf]
  %v181 = vld [vmem:[%s0 + $0x84] sm:$0xf]
  %v182 = vld [vmem:[%s0 + $0x88] sm:$0xf]
  %v183 = vld [vmem:[%s0 + $0x8c] sm:$0xf]
  %v184 = vld [vmem:[%s0 + $0x90] sm:$0xf]
  %v185 = vld [vmem:[%s0 + $0x94] sm:$0xf]
  %v186 = vld [vmem:[%s0 + $0x98] sm:$0xf]
  %v187 = vld [vmem:[%s0 + $0x9c] sm:$0xf]
  %v188 = vld [vmem:[%s0 + $0xa0] sm:$0xf]
  %v189 = vld [vmem:[%s0 + $0xa4] sm:$0xf]
  %v190 = vld [vmem:[%s0 + $0xa8] sm:$0xf]
  %v191 = vld [vmem:[%s0 + $0xac] sm:$0xf]
  %v192 = vld [vmem:[%s0 + $0xb0] sm:$0xf]
  %v193 = vld [vmem:[%s0 + $0xb4] sm:$0xf]
  %v194 = vld [vmem:[%s0 + $0xb8] sm:$0xf]
  %v195 = vld [vmem:[%s0 + $0xbc] sm:$0xf]
  %v196 = vld [vmem:[%s0 + $0xc0] sm:$0xf]
  %v197 = vld [vmem:[%s0 + $0xc4] sm:$0xf]
  %v198 = vld [vmem:[%s0 + $0xc8] sm:$0xf]
  %v199 = vld [vmem:[%s0 + $0xcc] sm:$0xf]
  %v200 = vld [vmem:[%s0 + $0xd0] sm:$0xf]
  %v201 = vld [vmem:[%s0 + $0xd4] sm:$0xf]
  %v202 = vld [vmem:[%s0 + $0xd8] sm:$0xf]
  %v203 = vld [vmem:[%s0 + $0xdc] sm:$0xf]
  %v204 = vld [vmem:[%s0 + $0xe0] sm:$0xf]
  %v205 = vld [vmem:[%s0 + $0xe4] sm:$0xf]
  %v206 = vld [vmem:[%s0 + $0xe8] sm:$0xf]
  %v207 = vld [vmem:[%s0 + $0xec] sm:$0xf]
  %v208 = vld [vmem:[%s0 + $0xf0] sm:$0xf]
  %v209 = vld [vmem:[%s0 + $0xf4] sm:$0xf]
  %v210 = vld [vmem:[%s0 + $0xf8] sm:$0xf]
  %v211 = vld [vmem:[%s0 + $0xfc] sm:$0xf]
  %v212 = vld [vmem:[%s1] sm:$0xf]
  %v213 = vld [vmem:[%s1 + $0x4] sm:$0xf]
  %v278 = vunpack.c.l.b16 %v148
  %v279 = vunpack.c.l.b16 %v149
  %v280 = vunpack.c.l.b16 %v150
  %v281 = vunpack.c.l.b16 %v151
  %v282 = vunpack.c.l.b16 %v152
  %v283 = vunpack.c.l.b16 %v153
  %v284 = vunpack.c.l.b16 %v154
  %v285 = vunpack.c.l.b16 %v155
  %v286 = vunpack.c.l.b16 %v156
  %v287 = vunpack.c.l.b16 %v157
  %v288 = vunpack.c.l.b16 %v158
  %v289 = vunpack.c.l.b16 %v159
  %v290 = vunpack.c.l.b16 %v160
  %v291 = vunpack.c.l.b16 %v161
  %v292 = vunpack.c.l.b16 %v162
  %v293 = vunpack.c.l.b16 %v163
  %v294 = vunpack.c.l.b16 %v164
  %v295 = vunpack.c.l.b16 %v165
  %v296 = vunpack.c.l.b16 %v166
  %v297 = vunpack.c.l.b16 %v167
  %v298 = vunpack.c.l.b16 %v168
  %v299 = vunpack.c.l.b16 %v169
  %v300 = vunpack.c.l.b16 %v170
  %v301 = vunpack.c.l.b16 %v171
  %v302 = vunpack.c.l.b16 %v172
  %v303 = vunpack.c.l.b16 %v173
  %v304 = vunpack.c.l.b16 %v174
  %v305 = vunpack.c.l.b16 %v175
  %v306 = vunpack.c.l.b16 %v176
  %v307 = vunpack.c.l.b16 %v177
  %v308 = vunpack.c.l.b16 %v178
  %v309 = vunpack.c.l.b16 %v179
  %v310 = vunpack.c.l.b16 %v180
  %v311 = vunpack.c.l.b16 %v181
  %v312 = vunpack.c.l.b16 %v182
  %v313 = vunpack.c.l.b16 %v183
  %v314 = vunpack.c.l.b16 %v184
  %v315 = vunpack.c.l.b16 %v185
  %v316 = vunpack.c.l.b16 %v186
  %v317 = vunpack.c.l.b16 %v187
  %v318 = vunpack.c.l.b16 %v188
  %v319 = vunpack.c.l.b16 %v189
  %v320 = vunpack.c.l.b16 %v190
  %v321 = vunpack.c.l.b16 %v191
  %v322 = vunpack.c.l.b16 %v192
  %v323 = vunpack.c.l.b16 %v193
  %v324 = vunpack.c.l.b16 %v194
  %v325 = vunpack.c.l.b16 %v195
  %v326 = vunpack.c.l.b16 %v196
  %v327 = vunpack.c.l.b16 %v197
  %v328 = vunpack.c.l.b16 %v198
  %v329 = vunpack.c.l.b16 %v199
  %v330 = vunpack.c.l.b16 %v200
  %v331 = vunpack.c.l.b16 %v201
  %v332 = vunpack.c.l.b16 %v202
  %v333 = vunpack.c.l.b16 %v203
  %v334 = vunpack.c.l.b16 %v204
  %v335 = vunpack.c.l.b16 %v205
  %v336 = vunpack.c.l.b16 %v206
  %v337 = vunpack.c.l.b16 %v207
  %v338 = vunpack.c.l.b16 %v208
  %v339 = vunpack.c.l.b16 %v209
  %v340 = vunpack.c.l.b16 %v210
  %v341 = vunpack.c.l.b16 %v211
  %v342 = vpack.c.b16 %v279, %v278
  %v343 = vpack.c.b16 %v281, %v280
  %v344 = vpack.c.b16 %v283, %v282
  %v345 = vpack.c.b16 %v285, %v284
  %v346 = vpack.c.b16 %v287, %v286
  %v347 = vpack.c.b16 %v289, %v288
  %v348 = vpack.c.b16 %v291, %v290
  %v349 = vpack.c.b16 %v293, %v292
  %v350 = vpack.c.b16 %v295, %v294
  %v351 = vpack.c.b16 %v297, %v296
  %v352 = vpack.c.b16 %v299, %v298
  %v353 = vpack.c.b16 %v301, %v300
  %v354 = vpack.c.b16 %v303, %v302
  %v355 = vpack.c.b16 %v305, %v304
  %v356 = vpack.c.b16 %v307, %v306
  %v357 = vpack.c.b16 %v309, %v308
  %v358 = vpack.c.b16 %v311, %v310
  %v359 = vpack.c.b16 %v313, %v312
  %v360 = vpack.c.b16 %v315, %v314
  %v361 = vpack.c.b16 %v317, %v316
  %v362 = vpack.c.b16 %v319, %v318
  %v363 = vpack.c.b16 %v321, %v320
  %v364 = vpack.c.b16 %v323, %v322
  %v365 = vpack.c.b16 %v325, %v324
  %v366 = vpack.c.b16 %v327, %v326
  %v367 = vpack.c.b16 %v329, %v328
  %v368 = vpack.c.b16 %v331, %v330
  %v369 = vpack.c.b16 %v333, %v332
  %v370 = vpack.c.b16 %v335, %v334
  %v371 = vpack.c.b16 %v337, %v336
  %v372 = vpack.c.b16 %v339, %v338
  %v373 = vpack.c.b16 %v341, %v340
  %v376 = vunpack.c.l.b16 %v212
  %v377 = vunpack.c.l.b16 %v213
  %v378 = vpack.c.b16 %v377, %v376
  %vm380 = vcmask 130048
  %v382 = vsel %vm380, %v342, 0
  %v385 = vsel %vm380, %v343, 0
  %v388 = vsel %vm380, %v344, 0
  %v391 = vsel %vm380, %v345, 0
  %v394 = vsel %vm380, %v346, 0
  %v397 = vsel %vm380, %v347, 0
  %v400 = vsel %vm380, %v348, 0
  %v403 = vsel %vm380, %v349, 0
  %v406 = vsel %vm380, %v350, 0
  %v409 = vsel %vm380, %v351, 0
  %v412 = vsel %vm380, %v352, 0
  %v415 = vsel %vm380, %v353, 0
  %v418 = vsel %vm380, %v354, 0
  %v421 = vsel %vm380, %v355, 0
  %v424 = vsel %vm380, %v356, 0
  %v427 = vsel %vm380, %v357, 0
  %v430 = vsel %vm380, %v358, 0
  %v433 = vsel %vm380, %v359, 0
  %v436 = vsel %vm380, %v360, 0
  %v439 = vsel %vm380, %v361, 0
  %v442 = vsel %vm380, %v362, 0
  %v445 = vsel %vm380, %v363, 0
  %v448 = vsel %vm380, %v364, 0
  %v451 = vsel %vm380, %v365, 0
  %v454 = vsel %vm380, %v366, 0
  %v457 = vsel %vm380, %v367, 0
  %v460 = vsel %vm380, %v368, 0
  %v463 = vsel %vm380, %v369, 0
  %v466 = vsel %vm380, %v370, 0
  %v469 = vsel %vm380, %v371, 0
  %v472 = vsel %vm380, %v372, 0
  %v475 = vsel %vm380, %v373, 0
  %477 = vmatprep.subr.bf16.mxu0 0
  %478 = vmatpush1.bf16.msra.mxu0 %v378
  %479 = vmatprep.subr.bf16.mxu0 0
  %480 = vmatpush1.bf16.msra.mxu0 0
  %481 = vmatprep.subr.bf16.mxu0 0
  %482 = vmatpush1.bf16.msra.mxu0 0
  %483 = vmatprep.subr.bf16.mxu0 0
  %484 = vmatpush1.bf16.msra.mxu0 0
  %485 = vmatprep.subr.bf16.mxu0 0
  %486 = vmatpush1.bf16.msra.mxu0 0
  %487 = vmatprep.subr.bf16.mxu0 0
  %488 = vmatpush1.bf16.msra.mxu0 0
  %489 = vmatprep.subr.bf16.mxu0 0
  %490 = vmatpush1.bf16.msra.mxu0 0
  %491 = vmatprep.subr.bf16.mxu0 0
  %492 = vmatpush1.bf16.msra.mxu0 0
  %493 = vmatprep.subr.bf16.mxu0 0
  %494 = vmatpush1.bf16.msra.mxu0 0
  %495 = vmatprep.subr.bf16.mxu0 0
  %496 = vmatpush1.bf16.msra.mxu0 0
  %497 = vmatprep.subr.bf16.mxu0 0
  %498 = vmatpush1.bf16.msra.mxu0 0
  %499 = vmatprep.subr.bf16.mxu0 0
  %500 = vmatpush1.bf16.msra.mxu0 0
  %501 = vmatprep.subr.bf16.mxu0 0
  %502 = vmatpush1.bf16.msra.mxu0 0
  %503 = vmatprep.subr.bf16.mxu0 0
  %504 = vmatpush1.bf16.msra.mxu0 0
  %505 = vmatprep.subr.bf16.mxu0 0
  %506 = vmatpush1.bf16.msra.mxu0 0
  %507 = vmatprep.subr.bf16.mxu0 0
  %508 = vmatpush1.bf16.msra.mxu0 0
  %509 = vmatprep.mubr.bf16.mxu0 0
  %510 = vmatmul.mubr.bf16.gmra.mrb[0].mxu0 %v382
  %v511 = vpop.f32.mrb[0].mxu0
  %v512 = vadd.f32 0.0, %v511
  %v513 = vpop.f32.mrb[0].mxu0
  %v514 = vpop.f32.mrb[0].mxu0
  %v515 = vadd.f32 0.0, %v514
  %v516 = vpop.f32.mrb[0].mxu0
  %517 = vmatprep.mubr.bf16.mxu0 0
  %518 = vmatmul.mubr.bf16.gmra.mrb[0].mxu0 %v385
  %v519 = vpop.f32.mrb[0].mxu0
  %v520 = vadd.f32 0.0, %v519
  %v521 = vpop.f32.mrb[0].mxu0
  %v522 = vpop.f32.mrb[0].mxu0
  %v523 = vadd.f32 0.0, %v522
  %v524 = vpop.f32.mrb[0].mxu0
  %525 = vmatprep.mubr.bf16.mxu0 0
  %526 = vmatmul.mubr.bf16.gmra.mrb[0].mxu0 %v388
  %v527 = vpop.f32.mrb[0].mxu0
  %v528 = vadd.f32 0.0, %v527
  %v529 = vpop.f32.mrb[0].mxu0
  %v530 = vpop.f32.mrb[0].mxu0
  %v531 = vadd.f32 0.0, %v530
  %v532 = vpop.f32.mrb[0].mxu0
  %533 = vmatprep.mubr.bf16.mxu0 0
  %534 = vmatmul.mubr.bf16.gmra.mrb[0].mxu0 %v391
  %v535 = vpop.f32.mrb[0].mxu0
  %v536 = vadd.f32 0.0, %v535
  %v537 = vpop.f32.mrb[0].mxu0
  %v538 = vpop.f32.mrb[0].mxu0
  %v539 = vadd.f32 0.0, %v538
  %v540 = vpop.f32.mrb[0].mxu0
  %541 = vmatprep.mubr.bf16.mxu0 0
  %542 = vmatmul.mubr.bf16.gmra.mrb[0].mxu0 %v394
  %v543 = vpop.f32.mrb[0].mxu0
  %v544 = vadd.f32 0.0, %v543
  %v545 = vpop.f32.mrb[0].mxu0
  %v546 = vpop.f32.mrb[0].mxu0
  %v547 = vadd.f32 0.0, %v546
  %v548 = vpop.f32.mrb[0].mxu0
  %549 = vmatprep.mubr.bf16.mxu0 0
  %550 = vmatmul.mubr.bf16.gmra.mrb[0].mxu0 %v397
  %v551 = vpop.f32.mrb[0].mxu0
  %v552 = vadd.f32 0.0, %v551
  %v553 = vpop.f32.mrb[0].mxu0
  %v554 = vpop.f32.mrb[0].mxu0
  %v555 = vadd.f32 0.0, %v554
  %v556 = vpop.f32.mrb[0].mxu0
  %557 = vmatprep.mubr.bf16.mxu0 0
  %558 = vmatmul.mubr.bf16.gmra.mrb[0].mxu0 %v400
  %v559 = vpop.f32.mrb[0].mxu0
  %v560 = vadd.f32 0.0, %v559
  %v561 = vpop.f32.mrb[0].mxu0
  %v562 = vpop.f32.mrb[0].mxu0
  %v563 = vadd.f32 0.0, %v562
  %v564 = vpop.f32.mrb[0].mxu0
  %565 = vmatprep.mubr.bf16.mxu0 0
  %566 = vmatmul.mubr.bf16.gmra.mrb[0].mxu0 %v403
  %v567 = vpop.f32.mrb[0].mxu0
  %v568 = vadd.f32 0.0, %v567
  %v569 = vpop.f32.mrb[0].mxu0
  %v570 = vpop.f32.mrb[0].mxu0
  %v571 = vadd.f32 0.0, %v570
  %v572 = vpop.f32.mrb[0].mxu0
  %573 = vmatprep.mubr.bf16.mxu0 0
  %574 = vmatmul.mubr.bf16.gmra.mrb[0].mxu0 %v406
  %v575 = vpop.f32.mrb[0].mxu0
  %v576 = vadd.f32 0.0, %v575
  %v577 = vpop.f32.mrb[0].mxu0
  %v578 = vpop.f32.mrb[0].mxu0
  %v579 = vadd.f32 0.0, %v578
  %v580 = vpop.f32.mrb[0].mxu0
  %581 = vmatprep.mubr.bf16.mxu0 0
  %582 = vmatmul.mubr.bf16.gmra.mrb[0].mxu0 %v409
  %v583 = vpop.f32.mrb[0].mxu0
  %v584 = vadd.f32 0.0, %v583
  %v585 = vpop.f32.mrb[0].mxu0
  %v586 = vpop.f32.mrb[0].mxu0
  %v587 = vadd.f32 0.0, %v586
  %v588 = vpop.f32.mrb[0].mxu0
  %589 = vmatprep.mubr.bf16.mxu0 0
  %590 = vmatmul.mubr.bf16.gmra.mrb[0].mxu0 %v412
  %v591 = vpop.f32.mrb[0].mxu0
  %v592 = vadd.f32 0.0, %v591
  %v593 = vpop.f32.mrb[0].mxu0
  %v594 = vpop.f32.mrb[0].mxu0
  %v595 = vadd.f32 0.0, %v594
  %v596 = vpop.f32.mrb[0].mxu0
  %597 = vmatprep.mubr.bf16.mxu0 0
  %598 = vmatmul.mubr.bf16.gmra.mrb[0].mxu0 %v415
  %v599 = vpop.f32.mrb[0].mxu0
  %v600 = vadd.f32 0.0, %v599
  %v601 = vpop.f32.mrb[0].mxu0
  %v602 = vpop.f32.mrb[0].mxu0
  %v603 = vadd.f32 0.0, %v602
  %v604 = vpop.f32.mrb[0].mxu0
  %605 = vmatprep.mubr.bf16.mxu0 0
  %606 = vmatmul.mubr.bf16.gmra.mrb[0].mxu0 %v418
  %v607 = vpop.f32.mrb[0].mxu0
  %v608 = vadd.f32 0.0, %v607
  %v609 = vpop.f32.mrb[0].mxu0
  %v610 = vpop.f32.mrb[0].mxu0
  %v611 = vadd.f32 0.0, %v610
  %v612 = vpop.f32.mrb[0].mxu0
  %613 = vmatprep.mubr.bf16.mxu0 0
  %614 = vmatmul.mubr.bf16.gmra.mrb[0].mxu0 %v421
  %v615 = vpop.f32.mrb[0].mxu0
  %v616 = vadd.f32 0.0, %v615
  %v617 = vpop.f32.mrb[0].mxu0
  %v618 = vpop.f32.mrb[0].mxu0
  %v619 = vadd.f32 0.0, %v618
  %v620 = vpop.f32.mrb[0].mxu0
  %621 = vmatprep.mubr.bf16.mxu0 0
  %622 = vmatmul.mubr.bf16.gmra.mrb[0].mxu0 %v424
  %v623 = vpop.f32.mrb[0].mxu0
  %v624 = vadd.f32 0.0, %v623
  %v625 = vpop.f32.mrb[0].mxu0
  %v626 = vpop.f32.mrb[0].mxu0
  %v627 = vadd.f32 0.0, %v626
  %v628 = vpop.f32.mrb[0].mxu0
  %629 = vmatprep.mubr.bf16.mxu0 0
  %630 = vmatmul.mubr.bf16.gmra.mrb[0].mxu0 %v427
  %v631 = vpop.f32.mrb[0].mxu0
  %v632 = vadd.f32 0.0, %v631
  %v633 = vpop.f32.mrb[0].mxu0
  %v634 = vpop.f32.mrb[0].mxu0
  %v635 = vadd.f32 0.0, %v634
  %v636 = vpop.f32.mrb[0].mxu0
  %637 = vmatprep.mubr.bf16.mxu0 0
  %638 = vmatmul.mubr.bf16.gmra.mrb[0].mxu0 %v430
  %v639 = vpop.f32.mrb[0].mxu0
  %v640 = vadd.f32 0.0, %v639
  %v641 = vpop.f32.mrb[0].mxu0
  %v642 = vpop.f32.mrb[0].mxu0
  %v643 = vadd.f32 0.0, %v642
  %v644 = vpop.f32.mrb[0].mxu0
  %645 = vmatprep.mubr.bf16.mxu0 0
  %646 = vmatmul.mubr.bf16.gmra.mrb[0].mxu0 %v433
  %v647 = vpop.f32.mrb[0].mxu0
  %v648 = vadd.f32 0.0, %v647
  %v649 = vpop.f32.mrb[0].mxu0
  %v650 = vpop.f32.mrb[0].mxu0
  %v651 = vadd.f32 0.0, %v650
  %v652 = vpop.f32.mrb[0].mxu0
  %653 = vmatprep.mubr.bf16.mxu0 0
  %654 = vmatmul.mubr.bf16.gmra.mrb[0].mxu0 %v436
  %v655 = vpop.f32.mrb[0].mxu0
  %v656 = vadd.f32 0.0, %v655
  %v657 = vpop.f32.mrb[0].mxu0
  %v658 = vpop.f32.mrb[0].mxu0
  %v659 = vadd.f32 0.0, %v658
  %v660 = vpop.f32.mrb[0].mxu0
  %661 = vmatprep.mubr.bf16.mxu0 0
  %662 = vmatmul.mubr.bf16.gmra.mrb[0].mxu0 %v439
  %v663 = vpop.f32.mrb[0].mxu0
  %v664 = vadd.f32 0.0, %v663
  %v665 = vpop.f32.mrb[0].mxu0
  %v666 = vpop.f32.mrb[0].mxu0
  %v667 = vadd.f32 0.0, %v666
  %v668 = vpop.f32.mrb[0].mxu0
  %669 = vmatprep.mubr.bf16.mxu0 0
  %670 = vmatmul.mubr.bf16.gmra.mrb[0].mxu0 %v442
  %v671 = vpop.f32.mrb[0].mxu0
  %v672 = vadd.f32 0.0, %v671
  %v673 = vpop.f32.mrb[0].mxu0
  %v674 = vpop.f32.mrb[0].mxu0
  %v675 = vadd.f32 0.0, %v674
  %v676 = vpop.f32.mrb[0].mxu0
  %677 = vmatprep.mubr.bf16.mxu0 0
  %678 = vmatmul.mubr.bf16.gmra.mrb[0].mxu0 %v445
  %v679 = vpop.f32.mrb[0].mxu0
  %v680 = vadd.f32 0.0, %v679
  %v681 = vpop.f32.mrb[0].mxu0
  %v682 = vpop.f32.mrb[0].mxu0
  %v683 = vadd.f32 0.0, %v682
  %v684 = vpop.f32.mrb[0].mxu0
  %685 = vmatprep.mubr.bf16.mxu0 0
  %686 = vmatmul.mubr.bf16.gmra.mrb[0].mxu0 %v448
  %v687 = vpop.f32.mrb[0].mxu0
  %v688 = vadd.f32 0.0, %v687
  %v689 = vpop.f32.mrb[0].mxu0
  %v690 = vpop.f32.mrb[0].mxu0
  %v691 = vadd.f32 0.0, %v690
  %v692 = vpop.f32.mrb[0].mxu0
  %693 = vmatprep.mubr.bf16.mxu0 0
  %694 = vmatmul.mubr.bf16.gmra.mrb[0].mxu0 %v451
  %v695 = vpop.f32.mrb[0].mxu0
  %v696 = vadd.f32 0.0, %v695
  %v697 = vpop.f32.mrb[0].mxu0
  %v698 = vpop.f32.mrb[0].mxu0
  %v699 = vadd.f32 0.0, %v698
  %v700 = vpop.f32.mrb[0].mxu0
  %701 = vmatprep.mubr.bf16.mxu0 0
  %702 = vmatmul.mubr.bf16.gmra.mrb[0].mxu0 %v454
  %v703 = vpop.f32.mrb[0].mxu0
  %v704 = vadd.f32 0.0, %v703
  %v705 = vpop.f32.mrb[0].mxu0
  %v706 = vpop.f32.mrb[0].mxu0
  %v707 = vadd.f32 0.0, %v706
  %v708 = vpop.f32.mrb[0].mxu0
  %709 = vmatprep.mubr.bf16.mxu0 0
  %710 = vmatmul.mubr.bf16.gmra.mrb[0].mxu0 %v457
  %v711 = vpop.f32.mrb[0].mxu0
  %v712 = vadd.f32 0.0, %v711
  %v713 = vpop.f32.mrb[0].mxu0
  %v714 = vpop.f32.mrb[0].mxu0
  %v715 = vadd.f32 0.0, %v714
  %v716 = vpop.f32.mrb[0].mxu0
  %717 = vmatprep.mubr.bf16.mxu0 0
  %718 = vmatmul.mubr.bf16.gmra.mrb[0].mxu0 %v460
  %v719 = vpop.f32.mrb[0].mxu0
  %v720 = vadd.f32 0.0, %v719
  %v721 = vpop.f32.mrb[0].mxu0
  %v722 = vpop.f32.mrb[0].mxu0
  %v723 = vadd.f32 0.0, %v722
  %v724 = vpop.f32.mrb[0].mxu0
  %725 = vmatprep.mubr.bf16.mxu0 0
  %726 = vmatmul.mubr.bf16.gmra.mrb[0].mxu0 %v463
  %v727 = vpop.f32.mrb[0].mxu0
  %v728 = vadd.f32 0.0, %v727
  %v729 = vpop.f32.mrb[0].mxu0
  %v730 = vpop.f32.mrb[0].mxu0
  %v731 = vadd.f32 0.0, %v730
  %v732 = vpop.f32.mrb[0].mxu0
  %733 = vmatprep.mubr.bf16.mxu0 0
  %734 = vmatmul.mubr.bf16.gmra.mrb[0].mxu0 %v466
  %v735 = vpop.f32.mrb[0].mxu0
  %v736 = vadd.f32 0.0, %v735
  %v737 = vpop.f32.mrb[0].mxu0
  %v738 = vpop.f32.mrb[0].mxu0
  %v739 = vadd.f32 0.0, %v738
  %v740 = vpop.f32.mrb[0].mxu0
  %741 = vmatprep.mubr.bf16.mxu0 0
  %742 = vmatmul.mubr.bf16.gmra.mrb[0].mxu0 %v469
  %v743 = vpop.f32.mrb[0].mxu0
  %v744 = vadd.f32 0.0, %v743
  %v745 = vpop.f32.mrb[0].mxu0
  %v746 = vpop.f32.mrb[0].mxu0
  %v747 = vadd.f32 0.0, %v746
  %v748 = vpop.f32.mrb[0].mxu0
  %749 = vmatprep.mubr.bf16.mxu0 0
  %750 = vmatmul.mubr.bf16.gmra.mrb[0].mxu0 %v472
  %v751 = vpop.f32.mrb[0].mxu0
  %v752 = vadd.f32 0.0, %v751
  %v753 = vpop.f32.mrb[0].mxu0
  %v754 = vpop.f32.mrb[0].mxu0
  %v755 = vadd.f32 0.0, %v754
  %v756 = vpop.f32.mrb[0].mxu0
  %757 = vmatprep.mubr.bf16.mxu0 0
  %758 = vmatmul.mubr.bf16.gmra.mrb[0].mxu0 %v475
  %v759 = vpop.f32.mrb[0].mxu0
  %v760 = vadd.f32 0.0, %v759
  %v761 = vpop.f32.mrb[0].mxu0
  %v762 = vpop.f32.mrb[0].mxu0
  %v763 = vadd.f32 0.0, %v762
  %v764 = vpop.f32.mrb[0].mxu0
  %765 = vdwg.mxu0
  %v766 = vadd.f32 %v84, %v512
  %v767 = vadd.f32 %v85, %v515
  %v768 = vadd.f32 %v86, %v520
  %v769 = vadd.f32 %v87, %v523
  %v770 = vadd.f32 %v88, %v528
  %v771 = vadd.f32 %v89, %v531
  %v772 = vadd.f32 %v90, %v536
  %v773 = vadd.f32 %v91, %v539
  %v774 = vadd.f32 %v92, %v544
  %v775 = vadd.f32 %v93, %v547
  %v776 = vadd.f32 %v94, %v552
  %v777 = vadd.f32 %v95, %v555
  %v778 = vadd.f32 %v96, %v560
  %v779 = vadd.f32 %v97, %v563
  %v780 = vadd.f32 %v98, %v568
  %v781 = vadd.f32 %v99, %v571
  %v782 = vadd.f32 %v100, %v576
  %v783 = vadd.f32 %v101, %v579
  %v784 = vadd.f32 %v102, %v584
  %v785 = vadd.f32 %v103, %v587
  %v786 = vadd.f32 %v104, %v592
  %v787 = vadd.f32 %v105, %v595
  %v788 = vadd.f32 %v106, %v600
  %v789 = vadd.f32 %v107, %v603
  %v790 = vadd.f32 %v108, %v608
  %v791 = vadd.f32 %v109, %v611
  %v792 = vadd.f32 %v110, %v616
  %v793 = vadd.f32 %v111, %v619
  %v794 = vadd.f32 %v112, %v624
  %v795 = vadd.f32 %v113, %v627
  %v796 = vadd.f32 %v114, %v632
  %v797 = vadd.f32 %v115, %v635
  %v798 = vadd.f32 %v116, %v640
  %v799 = vadd.f32 %v117, %v643
  %v800 = vadd.f32 %v118, %v648
  %v801 = vadd.f32 %v119, %v651
  %v802 = vadd.f32 %v120, %v656
  %v803 = vadd.f32 %v121, %v659
  %v804 = vadd.f32 %v122, %v664
  %v805 = vadd.f32 %v123, %v667
  %v806 = vadd.f32 %v124, %v672
  %v807 = vadd.f32 %v125, %v675
  %v808 = vadd.f32 %v126, %v680
  %v809 = vadd.f32 %v127, %v683
  %v810 = vadd.f32 %v128, %v688
  %v811 = vadd.f32 %v129, %v691
  %v812 = vadd.f32 %v130, %v696
  %v813 = vadd.f32 %v131, %v699
  %v814 = vadd.f32 %v132, %v704
  %v815 = vadd.f32 %v133, %v707
  %v816 = vadd.f32 %v134, %v712
  %v817 = vadd.f32 %v135, %v715
  %v818 = vadd.f32 %v136, %v720
  %v819 = vadd.f32 %v137, %v723
  %v820 = vadd.f32 %v138, %v728
  %v821 = vadd.f32 %v139, %v731
  %v822 = vadd.f32 %v140, %v736
  %v823 = vadd.f32 %v141, %v739
  %v824 = vadd.f32 %v142, %v744
  %v825 = vadd.f32 %v143, %v747
  %v826 = vadd.f32 %v144, %v752
  %v827 = vadd.f32 %v145, %v755
  %v828 = vadd.f32 %v146, %v760
  %v829 = vadd.f32 %v147, %v763
  %830 = vst.msk [vmem:[#allocation2] sm:$0xff] %vm380, %v766
  %831 = vst.msk [vmem:[#allocation2 + $0x8] sm:$0xff] %vm380, %v767
  %832 = vst.msk [vmem:[#allocation2 + $0x10] sm:$0xff] %vm380, %v768
  %833 = vst.msk [vmem:[#allocation2 + $0x18] sm:$0xff] %vm380, %v769
  %834 = vst.msk [vmem:[#allocation2 + $0x20] sm:$0xff] %vm380, %v770
  %835 = vst.msk [vmem:[#allocation2 + $0x28] sm:$0xff] %vm380, %v771
  %836 = vst.msk [vmem:[#allocation2 + $0x30] sm:$0xff] %vm380, %v772
  %837 = vst.msk [vmem:[#allocation2 + $0x38] sm:$0xff] %vm380, %v773
  %838 = vst.msk [vmem:[#allocation2 + $0x40] sm:$0xff] %vm380, %v774
  %839 = vst.msk [vmem:[#allocation2 + $0x48] sm:$0xff] %vm380, %v775
  %840 = vst.msk [vmem:[#allocation2 + $0x50] sm:$0xff] %vm380, %v776
  %841 = vst.msk [vmem:[#allocation2 + $0x58] sm:$0xff] %vm380, %v777
  %842 = vst.msk [vmem:[#allocation2 + $0x60] sm:$0xff] %vm380, %v778
  %843 = vst.msk [vmem:[#allocation2 + $0x68] sm:$0xff] %vm380, %v779
  %844 = vst.msk [vmem:[#allocation2 + $0x70] sm:$0xff] %vm380, %v780
  %845 = vst.msk [vmem:[#allocation2 + $0x78] sm:$0xff] %vm380, %v781
  %846 = vst.msk [vmem:[#allocation2 + $0x80] sm:$0xff] %vm380, %v782
  %847 = vst.msk [vmem:[#allocation2 + $0x88] sm:$0xff] %vm380, %v783
  %848 = vst.msk [vmem:[#allocation2 + $0x90] sm:$0xff] %vm380, %v784
  %849 = vst.msk [vmem:[#allocation2 + $0x98] sm:$0xff] %vm380, %v785
  %850 = vst.msk [vmem:[#allocation2 + $0xa0] sm:$0xff] %vm380, %v786
  %851 = vst.msk [vmem:[#allocation2 + $0xa8] sm:$0xff] %vm380, %v787
  %852 = vst.msk [vmem:[#allocation2 + $0xb0] sm:$0xff] %vm380, %v788
  %853 = vst.msk [vmem:[#allocation2 + $0xb8] sm:$0xff] %vm380, %v789
  %854 = vst.msk [vmem:[#allocation2 + $0xc0] sm:$0xff] %vm380, %v790
  %855 = vst.msk [vmem:[#allocation2 + $0xc8] sm:$0xff] %vm380, %v791
  %856 = vst.msk [vmem:[#allocation2 + $0xd0] sm:$0xff] %vm380, %v792
  %857 = vst.msk [vmem:[#allocation2 + $0xd8] sm:$0xff] %vm380, %v793
  %858 = vst.msk [vmem:[#allocation2 + $0xe0] sm:$0xff] %vm380, %v794
  %859 = vst.msk [vmem:[#allocation2 + $0xe8] sm:$0xff] %vm380, %v795
  %860 = vst.msk [vmem:[#allocation2 + $0xf0] sm:$0xff] %vm380, %v796
  %861 = vst.msk [vmem:[#allocation2 + $0xf8] sm:$0xff] %vm380, %v797
  %862 = vst.msk [vmem:[#allocation2 + $0x100] sm:$0xff] %vm380, %v798
  %863 = vst.msk [vmem:[#allocation2 + $0x108] sm:$0xff] %vm380, %v799
  %864 = vst.msk [vmem:[#allocation2 + $0x110] sm:$0xff] %vm380, %v800
  %865 = vst.msk [vmem:[#allocation2 + $0x118] sm:$0xff] %vm380, %v801
  %866 = vst.msk [vmem:[#allocation2 + $0x120] sm:$0xff] %vm380, %v802
  %867 = vst.msk [vmem:[#allocation2 + $0x128] sm:$0xff] %vm380, %v803
  %868 = vst.msk [vmem:[#allocation2 + $0x130] sm:$0xff] %vm380, %v804
  %869 = vst.msk [vmem:[#allocation2 + $0x138] sm:$0xff] %vm380, %v805
  %870 = vst.msk [vmem:[#allocation2 + $0x140] sm:$0xff] %vm380, %v806
  %871 = vst.msk [vmem:[#allocation2 + $0x148] sm:$0xff] %vm380, %v807
  %872 = vst.msk [vmem:[#allocation2 + $0x150] sm:$0xff] %vm380, %v808
  %873 = vst.msk [vmem:[#allocation2 + $0x158] sm:$0xff] %vm380, %v809
  %874 = vst.msk [vmem:[#allocation2 + $0x160] sm:$0xff] %vm380, %v810
  %875 = vst.msk [vmem:[#allocation2 + $0x168] sm:$0xff] %vm380, %v811
  %876 = vst.msk [vmem:[#allocation2 + $0x170] sm:$0xff] %vm380, %v812
  %877 = vst.msk [vmem:[#allocation2 + $0x178] sm:$0xff] %vm380, %v813
  %878 = vst.msk [vmem:[#allocation2 + $0x180] sm:$0xff] %vm380, %v814
  %879 = vst.msk [vmem:[#allocation2 + $0x188] sm:$0xff] %vm380, %v815
  %880 = vst.msk [vmem:[#allocation2 + $0x190] sm:$0xff] %vm380, %v816
  %881 = vst.msk [vmem:[#allocation2 + $0x198] sm:$0xff] %vm380, %v817
  %882 = vst.msk [vmem:[#allocation2 + $0x1a0] sm:$0xff] %vm380, %v818
  %883 = vst.msk [vmem:[#allocation2 + $0x1a8] sm:$0xff] %vm380, %v819
  %884 = vst.msk [vmem:[#allocation2 + $0x1b0] sm:$0xff] %vm380, %v820
  %885 = vst.msk [vmem:[#allocation2 + $0x1b8] sm:$0xff] %vm380, %v821
  %886 = vst.msk [vmem:[#allocation2 + $0x1c0] sm:$0xff] %vm380, %v822
  %887 = vst.msk [vmem:[#allocation2 + $0x1c8] sm:$0xff] %vm380, %v823
  %888 = vst.msk [vmem:[#allocation2 + $0x1d0] sm:$0xff] %vm380, %v824
  %889 = vst.msk [vmem:[#allocation2 + $0x1d8] sm:$0xff] %vm380, %v825
  %890 = vst.msk [vmem:[#allocation2 + $0x1e0] sm:$0xff] %vm380, %v826
  %891 = vst.msk [vmem:[#allocation2 + $0x1e8] sm:$0xff] %vm380, %v827
  %892 = vst.msk [vmem:[#allocation2 + $0x1f0] sm:$0xff] %vm380, %v828
  %893 = vst.msk [vmem:[#allocation2 + $0x1f8] sm:$0xff] %vm380, %v829
  // Predicated region
  $region18: #{bottleneck_forward.8} parent=0 // pred_check
    %p894 = pneg %p15
  $region19: #{bottleneck_forward.8} parent=0 // pred_check_branch
    %896 = sbr.rel (%p894) target = $region21
  $region20: #{bottleneck_forward.8} parent=0 // pred_region
    %v897 = vld [vmem:[#allocation2] sm:$0xff]
    %v898 = vld [vmem:[#allocation2 + $0x8] sm:$0xff]
    %v899 = vld [vmem:[#allocation2 + $0x10] sm:$0xff]
    %v900 = vld [vmem:[#allocation2 + $0x18] sm:$0xff]
    %v901 = vld [vmem:[#allocation2 + $0x20] sm:$0xff]
    %v902 = vld [vmem:[#allocation2 + $0x28] sm:$0xff]
    %v903 = vld [vmem:[#allocation2 + $0x30] sm:$0xff]
    %v904 = vld [vmem:[#allocation2 + $0x38] sm:$0xff]
    %v905 = vld [vmem:[#allocation2 + $0x40] sm:$0xff]
    %v906 = vld [vmem:[#allocation2 + $0x48] sm:$0xff]
    %v907 = vld [vmem:[#allocation2 + $0x50] sm:$0xff]
    %v908 = vld [vmem:[#allocation2 + $0x58] sm:$0xff]
    %v909 = vld [vmem:[#allocation2 + $0x60] sm:$0xff]
    %v910 = vld [vmem:[#allocation2 + $0x68] sm:$0xff]
    %v911 = vld [vmem:[#allocation2 + $0x70] sm:$0xff]
    %v912 = vld [vmem:[#allocation2 + $0x78] sm:$0xff]
    %v913 = vld [vmem:[#allocation2 + $0x80] sm:$0xff]
    %v914 = vld [vmem:[#allocation2 + $0x88] sm:$0xff]
    %v915 = vld [vmem:[#allocation2 + $0x90] sm:$0xff]
    %v916 = vld [vmem:[#allocation2 + $0x98] sm:$0xff]
    %v917 = vld [vmem:[#allocation2 + $0xa0] sm:$0xff]
    %v918 = vld [vmem:[#allocation2 + $0xa8] sm:$0xff]
    %v919 = vld [vmem:[#allocation2 + $0xb0] sm:$0xff]
    %v920 = vld [vmem:[#allocation2 + $0xb8] sm:$0xff]
    %v921 = vld [vmem:[#allocation2 + $0xc0] sm:$0xff]
    %v922 = vld [vmem:[#allocation2 + $0xc8] sm:$0xff]
    %v923 = vld [vmem:[#allocation2 + $0xd0] sm:$0xff]
    %v924 = vld [vmem:[#allocation2 + $0xd8] sm:$0xff]
    %v925 = vld [vmem:[#allocation2 + $0xe0] sm:$0xff]
    %v926 = vld [vmem:[#allocation2 + $0xe8] sm:$0xff]
    %v927 = vld [vmem:[#allocation2 + $0xf0] sm:$0xff]
    %v928 = vld [vmem:[#allocation2 + $0xf8] sm:$0xff]
    %v929 = vld [vmem:[#allocation2 + $0x100] sm:$0xff]
    %v930 = vld [vmem:[#allocation2 + $0x108] sm:$0xff]
    %v931 = vld [vmem:[#allocation2 + $0x110] sm:$0xff]
    %v932 = vld [vmem:[#allocation2 + $0x118] sm:$0xff]
    %v933 = vld [vmem:[#allocation2 + $0x120] sm:$0xff]
    %v934 = vld [vmem:[#allocation2 + $0x128] sm:$0xff]
    %v935 = vld [vmem:[#allocation2 + $0x130] sm:$0xff]
    %v936 = vld [vmem:[#allocation2 + $0x138] sm:$0xff]
    %v937 = vld [vmem:[#allocation2 + $0x140] sm:$0xff]
    %v938 = vld [vmem:[#allocation2 + $0x148] sm:$0xff]
    %v939 = vld [vmem:[#allocation2 + $0x150] sm:$0xff]
    %v940 = vld [vmem:[#allocation2 + $0x158] sm:$0xff]
    %v941 = vld [vmem:[#allocation2 + $0x160] sm:$0xff]
    %v942 = vld [vmem:[#allocation2 + $0x168] sm:$0xff]
    %v943 = vld [vmem:[#allocation2 + $0x170] sm:$0xff]
    %v944 = vld [vmem:[#allocation2 + $0x178] sm:$0xff]
    %v945 = vld [vmem:[#allocation2 + $0x180] sm:$0xff]
    %v946 = vld [vmem:[#allocation2 + $0x188] sm:$0xff]
    %v947 = vld [vmem:[#allocation2 + $0x190] sm:$0xff]
    %v948 = vld [vmem:[#allocation2 + $0x198] sm:$0xff]
    %v949 = vld [vmem:[#allocation2 + $0x1a0] sm:$0xff]
    %v950 = vld [vmem:[#allocation2 + $0x1a8] sm:$0xff]
    %v951 = vld [vmem:[#allocation2 + $0x1b0] sm:$0xff]
    %v952 = vld [vmem:[#allocation2 + $0x1b8] sm:$0xff]
    %v953 = vld [vmem:[#allocation2 + $0x1c0] sm:$0xff]
    %v954 = vld [vmem:[#allocation2 + $0x1c8] sm:$0xff]
    %v955 = vld [vmem:[#allocation2 + $0x1d0] sm:$0xff]
    %v956 = vld [vmem:[#allocation2 + $0x1d8] sm:$0xff]
    %v957 = vld [vmem:[#allocation2 + $0x1e0] sm:$0xff]
    %v958 = vld [vmem:[#allocation2 + $0x1e8] sm:$0xff]
    %v959 = vld [vmem:[#allocation2 + $0x1f0] sm:$0xff]
    %v960 = vld [vmem:[#allocation2 + $0x1f8] sm:$0xff]
    %v961 = vld [vmem:[%s2] sm:$0x1]
    %v963 = vlaneseq
    %v964 = vshrl.u32 %v963, 7
    %v965 = vsub.s32 0, %v964
    %v966 = vrot.slane %v961, %v965
    %v968 = vadd.f32 %v897, %v966
    %v969 = vadd.f32 %v898, %v966
    %v970 = vadd.f32 %v899, %v966
    %v971 = vadd.f32 %v900, %v966
    %v972 = vadd.f32 %v901, %v966
    %v973 = vadd.f32 %v902, %v966
    %v974 = vadd.f32 %v903, %v966
    %v975 = vadd.f32 %v904, %v966
    %v976 = vadd.f32 %v905, %v966
    %v977 = vadd.f32 %v906, %v966
    %v978 = vadd.f32 %v907, %v966
    %v979 = vadd.f32 %v908, %v966
    %v980 = vadd.f32 %v909, %v966
    %v981 = vadd.f32 %v910, %v966
    %v982 = vadd.f32 %v911, %v966
    %v983 = vadd.f32 %v912, %v966
    %v984 = vadd.f32 %v913, %v966
    %v985 = vadd.f32 %v914, %v966
    %v986 = vadd.f32 %v915, %v966
    %v987 = vadd.f32 %v916, %v966
    %v988 = vadd.f32 %v917, %v966
    %v989 = vadd.f32 %v918, %v966
    %v990 = vadd.f32 %v919, %v966
    %v991 = vadd.f32 %v920, %v966
    %v992 = vadd.f32 %v921, %v966
    %v993 = vadd.f32 %v922, %v966
    %v994 = vadd.f32 %v923, %v966
    %v995 = vadd.f32 %v924, %v966
    %v996 = vadd.f32 %v925, %v966
    %v997 = vadd.f32 %v926, %v966
    %v998 = vadd.f32 %v927, %v966
    %v999 = vadd.f32 %v928, %v966
    %v1000 = vadd.f32 %v929, %v966
    %v1001 = vadd.f32 %v930, %v966
    %v1002 = vadd.f32 %v931, %v966
    %v1003 = vadd.f32 %v932, %v966
    %v1004 = vadd.f32 %v933, %v966
    %v1005 = vadd.f32 %v934, %v966
    %v1006 = vadd.f32 %v935, %v966
    %v1007 = vadd.f32 %v936, %v966
    %v1008 = vadd.f32 %v937, %v966
    %v1009 = vadd.f32 %v938, %v966
    %v1010 = vadd.f32 %v939, %v966
    %v1011 = vadd.f32 %v940, %v966
    %v1012 = vadd.f32 %v941, %v966
    %v1013 = vadd.f32 %v942, %v966
    %v1014 = vadd.f32 %v943, %v966
    %v1015 = vadd.f32 %v944, %v966
    %v1016 = vadd.f32 %v945, %v966
    %v1017 = vadd.f32 %v946, %v966
    %v1018 = vadd.f32 %v947, %v966
    %v1019 = vadd.f32 %v948, %v966
    %v1020 = vadd.f32 %v949, %v966
    %v1021 = vadd.f32 %v950, %v966
    %v1022 = vadd.f32 %v951, %v966
    %v1023 = vadd.f32 %v952, %v966
    %v1024 = vadd.f32 %v953, %v966
    %v1025 = vadd.f32 %v954, %v966
    %v1026 = vadd.f32 %v955, %v966
    %v1027 = vadd.f32 %v956, %v966
    %v1028 = vadd.f32 %v957, %v966
    %v1029 = vadd.f32 %v958, %v966
    %v1030 = vadd.f32 %v959, %v966
    %v1031 = vadd.f32 %v960, %v966
    %v1032 = vmax.f32 %v968, 0.0
    %v1033 = vmax.f32 %v969, 0.0
    %v1034 = vmax.f32 %v970, 0.0
    %v1035 = vmax.f32 %v971, 0.0
    %v1036 = vmax.f32 %v972, 0.0
    %v1037 = vmax.f32 %v973, 0.0
    %v1038 = vmax.f32 %v974, 0.0
    %v1039 = vmax.f32 %v975, 0.0
    %v1040 = vmax.f32 %v976, 0.0
    %v1041 = vmax.f32 %v977, 0.0
    %v1042 = vmax.f32 %v978, 0.0
    %v1043 = vmax.f32 %v979, 0.0
    %v1044 = vmax.f32 %v980, 0.0
    %v1045 = vmax.f32 %v981, 0.0
    %v1046 = vmax.f32 %v982, 0.0
    %v1047 = vmax.f32 %v983, 0.0
    %v1048 = vmax.f32 %v984, 0.0
    %v1049 = vmax.f32 %v985, 0.0
    %v1050 = vmax.f32 %v986, 0.0
    %v1051 = vmax.f32 %v987, 0.0
    %v1052 = vmax.f32 %v988, 0.0
    %v1053 = vmax.f32 %v989, 0.0
    %v1054 = vmax.f32 %v990, 0.0
    %v1055 = vmax.f32 %v991, 0.0
    %v1056 = vmax.f32 %v992, 0.0
    %v1057 = vmax.f32 %v993, 0.0
    %v1058 = vmax.f32 %v994, 0.0
    %v1059 = vmax.f32 %v995, 0.0
    %v1060 = vmax.f32 %v996, 0.0
    %v1061 = vmax.f32 %v997, 0.0
    %v1062 = vmax.f32 %v998, 0.0
    %v1063 = vmax.f32 %v999, 0.0
    %v1064 = vmax.f32 %v1000, 0.0
    %v1065 = vmax.f32 %v1001, 0.0
    %v1066 = vmax.f32 %v1002, 0.0
    %v1067 = vmax.f32 %v1003, 0.0
    %v1068 = vmax.f32 %v1004, 0.0
    %v1069 = vmax.f32 %v1005, 0.0
    %v1070 = vmax.f32 %v1006, 0.0
    %v1071 = vmax.f32 %v1007, 0.0
    %v1072 = vmax.f32 %v1008, 0.0
    %v1073 = vmax.f32 %v1009, 0.0
    %v1074 = vmax.f32 %v1010, 0.0
    %v1075 = vmax.f32 %v1011, 0.0
    %v1076 = vmax.f32 %v1012, 0.0
    %v1077 = vmax.f32 %v1013, 0.0
    %v1078 = vmax.f32 %v1014, 0.0
    %v1079 = vmax.f32 %v1015, 0.0
    %v1080 = vmax.f32 %v1016, 0.0
    %v1081 = vmax.f32 %v1017, 0.0
    %v1082 = vmax.f32 %v1018, 0.0
    %v1083 = vmax.f32 %v1019, 0.0
    %v1084 = vmax.f32 %v1020, 0.0
    %v1085 = vmax.f32 %v1021, 0.0
    %v1086 = vmax.f32 %v1022, 0.0
    %v1087 = vmax.f32 %v1023, 0.0
    %v1088 = vmax.f32 %v1024, 0.0
    %v1089 = vmax.f32 %v1025, 0.0
    %v1090 = vmax.f32 %v1026, 0.0
    %v1091 = vmax.f32 %v1027, 0.0
    %v1092 = vmax.f32 %v1028, 0.0
    %v1093 = vmax.f32 %v1029, 0.0
    %v1094 = vmax.f32 %v1030, 0.0
    %v1095 = vmax.f32 %v1031, 0.0
    %v1096 = vpack.c.bf16 %v1033, %v1032
    %v1097 = vpack.c.bf16 %v1035, %v1034
    %v1098 = vpack.c.bf16 %v1037, %v1036
    %v1099 = vpack.c.bf16 %v1039, %v1038
    %v1100 = vpack.c.bf16 %v1041, %v1040
    %v1101 = vpack.c.bf16 %v1043, %v1042
    %v1102 = vpack.c.bf16 %v1045, %v1044
    %v1103 = vpack.c.bf16 %v1047, %v1046
    %v1104 = vpack.c.bf16 %v1049, %v1048
    %v1105 = vpack.c.bf16 %v1051, %v1050
    %v1106 = vpack.c.bf16 %v1053, %v1052
    %v1107 = vpack.c.bf16 %v1055, %v1054
    %v1108 = vpack.c.bf16 %v1057, %v1056
    %v1109 = vpack.c.bf16 %v1059, %v1058
    %v1110 = vpack.c.bf16 %v1061, %v1060
    %v1111 = vpack.c.bf16 %v1063, %v1062
    %v1112 = vpack.c.bf16 %v1065, %v1064
    %v1113 = vpack.c.bf16 %v1067, %v1066
    %v1114 = vpack.c.bf16 %v1069, %v1068
    %v1115 = vpack.c.bf16 %v1071, %v1070
    %v1116 = vpack.c.bf16 %v1073, %v1072
    %v1117 = vpack.c.bf16 %v1075, %v1074
    %v1118 = vpack.c.bf16 %v1077, %v1076
    %v1119 = vpack.c.bf16 %v1079, %v1078
    %v1120 = vpack.c.bf16 %v1081, %v1080
    %v1121 = vpack.c.bf16 %v1083, %v1082
    %v1122 = vpack.c.bf16 %v1085, %v1084
    %v1123 = vpack.c.bf16 %v1087, %v1086
    %v1124 = vpack.c.bf16 %v1089, %v1088
    %v1125 = vpack.c.bf16 %v1091, %v1090
    %v1126 = vpack.c.bf16 %v1093, %v1092
    %v1127 = vpack.c.bf16 %v1095, %v1094
    %v1160 = vunpack.c.l.b16 %v1096
    %v1161 = vunpack.c.h.b16 %v1096
    %v1162 = vunpack.c.l.b16 %v1097
    %v1163 = vunpack.c.h.b16 %v1097
    %v1164 = vunpack.c.l.b16 %v1098
    %v1165 = vunpack.c.h.b16 %v1098
    %v1166 = vunpack.c.l.b16 %v1099
    %v1167 = vunpack.c.h.b16 %v1099
    %v1168 = vunpack.c.l.b16 %v1100
    %v1169 = vunpack.c.h.b16 %v1100
    %v1170 = vunpack.c.l.b16 %v1101
    %v1171 = vunpack.c.h.b16 %v1101
    %v1172 = vunpack.c.l.b16 %v1102
    %v1173 = vunpack.c.h.b16 %v1102
    %v1174 = vunpack.c.l.b16 %v1103
    %v1175 = vunpack.c.h.b16 %v1103
    %v1176 = vunpack.c.l.b16 %v1104
    %v1177 = vunpack.c.h.b16 %v1104
    %v1178 = vunpack.c.l.b16 %v1105
    %v1179 = vunpack.c.h.b16 %v1105
    %v1180 = vunpack.c.l.b16 %v1106
    %v1181 = vunpack.c.h.b16 %v1106
    %v1182 = vunpack.c.l.b16 %v1107
    %v1183 = vunpack.c.h.b16 %v1107
    %v1184 = vunpack.c.l.b16 %v1108
    %v1185 = vunpack.c.h.b16 %v1108
    %v1186 = vunpack.c.l.b16 %v1109
    %v1187 = vunpack.c.h.b16 %v1109
    %v1188 = vunpack.c.l.b16 %v1110
    %v1189 = vunpack.c.h.b16 %v1110
    %v1190 = vunpack.c.l.b16 %v1111
    %v1191 = vunpack.c.h.b16 %v1111
    %v1192 = vunpack.c.l.b16 %v1112
    %v1193 = vunpack.c.h.b16 %v1112
    %v1194 = vunpack.c.l.b16 %v1113
    %v1195 = vunpack.c.h.b16 %v1113
    %v1196 = vunpack.c.l.b16 %v1114
    %v1197 = vunpack.c.h.b16 %v1114
    %v1198 = vunpack.c.l.b16 %v1115
    %v1199 = vunpack.c.h.b16 %v1115
    %v1200 = vunpack.c.l.b16 %v1116
    %v1201 = vunpack.c.h.b16 %v1116
    %v1202 = vunpack.c.l.b16 %v1117
    %v1203 = vunpack.c.h.b16 %v1117
    %v1204 = vunpack.c.l.b16 %v1118
    %v1205 = vunpack.c.h.b16 %v1118
    %v1206 = vunpack.c.l.b16 %v1119
    %v1207 = vunpack.c.h.b16 %v1119
    %v1208 = vunpack.c.l.b16 %v1120
    %v1209 = vunpack.c.h.b16 %v1120
    %v1210 = vunpack.c.l.b16 %v1121
    %v1211 = vunpack.c.h.b16 %v1121
    %v1212 = vunpack.c.l.b16 %v1122
    %v1213 = vunpack.c.h.b16 %v1122
    %v1214 = vunpack.c.l.b16 %v1123
    %v1215 = vunpack.c.h.b16 %v1123
    %v1216 = vunpack.c.l.b16 %v1124
    %v1217 = vunpack.c.h.b16 %v1124
    %v1218 = vunpack.c.l.b16 %v1125
    %v1219 = vunpack.c.h.b16 %v1125
    %v1220 = vunpack.c.l.b16 %v1126
    %v1221 = vunpack.c.h.b16 %v1126
    %v1222 = vunpack.c.l.b16 %v1127
    %v1223 = vunpack.c.h.b16 %v1127
    %v1224 = vpack.c.b16 %v1160, %v1160
    %v1225 = vpack.c.b16 %v1161, %v1161
    %v1226 = vpack.c.b16 %v1162, %v1162
    %v1227 = vpack.c.b16 %v1163, %v1163
    %v1228 = vpack.c.b16 %v1164, %v1164
    %v1229 = vpack.c.b16 %v1165, %v1165
    %v1230 = vpack.c.b16 %v1166, %v1166
    %v1231 = vpack.c.b16 %v1167, %v1167
    %v1232 = vpack.c.b16 %v1168, %v1168
    %v1233 = vpack.c.b16 %v1169, %v1169
    %v1234 = vpack.c.b16 %v1170, %v1170
    %v1235 = vpack.c.b16 %v1171, %v1171
    %v1236 = vpack.c.b16 %v1172, %v1172
    %v1237 = vpack.c.b16 %v1173, %v1173
    %v1238 = vpack.c.b16 %v1174, %v1174
    %v1239 = vpack.c.b16 %v1175, %v1175
    %v1240 = vpack.c.b16 %v1176, %v1176
    %v1241 = vpack.c.b16 %v1177, %v1177
    %v1242 = vpack.c.b16 %v1178, %v1178
    %v1243 = vpack.c.b16 %v1179, %v1179
    %v1244 = vpack.c.b16 %v1180, %v1180
    %v1245 = vpack.c.b16 %v1181, %v1181
    %v1246 = vpack.c.b16 %v1182, %v1182
    %v1247 = vpack.c.b16 %v1183, %v1183
    %v1248 = vpack.c.b16 %v1184, %v1184
    %v1249 = vpack.c.b16 %v1185, %v1185
    %v1250 = vpack.c.b16 %v1186, %v1186
    %v1251 = vpack.c.b16 %v1187, %v1187
    %v1252 = vpack.c.b16 %v1188, %v1188
    %v1253 = vpack.c.b16 %v1189, %v1189
    %v1254 = vpack.c.b16 %v1190, %v1190
    %v1255 = vpack.c.b16 %v1191, %v1191
    %v1256 = vpack.c.b16 %v1192, %v1192
    %v1257 = vpack.c.b16 %v1193, %v1193
    %v1258 = vpack.c.b16 %v1194, %v1194
    %v1259 = vpack.c.b16 %v1195, %v1195
    %v1260 = vpack.c.b16 %v1196, %v1196
    %v1261 = vpack.c.b16 %v1197, %v1197
    %v1262 = vpack.c.b16 %v1198, %v1198
    %v1263 = vpack.c.b16 %v1199, %v1199
    %v1264 = vpack.c.b16 %v1200, %v1200
    %v1265 = vpack.c.b16 %v1201, %v1201
    %v1266 = vpack.c.b16 %v1202, %v1202
    %v1267 = vpack.c.b16 %v1203, %v1203
    %v1268 = vpack.c.b16 %v1204, %v1204
    %v1269 = vpack.c.b16 %v1205, %v1205
    %v1270 = vpack.c.b16 %v1206, %v1206
    %v1271 = vpack.c.b16 %v1207, %v1207
    %v1272 = vpack.c.b16 %v1208, %v1208
    %v1273 = vpack.c.b16 %v1209, %v1209
    %v1274 = vpack.c.b16 %v1210, %v1210
    %v1275 = vpack.c.b16 %v1211, %v1211
    %v1276 = vpack.c.b16 %v1212, %v1212
    %v1277 = vpack.c.b16 %v1213, %v1213
    %v1278 = vpack.c.b16 %v1214, %v1214
    %v1279 = vpack.c.b16 %v1215, %v1215
    %v1280 = vpack.c.b16 %v1216, %v1216
    %v1281 = vpack.c.b16 %v1217, %v1217
    %v1282 = vpack.c.b16 %v1218, %v1218
    %v1283 = vpack.c.b16 %v1219, %v1219
    %v1284 = vpack.c.b16 %v1220, %v1220
    %v1285 = vpack.c.b16 %v1221, %v1221
    %v1286 = vpack.c.b16 %v1222, %v1222
    %v1287 = vpack.c.b16 %v1223, %v1223
    %vm1352 = vcmask 125952
    %1353 = vst.msk [vmem:[%s3] sm:$0xf] %vm1352, %v1224
    %1354 = vst.msk [vmem:[%s3 + $0x4] sm:$0xf] %vm1352, %v1225
    %1355 = vst.msk [vmem:[%s3 + $0x8] sm:$0xf] %vm1352, %v1226
    %1356 = vst.msk [vmem:[%s3 + $0xc] sm:$0xf] %vm1352, %v1227
    %1357 = vst.msk [vmem:[%s3 + $0x10] sm:$0xf] %vm1352, %v1228
    %1358 = vst.msk [vmem:[%s3 + $0x14] sm:$0xf] %vm1352, %v1229
    %1359 = vst.msk [vmem:[%s3 + $0x18] sm:$0xf] %vm1352, %v1230
    %1360 = vst.msk [vmem:[%s3 + $0x1c] sm:$0xf] %vm1352, %v1231
    %1361 = vst.msk [vmem:[%s3 + $0x20] sm:$0xf] %vm1352, %v1232
    %1362 = vst.msk [vmem:[%s3 + $0x24] sm:$0xf] %vm1352, %v1233
    %1363 = vst.msk [vmem:[%s3 + $0x28] sm:$0xf] %vm1352, %v1234
    %1364 = vst.msk [vmem:[%s3 + $0x2c] sm:$0xf] %vm1352, %v1235
    %1365 = vst.msk [vmem:[%s3 + $0x30] sm:$0xf] %vm1352, %v1236
    %1366 = vst.msk [vmem:[%s3 + $0x34] sm:$0xf] %vm1352, %v1237
    %1367 = vst.msk [vmem:[%s3 + $0x38] sm:$0xf] %vm1352, %v1238
    %1368 = vst.msk [vmem:[%s3 + $0x3c] sm:$0xf] %vm1352, %v1239
    %1369 = vst.msk [vmem:[%s3 + $0x40] sm:$0xf] %vm1352, %v1240
    %1370 = vst.msk [vmem:[%s3 + $0x44] sm:$0xf] %vm1352, %v1241
    %1371 = vst.msk [vmem:[%s3 + $0x48] sm:$0xf] %vm1352, %v1242
    %1372 = vst.msk [vmem:[%s3 + $0x4c] sm:$0xf] %vm1352, %v1243
    %1373 = vst.msk [vmem:[%s3 + $0x50] sm:$0xf] %vm1352, %v1244
    %1374 = vst.msk [vmem:[%s3 + $0x54] sm:$0xf] %vm1352, %v1245
    %1375 = vst.msk [vmem:[%s3 + $0x58] sm:$0xf] %vm1352, %v1246
    %1376 = vst.msk [vmem:[%s3 + $0x5c] sm:$0xf] %vm1352, %v1247
    %1377 = vst.msk [vmem:[%s3 + $0x60] sm:$0xf] %vm1352, %v1248
    %1378 = vst.msk [vmem:[%s3 + $0x64] sm:$0xf] %vm1352, %v1249
    %1379 = vst.msk [vmem:[%s3 + $0x68] sm:$0xf] %vm1352, %v1250
    %1380 = vst.msk [vmem:[%s3 + $0x6c] sm:$0xf] %vm1352, %v1251
    %1381 = vst.msk [vmem:[%s3 + $0x70] sm:$0xf] %vm1352, %v1252
    %1382 = vst.msk [vmem:[%s3 + $0x74] sm:$0xf] %vm1352, %v1253
    %1383 = vst.msk [vmem:[%s3 + $0x78] sm:$0xf] %vm1352, %v1254
    %1384 = vst.msk [vmem:[%s3 + $0x7c] sm:$0xf] %vm1352, %v1255
    %1385 = vst.msk [vmem:[%s3 + $0x80] sm:$0xf] %vm1352, %v1256
    %1386 = vst.msk [vmem:[%s3 + $0x84] sm:$0xf] %vm1352, %v1257
    %1387 = vst.msk [vmem:[%s3 + $0x88] sm:$0xf] %vm1352, %v1258
    %1388 = vst.msk [vmem:[%s3 + $0x8c] sm:$0xf] %vm1352, %v1259
    %1389 = vst.msk [vmem:[%s3 + $0x90] sm:$0xf] %vm1352, %v1260
    %1390 = vst.msk [vmem:[%s3 + $0x94] sm:$0xf] %vm1352, %v1261
    %1391 = vst.msk [vmem:[%s3 + $0x98] sm:$0xf] %vm1352, %v1262
    %1392 = vst.msk [vmem:[%s3 + $0x9c] sm:$0xf] %vm1352, %v1263
    %1393 = vst.msk [vmem:[%s3 + $0xa0] sm:$0xf] %vm1352, %v1264
    %1394 = vst.msk [vmem:[%s3 + $0xa4] sm:$0xf] %vm1352, %v1265
    %1395 = vst.msk [vmem:[%s3 + $0xa8] sm:$0xf] %vm1352, %v1266
    %1396 = vst.msk [vmem:[%s3 + $0xac] sm:$0xf] %vm1352, %v1267
    %1397 = vst.msk [vmem:[%s3 + $0xb0] sm:$0xf] %vm1352, %v1268
    %1398 = vst.msk [vmem:[%s3 + $0xb4] sm:$0xf] %vm1352, %v1269
    %1399 = vst.msk [vmem:[%s3 + $0xb8] sm:$0xf] %vm1352, %v1270
    %1400 = vst.msk [vmem:[%s3 + $0xbc] sm:$0xf] %vm1352, %v1271
    %1401 = vst.msk [vmem:[%s3 + $0xc0] sm:$0xf] %vm1352, %v1272
    %1402 = vst.msk [vmem:[%s3 + $0xc4] sm:$0xf] %vm1352, %v1273
    %1403 = vst.msk [vmem:[%s3 + $0xc8] sm:$0xf] %vm1352, %v1274
    %1404 = vst.msk [vmem:[%s3 + $0xcc] sm:$0xf] %vm1352, %v1275
    %1405 = vst.msk [vmem:[%s3 + $0xd0] sm:$0xf] %vm1352, %v1276
    %1406 = vst.msk [vmem:[%s3 + $0xd4] sm:$0xf] %vm1352, %v1277
    %1407 = vst.msk [vmem:[%s3 + $0xd8] sm:$0xf] %vm1352, %v1278
    %1408 = vst.msk [vmem:[%s3 + $0xdc] sm:$0xf] %vm1352, %v1279
    %1409 = vst.msk [vmem:[%s3 + $0xe0] sm:$0xf] %vm1352, %v1280
    %1410 = vst.msk [vmem:[%s3 + $0xe4] sm:$0xf] %vm1352, %v1281
    %1411 = vst.msk [vmem:[%s3 + $0xe8] sm:$0xf] %vm1352, %v1282
    %1412 = vst.msk [vmem:[%s3 + $0xec] sm:$0xf] %vm1352, %v1283
    %1413 = vst.msk [vmem:[%s3 + $0xf0] sm:$0xf] %vm1352, %v1284
    %1414 = vst.msk [vmem:[%s3 + $0xf4] sm:$0xf] %vm1352, %v1285
    %1415 = vst.msk [vmem:[%s3 + $0xf8] sm:$0xf] %vm1352, %v1286
    %1416 = vst.msk [vmem:[%s3 + $0xfc] sm:$0xf] %vm1352, %v1287
  $region21: #{bottleneck_forward.8} parent=0 // pred_fallthru
    _
  // Predicated region
  $region22: #{bottleneck_forward.8} parent=0 // pred_check
    _
  $region23: #{bottleneck_forward.8} parent=0 // pred_check_branch
    %1418 = sbr.rel (0) target = $region25
  $region24: #{bottleneck_forward.8} parent=0 // pred_region
    _
  $region25: #{bottleneck_forward.8} parent=0 // pred_fallthru
    _
  // Predicated region
  $region26: #{bottleneck_forward.8} parent=0 // pred_check
    _
  $region27: #{bottleneck_forward.8} parent=0 // pred_check_branch
    %1420 = sbr.rel (0) target = $region29
  $region28: #{bottleneck_forward.8} parent=0 // pred_region
    _
  $region29: #{bottleneck_forward.8} parent=0 // pred_fallthru
    _

// kernel: bottleneck_forward.10
$region0: #{bottleneck_forward.10}
  #allocation0 [shape = 'u32[]', space=smem, size = 0x4, offset = 0x4, fixed_abs, tag = 'smem constant byte address 0x4 - core index']
  #allocation1 [shape = 'u32[144,128]{1,0:T(1,128)}', space=vmem, size = 0x12000, scoped, tag = 'internal scratch']
  #allocation2 [shape = 'f32[128,64]{1,0:T(8,128)}', space=vmem, size = 0x10000, scoped, tag = 'scratch operand']
  %s0 = inlined_call_operand.vmem [shape: bf16[128,16], index: 0, kind: input, shape index: {}]
  %s1 = inlined_call_operand.vmem [shape: bf16[16,64], index: 1, kind: input, shape index: {}]
  %s2 = inlined_call_operand.vmem [shape: f32[1,64], index: 2, kind: input, shape index: {}]
  %s3 = inlined_call_operand.vmem [shape: bf16[128,64], index: 3, kind: input, shape index: {}]
  %s4 = inlined_call_operand.vmem [shape: bf16[128,64], index: 4, kind: output, shape index: {}]
  %s5 = sld [smem:[#allocation0]]
  $region34: #{bottleneck_forward.10} parent=0
    _
  %s7 = ssub.s32 1, %s5
  %s8 = scalar_select 0, %s7, %s5
  // Predicated region
  $region2: #{bottleneck_forward.10} parent=0 // pred_check
    _
  $region3: #{bottleneck_forward.10} parent=0 // pred_check_branch
    %10 = sbr.rel (0) target = $region5
  $region4: #{bottleneck_forward.10} parent=0 // pred_region
    _
  $region5: #{bottleneck_forward.10} parent=0 // pred_fallthru
    _
  // Predicated region
  $region6: #{bottleneck_forward.10} parent=0 // pred_check
    _
  $region7: #{bottleneck_forward.10} parent=0 // pred_check_branch
    %12 = sbr.rel (0) target = $region9
  $region8: #{bottleneck_forward.10} parent=0 // pred_region
    _
  $region9: #{bottleneck_forward.10} parent=0 // pred_fallthru
    _
  // Predicated region
  $region10: #{bottleneck_forward.10} parent=0 // pred_check
    _
  $region11: #{bottleneck_forward.10} parent=0 // pred_check_branch
    %14 = sbr.rel (0) target = $region13
  $region12: #{bottleneck_forward.10} parent=0 // pred_region
    _
  $region13: #{bottleneck_forward.10} parent=0 // pred_fallthru
    _
  // Predicated region
  $region14: #{bottleneck_forward.10} parent=0 // pred_check
    _
  $region15: #{bottleneck_forward.10} parent=0 // pred_check_branch
    %16 = sbr.rel (0) target = $region17
  $region16: #{bottleneck_forward.10} parent=0 // pred_region
    _
  $region17: #{bottleneck_forward.10} parent=0 // pred_fallthru
    _
  %p18 = scmp.eq.s32.totalorder 0, 0
  // Predicated region
  $region18: #{bottleneck_forward.10} parent=0 // pred_check
    %p19 = pneg %p18
  $region19: #{bottleneck_forward.10} parent=0 // pred_check_branch
    %21 = sbr.rel (%p19) target = $region21
  $region20: #{bottleneck_forward.10} parent=0 // pred_region
    %vm22 = vcmask 523264
    %23 = vst.msk [vmem:[#allocation2] sm:$0xff] %vm22, 0.0
    %24 = vst.msk [vmem:[#allocation2 + $0x8] sm:$0xff] %vm22, 0.0
    %25 = vst.msk [vmem:[#allocation2 + $0x10] sm:$0xff] %vm22, 0.0
    %26 = vst.msk [vmem:[#allocation2 + $0x18] sm:$0xff] %vm22, 0.0
    %27 = vst.msk [vmem:[#allocation2 + $0x20] sm:$0xff] %vm22, 0.0
    %28 = vst.msk [vmem:[#allocation2 + $0x28] sm:$0xff] %vm22, 0.0
    %29 = vst.msk [vmem:[#allocation2 + $0x30] sm:$0xff] %vm22, 0.0
    %30 = vst.msk [vmem:[#allocation2 + $0x38] sm:$0xff] %vm22, 0.0
    %31 = vst.msk [vmem:[#allocation2 + $0x40] sm:$0xff] %vm22, 0.0
    %32 = vst.msk [vmem:[#allocation2 + $0x48] sm:$0xff] %vm22, 0.0
    %33 = vst.msk [vmem:[#allocation2 + $0x50] sm:$0xff] %vm22, 0.0
    %34 = vst.msk [vmem:[#allocation2 + $0x58] sm:$0xff] %vm22, 0.0
    %35 = vst.msk [vmem:[#allocation2 + $0x60] sm:$0xff] %vm22, 0.0
    %36 = vst.msk [vmem:[#allocation2 + $0x68] sm:$0xff] %vm22, 0.0
    %37 = vst.msk [vmem:[#allocation2 + $0x70] sm:$0xff] %vm22, 0.0
    %38 = vst.msk [vmem:[#allocation2 + $0x78] sm:$0xff] %vm22, 0.0
  $region21: #{bottleneck_forward.10} parent=0 // pred_fallthru
    _
  %v39 = vld [vmem:[#allocation2] sm:$0xff]
  %v40 = vld [vmem:[#allocation2 + $0x8] sm:$0xff]
  %v41 = vld [vmem:[#allocation2 + $0x10] sm:$0xff]
  %v42 = vld [vmem:[#allocation2 + $0x18] sm:$0xff]
  %v43 = vld [vmem:[#allocation2 + $0x20] sm:$0xff]
  %v44 = vld [vmem:[#allocation2 + $0x28] sm:$0xff]
  %v45 = vld [vmem:[#allocation2 + $0x30] sm:$0xff]
  %v46 = vld [vmem:[#allocation2 + $0x38] sm:$0xff]
  %v47 = vld [vmem:[#allocation2 + $0x40] sm:$0xff]
  %v48 = vld [vmem:[#allocation2 + $0x48] sm:$0xff]
  %v49 = vld [vmem:[#allocation2 + $0x50] sm:$0xff]
  %v50 = vld [vmem:[#allocation2 + $0x58] sm:$0xff]
  %v51 = vld [vmem:[#allocation2 + $0x60] sm:$0xff]
  %v52 = vld [vmem:[#allocation2 + $0x68] sm:$0xff]
  %v53 = vld [vmem:[#allocation2 + $0x70] sm:$0xff]
  %v54 = vld [vmem:[#allocation2 + $0x78] sm:$0xff]
  %v55 = vld [vmem:[%s0] sm:$0xf]
  %v56 = vld [vmem:[%s0 + $0x4] sm:$0xf]
  %v57 = vld [vmem:[%s0 + $0x8] sm:$0xf]
  %v58 = vld [vmem:[%s0 + $0xc] sm:$0xf]
  %v59 = vld [vmem:[%s0 + $0x10] sm:$0xf]
  %v60 = vld [vmem:[%s0 + $0x14] sm:$0xf]
  %v61 = vld [vmem:[%s0 + $0x18] sm:$0xf]
  %v62 = vld [vmem:[%s0 + $0x1c] sm:$0xf]
  %v63 = vld [vmem:[%s0 + $0x20] sm:$0xf]
  %v64 = vld [vmem:[%s0 + $0x24] sm:$0xf]
  %v65 = vld [vmem:[%s0 + $0x28] sm:$0xf]
  %v66 = vld [vmem:[%s0 + $0x2c] sm:$0xf]
  %v67 = vld [vmem:[%s0 + $0x30] sm:$0xf]
  %v68 = vld [vmem:[%s0 + $0x34] sm:$0xf]
  %v69 = vld [vmem:[%s0 + $0x38] sm:$0xf]
  %v70 = vld [vmem:[%s0 + $0x3c] sm:$0xf]
  %v71 = vld [vmem:[%s1] sm:$0xf]
  %v72 = vld [vmem:[%s1 + $0x4] sm:$0xf]
  %v89 = vunpack.c.l.b16 %v55
  %v90 = vunpack.c.l.b16 %v56
  %v91 = vunpack.c.l.b16 %v57
  %v92 = vunpack.c.l.b16 %v58
  %v93 = vunpack.c.l.b16 %v59
  %v94 = vunpack.c.l.b16 %v60
  %v95 = vunpack.c.l.b16 %v61
  %v96 = vunpack.c.l.b16 %v62
  %v97 = vunpack.c.l.b16 %v63
  %v98 = vunpack.c.l.b16 %v64
  %v99 = vunpack.c.l.b16 %v65
  %v100 = vunpack.c.l.b16 %v66
  %v101 = vunpack.c.l.b16 %v67
  %v102 = vunpack.c.l.b16 %v68
  %v103 = vunpack.c.l.b16 %v69
  %v104 = vunpack.c.l.b16 %v70
  %v105 = vpack.c.b16 %v90, %v89
  %v106 = vpack.c.b16 %v92, %v91
  %v107 = vpack.c.b16 %v94, %v93
  %v108 = vpack.c.b16 %v96, %v95
  %v109 = vpack.c.b16 %v98, %v97
  %v110 = vpack.c.b16 %v100, %v99
  %v111 = vpack.c.b16 %v102, %v101
  %v112 = vpack.c.b16 %v104, %v103
  %v115 = vunpack.c.l.b16 %v71
  %v116 = vunpack.c.l.b16 %v72
  %v117 = vpack.c.b16 %v116, %v115
  %vm119 = vcmask 130048
  %v121 = vsel %vm119, %v105, 0
  %v124 = vsel %vm119, %v106, 0
  %v127 = vsel %vm119, %v107, 0
  %v130 = vsel %vm119, %v108, 0
  %v133 = vsel %vm119, %v109, 0
  %v136 = vsel %vm119, %v110, 0
  %v139 = vsel %vm119, %v111, 0
  %v142 = vsel %vm119, %v112, 0
  %144 = vmatprep.subr.bf16.mxu0 0
  %145 = vmatpush1.bf16.msra.mxu0 %v117
  %146 = vmatprep.subr.bf16.mxu0 0
  %147 = vmatpush1.bf16.msra.mxu0 0
  %148 = vmatprep.subr.bf16.mxu0 0
  %149 = vmatpush1.bf16.msra.mxu0 0
  %150 = vmatprep.subr.bf16.mxu0 0
  %151 = vmatpush1.bf16.msra.mxu0 0
  %152 = vmatprep.subr.bf16.mxu0 0
  %153 = vmatpush1.bf16.msra.mxu0 0
  %154 = vmatprep.subr.bf16.mxu0 0
  %155 = vmatpush1.bf16.msra.mxu0 0
  %156 = vmatprep.subr.bf16.mxu0 0
  %157 = vmatpush1.bf16.msra.mxu0 0
  %158 = vmatprep.subr.bf16.mxu0 0
  %159 = vmatpush1.bf16.msra.mxu0 0
  %160 = vmatprep.subr.bf16.mxu0 0
  %161 = vmatpush1.bf16.msra.mxu0 0
  %162 = vmatprep.subr.bf16.mxu0 0
  %163 = vmatpush1.bf16.msra.mxu0 0
  %164 = vmatprep.subr.bf16.mxu0 0
  %165 = vmatpush1.bf16.msra.mxu0 0
  %166 = vmatprep.subr.bf16.mxu0 0
  %167 = vmatpush1.bf16.msra.mxu0 0
  %168 = vmatprep.subr.bf16.mxu0 0
  %169 = vmatpush1.bf16.msra.mxu0 0
  %170 = vmatprep.subr.bf16.mxu0 0
  %171 = vmatpush1.bf16.msra.mxu0 0
  %172 = vmatprep.subr.bf16.mxu0 0
  %173 = vmatpush1.bf16.msra.mxu0 0
  %174 = vmatprep.subr.bf16.mxu0 0
  %175 = vmatpush1.bf16.msra.mxu0 0
  %176 = vmatprep.mubr.bf16.mxu0 0
  %177 = vmatmul.mubr.bf16.gmra.mrb[0].mxu0 %v121
  %v178 = vpop.f32.mrb[0].mxu0
  %v179 = vadd.f32 0.0, %v178
  %v180 = vpop.f32.mrb[0].mxu0
  %v181 = vpop.f32.mrb[0].mxu0
  %v182 = vadd.f32 0.0, %v181
  %v183 = vpop.f32.mrb[0].mxu0
  %184 = vmatprep.mubr.bf16.mxu0 0
  %185 = vmatmul.mubr.bf16.gmra.mrb[0].mxu0 %v124
  %v186 = vpop.f32.mrb[0].mxu0
  %v187 = vadd.f32 0.0, %v186
  %v188 = vpop.f32.mrb[0].mxu0
  %v189 = vpop.f32.mrb[0].mxu0
  %v190 = vadd.f32 0.0, %v189
  %v191 = vpop.f32.mrb[0].mxu0
  %192 = vmatprep.mubr.bf16.mxu0 0
  %193 = vmatmul.mubr.bf16.gmra.mrb[0].mxu0 %v127
  %v194 = vpop.f32.mrb[0].mxu0
  %v195 = vadd.f32 0.0, %v194
  %v196 = vpop.f32.mrb[0].mxu0
  %v197 = vpop.f32.mrb[0].mxu0
  %v198 = vadd.f32 0.0, %v197
  %v199 = vpop.f32.mrb[0].mxu0
  %200 = vmatprep.mubr.bf16.mxu0 0
  %201 = vmatmul.mubr.bf16.gmra.mrb[0].mxu0 %v130
  %v202 = vpop.f32.mrb[0].mxu0
  %v203 = vadd.f32 0.0, %v202
  %v204 = vpop.f32.mrb[0].mxu0
  %v205 = vpop.f32.mrb[0].mxu0
  %v206 = vadd.f32 0.0, %v205
  %v207 = vpop.f32.mrb[0].mxu0
  %208 = vmatprep.mubr.bf16.mxu0 0
  %209 = vmatmul.mubr.bf16.gmra.mrb[0].mxu0 %v133
  %v210 = vpop.f32.mrb[0].mxu0
  %v211 = vadd.f32 0.0, %v210
  %v212 = vpop.f32.mrb[0].mxu0
  %v213 = vpop.f32.mrb[0].mxu0
  %v214 = vadd.f32 0.0, %v213
  %v215 = vpop.f32.mrb[0].mxu0
  %216 = vmatprep.mubr.bf16.mxu0 0
  %217 = vmatmul.mubr.bf16.gmra.mrb[0].mxu0 %v136
  %v218 = vpop.f32.mrb[0].mxu0
  %v219 = vadd.f32 0.0, %v218
  %v220 = vpop.f32.mrb[0].mxu0
  %v221 = vpop.f32.mrb[0].mxu0
  %v222 = vadd.f32 0.0, %v221
  %v223 = vpop.f32.mrb[0].mxu0
  %224 = vmatprep.mubr.bf16.mxu0 0
  %225 = vmatmul.mubr.bf16.gmra.mrb[0].mxu0 %v139
  %v226 = vpop.f32.mrb[0].mxu0
  %v227 = vadd.f32 0.0, %v226
  %v228 = vpop.f32.mrb[0].mxu0
  %v229 = vpop.f32.mrb[0].mxu0
  %v230 = vadd.f32 0.0, %v229
  %v231 = vpop.f32.mrb[0].mxu0
  %232 = vmatprep.mubr.bf16.mxu0 0
  %233 = vmatmul.mubr.bf16.gmra.mrb[0].mxu0 %v142
  %v234 = vpop.f32.mrb[0].mxu0
  %v235 = vadd.f32 0.0, %v234
  %v236 = vpop.f32.mrb[0].mxu0
  %v237 = vpop.f32.mrb[0].mxu0
  %v238 = vadd.f32 0.0, %v237
  %v239 = vpop.f32.mrb[0].mxu0
  %240 = vdwg.mxu0
  %v241 = vadd.f32 %v39, %v179
  %v242 = vadd.f32 %v40, %v182
  %v243 = vadd.f32 %v41, %v187
  %v244 = vadd.f32 %v42, %v190
  %v245 = vadd.f32 %v43, %v195
  %v246 = vadd.f32 %v44, %v198
  %v247 = vadd.f32 %v45, %v203
  %v248 = vadd.f32 %v46, %v206
  %v249 = vadd.f32 %v47, %v211
  %v250 = vadd.f32 %v48, %v214
  %v251 = vadd.f32 %v49, %v219
  %v252 = vadd.f32 %v50, %v222
  %v253 = vadd.f32 %v51, %v227
  %v254 = vadd.f32 %v52, %v230
  %v255 = vadd.f32 %v53, %v235
  %v256 = vadd.f32 %v54, %v238
  %vm257 = vcmask 523264
  %258 = vst.msk [vmem:[#allocation2] sm:$0xff] %vm257, %v241
  %259 = vst.msk [vmem:[#allocation2 + $0x8] sm:$0xff] %vm257, %v242
  %260 = vst.msk [vmem:[#allocation2 + $0x10] sm:$0xff] %vm257, %v243
  %261 = vst.msk [vmem:[#allocation2 + $0x18] sm:$0xff] %vm257, %v244
  %262 = vst.msk [vmem:[#allocation2 + $0x20] sm:$0xff] %vm257, %v245
  %263 = vst.msk [vmem:[#allocation2 + $0x28] sm:$0xff] %vm257, %v246
  %264 = vst.msk [vmem:[#allocation2 + $0x30] sm:$0xff] %vm257, %v247
  %265 = vst.msk [vmem:[#allocation2 + $0x38] sm:$0xff] %vm257, %v248
  %266 = vst.msk [vmem:[#allocation2 + $0x40] sm:$0xff] %vm257, %v249
  %267 = vst.msk [vmem:[#allocation2 + $0x48] sm:$0xff] %vm257, %v250
  %268 = vst.msk [vmem:[#allocation2 + $0x50] sm:$0xff] %vm257, %v251
  %269 = vst.msk [vmem:[#allocation2 + $0x58] sm:$0xff] %vm257, %v252
  %270 = vst.msk [vmem:[#allocation2 + $0x60] sm:$0xff] %vm257, %v253
  %271 = vst.msk [vmem:[#allocation2 + $0x68] sm:$0xff] %vm257, %v254
  %272 = vst.msk [vmem:[#allocation2 + $0x70] sm:$0xff] %vm257, %v255
  %273 = vst.msk [vmem:[#allocation2 + $0x78] sm:$0xff] %vm257, %v256
  // Predicated region
  $region22: #{bottleneck_forward.10} parent=0 // pred_check
    %p274 = pneg %p18
  $region23: #{bottleneck_forward.10} parent=0 // pred_check_branch
    %276 = sbr.rel (%p274) target = $region25
  $region24: #{bottleneck_forward.10} parent=0 // pred_region
    %v277 = vld [vmem:[#allocation2] sm:$0xff]
    %v278 = vld [vmem:[#allocation2 + $0x8] sm:$0xff]
    %v279 = vld [vmem:[#allocation2 + $0x10] sm:$0xff]
    %v280 = vld [vmem:[#allocation2 + $0x18] sm:$0xff]
    %v281 = vld [vmem:[#allocation2 + $0x20] sm:$0xff]
    %v282 = vld [vmem:[#allocation2 + $0x28] sm:$0xff]
    %v283 = vld [vmem:[#allocation2 + $0x30] sm:$0xff]
    %v284 = vld [vmem:[#allocation2 + $0x38] sm:$0xff]
    %v285 = vld [vmem:[#allocation2 + $0x40] sm:$0xff]
    %v286 = vld [vmem:[#allocation2 + $0x48] sm:$0xff]
    %v287 = vld [vmem:[#allocation2 + $0x50] sm:$0xff]
    %v288 = vld [vmem:[#allocation2 + $0x58] sm:$0xff]
    %v289 = vld [vmem:[#allocation2 + $0x60] sm:$0xff]
    %v290 = vld [vmem:[#allocation2 + $0x68] sm:$0xff]
    %v291 = vld [vmem:[#allocation2 + $0x70] sm:$0xff]
    %v292 = vld [vmem:[#allocation2 + $0x78] sm:$0xff]
    %v293 = vld [vmem:[%s2] sm:$0x1]
    %v295 = vlaneseq
    %v296 = vshrl.u32 %v295, 7
    %v297 = vsub.s32 0, %v296
    %v298 = vrot.slane %v293, %v297
    %v300 = vadd.f32 %v277, %v298
    %v301 = vadd.f32 %v278, %v298
    %v302 = vadd.f32 %v279, %v298
    %v303 = vadd.f32 %v280, %v298
    %v304 = vadd.f32 %v281, %v298
    %v305 = vadd.f32 %v282, %v298
    %v306 = vadd.f32 %v283, %v298
    %v307 = vadd.f32 %v284, %v298
    %v308 = vadd.f32 %v285, %v298
    %v309 = vadd.f32 %v286, %v298
    %v310 = vadd.f32 %v287, %v298
    %v311 = vadd.f32 %v288, %v298
    %v312 = vadd.f32 %v289, %v298
    %v313 = vadd.f32 %v290, %v298
    %v314 = vadd.f32 %v291, %v298
    %v315 = vadd.f32 %v292, %v298
    %v316 = vld [vmem:[%s3] sm:$0xf]
    %v317 = vld [vmem:[%s3 + $0x4] sm:$0xf]
    %v318 = vld [vmem:[%s3 + $0x8] sm:$0xf]
    %v319 = vld [vmem:[%s3 + $0xc] sm:$0xf]
    %v320 = vld [vmem:[%s3 + $0x10] sm:$0xf]
    %v321 = vld [vmem:[%s3 + $0x14] sm:$0xf]
    %v322 = vld [vmem:[%s3 + $0x18] sm:$0xf]
    %v323 = vld [vmem:[%s3 + $0x1c] sm:$0xf]
    %v324 = vld [vmem:[%s3 + $0x20] sm:$0xf]
    %v325 = vld [vmem:[%s3 + $0x24] sm:$0xf]
    %v326 = vld [vmem:[%s3 + $0x28] sm:$0xf]
    %v327 = vld [vmem:[%s3 + $0x2c] sm:$0xf]
    %v328 = vld [vmem:[%s3 + $0x30] sm:$0xf]
    %v329 = vld [vmem:[%s3 + $0x34] sm:$0xf]
    %v330 = vld [vmem:[%s3 + $0x38] sm:$0xf]
    %v331 = vld [vmem:[%s3 + $0x3c] sm:$0xf]
    %v332 = vunpack.c.l.bf16 %v316
    %v333 = vunpack.c.l.bf16 %v317
    %v334 = vunpack.c.l.bf16 %v318
    %v335 = vunpack.c.l.bf16 %v319
    %v336 = vunpack.c.l.bf16 %v320
    %v337 = vunpack.c.l.bf16 %v321
    %v338 = vunpack.c.l.bf16 %v322
    %v339 = vunpack.c.l.bf16 %v323
    %v340 = vunpack.c.l.bf16 %v324
    %v341 = vunpack.c.l.bf16 %v325
    %v342 = vunpack.c.l.bf16 %v326
    %v343 = vunpack.c.l.bf16 %v327
    %v344 = vunpack.c.l.bf16 %v328
    %v345 = vunpack.c.l.bf16 %v329
    %v346 = vunpack.c.l.bf16 %v330
    %v347 = vunpack.c.l.bf16 %v331
    %v348 = vadd.f32 %v300, %v332
    %v349 = vadd.f32 %v301, %v333
    %v350 = vadd.f32 %v302, %v334
    %v351 = vadd.f32 %v303, %v335
    %v352 = vadd.f32 %v304, %v336
    %v353 = vadd.f32 %v305, %v337
    %v354 = vadd.f32 %v306, %v338
    %v355 = vadd.f32 %v307, %v339
    %v356 = vadd.f32 %v308, %v340
    %v357 = vadd.f32 %v309, %v341
    %v358 = vadd.f32 %v310, %v342
    %v359 = vadd.f32 %v311, %v343
    %v360 = vadd.f32 %v312, %v344
    %v361 = vadd.f32 %v313, %v345
    %v362 = vadd.f32 %v314, %v346
    %v363 = vadd.f32 %v315, %v347
    %v364 = vmax.f32 %v348, 0.0
    %v365 = vmax.f32 %v349, 0.0
    %v366 = vmax.f32 %v350, 0.0
    %v367 = vmax.f32 %v351, 0.0
    %v368 = vmax.f32 %v352, 0.0
    %v369 = vmax.f32 %v353, 0.0
    %v370 = vmax.f32 %v354, 0.0
    %v371 = vmax.f32 %v355, 0.0
    %v372 = vmax.f32 %v356, 0.0
    %v373 = vmax.f32 %v357, 0.0
    %v374 = vmax.f32 %v358, 0.0
    %v375 = vmax.f32 %v359, 0.0
    %v376 = vmax.f32 %v360, 0.0
    %v377 = vmax.f32 %v361, 0.0
    %v378 = vmax.f32 %v362, 0.0
    %v379 = vmax.f32 %v363, 0.0
    %v380 = vpack.c.bf16 %v365, %v364
    %v381 = vpack.c.bf16 %v367, %v366
    %v382 = vpack.c.bf16 %v369, %v368
    %v383 = vpack.c.bf16 %v371, %v370
    %v384 = vpack.c.bf16 %v373, %v372
    %v385 = vpack.c.bf16 %v375, %v374
    %v386 = vpack.c.bf16 %v377, %v376
    %v387 = vpack.c.bf16 %v379, %v378
    %v396 = vunpack.c.l.b16 %v380
    %v397 = vunpack.c.h.b16 %v380
    %v398 = vunpack.c.l.b16 %v381
    %v399 = vunpack.c.h.b16 %v381
    %v400 = vunpack.c.l.b16 %v382
    %v401 = vunpack.c.h.b16 %v382
    %v402 = vunpack.c.l.b16 %v383
    %v403 = vunpack.c.h.b16 %v383
    %v404 = vunpack.c.l.b16 %v384
    %v405 = vunpack.c.h.b16 %v384
    %v406 = vunpack.c.l.b16 %v385
    %v407 = vunpack.c.h.b16 %v385
    %v408 = vunpack.c.l.b16 %v386
    %v409 = vunpack.c.h.b16 %v386
    %v410 = vunpack.c.l.b16 %v387
    %v411 = vunpack.c.h.b16 %v387
    %v412 = vpack.c.b16 %v396, %v396
    %v413 = vpack.c.b16 %v397, %v397
    %v414 = vpack.c.b16 %v398, %v398
    %v415 = vpack.c.b16 %v399, %v399
    %v416 = vpack.c.b16 %v400, %v400
    %v417 = vpack.c.b16 %v401, %v401
    %v418 = vpack.c.b16 %v402, %v402
    %v419 = vpack.c.b16 %v403, %v403
    %v420 = vpack.c.b16 %v404, %v404
    %v421 = vpack.c.b16 %v405, %v405
    %v422 = vpack.c.b16 %v406, %v406
    %v423 = vpack.c.b16 %v407, %v407
    %v424 = vpack.c.b16 %v408, %v408
    %v425 = vpack.c.b16 %v409, %v409
    %v426 = vpack.c.b16 %v410, %v410
    %v427 = vpack.c.b16 %v411, %v411
    %vm444 = vcmask 519168
    %445 = vst.msk [vmem:[%s4] sm:$0xf] %vm444, %v412
    %446 = vst.msk [vmem:[%s4 + $0x4] sm:$0xf] %vm444, %v413
    %447 = vst.msk [vmem:[%s4 + $0x8] sm:$0xf] %vm444, %v414
    %448 = vst.msk [vmem:[%s4 + $0xc] sm:$0xf] %vm444, %v415
    %449 = vst.msk [vmem:[%s4 + $0x10] sm:$0xf] %vm444, %v416
    %450 = vst.msk [vmem:[%s4 + $0x14] sm:$0xf] %vm444, %v417
    %451 = vst.msk [vmem:[%s4 + $0x18] sm:$0xf] %vm444, %v418
    %452 = vst.msk [vmem:[%s4 + $0x1c] sm:$0xf] %vm444, %v419
    %453 = vst.msk [vmem:[%s4 + $0x20] sm:$0xf] %vm444, %v420
    %454 = vst.msk [vmem:[%s4 + $0x24] sm:$0xf] %vm444, %v421
    %455 = vst.msk [vmem:[%s4 + $0x28] sm:$0xf] %vm444, %v422
    %456 = vst.msk [vmem:[%s4 + $0x2c] sm:$0xf] %vm444, %v423
    %457 = vst.msk [vmem:[%s4 + $0x30] sm:$0xf] %vm444, %v424
    %458 = vst.msk [vmem:[%s4 + $0x34] sm:$0xf] %vm444, %v425
    %459 = vst.msk [vmem:[%s4 + $0x38] sm:$0xf] %vm444, %v426
    %460 = vst.msk [vmem:[%s4 + $0x3c] sm:$0xf] %vm444, %v427
  $region25: #{bottleneck_forward.10} parent=0 // pred_fallthru
    _
  // Predicated region
  $region26: #{bottleneck_forward.10} parent=0 // pred_check
    _
  $region27: #{bottleneck_forward.10} parent=0 // pred_check_branch
    %462 = sbr.rel (0) target = $region29
  $region28: #{bottleneck_forward.10} parent=0 // pred_region
    _
  $region29: #{bottleneck_forward.10} parent=0 // pred_fallthru
    _
  // Predicated region
  $region30: #{bottleneck_forward.10} parent=0 // pred_check
    _
  $region31: #{bottleneck_forward.10} parent=0 // pred_check_branch
    %464 = sbr.rel (0) target = $region33
  $region32: #{bottleneck_forward.10} parent=0 // pred_region
    _
  $region33: #{bottleneck_forward.10} parent=0 // pred_fallthru
    _

// kernel: bottleneck_forward.9
$region0: #{bottleneck_forward.9}
  #allocation0 [shape = 'u32[]', space=smem, size = 0x4, offset = 0x4, fixed_abs, tag = 'smem constant byte address 0x4 - core index']
  #allocation1 [shape = 'u32[144,128]{1,0:T(1,128)}', space=vmem, size = 0x12000, scoped, tag = 'internal scratch']
  %s0 = inlined_call_operand.vmem [shape: bf16[4,2,9,9,16], index: 0, kind: input, shape index: {}]
  %s1 = inlined_call_operand.vmem [shape: bf16[9,16,16], index: 1, kind: input, shape index: {}]
  %s2 = inlined_call_operand.vmem [shape: f32[1,16], index: 2, kind: input, shape index: {}]
  %s3 = inlined_call_operand.vmem [shape: bf16[2,8,8,16], index: 3, kind: output, shape index: {}]
  %s4 = sld [smem:[#allocation0]]
  $region86: #{bottleneck_forward.9} parent=0
    _
  %s6 = ssub.s32 1, %s4
  %s7 = scalar_select 0, %s6, %s4
  $region1: #{bottleneck_forward.9} parent=0
    #allocation2 [shape = 'u8[294912]{0}', space=vmem, size = 0x48000, scoped, tag = 'input window, operand 0']
    loop: start=0, step=1, limit=4
    $region2: #{bottleneck_forward.9} parent=1 // loop_pre_header
      _
    $region3: #{bottleneck_forward.9} parent=1 // loop_header
      %s9 = sphi 0, %s13
      %p10 = scmp.ge.s32.totalorder %s9, 4
      %s19 = sphi 0, %s21
      %s22 = sphi 0, %s19
      %s23 = sphi 0, %s22
      %s39 = sphi 0, %s23
      %s43 = sphi 0, %s43
      %s45 = sphi 0, %s43
      %s46 = sphi 0, %s45
      %s60 = sphi 0, %s46
      %s64 = sphi 0, %s64
      %s66 = sphi 0, %s64
      %s67 = sphi 0, %s66
      %s81 = sphi 0, %s67
      %s87 = sphi 0, %s89
      %s90 = sphi 0, %s87
      %s91 = sphi 0, %s90
      %s107 = sphi 0, %s91
    $region4: #{bottleneck_forward.9} parent=1 // loop_header_branch
      %12 = sbr.rel (%p10) target = $region8
    $region5: #{bottleneck_forward.9} parent=1 // loop_body
      %s14 = ssub.s32 %s9, 1
      %s15 = ssub.s32 %s9, 2
      %s16 = sadd.s32 %s9, 1
      %s17 = ssub.s32 %s9, %s16
      %p18 = scmp.eq.s32.totalorder %s17, 0
      %s20 = sadd.s32 %s19, 1
      %s21 = scalar_select %p18, %s19, %s20
      %p24 = pneg %p18
      %p25 = scmp.eq.s32.totalorder %s9, 1
      %p26 = por %p24, %p25
      %p27 = scmp.ne.s32.totalorder %s19, %s22
      %p28 = scmp.eq.s32.totalorder %s9, 0
      %p29 = por %p27, %p28
      %p30 = scmp.ne.s32.totalorder %s19, %s22
      %p31 = scmp.eq.s32.totalorder %s14, 1
      %p32 = por %p30, %p31
      %p33 = scmp.ne.s32.totalorder %s22, %s23
      %p34 = scmp.eq.s32.totalorder %s14, 0
      %p35 = por %p33, %p34
      %p36 = scmp.ne.s32.totalorder %s22, %s23
      %p37 = scmp.eq.s32.totalorder %s15, 1
      %p38 = por %p36, %p37
      %p40 = scmp.ne.s32.totalorder %s23, %s39
      %p41 = scmp.eq.s32.totalorder %s15, 0
      %p42 = por %p40, %p41
      %s44 = sadd.s32 %s43, 1
      %p47 = scmp.eq.s32.totalorder %s9, 1
      %p48 = scmp.ne.s32.totalorder %s43, %s45
      %p49 = scmp.eq.s32.totalorder %s9, 0
      %p50 = por %p48, %p49
      %p51 = scmp.ne.s32.totalorder %s43, %s45
      %p52 = scmp.eq.s32.totalorder %s14, 1
      %p53 = por %p51, %p52
      %p54 = scmp.ne.s32.totalorder %s45, %s46
      %p55 = scmp.eq.s32.totalorder %s14, 0
      %p56 = por %p54, %p55
      %p57 = scmp.ne.s32.totalorder %s45, %s46
      %p58 = scmp.eq.s32.totalorder %s15, 1
      %p59 = por %p57, %p58
      %p61 = scmp.ne.s32.totalorder %s46, %s60
      %p62 = scmp.eq.s32.totalorder %s15, 0
      %p63 = por %p61, %p62
      %s65 = sadd.s32 %s64, 1
      %p68 = scmp.eq.s32.totalorder %s9, 1
      %p69 = scmp.ne.s32.totalorder %s64, %s66
      %p70 = scmp.eq.s32.totalorder %s9, 0
      %p71 = por %p69, %p70
      %p72 = scmp.ne.s32.totalorder %s64, %s66
      %p73 = scmp.eq.s32.totalorder %s14, 1
      %p74 = por %p72, %p73
      %p75 = scmp.ne.s32.totalorder %s66, %s67
      %p76 = scmp.eq.s32.totalorder %s14, 0
      %p77 = por %p75, %p76
      %p78 = scmp.ne.s32.totalorder %s66, %s67
      %p79 = scmp.eq.s32.totalorder %s15, 1
      %p80 = por %p78, %p79
      %p82 = scmp.ne.s32.totalorder %s67, %s81
      %p83 = scmp.eq.s32.totalorder %s15, 0
      %p84 = por %p82, %p83
      %s85 = ssub.s32 %s9, %s16
      %p86 = scmp.eq.s32.totalorder %s85, 0
      %s88 = sadd.s32 %s87, 1
      %s89 = scalar_select %p86, %s87, %s88
      %p92 = pneg %p86
      %p93 = scmp.eq.s32.totalorder %s9, 1
      %p94 = por %p92, %p93
      %p95 = scmp.ne.s32.totalorder %s87, %s90
      %p96 = scmp.eq.s32.totalorder %s9, 0
      %p97 = por %p95, %p96
      %p98 = scmp.ne.s32.totalorder %s87, %s90
      %p99 = scmp.eq.s32.totalorder %s14, 1
      %p100 = por %p98, %p99
      %p101 = scmp.ne.s32.totalorder %s90, %s91
      %p102 = scmp.eq.s32.totalorder %s14, 0
      %p103 = por %p101, %p102
      %p104 = scmp.ne.s32.totalorder %s90, %s91
      %p105 = scmp.eq.s32.totalorder %s15, 1
      %p106 = por %p104, %p105
      %p108 = scmp.ne.s32.totalorder %s91, %s107
      %p109 = scmp.eq.s32.totalorder %s15, 0
      %p110 = por %p108, %p109
      %p111 = scmp.le.s32.totalorder 1, %s9
      %p112 = scmp.lt.s32.totalorder %s9, 3
      %p113 = pnand %p111, %p112
      %p114 = pneg %p113
      // Predicated region
      $region9: #{bottleneck_forward.9} parent=5 // pred_check
        _
      $region10: #{bottleneck_forward.9} parent=5 // pred_check_branch
        %116 = sbr.rel (%p113) target = $region12
      $region11: #{bottleneck_forward.9} parent=5 // pred_region
        %s117 = ssub.s32 %s9, 1
        // Predicated region
        $region13: #{bottleneck_forward.9} parent=11 // pred_check
          %p118 = pneg %p56
        $region14: #{bottleneck_forward.9} parent=11 // pred_check_branch
          %120 = sbr.rel (%p118) target = $region16
        $region15: #{bottleneck_forward.9} parent=11 // pred_region
          _
        $region16: #{bottleneck_forward.9} parent=11 // pred_fallthru
          _
        // Predicated region
        $region17: #{bottleneck_forward.9} parent=11 // pred_check
          %p121 = pneg %p77
        $region18: #{bottleneck_forward.9} parent=11 // pred_check_branch
          %123 = sbr.rel (%p121) target = $region20
        $region19: #{bottleneck_forward.9} parent=11 // pred_region
          _
        $region20: #{bottleneck_forward.9} parent=11 // pred_fallthru
          _
      $region12: #{bottleneck_forward.9} parent=5 // pred_fallthru
        _
      %p124 = scmp.lt.s32.totalorder %s9, 2
      // Predicated region
      $region21: #{bottleneck_forward.9} parent=5 // pred_check
        %p125 = pneg %p124
      $region22: #{bottleneck_forward.9} parent=5 // pred_check_branch
        %127 = sbr.rel (%p125) target = $region24
      $region23: #{bottleneck_forward.9} parent=5 // pred_region
        // Predicated region
        $region25: #{bottleneck_forward.9} parent=23 // pred_check
          %p128 = pneg %p29
        $region26: #{bottleneck_forward.9} parent=23 // pred_check_branch
          %130 = sbr.rel (%p128) target = $region28
        $region27: #{bottleneck_forward.9} parent=23 // pred_region
          %s131 = sand.u32 %s19, 1
          %s132 = sand.u32 %s19, 1
          %s133 = smul.addr %s132, 288
          %s134 = scalar_lea.vmem [#allocation2], %s133
          %s135 = smul.addr %s9, 18
          %s136 = smul.addr %s135, 4
          %s137 = scalar_lea.vmem %s0, %s136
          // Predicated region
          $region29: #{bottleneck_forward.9} parent=27 // pred_check
            _
          $region30: #{bottleneck_forward.9} parent=27 // pred_check_branch
            %139 = sbr.rel (0) target = $region32
          $region31: #{bottleneck_forward.9} parent=27 // pred_region
            // Predicated region
            $region33: #{bottleneck_forward.9} parent=31 // pred_check
              _
            $region34: #{bottleneck_forward.9} parent=31 // pred_check_branch
              %141 = sbr.rel target = $region36
            $region35: #{bottleneck_forward.9} parent=31 // pred_region
              // Predicated region
              $region48: #{bottleneck_forward.9} parent=35 // pred_check
                _
              $region49: #{bottleneck_forward.9} parent=35 // pred_check_branch
                %298 = sbr.rel (0) target = $region51
              $region50: #{bottleneck_forward.9} parent=35 // pred_region
                loop: start=0, step=1, limit=1
                $region52: #{bottleneck_forward.9} parent=50 // loop_pre_header
                  _
                $region53: #{bottleneck_forward.9} parent=50 // loop_header
                  %s300 = sphi 0, %s304
                  %p301 = scmp.ge.s32.totalorder %s300, 1
                  %s305 = sphi %s137, %s137
                  %s306 = sphi %s134, %s134
                $region54: #{bottleneck_forward.9} parent=50 // loop_header_branch
                  %303 = sbr.rel (%p301) target = $region58
                $region55: #{bottleneck_forward.9} parent=50 // loop_body
                  _
                $region56: #{bottleneck_forward.9} parent=50 // loop_footer
                  %s304 = sadd.s32 1, %s300
                $region57: #{bottleneck_forward.9} parent=50 // loop_footer_branch
                  %299 = sbr.rel target = $region53
                $region58: #{bottleneck_forward.9} parent=50 // loop_exit
                  _
                loop: start=0, step=1, limit=1
                $region59: #{bottleneck_forward.9} parent=50 // loop_pre_header
                  _
                $region60: #{bottleneck_forward.9} parent=50 // loop_header
                  %s309 = sphi 0, %s313
                  %p310 = scmp.ge.s32.totalorder %s309, 1
                  %s314 = sphi %s137, %s137
                  %s315 = sphi %s134, %s134
                $region61: #{bottleneck_forward.9} parent=50 // loop_header_branch
                  %312 = sbr.rel (%p310) target = $region65
                $region62: #{bottleneck_forward.9} parent=50 // loop_body
                  %v316 = vld [vmem:[%s314] sm:$0xf]
                  %317 = vst [vmem:[%s315] sm:$0xf] %v316
                  %v318 = vld [vmem:[%s314 + $0x4] sm:$0xf]
                  %319 = vst [vmem:[%s315 + $0x4] sm:$0xf] %v318
                  %v320 = vld [vmem:[%s314 + $0x8] sm:$0xf]
                  %321 = vst [vmem:[%s315 + $0x8] sm:$0xf] %v320
                  %v322 = vld [vmem:[%s314 + $0xc] sm:$0xf]
                  %323 = vst [vmem:[%s315 + $0xc] sm:$0xf] %v322
                  %v324 = vld [vmem:[%s314 + $0x10] sm:$0xf]
                  %325 = vst [vmem:[%s315 + $0x10] sm:$0xf] %v324
                  %v326 = vld [vmem:[%s314 + $0x14] sm:$0xf]
                  %327 = vst [vmem:[%s315 + $0x14] sm:$0xf] %v326
                  %v328 = vld [vmem:[%s314 + $0x18] sm:$0xf]
                  %329 = vst [vmem:[%s315 + $0x18] sm:$0xf] %v328
                  %v330 = vld [vmem:[%s314 + $0x1c] sm:$0xf]
                  %331 = vst [vmem:[%s315 + $0x1c] sm:$0xf] %v330
                  %v332 = vld [vmem:[%s314 + $0x20] sm:$0xf]
                  %333 = vst [vmem:[%s315 + $0x20] sm:$0xf] %v332
                  %v334 = vld [vmem:[%s314 + $0x24] sm:$0xf]
                  %335 = vst [vmem:[%s315 + $0x24] sm:$0xf] %v334
                  %v336 = vld [vmem:[%s314 + $0x28] sm:$0xf]
                  %337 = vst [vmem:[%s315 + $0x28] sm:$0xf] %v336
                  %v338 = vld [vmem:[%s314 + $0x2c] sm:$0xf]
                  %339 = vst [vmem:[%s315 + $0x2c] sm:$0xf] %v338
                  %v340 = vld [vmem:[%s314 + $0x30] sm:$0xf]
                  %341 = vst [vmem:[%s315 + $0x30] sm:$0xf] %v340
                  %v342 = vld [vmem:[%s314 + $0x34] sm:$0xf]
                  %343 = vst [vmem:[%s315 + $0x34] sm:$0xf] %v342
                  %v344 = vld [vmem:[%s314 + $0x38] sm:$0xf]
                  %345 = vst [vmem:[%s315 + $0x38] sm:$0xf] %v344
                  %v346 = vld [vmem:[%s314 + $0x3c] sm:$0xf]
                  %347 = vst [vmem:[%s315 + $0x3c] sm:$0xf] %v346
                  %v348 = vld [vmem:[%s314 + $0x40] sm:$0xf]
                  %349 = vst [vmem:[%s315 + $0x40] sm:$0xf] %v348
                  %v350 = vld [vmem:[%s314 + $0x44] sm:$0xf]
                  %351 = vst [vmem:[%s315 + $0x44] sm:$0xf] %v350
                  %v352 = vld [vmem:[%s314 + $0x90] sm:$0xf]
                  %353 = vst [vmem:[%s315 + $0x48] sm:$0xf] %v352
                  %v354 = vld [vmem:[%s314 + $0x94] sm:$0xf]
                  %355 = vst [vmem:[%s315 + $0x4c] sm:$0xf] %v354
                  %v356 = vld [vmem:[%s314 + $0x98] sm:$0xf]
                  %357 = vst [vmem:[%s315 + $0x50] sm:$0xf] %v356
                  %v358 = vld [vmem:[%s314 + $0x9c] sm:$0xf]
                  %359 = vst [vmem:[%s315 + $0x54] sm:$0xf] %v358
                  %v360 = vld [vmem:[%s314 + $0xa0] sm:$0xf]
                  %361 = vst [vmem:[%s315 + $0x58] sm:$0xf] %v360
                  %v362 = vld [vmem:[%s314 + $0xa4] sm:$0xf]
                  %363 = vst [vmem:[%s315 + $0x5c] sm:$0xf] %v362
                  %v364 = vld [vmem:[%s314 + $0xa8] sm:$0xf]
                  %365 = vst [vmem:[%s315 + $0x60] sm:$0xf] %v364
                  %v366 = vld [vmem:[%s314 + $0xac] sm:$0xf]
                  %367 = vst [vmem:[%s315 + $0x64] sm:$0xf] %v366
                  %v368 = vld [vmem:[%s314 + $0xb0] sm:$0xf]
                  %369 = vst [vmem:[%s315 + $0x68] sm:$0xf] %v368
                  %v370 = vld [vmem:[%s314 + $0xb4] sm:$0xf]
                  %371 = vst [vmem:[%s315 + $0x6c] sm:$0xf] %v370
                  %v372 = vld [vmem:[%s314 + $0xb8] sm:$0xf]
                  %373 = vst [vmem:[%s315 + $0x70] sm:$0xf] %v372
                  %v374 = vld [vmem:[%s314 + $0xbc] sm:$0xf]
                  %375 = vst [vmem:[%s315 + $0x74] sm:$0xf] %v374
                  %v376 = vld [vmem:[%s314 + $0xc0] sm:$0xf]
                  %377 = vst [vmem:[%s315 + $0x78] sm:$0xf] %v376
                  %v378 = vld [vmem:[%s314 + $0xc4] sm:$0xf]
                  %379 = vst [vmem:[%s315 + $0x7c] sm:$0xf] %v378
                  %v380 = vld [vmem:[%s314 + $0xc8] sm:$0xf]
                  %381 = vst [vmem:[%s315 + $0x80] sm:$0xf] %v380
                  %v382 = vld [vmem:[%s314 + $0xcc] sm:$0xf]
                  %383 = vst [vmem:[%s315 + $0x84] sm:$0xf] %v382
                  %v384 = vld [vmem:[%s314 + $0xd0] sm:$0xf]
                  %385 = vst [vmem:[%s315 + $0x88] sm:$0xf] %v384
                  %v386 = vld [vmem:[%s314 + $0xd4] sm:$0xf]
                  %387 = vst [vmem:[%s315 + $0x8c] sm:$0xf] %v386
                  %v388 = vld [vmem:[%s314 + $0x120] sm:$0xf]
                  %389 = vst [vmem:[%s315 + $0x90] sm:$0xf] %v388
                  %v390 = vld [vmem:[%s314 + $0x124] sm:$0xf]
                  %391 = vst [vmem:[%s315 + $0x94] sm:$0xf] %v390
                  %v392 = vld [vmem:[%s314 + $0x128] sm:$0xf]
                  %393 = vst [vmem:[%s315 + $0x98] sm:$0xf] %v392
                  %v394 = vld [vmem:[%s314 + $0x12c] sm:$0xf]
                  %395 = vst [vmem:[%s315 + $0x9c] sm:$0xf] %v394
                  %v396 = vld [vmem:[%s314 + $0x130] sm:$0xf]
                  %397 = vst [vmem:[%s315 + $0xa0] sm:$0xf] %v396
                  %v398 = vld [vmem:[%s314 + $0x134] sm:$0xf]
                  %399 = vst [vmem:[%s315 + $0xa4] sm:$0xf] %v398
                  %v400 = vld [vmem:[%s314 + $0x138] sm:$0xf]
                  %401 = vst [vmem:[%s315 + $0xa8] sm:$0xf] %v400
                  %v402 = vld [vmem:[%s314 + $0x13c] sm:$0xf]
                  %403 = vst [vmem:[%s315 + $0xac] sm:$0xf] %v402
                  %v404 = vld [vmem:[%s314 + $0x140] sm:$0xf]
                  %405 = vst [vmem:[%s315 + $0xb0] sm:$0xf] %v404
                  %v406 = vld [vmem:[%s314 + $0x144] sm:$0xf]
                  %407 = vst [vmem:[%s315 + $0xb4] sm:$0xf] %v406
                  %v408 = vld [vmem:[%s314 + $0x148] sm:$0xf]
                  %409 = vst [vmem:[%s315 + $0xb8] sm:$0xf] %v408
                  %v410 = vld [vmem:[%s314 + $0x14c] sm:$0xf]
                  %411 = vst [vmem:[%s315 + $0xbc] sm:$0xf] %v410
                  %v412 = vld [vmem:[%s314 + $0x150] sm:$0xf]
                  %413 = vst [vmem:[%s315 + $0xc0] sm:$0xf] %v412
                  %v414 = vld [vmem:[%s314 + $0x154] sm:$0xf]
                  %415 = vst [vmem:[%s315 + $0xc4] sm:$0xf] %v414
                  %v416 = vld [vmem:[%s314 + $0x158] sm:$0xf]
                  %417 = vst [vmem:[%s315 + $0xc8] sm:$0xf] %v416
                  %v418 = vld [vmem:[%s314 + $0x15c] sm:$0xf]
                  %419 = vst [vmem:[%s315 + $0xcc] sm:$0xf] %v418
                  %v420 = vld [vmem:[%s314 + $0x160] sm:$0xf]
                  %421 = vst [vmem:[%s315 + $0xd0] sm:$0xf] %v420
                  %v422 = vld [vmem:[%s314 + $0x164] sm:$0xf]
                  %423 = vst [vmem:[%s315 + $0xd4] sm:$0xf] %v422
                  %v424 = vld [vmem:[%s314 + $0x1b0] sm:$0xf]
                  %425 = vst [vmem:[%s315 + $0xd8] sm:$0xf] %v424
                  %v426 = vld [vmem:[%s314 + $0x1b4] sm:$0xf]
                  %427 = vst [vmem:[%s315 + $0xdc] sm:$0xf] %v426
                  %v428 = vld [vmem:[%s314 + $0x1b8] sm:$0xf]
                  %429 = vst [vmem:[%s315 + $0xe0] sm:$0xf] %v428
                  %v430 = vld [vmem:[%s314 + $0x1bc] sm:$0xf]
                  %431 = vst [vmem:[%s315 + $0xe4] sm:$0xf] %v430
                  %v432 = vld [vmem:[%s314 + $0x1c0] sm:$0xf]
                  %433 = vst [vmem:[%s315 + $0xe8] sm:$0xf] %v432
                  %v434 = vld [vmem:[%s314 + $0x1c4] sm:$0xf]
                  %435 = vst [vmem:[%s315 + $0xec] sm:$0xf] %v434
                  %v436 = vld [vmem:[%s314 + $0x1c8] sm:$0xf]
                  %437 = vst [vmem:[%s315 + $0xf0] sm:$0xf] %v436
                  %v438 = vld [vmem:[%s314 + $0x1cc] sm:$0xf]
                  %439 = vst [vmem:[%s315 + $0xf4] sm:$0xf] %v438
                  %v440 = vld [vmem:[%s314 + $0x1d0] sm:$0xf]
                  %441 = vst [vmem:[%s315 + $0xf8] sm:$0xf] %v440
                  %v442 = vld [vmem:[%s314 + $0x1d4] sm:$0xf]
                  %443 = vst [vmem:[%s315 + $0xfc] sm:$0xf] %v442
                  %v444 = vld [vmem:[%s314 + $0x1d8] sm:$0xf]
                  %445 = vst [vmem:[%s315 + $0x100] sm:$0xf] %v444
                  %v446 = vld [vmem:[%s314 + $0x1dc] sm:$0xf]
                  %447 = vst [vmem:[%s315 + $0x104] sm:$0xf] %v446
                  %v448 = vld [vmem:[%s314 + $0x1e0] sm:$0xf]
                  %449 = vst [vmem:[%s315 + $0x108] sm:$0xf] %v448
                  %v450 = vld [vmem:[%s314 + $0x1e4] sm:$0xf]
                  %451 = vst [vmem:[%s315 + $0x10c] sm:$0xf] %v450
                  %v452 = vld [vmem:[%s314 + $0x1e8] sm:$0xf]
                  %453 = vst [vmem:[%s315 + $0x110] sm:$0xf] %v452
                  %v454 = vld [vmem:[%s314 + $0x1ec] sm:$0xf]
                  %455 = vst [vmem:[%s315 + $0x114] sm:$0xf] %v454
                  %v456 = vld [vmem:[%s314 + $0x1f0] sm:$0xf]
                  %457 = vst [vmem:[%s315 + $0x118] sm:$0xf] %v456
                  %v458 = vld [vmem:[%s314 + $0x1f4] sm:$0xf]
                  %459 = vst [vmem:[%s315 + $0x11c] sm:$0xf] %v458
                $region63: #{bottleneck_forward.9} parent=50 // loop_footer
                  %s313 = sadd.s32 1, %s309
                $region64: #{bottleneck_forward.9} parent=50 // loop_footer_branch
                  %308 = sbr.rel target = $region60
                $region65: #{bottleneck_forward.9} parent=50 // loop_exit
                  _
              $region51: #{bottleneck_forward.9} parent=35 // pred_fallthru
                _
            $region36: #{bottleneck_forward.9} parent=31 // pred_fallthru
              _
            // Predicated region
            $region37: #{bottleneck_forward.9} parent=31 // pred_check
              _
            $region38: #{bottleneck_forward.9} parent=31 // pred_check_branch
              %143 = sbr.rel (0) target = $region40
            $region39: #{bottleneck_forward.9} parent=31 // pred_region
              loop: start=0, step=1, limit=1
              $region41: #{bottleneck_forward.9} parent=39 // loop_pre_header
                _
              $region42: #{bottleneck_forward.9} parent=39 // loop_header
                %s146 = sphi 0, %s150
                %p147 = scmp.ge.s32.totalorder %s146, 1
                %s151 = sphi %s137, %s137
                %s152 = sphi %s134, %s134
              $region43: #{bottleneck_forward.9} parent=39 // loop_header_branch
                %149 = sbr.rel (%p147) target = $region47
              $region44: #{bottleneck_forward.9} parent=39 // loop_body
                %v153 = vld [vmem:[%s151] sm:$0xf]
                %154 = vst [vmem:[%s152] sm:$0xf] %v153
                %v155 = vld [vmem:[%s151 + $0x4] sm:$0xf]
                %156 = vst [vmem:[%s152 + $0x4] sm:$0xf] %v155
                %v157 = vld [vmem:[%s151 + $0x8] sm:$0xf]
                %158 = vst [vmem:[%s152 + $0x8] sm:$0xf] %v157
                %v159 = vld [vmem:[%s151 + $0xc] sm:$0xf]
                %160 = vst [vmem:[%s152 + $0xc] sm:$0xf] %v159
                %v161 = vld [vmem:[%s151 + $0x10] sm:$0xf]
                %162 = vst [vmem:[%s152 + $0x10] sm:$0xf] %v161
                %v163 = vld [vmem:[%s151 + $0x14] sm:$0xf]
                %164 = vst [vmem:[%s152 + $0x14] sm:$0xf] %v163
                %v165 = vld [vmem:[%s151 + $0x18] sm:$0xf]
                %166 = vst [vmem:[%s152 + $0x18] sm:$0xf] %v165
                %v167 = vld [vmem:[%s151 + $0x1c] sm:$0xf]
                %168 = vst [vmem:[%s152 + $0x1c] sm:$0xf] %v167
                %v169 = vld [vmem:[%s151 + $0x20] sm:$0xf]
                %170 = vst [vmem:[%s152 + $0x20] sm:$0xf] %v169
                %v171 = vld [vmem:[%s151 + $0x24] sm:$0xf]
                %172 = vst [vmem:[%s152 + $0x24] sm:$0xf] %v171
                %v173 = vld [vmem:[%s151 + $0x28] sm:$0xf]
                %174 = vst [vmem:[%s152 + $0x28] sm:$0xf] %v173
                %v175 = vld [vmem:[%s151 + $0x2c] sm:$0xf]
                %176 = vst [vmem:[%s152 + $0x2c] sm:$0xf] %v175
                %v177 = vld [vmem:[%s151 + $0x30] sm:$0xf]
                %178 = vst [vmem:[%s152 + $0x30] sm:$0xf] %v177
                %v179 = vld [vmem:[%s151 + $0x34] sm:$0xf]
                %180 = vst [vmem:[%s152 + $0x34] sm:$0xf] %v179
                %v181 = vld [vmem:[%s151 + $0x38] sm:$0xf]
                %182 = vst [vmem:[%s152 + $0x38] sm:$0xf] %v181
                %v183 = vld [vmem:[%s151 + $0x3c] sm:$0xf]
                %184 = vst [vmem:[%s152 + $0x3c] sm:$0xf] %v183
                %v185 = vld [vmem:[%s151 + $0x40] sm:$0xf]
                %186 = vst [vmem:[%s152 + $0x40] sm:$0xf] %v185
                %v187 = vld [vmem:[%s151 + $0x44] sm:$0xf]
                %188 = vst [vmem:[%s152 + $0x44] sm:$0xf] %v187
                %v189 = vld [vmem:[%s151 + $0x90] sm:$0xf]
                %190 = vst [vmem:[%s152 + $0x48] sm:$0xf] %v189
                %v191 = vld [vmem:[%s151 + $0x94] sm:$0xf]
                %192 = vst [vmem:[%s152 + $0x4c] sm:$0xf] %v191
                %v193 = vld [vmem:[%s151 + $0x98] sm:$0xf]
                %194 = vst [vmem:[%s152 + $0x50] sm:$0xf] %v193
                %v195 = vld [vmem:[%s151 + $0x9c] sm:$0xf]
                %196 = vst [vmem:[%s152 + $0x54] sm:$0xf] %v195
                %v197 = vld [vmem:[%s151 + $0xa0] sm:$0xf]
                %198 = vst [vmem:[%s152 + $0x58] sm:$0xf] %v197
                %v199 = vld [vmem:[%s151 + $0xa4] sm:$0xf]
                %200 = vst [vmem:[%s152 + $0x5c] sm:$0xf] %v199
                %v201 = vld [vmem:[%s151 + $0xa8] sm:$0xf]
                %202 = vst [vmem:[%s152 + $0x60] sm:$0xf] %v201
                %v203 = vld [vmem:[%s151 + $0xac] sm:$0xf]
                %204 = vst [vmem:[%s152 + $0x64] sm:$0xf] %v203
                %v205 = vld [vmem:[%s151 + $0xb0] sm:$0xf]
                %206 = vst [vmem:[%s152 + $0x68] sm:$0xf] %v205
                %v207 = vld [vmem:[%s151 + $0xb4] sm:$0xf]
                %208 = vst [vmem:[%s152 + $0x6c] sm:$0xf] %v207
                %v209 = vld [vmem:[%s151 + $0xb8] sm:$0xf]
                %210 = vst [vmem:[%s152 + $0x70] sm:$0xf] %v209
                %v211 = vld [vmem:[%s151 + $0xbc] sm:$0xf]
                %212 = vst [vmem:[%s152 + $0x74] sm:$0xf] %v211
                %v213 = vld [vmem:[%s151 + $0xc0] sm:$0xf]
                %214 = vst [vmem:[%s152 + $0x78] sm:$0xf] %v213
                %v215 = vld [vmem:[%s151 + $0xc4] sm:$0xf]
                %216 = vst [vmem:[%s152 + $0x7c] sm:$0xf] %v215
                %v217 = vld [vmem:[%s151 + $0xc8] sm:$0xf]
                %218 = vst [vmem:[%s152 + $0x80] sm:$0xf] %v217
                %v219 = vld [vmem:[%s151 + $0xcc] sm:$0xf]
                %220 = vst [vmem:[%s152 + $0x84] sm:$0xf] %v219
                %v221 = vld [vmem:[%s151 + $0xd0] sm:$0xf]
                %222 = vst [vmem:[%s152 + $0x88] sm:$0xf] %v221
                %v223 = vld [vmem:[%s151 + $0xd4] sm:$0xf]
                %224 = vst [vmem:[%s152 + $0x8c] sm:$0xf] %v223
                %v225 = vld [vmem:[%s151 + $0x120] sm:$0xf]
                %226 = vst [vmem:[%s152 + $0x90] sm:$0xf] %v225
                %v227 = vld [vmem:[%s151 + $0x124] sm:$0xf]
                %228 = vst [vmem:[%s152 + $0x94] sm:$0xf] %v227
                %v229 = vld [vmem:[%s151 + $0x128] sm:$0xf]
                %230 = vst [vmem:[%s152 + $0x98] sm:$0xf] %v229
                %v231 = vld [vmem:[%s151 + $0x12c] sm:$0xf]
                %232 = vst [vmem:[%s152 + $0x9c] sm:$0xf] %v231
                %v233 = vld [vmem:[%s151 + $0x130] sm:$0xf]
                %234 = vst [vmem:[%s152 + $0xa0] sm:$0xf] %v233
                %v235 = vld [vmem:[%s151 + $0x134] sm:$0xf]
                %236 = vst [vmem:[%s152 + $0xa4] sm:$0xf] %v235
                %v237 = vld [vmem:[%s151 + $0x138] sm:$0xf]
                %238 = vst [vmem:[%s152 + $0xa8] sm:$0xf] %v237
                %v239 = vld [vmem:[%s151 + $0x13c] sm:$0xf]
                %240 = vst [vmem:[%s152 + $0xac] sm:$0xf] %v239
                %v241 = vld [vmem:[%s151 + $0x140] sm:$0xf]
                %242 = vst [vmem:[%s152 + $0xb0] sm:$0xf] %v241
                %v243 = vld [vmem:[%s151 + $0x144] sm:$0xf]
                %244 = vst [vmem:[%s152 + $0xb4] sm:$0xf] %v243
                %v245 = vld [vmem:[%s151 + $0x148] sm:$0xf]
                %246 = vst [vmem:[%s152 + $0xb8] sm:$0xf] %v245
                %v247 = vld [vmem:[%s151 + $0x14c] sm:$0xf]
                %248 = vst [vmem:[%s152 + $0xbc] sm:$0xf] %v247
                %v249 = vld [vmem:[%s151 + $0x150] sm:$0xf]
                %250 = vst [vmem:[%s152 + $0xc0] sm:$0xf] %v249
                %v251 = vld [vmem:[%s151 + $0x154] sm:$0xf]
                %252 = vst [vmem:[%s152 + $0xc4] sm:$0xf] %v251
                %v253 = vld [vmem:[%s151 + $0x158] sm:$0xf]
                %254 = vst [vmem:[%s152 + $0xc8] sm:$0xf] %v253
                %v255 = vld [vmem:[%s151 + $0x15c] sm:$0xf]
                %256 = vst [vmem:[%s152 + $0xcc] sm:$0xf] %v255
                %v257 = vld [vmem:[%s151 + $0x160] sm:$0xf]
                %258 = vst [vmem:[%s152 + $0xd0] sm:$0xf] %v257
                %v259 = vld [vmem:[%s151 + $0x164] sm:$0xf]
                %260 = vst [vmem:[%s152 + $0xd4] sm:$0xf] %v259
                %v261 = vld [vmem:[%s151 + $0x1b0] sm:$0xf]
                %262 = vst [vmem:[%s152 + $0xd8] sm:$0xf] %v261
                %v263 = vld [vmem:[%s151 + $0x1b4] sm:$0xf]
                %264 = vst [vmem:[%s152 + $0xdc] sm:$0xf] %v263
                %v265 = vld [vmem:[%s151 + $0x1b8] sm:$0xf]
                %266 = vst [vmem:[%s152 + $0xe0] sm:$0xf] %v265
                %v267 = vld [vmem:[%s151 + $0x1bc] sm:$0xf]
                %268 = vst [vmem:[%s152 + $0xe4] sm:$0xf] %v267
                %v269 = vld [vmem:[%s151 + $0x1c0] sm:$0xf]
                %270 = vst [vmem:[%s152 + $0xe8] sm:$0xf] %v269
                %v271 = vld [vmem:[%s151 + $0x1c4] sm:$0xf]
                %272 = vst [vmem:[%s152 + $0xec] sm:$0xf] %v271
                %v273 = vld [vmem:[%s151 + $0x1c8] sm:$0xf]
                %274 = vst [vmem:[%s152 + $0xf0] sm:$0xf] %v273
                %v275 = vld [vmem:[%s151 + $0x1cc] sm:$0xf]
                %276 = vst [vmem:[%s152 + $0xf4] sm:$0xf] %v275
                %v277 = vld [vmem:[%s151 + $0x1d0] sm:$0xf]
                %278 = vst [vmem:[%s152 + $0xf8] sm:$0xf] %v277
                %v279 = vld [vmem:[%s151 + $0x1d4] sm:$0xf]
                %280 = vst [vmem:[%s152 + $0xfc] sm:$0xf] %v279
                %v281 = vld [vmem:[%s151 + $0x1d8] sm:$0xf]
                %282 = vst [vmem:[%s152 + $0x100] sm:$0xf] %v281
                %v283 = vld [vmem:[%s151 + $0x1dc] sm:$0xf]
                %284 = vst [vmem:[%s152 + $0x104] sm:$0xf] %v283
                %v285 = vld [vmem:[%s151 + $0x1e0] sm:$0xf]
                %286 = vst [vmem:[%s152 + $0x108] sm:$0xf] %v285
                %v287 = vld [vmem:[%s151 + $0x1e4] sm:$0xf]
                %288 = vst [vmem:[%s152 + $0x10c] sm:$0xf] %v287
                %v289 = vld [vmem:[%s151 + $0x1e8] sm:$0xf]
                %290 = vst [vmem:[%s152 + $0x110] sm:$0xf] %v289
                %v291 = vld [vmem:[%s151 + $0x1ec] sm:$0xf]
                %292 = vst [vmem:[%s152 + $0x114] sm:$0xf] %v291
                %v293 = vld [vmem:[%s151 + $0x1f0] sm:$0xf]
                %294 = vst [vmem:[%s152 + $0x118] sm:$0xf] %v293
                %v295 = vld [vmem:[%s151 + $0x1f4] sm:$0xf]
                %296 = vst [vmem:[%s152 + $0x11c] sm:$0xf] %v295
              $region45: #{bottleneck_forward.9} parent=39 // loop_footer
                %s150 = sadd.s32 1, %s146
              $region46: #{bottleneck_forward.9} parent=39 // loop_footer_branch
                %145 = sbr.rel target = $region42
              $region47: #{bottleneck_forward.9} parent=39 // loop_exit
                _
            $region40: #{bottleneck_forward.9} parent=31 // pred_fallthru
              _
          $region32: #{bottleneck_forward.9} parent=27 // pred_fallthru
            _
          %460 = vnop
        $region28: #{bottleneck_forward.9} parent=23 // pred_fallthru
          _
      $region24: #{bottleneck_forward.9} parent=5 // pred_fallthru
        _
      %p461 = scmp.le.s32.totalorder 1, %s9
      %p462 = scmp.lt.s32.totalorder %s9, 3
      %p463 = pnand %p461, %p462
      %p464 = pneg %p463
      // Predicated region
      $region66: #{bottleneck_forward.9} parent=5 // pred_check
        _
      $region67: #{bottleneck_forward.9} parent=5 // pred_check_branch
        %466 = sbr.rel (%p463) target = $region69
      $region68: #{bottleneck_forward.9} parent=5 // pred_region
        %s467 = ssub.s32 %s9, 1
        %s468 = sand.u32 %s22, 1
        %s469 = sand.u32 %s22, 1
        %s470 = smul.addr %s469, 288
        %s471 = scalar_lea.vmem [#allocation2], %s470
        // Predicated region
        $region70: #{bottleneck_forward.9} parent=68 // pred_check
          %p472 = pneg %p35
        $region71: #{bottleneck_forward.9} parent=68 // pred_check_branch
          %474 = sbr.rel (%p472) target = $region73
        $region72: #{bottleneck_forward.9} parent=68 // pred_region
          _
        $region73: #{bottleneck_forward.9} parent=68 // pred_fallthru
          _
        %s475 = sand.u32 %s22, 1
        %s476 = sand.u32 %s22, 1
        %s477 = smul.addr %s476, 288
        %s478 = scalar_lea.vmem [#allocation2], %s477
        %p479 = pneg %p35
        %p480 = pneg %p32
        %p481 = pneg %p56
        %p482 = pneg %p53
        %p483 = pneg %p77
        %p484 = pneg %p74
        %p485 = pneg %p103
        %p486 = pneg %p100
        %p487 = scmp.lt.s32.totalorder %s14, 1
        %s488 = scalar_select %p487, %s14, 1
        %s489 = smul.addr %s488, 8
        %s490 = smul.addr %s489, 4
        %s491 = scalar_lea.vmem %s3, %s490
        %p492 = scmp.lt.s32.totalorder %s14, 1
        %s493 = scalar_select %p492, %s14, 1
        %s494 = smul.addr %s493, 8
        %s495 = smul.addr %s494, 4
        %s496 = scalar_lea.vmem %s3, %s495
        %v498 = vld [vmem:[%s471] sm:$0xf]
        %v499 = vld [vmem:[%s471 + $0x8] sm:$0xf]
        %v500 = vld [vmem:[%s471 + $0x10] sm:$0xf]
        %v501 = vld [vmem:[%s471 + $0x18] sm:$0xf]
        %v502 = vld [vmem:[%s471 + $0x20] sm:$0xf]
        %v503 = vld [vmem:[%s471 + $0x28] sm:$0xf]
        %v504 = vld [vmem:[%s471 + $0x30] sm:$0xf]
        %v505 = vld [vmem:[%s471 + $0x38] sm:$0xf]
        %v506 = vld [vmem:[%s1] sm:$0xf]
        %v507 = vld [vmem:[%s1 + $0x4] sm:$0xf]
        %s508 = scalar_lea.vmem %s471, 72 [#allocation2]
        %v509 = vld [vmem:[%s508] sm:$0xf]
        %v510 = vld [vmem:[%s508 + $0x8] sm:$0xf]
        %v511 = vld [vmem:[%s508 + $0x10] sm:$0xf]
        %v512 = vld [vmem:[%s508 + $0x18] sm:$0xf]
        %v513 = vld [vmem:[%s508 + $0x20] sm:$0xf]
        %v514 = vld [vmem:[%s508 + $0x28] sm:$0xf]
        %v515 = vld [vmem:[%s508 + $0x30] sm:$0xf]
        %v516 = vld [vmem:[%s508 + $0x38] sm:$0xf]
        %s517 = scalar_lea.vmem %s1, 8
        %v518 = vld [vmem:[%s517] sm:$0xf]
        %v519 = vld [vmem:[%s517 + $0x4] sm:$0xf]
        %v528 = vunpack.c.l.b16 %v509
        %v529 = vunpack.c.l.b16 %v510
        %v530 = vunpack.c.l.b16 %v511
        %v531 = vunpack.c.l.b16 %v512
        %v532 = vunpack.c.l.b16 %v513
        %v533 = vunpack.c.l.b16 %v514
        %v534 = vunpack.c.l.b16 %v515
        %v535 = vunpack.c.l.b16 %v516
        %v536 = vpack.c.b16 %v529, %v528
        %v537 = vpack.c.b16 %v531, %v530
        %v538 = vpack.c.b16 %v533, %v532
        %v539 = vpack.c.b16 %v535, %v534
        %v542 = vunpack.c.l.b16 %v518
        %v543 = vunpack.c.l.b16 %v519
        %v544 = vpack.c.b16 %v543, %v542
        %vm546 = vcmask 130048
        %v548 = vsel %vm546, %v536, 0
        %v551 = vsel %vm546, %v537, 0
        %v554 = vsel %vm546, %v538, 0
        %v557 = vsel %vm546, %v539, 0
        %559 = vmatprep.subr.bf16.mxu0 0
        %560 = vmatpush1.bf16.msra.mxu0 %v544
        %561 = vmatprep.subr.bf16.mxu0 0
        %562 = vmatpush1.bf16.msra.mxu0 0
        %563 = vmatprep.subr.bf16.mxu0 0
        %564 = vmatpush1.bf16.msra.mxu0 0
        %565 = vmatprep.subr.bf16.mxu0 0
        %566 = vmatpush1.bf16.msra.mxu0 0
        %567 = vmatprep.subr.bf16.mxu0 0
        %568 = vmatpush1.bf16.msra.mxu0 0
        %569 = vmatprep.subr.bf16.mxu0 0
        %570 = vmatpush1.bf16.msra.mxu0 0
        %571 = vmatprep.subr.bf16.mxu0 0
        %572 = vmatpush1.bf16.msra.mxu0 0
        %573 = vmatprep.subr.bf16.mxu0 0
        %574 = vmatpush1.bf16.msra.mxu0 0
        %575 = vmatprep.subr.bf16.mxu0 0
        %576 = vmatpush1.bf16.msra.mxu0 0
        %577 = vmatprep.subr.bf16.mxu0 0
        %578 = vmatpush1.bf16.msra.mxu0 0
        %579 = vmatprep.subr.bf16.mxu0 0
        %580 = vmatpush1.bf16.msra.mxu0 0
        %581 = vmatprep.subr.bf16.mxu0 0
        %582 = vmatpush1.bf16.msra.mxu0 0
        %583 = vmatprep.subr.bf16.mxu0 0
        %584 = vmatpush1.bf16.msra.mxu0 0
        %585 = vmatprep.subr.bf16.mxu0 0
        %586 = vmatpush1.bf16.msra.mxu0 0
        %587 = vmatprep.subr.bf16.mxu0 0
        %588 = vmatpush1.bf16.msra.mxu0 0
        %589 = vmatprep.subr.bf16.mxu0 0
        %590 = vmatpush1.bf16.msra.mxu0 0
        %591 = vmatprep.mubr.bf16.mxu0 0
        %592 = vmatmul.mubr.bf16.gmra.mrb[0].mxu0 %v548
        %v593 = vpop.f32.mrb[0].mxu0
        %v594 = vadd.f32 0.0, %v593
        %v595 = vpop.f32.mrb[0].mxu0
        %v596 = vpop.f32.mrb[0].mxu0
        %v597 = vadd.f32 0.0, %v596
        %v598 = vpop.f32.mrb[0].mxu0
        %599 = vmatprep.mubr.bf16.mxu0 0
        %600 = vmatmul.mubr.bf16.gmra.mrb[0].mxu0 %v551
        %v601 = vpop.f32.mrb[0].mxu0
        %v602 = vadd.f32 0.0, %v601
        %v603 = vpop.f32.mrb[0].mxu0
        %v604 = vpop.f32.mrb[0].mxu0
        %v605 = vadd.f32 0.0, %v604
        %v606 = vpop.f32.mrb[0].mxu0
        %607 = vmatprep.mubr.bf16.mxu0 0
        %608 = vmatmul.mubr.bf16.gmra.mrb[0].mxu0 %v554
        %v609 = vpop.f32.mrb[0].mxu0
        %v610 = vadd.f32 0.0, %v609
        %v611 = vpop.f32.mrb[0].mxu0
        %v612 = vpop.f32.mrb[0].mxu0
        %v613 = vadd.f32 0.0, %v612
        %v614 = vpop.f32.mrb[0].mxu0
        %615 = vmatprep.mubr.bf16.mxu0 0
        %616 = vmatmul.mubr.bf16.gmra.mrb[0].mxu0 %v557
        %v617 = vpop.f32.mrb[0].mxu0
        %v618 = vadd.f32 0.0, %v617
        %v619 = vpop.f32.mrb[0].mxu0
        %v620 = vpop.f32.mrb[0].mxu0
        %v621 = vadd.f32 0.0, %v620
        %v622 = vpop.f32.mrb[0].mxu0
        %623 = vdwg.mxu0
        %v632 = vunpack.c.l.b16 %v498
        %v633 = vunpack.c.l.b16 %v499
        %v634 = vunpack.c.l.b16 %v500
        %v635 = vunpack.c.l.b16 %v501
        %v636 = vunpack.c.l.b16 %v502
        %v637 = vunpack.c.l.b16 %v503
        %v638 = vunpack.c.l.b16 %v504
        %v639 = vunpack.c.l.b16 %v505
        %v640 = vpack.c.b16 %v633, %v632
        %v641 = vpack.c.b16 %v635, %v634
        %v642 = vpack.c.b16 %v637, %v636
        %v643 = vpack.c.b16 %v639, %v638
        %v646 = vunpack.c.l.b16 %v506
        %v647 = vunpack.c.l.b16 %v507
        %v648 = vpack.c.b16 %v647, %v646
        %v651 = vsel %vm546, %v640, 0
        %v654 = vsel %vm546, %v641, 0
        %v657 = vsel %vm546, %v642, 0
        %v660 = vsel %vm546, %v643, 0
        %662 = vmatprep.subr.bf16.mxu0 0
        %663 = vmatpush1.bf16.msra.mxu0 %v648
        %664 = vmatprep.subr.bf16.mxu0 0
        %665 = vmatpush1.bf16.msra.mxu0 0
        %666 = vmatprep.subr.bf16.mxu0 0
        %667 = vmatpush1.bf16.msra.mxu0 0
        %668 = vmatprep.subr.bf16.mxu0 0
        %669 = vmatpush1.bf16.msra.mxu0 0
        %670 = vmatprep.subr.bf16.mxu0 0
        %671 = vmatpush1.bf16.msra.mxu0 0
        %672 = vmatprep.subr.bf16.mxu0 0
        %673 = vmatpush1.bf16.msra.mxu0 0
        %674 = vmatprep.subr.bf16.mxu0 0
        %675 = vmatpush1.bf16.msra.mxu0 0
        %676 = vmatprep.subr.bf16.mxu0 0
        %677 = vmatpush1.bf16.msra.mxu0 0
        %678 = vmatprep.subr.bf16.mxu0 0
        %679 = vmatpush1.bf16.msra.mxu0 0
        %680 = vmatprep.subr.bf16.mxu0 0
        %681 = vmatpush1.bf16.msra.mxu0 0
        %682 = vmatprep.subr.bf16.mxu0 0
        %683 = vmatpush1.bf16.msra.mxu0 0
        %684 = vmatprep.subr.bf16.mxu0 0
        %685 = vmatpush1.bf16.msra.mxu0 0
        %686 = vmatprep.subr.bf16.mxu0 0
        %687 = vmatpush1.bf16.msra.mxu0 0
        %688 = vmatprep.subr.bf16.mxu0 0
        %689 = vmatpush1.bf16.msra.mxu0 0
        %690 = vmatprep.subr.bf16.mxu0 0
        %691 = vmatpush1.bf16.msra.mxu0 0
        %692 = vmatprep.subr.bf16.mxu0 0
        %693 = vmatpush1.bf16.msra.mxu0 0
        %694 = vmatprep.mubr.bf16.mxu0 0
        %695 = vmatmul.mubr.bf16.gmra.mrb[0].mxu0 %v651
        %v696 = vpop.f32.mrb[0].mxu0
        %v697 = vadd.f32 %v594, %v696
        %v698 = vpop.f32.mrb[0].mxu0
        %v699 = vpop.f32.mrb[0].mxu0
        %v700 = vadd.f32 %v597, %v699
        %v701 = vpop.f32.mrb[0].mxu0
        %702 = vmatprep.mubr.bf16.mxu0 0
        %703 = vmatmul.mubr.bf16.gmra.mrb[0].mxu0 %v654
        %v704 = vpop.f32.mrb[0].mxu0
        %v705 = vadd.f32 %v602, %v704
        %v706 = vpop.f32.mrb[0].mxu0
        %v707 = vpop.f32.mrb[0].mxu0
        %v708 = vadd.f32 %v605, %v707
        %v709 = vpop.f32.mrb[0].mxu0
        %710 = vmatprep.mubr.bf16.mxu0 0
        %711 = vmatmul.mubr.bf16.gmra.mrb[0].mxu0 %v657
        %v712 = vpop.f32.mrb[0].mxu0
        %v713 = vadd.f32 %v610, %v712
        %v714 = vpop.f32.mrb[0].mxu0
        %v715 = vpop.f32.mrb[0].mxu0
        %v716 = vadd.f32 %v613, %v715
        %v717 = vpop.f32.mrb[0].mxu0
        %718 = vmatprep.mubr.bf16.mxu0 0
        %719 = vmatmul.mubr.bf16.gmra.mrb[0].mxu0 %v660
        %v720 = vpop.f32.mrb[0].mxu0
        %v721 = vadd.f32 %v618, %v720
        %v722 = vpop.f32.mrb[0].mxu0
        %v723 = vpop.f32.mrb[0].mxu0
        %v724 = vadd.f32 %v621, %v723
        %v725 = vpop.f32.mrb[0].mxu0
        %726 = vdwg.mxu0
        %v727 = vld [vmem:[%s471] sm:$0xf]
        %v728 = vld [vmem:[%s471 + $0x4] sm:$0x1]
        %v729 = vld [vmem:[%s471 + $0x8] sm:$0xf]
        %v730 = vld [vmem:[%s471 + $0xc] sm:$0x1]
        %v731 = vld [vmem:[%s471 + $0x10] sm:$0xf]
        %v732 = vld [vmem:[%s471 + $0x14] sm:$0x1]
        %v733 = vld [vmem:[%s471 + $0x18] sm:$0xf]
        %v734 = vld [vmem:[%s471 + $0x1c] sm:$0x1]
        %v735 = vld [vmem:[%s471 + $0x20] sm:$0xf]
        %v736 = vld [vmem:[%s471 + $0x24] sm:$0x1]
        %v737 = vld [vmem:[%s471 + $0x28] sm:$0xf]
        %v738 = vld [vmem:[%s471 + $0x2c] sm:$0x1]
        %v739 = vld [vmem:[%s471 + $0x30] sm:$0xf]
        %v740 = vld [vmem:[%s471 + $0x34] sm:$0x1]
        %v741 = vld [vmem:[%s471 + $0x38] sm:$0xf]
        %v742 = vld [vmem:[%s471 + $0x3c] sm:$0x1]
        %vm743 = vsmask.f32 3328
        %vm744 = vsmask.f32 7440
        %vm745 = vmor %vm743, %vm744
        %v747 = vshrl.u32 %v727, 16
        %v749 = vrot.slane %v747, 4
        %v750 = vshll.u32 %v727, 16
        %v752 = vrot.slane %v750, 5
        %v753 = vor.u32 %v749, %v752
        %v754 = vrot.slane %v753, 4
        %v756 = vshll.u32 %v728, 16
        %v758 = vrot.slane %v756, 5
        %v759 = vsel %vm745, %v754, %v758
        %v761 = vshrl.u32 %v729, 16
        %v763 = vrot.slane %v761, 4
        %v764 = vshll.u32 %v729, 16
        %v766 = vrot.slane %v764, 5
        %v767 = vor.u32 %v763, %v766
        %v768 = vrot.slane %v767, 4
        %v770 = vshll.u32 %v730, 16
        %v772 = vrot.slane %v770, 5
        %v773 = vsel %vm745, %v768, %v772
        %v775 = vshrl.u32 %v731, 16
        %v777 = vrot.slane %v775, 4
        %v778 = vshll.u32 %v731, 16
        %v780 = vrot.slane %v778, 5
        %v781 = vor.u32 %v777, %v780
        %v782 = vrot.slane %v781, 4
        %v784 = vshll.u32 %v732, 16
        %v786 = vrot.slane %v784, 5
        %v787 = vsel %vm745, %v782, %v786
        %v789 = vshrl.u32 %v733, 16
        %v791 = vrot.slane %v789, 4
        %v792 = vshll.u32 %v733, 16
        %v794 = vrot.slane %v792, 5
        %v795 = vor.u32 %v791, %v794
        %v796 = vrot.slane %v795, 4
        %v798 = vshll.u32 %v734, 16
        %v800 = vrot.slane %v798, 5
        %v801 = vsel %vm745, %v796, %v800
        %v803 = vshrl.u32 %v735, 16
        %v805 = vrot.slane %v803, 4
        %v806 = vshll.u32 %v735, 16
        %v808 = vrot.slane %v806, 5
        %v809 = vor.u32 %v805, %v808
        %v810 = vrot.slane %v809, 4
        %v812 = vshll.u32 %v736, 16
        %v814 = vrot.slane %v812, 5
        %v815 = vsel %vm745, %v810, %v814
        %v817 = vshrl.u32 %v737, 16
        %v819 = vrot.slane %v817, 4
        %v820 = vshll.u32 %v737, 16
        %v822 = vrot.slane %v820, 5
        %v823 = vor.u32 %v819, %v822
        %v824 = vrot.slane %v823, 4
        %v826 = vshll.u32 %v738, 16
        %v828 = vrot.slane %v826, 5
        %v829 = vsel %vm745, %v824, %v828
        %v831 = vshrl.u32 %v739, 16
        %v833 = vrot.slane %v831, 4
        %v834 = vshll.u32 %v739, 16
        %v836 = vrot.slane %v834, 5
        %v837 = vor.u32 %v833, %v836
        %v838 = vrot.slane %v837, 4
        %v840 = vshll.u32 %v740, 16
        %v842 = vrot.slane %v840, 5
        %v843 = vsel %vm745, %v838, %v842
        %v845 = vshrl.u32 %v741, 16
        %v847 = vrot.slane %v845, 4
        %v848 = vshll.u32 %v741, 16
        %v850 = vrot.slane %v848, 5
        %v851 = vor.u32 %v847, %v850
        %v852 = vrot.slane %v851, 4
        %v854 = vshll.u32 %v742, 16
        %v856 = vrot.slane %v854, 5
        %v857 = vsel %vm745, %v852, %v856
        %s858 = scalar_lea.vmem %s1, 16
        %v859 = vld [vmem:[%s858] sm:$0xf]
        %v860 = vld [vmem:[%s858 + $0x4] sm:$0xf]
        %v861 = vunpack.c.l.b16 %v759
        %v862 = vunpack.c.l.b16 %v773
        %v863 = vunpack.c.l.b16 %v787
        %v864 = vunpack.c.l.b16 %v801
        %v865 = vunpack.c.l.b16 %v815
        %v866 = vunpack.c.l.b16 %v829
        %v867 = vunpack.c.l.b16 %v843
        %v868 = vunpack.c.l.b16 %v857
        %v869 = vpack.c.b16 %v862, %v861
        %v870 = vpack.c.b16 %v864, %v863
        %v871 = vpack.c.b16 %v866, %v865
        %v872 = vpack.c.b16 %v868, %v867
        %v875 = vunpack.c.l.b16 %v859
        %v876 = vunpack.c.l.b16 %v860
        %v877 = vpack.c.b16 %v876, %v875
        %v880 = vsel %vm546, %v869, 0
        %v883 = vsel %vm546, %v870, 0
        %v886 = vsel %vm546, %v871, 0
        %v889 = vsel %vm546, %v872, 0
        %891 = vmatprep.subr.bf16.mxu0 0
        %892 = vmatpush1.bf16.msra.mxu0 %v877
        %893 = vmatprep.subr.bf16.mxu0 0
        %894 = vmatpush1.bf16.msra.mxu0 0
        %895 = vmatprep.subr.bf16.mxu0 0
        %896 = vmatpush1.bf16.msra.mxu0 0
        %897 = vmatprep.subr.bf16.mxu0 0
        %898 = vmatpush1.bf16.msra.mxu0 0
        %899 = vmatprep.subr.bf16.mxu0 0
        %900 = vmatpush1.bf16.msra.mxu0 0
        %901 = vmatprep.subr.bf16.mxu0 0
        %902 = vmatpush1.bf16.msra.mxu0 0
        %903 = vmatprep.subr.bf16.mxu0 0
        %904 = vmatpush1.bf16.msra.mxu0 0
        %905 = vmatprep.subr.bf16.mxu0 0
        %906 = vmatpush1.bf16.msra.mxu0 0
        %907 = vmatprep.subr.bf16.mxu0 0
        %908 = vmatpush1.bf16.msra.mxu0 0
        %909 = vmatprep.subr.bf16.mxu0 0
        %910 = vmatpush1.bf16.msra.mxu0 0
        %911 = vmatprep.subr.bf16.mxu0 0
        %912 = vmatpush1.bf16.msra.mxu0 0
        %913 = vmatprep.subr.bf16.mxu0 0
        %914 = vmatpush1.bf16.msra.mxu0 0
        %915 = vmatprep.subr.bf16.mxu0 0
        %916 = vmatpush1.bf16.msra.mxu0 0
        %917 = vmatprep.subr.bf16.mxu0 0
        %918 = vmatpush1.bf16.msra.mxu0 0
        %919 = vmatprep.subr.bf16.mxu0 0
        %920 = vmatpush1.bf16.msra.mxu0 0
        %921 = vmatprep.subr.bf16.mxu0 0
        %922 = vmatpush1.bf16.msra.mxu0 0
        %923 = vmatprep.mubr.bf16.mxu0 0
        %924 = vmatmul.mubr.bf16.gmra.mrb[0].mxu0 %v880
        %v925 = vpop.f32.mrb[0].mxu0
        %v926 = vadd.f32 0.0, %v925
        %v927 = vpop.f32.mrb[0].mxu0
        %v928 = vpop.f32.mrb[0].mxu0
        %v929 = vadd.f32 0.0, %v928
        %v930 = vpop.f32.mrb[0].mxu0
        %931 = vmatprep.mubr.bf16.mxu0 0
        %932 = vmatmul.mubr.bf16.gmra.mrb[0].mxu0 %v883
        %v933 = vpop.f32.mrb[0].mxu0
        %v934 = vadd.f32 0.0, %v933
        %v935 = vpop.f32.mrb[0].mxu0
        %v936 = vpop.f32.mrb[0].mxu0
        %v937 = vadd.f32 0.0, %v936
        %v938 = vpop.f32.mrb[0].mxu0
        %939 = vmatprep.mubr.bf16.mxu0 0
        %940 = vmatmul.mubr.bf16.gmra.mrb[0].mxu0 %v886
        %v941 = vpop.f32.mrb[0].mxu0
        %v942 = vadd.f32 0.0, %v941
        %v943 = vpop.f32.mrb[0].mxu0
        %v944 = vpop.f32.mrb[0].mxu0
        %v945 = vadd.f32 0.0, %v944
        %v946 = vpop.f32.mrb[0].mxu0
        %947 = vmatprep.mubr.bf16.mxu0 0
        %948 = vmatmul.mubr.bf16.gmra.mrb[0].mxu0 %v889
        %v949 = vpop.f32.mrb[0].mxu0
        %v950 = vadd.f32 0.0, %v949
        %v951 = vpop.f32.mrb[0].mxu0
        %v952 = vpop.f32.mrb[0].mxu0
        %v953 = vadd.f32 0.0, %v952
        %v954 = vpop.f32.mrb[0].mxu0
        %955 = vdwg.mxu0
        %v956 = vadd.f32 %v697, %v926
        %v957 = vadd.f32 %v700, %v929
        %v958 = vadd.f32 %v705, %v934
        %v959 = vadd.f32 %v708, %v937
        %v960 = vadd.f32 %v713, %v942
        %v961 = vadd.f32 %v716, %v945
        %v962 = vadd.f32 %v721, %v950
        %v963 = vadd.f32 %v724, %v953
        %s964 = scalar_lea.vmem %s471, 144 [#allocation2]
        %v965 = vld [vmem:[%s964] sm:$0xf]
        %v966 = vld [vmem:[%s964 + $0x8] sm:$0xf]
        %v967 = vld [vmem:[%s964 + $0x10] sm:$0xf]
        %v968 = vld [vmem:[%s964 + $0x18] sm:$0xf]
        %v969 = vld [vmem:[%s964 + $0x20] sm:$0xf]
        %v970 = vld [vmem:[%s964 + $0x28] sm:$0xf]
        %v971 = vld [vmem:[%s964 + $0x30] sm:$0xf]
        %v972 = vld [vmem:[%s964 + $0x38] sm:$0xf]
        %s973 = scalar_lea.vmem %s1, 24
        %v974 = vld [vmem:[%s973] sm:$0xf]
        %v975 = vld [vmem:[%s973 + $0x4] sm:$0xf]
        %v984 = vunpack.c.l.b16 %v965
        %v985 = vunpack.c.l.b16 %v966
        %v986 = vunpack.c.l.b16 %v967
        %v987 = vunpack.c.l.b16 %v968
        %v988 = vunpack.c.l.b16 %v969
        %v989 = vunpack.c.l.b16 %v970
        %v990 = vunpack.c.l.b16 %v971
        %v991 = vunpack.c.l.b16 %v972
        %v992 = vpack.c.b16 %v985, %v984
        %v993 = vpack.c.b16 %v987, %v986
        %v994 = vpack.c.b16 %v989, %v988
        %v995 = vpack.c.b16 %v991, %v990
        %v998 = vunpack.c.l.b16 %v974
        %v999 = vunpack.c.l.b16 %v975
        %v1000 = vpack.c.b16 %v999, %v998
        %v1003 = vsel %vm546, %v992, 0
        %v1006 = vsel %vm546, %v993, 0
        %v1009 = vsel %vm546, %v994, 0
        %v1012 = vsel %vm546, %v995, 0
        %1014 = vmatprep.subr.bf16.mxu0 0
        %1015 = vmatpush1.bf16.msra.mxu0 %v1000
        %1016 = vmatprep.subr.bf16.mxu0 0
        %1017 = vmatpush1.bf16.msra.mxu0 0
        %1018 = vmatprep.subr.bf16.mxu0 0
        %1019 = vmatpush1.bf16.msra.mxu0 0
        %1020 = vmatprep.subr.bf16.mxu0 0
        %1021 = vmatpush1.bf16.msra.mxu0 0
        %1022 = vmatprep.subr.bf16.mxu0 0
        %1023 = vmatpush1.bf16.msra.mxu0 0
        %1024 = vmatprep.subr.bf16.mxu0 0
        %1025 = vmatpush1.bf16.msra.mxu0 0
        %1026 = vmatprep.subr.bf16.mxu0 0
        %1027 = vmatpush1.bf16.msra.mxu0 0
        %1028 = vmatprep.subr.bf16.mxu0 0
        %1029 = vmatpush1.bf16.msra.mxu0 0
        %1030 = vmatprep.subr.bf16.mxu0 0
        %1031 = vmatpush1.bf16.msra.mxu0 0
        %1032 = vmatprep.subr.bf16.mxu0 0
        %1033 = vmatpush1.bf16.msra.mxu0 0
        %1034 = vmatprep.subr.bf16.mxu0 0
        %1035 = vmatpush1.bf16.msra.mxu0 0
        %1036 = vmatprep.subr.bf16.mxu0 0
        %1037 = vmatpush1.bf16.msra.mxu0 0
        %1038 = vmatprep.subr.bf16.mxu0 0
        %1039 = vmatpush1.bf16.msra.mxu0 0
        %1040 = vmatprep.subr.bf16.mxu0 0
        %1041 = vmatpush1.bf16.msra.mxu0 0
        %1042 = vmatprep.subr.bf16.mxu0 0
        %1043 = vmatpush1.bf16.msra.mxu0 0
        %1044 = vmatprep.subr.bf16.mxu0 0
        %1045 = vmatpush1.bf16.msra.mxu0 0
        %1046 = vmatprep.mubr.bf16.mxu0 0
        %1047 = vmatmul.mubr.bf16.gmra.mrb[0].mxu0 %v1003
        %v1048 = vpop.f32.mrb[0].mxu0
        %v1049 = vadd.f32 0.0, %v1048
        %v1050 = vpop.f32.mrb[0].mxu0
        %v1051 = vpop.f32.mrb[0].mxu0
        %v1052 = vadd.f32 0.0, %v1051
        %v1053 = vpop.f32.mrb[0].mxu0
        %1054 = vmatprep.mubr.bf16.mxu0 0
        %1055 = vmatmul.mubr.bf16.gmra.mrb[0].mxu0 %v1006
        %v1056 = vpop.f32.mrb[0].mxu0
        %v1057 = vadd.f32 0.0, %v1056
        %v1058 = vpop.f32.mrb[0].mxu0
        %v1059 = vpop.f32.mrb[0].mxu0
        %v1060 = vadd.f32 0.0, %v1059
        %v1061 = vpop.f32.mrb[0].mxu0
        %1062 = vmatprep.mubr.bf16.mxu0 0
        %1063 = vmatmul.mubr.bf16.gmra.mrb[0].mxu0 %v1009
        %v1064 = vpop.f32.mrb[0].mxu0
        %v1065 = vadd.f32 0.0, %v1064
        %v1066 = vpop.f32.mrb[0].mxu0
        %v1067 = vpop.f32.mrb[0].mxu0
        %v1068 = vadd.f32 0.0, %v1067
        %v1069 = vpop.f32.mrb[0].mxu0
        %1070 = vmatprep.mubr.bf16.mxu0 0
        %1071 = vmatmul.mubr.bf16.gmra.mrb[0].mxu0 %v1012
        %v1072 = vpop.f32.mrb[0].mxu0
        %v1073 = vadd.f32 0.0, %v1072
        %v1074 = vpop.f32.mrb[0].mxu0
        %v1075 = vpop.f32.mrb[0].mxu0
        %v1076 = vadd.f32 0.0, %v1075
        %v1077 = vpop.f32.mrb[0].mxu0
        %1078 = vdwg.mxu0
        %v1079 = vadd.f32 %v956, %v1049
        %v1080 = vadd.f32 %v957, %v1052
        %v1081 = vadd.f32 %v958, %v1057
        %v1082 = vadd.f32 %v959, %v1060
        %v1083 = vadd.f32 %v960, %v1065
        %v1084 = vadd.f32 %v961, %v1068
        %v1085 = vadd.f32 %v962, %v1073
        %v1086 = vadd.f32 %v963, %v1076
        %s1087 = scalar_lea.vmem %s471, 216 [#allocation2]
        %v1088 = vld [vmem:[%s1087] sm:$0xf]
        %v1089 = vld [vmem:[%s1087 + $0x8] sm:$0xf]
        %v1090 = vld [vmem:[%s1087 + $0x10] sm:$0xf]
        %v1091 = vld [vmem:[%s1087 + $0x18] sm:$0xf]
        %v1092 = vld [vmem:[%s1087 + $0x20] sm:$0xf]
        %v1093 = vld [vmem:[%s1087 + $0x28] sm:$0xf]
        %v1094 = vld [vmem:[%s1087 + $0x30] sm:$0xf]
        %v1095 = vld [vmem:[%s1087 + $0x38] sm:$0xf]
        %s1096 = scalar_lea.vmem %s1, 32
        %v1097 = vld [vmem:[%s1096] sm:$0xf]
        %v1098 = vld [vmem:[%s1096 + $0x4] sm:$0xf]
        %v1107 = vunpack.c.l.b16 %v1088
        %v1108 = vunpack.c.l.b16 %v1089
        %v1109 = vunpack.c.l.b16 %v1090
        %v1110 = vunpack.c.l.b16 %v1091
        %v1111 = vunpack.c.l.b16 %v1092
        %v1112 = vunpack.c.l.b16 %v1093
        %v1113 = vunpack.c.l.b16 %v1094
        %v1114 = vunpack.c.l.b16 %v1095
        %v1115 = vpack.c.b16 %v1108, %v1107
        %v1116 = vpack.c.b16 %v1110, %v1109
        %v1117 = vpack.c.b16 %v1112, %v1111
        %v1118 = vpack.c.b16 %v1114, %v1113
        %v1121 = vunpack.c.l.b16 %v1097
        %v1122 = vunpack.c.l.b16 %v1098
        %v1123 = vpack.c.b16 %v1122, %v1121
        %v1126 = vsel %vm546, %v1115, 0
        %v1129 = vsel %vm546, %v1116, 0
        %v1132 = vsel %vm546, %v1117, 0
        %v1135 = vsel %vm546, %v1118, 0
        %1137 = vmatprep.subr.bf16.mxu0 0
        %1138 = vmatpush1.bf16.msra.mxu0 %v1123
        %1139 = vmatprep.subr.bf16.mxu0 0
        %1140 = vmatpush1.bf16.msra.mxu0 0
        %1141 = vmatprep.subr.bf16.mxu0 0
        %1142 = vmatpush1.bf16.msra.mxu0 0
        %1143 = vmatprep.subr.bf16.mxu0 0
        %1144 = vmatpush1.bf16.msra.mxu0 0
        %1145 = vmatprep.subr.bf16.mxu0 0
        %1146 = vmatpush1.bf16.msra.mxu0 0
        %1147 = vmatprep.subr.bf16.mxu0 0
        %1148 = vmatpush1.bf16.msra.mxu0 0
        %1149 = vmatprep.subr.bf16.mxu0 0
        %1150 = vmatpush1.bf16.msra.mxu0 0
        %1151 = vmatprep.subr.bf16.mxu0 0
        %1152 = vmatpush1.bf16.msra.mxu0 0
        %1153 = vmatprep.subr.bf16.mxu0 0
        %1154 = vmatpush1.bf16.msra.mxu0 0
        %1155 = vmatprep.subr.bf16.mxu0 0
        %1156 = vmatpush1.bf16.msra.mxu0 0
        %1157 = vmatprep.subr.bf16.mxu0 0
        %1158 = vmatpush1.bf16.msra.mxu0 0
        %1159 = vmatprep.subr.bf16.mxu0 0
        %1160 = vmatpush1.bf16.msra.mxu0 0
        %1161 = vmatprep.subr.bf16.mxu0 0
        %1162 = vmatpush1.bf16.msra.mxu0 0
        %1163 = vmatprep.subr.bf16.mxu0 0
        %1164 = vmatpush1.bf16.msra.mxu0 0
        %1165 = vmatprep.subr.bf16.mxu0 0
        %1166 = vmatpush1.bf16.msra.mxu0 0
        %1167 = vmatprep.subr.bf16.mxu0 0
        %1168 = vmatpush1.bf16.msra.mxu0 0
        %1169 = vmatprep.mubr.bf16.mxu0 0
        %1170 = vmatmul.mubr.bf16.gmra.mrb[0].mxu0 %v1126
        %v1171 = vpop.f32.mrb[0].mxu0
        %v1172 = vadd.f32 0.0, %v1171
        %v1173 = vpop.f32.mrb[0].mxu0
        %v1174 = vpop.f32.mrb[0].mxu0
        %v1175 = vadd.f32 0.0, %v1174
        %v1176 = vpop.f32.mrb[0].mxu0
        %1177 = vmatprep.mubr.bf16.mxu0 0
        %1178 = vmatmul.mubr.bf16.gmra.mrb[0].mxu0 %v1129
        %v1179 = vpop.f32.mrb[0].mxu0
        %v1180 = vadd.f32 0.0, %v1179
        %v1181 = vpop.f32.mrb[0].mxu0
        %v1182 = vpop.f32.mrb[0].mxu0
        %v1183 = vadd.f32 0.0, %v1182
        %v1184 = vpop.f32.mrb[0].mxu0
        %1185 = vmatprep.mubr.bf16.mxu0 0
        %1186 = vmatmul.mubr.bf16.gmra.mrb[0].mxu0 %v1132
        %v1187 = vpop.f32.mrb[0].mxu0
        %v1188 = vadd.f32 0.0, %v1187
        %v1189 = vpop.f32.mrb[0].mxu0
        %v1190 = vpop.f32.mrb[0].mxu0
        %v1191 = vadd.f32 0.0, %v1190
        %v1192 = vpop.f32.mrb[0].mxu0
        %1193 = vmatprep.mubr.bf16.mxu0 0
        %1194 = vmatmul.mubr.bf16.gmra.mrb[0].mxu0 %v1135
        %v1195 = vpop.f32.mrb[0].mxu0
        %v1196 = vadd.f32 0.0, %v1195
        %v1197 = vpop.f32.mrb[0].mxu0
        %v1198 = vpop.f32.mrb[0].mxu0
        %v1199 = vadd.f32 0.0, %v1198
        %v1200 = vpop.f32.mrb[0].mxu0
        %1201 = vdwg.mxu0
        %v1202 = vadd.f32 %v1079, %v1172
        %v1203 = vadd.f32 %v1080, %v1175
        %v1204 = vadd.f32 %v1081, %v1180
        %v1205 = vadd.f32 %v1082, %v1183
        %v1206 = vadd.f32 %v1083, %v1188
        %v1207 = vadd.f32 %v1084, %v1191
        %v1208 = vadd.f32 %v1085, %v1196
        %v1209 = vadd.f32 %v1086, %v1199
        %v1210 = vld [vmem:[%s964] sm:$0xf]
        %v1211 = vld [vmem:[%s964 + $0x4] sm:$0x1]
        %v1212 = vld [vmem:[%s964 + $0x8] sm:$0xf]
        %v1213 = vld [vmem:[%s964 + $0xc] sm:$0x1]
        %v1214 = vld [vmem:[%s964 + $0x10] sm:$0xf]
        %v1215 = vld [vmem:[%s964 + $0x14] sm:$0x1]
        %v1216 = vld [vmem:[%s964 + $0x18] sm:$0xf]
        %v1217 = vld [vmem:[%s964 + $0x1c] sm:$0x1]
        %v1218 = vld [vmem:[%s964 + $0x20] sm:$0xf]
        %v1219 = vld [vmem:[%s964 + $0x24] sm:$0x1]
        %v1220 = vld [vmem:[%s964 + $0x28] sm:$0xf]
        %v1221 = vld [vmem:[%s964 + $0x2c] sm:$0x1]
        %v1222 = vld [vmem:[%s964 + $0x30] sm:$0xf]
        %v1223 = vld [vmem:[%s964 + $0x34] sm:$0x1]
        %v1224 = vld [vmem:[%s964 + $0x38] sm:$0xf]
        %v1225 = vld [vmem:[%s964 + $0x3c] sm:$0x1]
        %v1227 = vshrl.u32 %v1210, 16
        %v1229 = vrot.slane %v1227, 4
        %v1230 = vshll.u32 %v1210, 16
        %v1232 = vrot.slane %v1230, 5
        %v1233 = vor.u32 %v1229, %v1232
        %v1234 = vrot.slane %v1233, 4
        %v1236 = vshll.u32 %v1211, 16
        %v1238 = vrot.slane %v1236, 5
        %v1239 = vsel %vm745, %v1234, %v1238
        %v1241 = vshrl.u32 %v1212, 16
        %v1243 = vrot.slane %v1241, 4
        %v1244 = vshll.u32 %v1212, 16
        %v1246 = vrot.slane %v1244, 5
        %v1247 = vor.u32 %v1243, %v1246
        %v1248 = vrot.slane %v1247, 4
        %v1250 = vshll.u32 %v1213, 16
        %v1252 = vrot.slane %v1250, 5
        %v1253 = vsel %vm745, %v1248, %v1252
        %v1255 = vshrl.u32 %v1214, 16
        %v1257 = vrot.slane %v1255, 4
        %v1258 = vshll.u32 %v1214, 16
        %v1260 = vrot.slane %v1258, 5
        %v1261 = vor.u32 %v1257, %v1260
        %v1262 = vrot.slane %v1261, 4
        %v1264 = vshll.u32 %v1215, 16
        %v1266 = vrot.slane %v1264, 5
        %v1267 = vsel %vm745, %v1262, %v1266
        %v1269 = vshrl.u32 %v1216, 16
        %v1271 = vrot.slane %v1269, 4
        %v1272 = vshll.u32 %v1216, 16
        %v1274 = vrot.slane %v1272, 5
        %v1275 = vor.u32 %v1271, %v1274
        %v1276 = vrot.slane %v1275, 4
        %v1278 = vshll.u32 %v1217, 16
        %v1280 = vrot.slane %v1278, 5
        %v1281 = vsel %vm745, %v1276, %v1280
        %v1283 = vshrl.u32 %v1218, 16
        %v1285 = vrot.slane %v1283, 4
        %v1286 = vshll.u32 %v1218, 16
        %v1288 = vrot.slane %v1286, 5
        %v1289 = vor.u32 %v1285, %v1288
        %v1290 = vrot.slane %v1289, 4
        %v1292 = vshll.u32 %v1219, 16
        %v1294 = vrot.slane %v1292, 5
        %v1295 = vsel %vm745, %v1290, %v1294
        %v1297 = vshrl.u32 %v1220, 16
        %v1299 = vrot.slane %v1297, 4
        %v1300 = vshll.u32 %v1220, 16
        %v1302 = vrot.slane %v1300, 5
        %v1303 = vor.u32 %v1299, %v1302
        %v1304 = vrot.slane %v1303, 4
        %v1306 = vshll.u32 %v1221, 16
        %v1308 = vrot.slane %v1306, 5
        %v1309 = vsel %vm745, %v1304, %v1308
        %v1311 = vshrl.u32 %v1222, 16
        %v1313 = vrot.slane %v1311, 4
        %v1314 = vshll.u32 %v1222, 16
        %v1316 = vrot.slane %v1314, 5
        %v1317 = vor.u32 %v1313, %v1316
        %v1318 = vrot.slane %v1317, 4
        %v1320 = vshll.u32 %v1223, 16
        %v1322 = vrot.slane %v1320, 5
        %v1323 = vsel %vm745, %v1318, %v1322
        %v1325 = vshrl.u32 %v1224, 16
        %v1327 = vrot.slane %v1325, 4
        %v1328 = vshll.u32 %v1224, 16
        %v1330 = vrot.slane %v1328, 5
        %v1331 = vor.u32 %v1327, %v1330
        %v1332 = vrot.slane %v1331, 4
        %v1334 = vshll.u32 %v1225, 16
        %v1336 = vrot.slane %v1334, 5
        %v1337 = vsel %vm745, %v1332, %v1336
        %s1338 = scalar_lea.vmem %s1, 40
        %v1339 = vld [vmem:[%s1338] sm:$0xf]
        %v1340 = vld [vmem:[%s1338 + $0x4] sm:$0xf]
        %v1341 = vunpack.c.l.b16 %v1239
        %v1342 = vunpack.c.l.b16 %v1253
        %v1343 = vunpack.c.l.b16 %v1267
        %v1344 = vunpack.c.l.b16 %v1281
        %v1345 = vunpack.c.l.b16 %v1295
        %v1346 = vunpack.c.l.b16 %v1309
        %v1347 = vunpack.c.l.b16 %v1323
        %v1348 = vunpack.c.l.b16 %v1337
        %v1349 = vpack.c.b16 %v1342, %v1341
        %v1350 = vpack.c.b16 %v1344, %v1343
        %v1351 = vpack.c.b16 %v1346, %v1345
        %v1352 = vpack.c.b16 %v1348, %v1347
        %v1355 = vunpack.c.l.b16 %v1339
        %v1356 = vunpack.c.l.b16 %v1340
        %v1357 = vpack.c.b16 %v1356, %v1355
        %v1360 = vsel %vm546, %v1349, 0
        %v1363 = vsel %vm546, %v1350, 0
        %v1366 = vsel %vm546, %v1351, 0
        %v1369 = vsel %vm546, %v1352, 0
        %1371 = vmatprep.subr.bf16.mxu0 0
        %1372 = vmatpush1.bf16.msra.mxu0 %v1357
        %1373 = vmatprep.subr.bf16.mxu0 0
        %1374 = vmatpush1.bf16.msra.mxu0 0
        %1375 = vmatprep.subr.bf16.mxu0 0
        %1376 = vmatpush1.bf16.msra.mxu0 0
        %1377 = vmatprep.subr.bf16.mxu0 0
        %1378 = vmatpush1.bf16.msra.mxu0 0
        %1379 = vmatprep.subr.bf16.mxu0 0
        %1380 = vmatpush1.bf16.msra.mxu0 0
        %1381 = vmatprep.subr.bf16.mxu0 0
        %1382 = vmatpush1.bf16.msra.mxu0 0
        %1383 = vmatprep.subr.bf16.mxu0 0
        %1384 = vmatpush1.bf16.msra.mxu0 0
        %1385 = vmatprep.subr.bf16.mxu0 0
        %1386 = vmatpush1.bf16.msra.mxu0 0
        %1387 = vmatprep.subr.bf16.mxu0 0
        %1388 = vmatpush1.bf16.msra.mxu0 0
        %1389 = vmatprep.subr.bf16.mxu0 0
        %1390 = vmatpush1.bf16.msra.mxu0 0
        %1391 = vmatprep.subr.bf16.mxu0 0
        %1392 = vmatpush1.bf16.msra.mxu0 0
        %1393 = vmatprep.subr.bf16.mxu0 0
        %1394 = vmatpush1.bf16.msra.mxu0 0
        %1395 = vmatprep.subr.bf16.mxu0 0
        %1396 = vmatpush1.bf16.msra.mxu0 0
        %1397 = vmatprep.subr.bf16.mxu0 0
        %1398 = vmatpush1.bf16.msra.mxu0 0
        %1399 = vmatprep.subr.bf16.mxu0 0
        %1400 = vmatpush1.bf16.msra.mxu0 0
        %1401 = vmatprep.subr.bf16.mxu0 0
        %1402 = vmatpush1.bf16.msra.mxu0 0
        %1403 = vmatprep.mubr.bf16.mxu0 0
        %1404 = vmatmul.mubr.bf16.gmra.mrb[0].mxu0 %v1360
        %v1405 = vpop.f32.mrb[0].mxu0
        %v1406 = vadd.f32 0.0, %v1405
        %v1407 = vpop.f32.mrb[0].mxu0
        %v1408 = vpop.f32.mrb[0].mxu0
        %v1409 = vadd.f32 0.0, %v1408
        %v1410 = vpop.f32.mrb[0].mxu0
        %1411 = vmatprep.mubr.bf16.mxu0 0
        %1412 = vmatmul.mubr.bf16.gmra.mrb[0].mxu0 %v1363
        %v1413 = vpop.f32.mrb[0].mxu0
        %v1414 = vadd.f32 0.0, %v1413
        %v1415 = vpop.f32.mrb[0].mxu0
        %v1416 = vpop.f32.mrb[0].mxu0
        %v1417 = vadd.f32 0.0, %v1416
        %v1418 = vpop.f32.mrb[0].mxu0
        %1419 = vmatprep.mubr.bf16.mxu0 0
        %1420 = vmatmul.mubr.bf16.gmra.mrb[0].mxu0 %v1366
        %v1421 = vpop.f32.mrb[0].mxu0
        %v1422 = vadd.f32 0.0, %v1421
        %v1423 = vpop.f32.mrb[0].mxu0
        %v1424 = vpop.f32.mrb[0].mxu0
        %v1425 = vadd.f32 0.0, %v1424
        %v1426 = vpop.f32.mrb[0].mxu0
        %1427 = vmatprep.mubr.bf16.mxu0 0
        %1428 = vmatmul.mubr.bf16.gmra.mrb[0].mxu0 %v1369
        %v1429 = vpop.f32.mrb[0].mxu0
        %v1430 = vadd.f32 0.0, %v1429
        %v1431 = vpop.f32.mrb[0].mxu0
        %v1432 = vpop.f32.mrb[0].mxu0
        %v1433 = vadd.f32 0.0, %v1432
        %v1434 = vpop.f32.mrb[0].mxu0
        %1435 = vdwg.mxu0
        %v1436 = vadd.f32 %v1202, %v1406
        %v1437 = vadd.f32 %v1203, %v1409
        %v1438 = vadd.f32 %v1204, %v1414
        %v1439 = vadd.f32 %v1205, %v1417
        %v1440 = vadd.f32 %v1206, %v1422
        %v1441 = vadd.f32 %v1207, %v1425
        %v1442 = vadd.f32 %v1208, %v1430
        %v1443 = vadd.f32 %v1209, %v1433
        %s1444 = scalar_lea.vmem %s471, 8 [#allocation2]
        %v1445 = vld [vmem:[%s1444] sm:$0xf]
        %v1446 = vld [vmem:[%s1444 + $0x8] sm:$0xf]
        %v1447 = vld [vmem:[%s1444 + $0x10] sm:$0xf]
        %v1448 = vld [vmem:[%s1444 + $0x18] sm:$0xf]
        %v1449 = vld [vmem:[%s1444 + $0x20] sm:$0xf]
        %v1450 = vld [vmem:[%s1444 + $0x28] sm:$0xf]
        %v1451 = vld [vmem:[%s1444 + $0x30] sm:$0xf]
        %v1452 = vld [vmem:[%s1444 + $0x38] sm:$0xf]
        %s1453 = scalar_lea.vmem %s1, 48
        %v1454 = vld [vmem:[%s1453] sm:$0xf]
        %v1455 = vld [vmem:[%s1453 + $0x4] sm:$0xf]
        %v1464 = vunpack.c.l.b16 %v1445
        %v1465 = vunpack.c.l.b16 %v1446
        %v1466 = vunpack.c.l.b16 %v1447
        %v1467 = vunpack.c.l.b16 %v1448
        %v1468 = vunpack.c.l.b16 %v1449
        %v1469 = vunpack.c.l.b16 %v1450
        %v1470 = vunpack.c.l.b16 %v1451
        %v1471 = vunpack.c.l.b16 %v1452
        %v1472 = vpack.c.b16 %v1465, %v1464
        %v1473 = vpack.c.b16 %v1467, %v1466
        %v1474 = vpack.c.b16 %v1469, %v1468
        %v1475 = vpack.c.b16 %v1471, %v1470
        %v1478 = vunpack.c.l.b16 %v1454
        %v1479 = vunpack.c.l.b16 %v1455
        %v1480 = vpack.c.b16 %v1479, %v1478
        %v1483 = vsel %vm546, %v1472, 0
        %v1486 = vsel %vm546, %v1473, 0
        %v1489 = vsel %vm546, %v1474, 0
        %v1492 = vsel %vm546, %v1475, 0
        %1494 = vmatprep.subr.bf16.mxu0 0
        %1495 = vmatpush1.bf16.msra.mxu0 %v1480
        %1496 = vmatprep.subr.bf16.mxu0 0
        %1497 = vmatpush1.bf16.msra.mxu0 0
        %1498 = vmatprep.subr.bf16.mxu0 0
        %1499 = vmatpush1.bf16.msra.mxu0 0
        %1500 = vmatprep.subr.bf16.mxu0 0
        %1501 = vmatpush1.bf16.msra.mxu0 0
        %1502 = vmatprep.subr.bf16.mxu0 0
        %1503 = vmatpush1.bf16.msra.mxu0 0
        %1504 = vmatprep.subr.bf16.mxu0 0
        %1505 = vmatpush1.bf16.msra.mxu0 0
        %1506 = vmatprep.subr.bf16.mxu0 0
        %1507 = vmatpush1.bf16.msra.mxu0 0
        %1508 = vmatprep.subr.bf16.mxu0 0
        %1509 = vmatpush1.bf16.msra.mxu0 0
        %1510 = vmatprep.subr.bf16.mxu0 0
        %1511 = vmatpush1.bf16.msra.mxu0 0
        %1512 = vmatprep.subr.bf16.mxu0 0
        %1513 = vmatpush1.bf16.msra.mxu0 0
        %1514 = vmatprep.subr.bf16.mxu0 0
        %1515 = vmatpush1.bf16.msra.mxu0 0
        %1516 = vmatprep.subr.bf16.mxu0 0
        %1517 = vmatpush1.bf16.msra.mxu0 0
        %1518 = vmatprep.subr.bf16.mxu0 0
        %1519 = vmatpush1.bf16.msra.mxu0 0
        %1520 = vmatprep.subr.bf16.mxu0 0
        %1521 = vmatpush1.bf16.msra.mxu0 0
        %1522 = vmatprep.subr.bf16.mxu0 0
        %1523 = vmatpush1.bf16.msra.mxu0 0
        %1524 = vmatprep.subr.bf16.mxu0 0
        %1525 = vmatpush1.bf16.msra.mxu0 0
        %1526 = vmatprep.mubr.bf16.mxu0 0
        %1527 = vmatmul.mubr.bf16.gmra.mrb[0].mxu0 %v1483
        %v1528 = vpop.f32.mrb[0].mxu0
        %v1529 = vadd.f32 0.0, %v1528
        %v1530 = vpop.f32.mrb[0].mxu0
        %v1531 = vpop.f32.mrb[0].mxu0
        %v1532 = vadd.f32 0.0, %v1531
        %v1533 = vpop.f32.mrb[0].mxu0
        %1534 = vmatprep.mubr.bf16.mxu0 0
        %1535 = vmatmul.mubr.bf16.gmra.mrb[0].mxu0 %v1486
        %v1536 = vpop.f32.mrb[0].mxu0
        %v1537 = vadd.f32 0.0, %v1536
        %v1538 = vpop.f32.mrb[0].mxu0
        %v1539 = vpop.f32.mrb[0].mxu0
        %v1540 = vadd.f32 0.0, %v1539
        %v1541 = vpop.f32.mrb[0].mxu0
        %1542 = vmatprep.mubr.bf16.mxu0 0
        %1543 = vmatmul.mubr.bf16.gmra.mrb[0].mxu0 %v1489
        %v1544 = vpop.f32.mrb[0].mxu0
        %v1545 = vadd.f32 0.0, %v1544
        %v1546 = vpop.f32.mrb[0].mxu0
        %v1547 = vpop.f32.mrb[0].mxu0
        %v1548 = vadd.f32 0.0, %v1547
        %v1549 = vpop.f32.mrb[0].mxu0
        %1550 = vmatprep.mubr.bf16.mxu0 0
        %1551 = vmatmul.mubr.bf16.gmra.mrb[0].mxu0 %v1492
        %v1552 = vpop.f32.mrb[0].mxu0
        %v1553 = vadd.f32 0.0, %v1552
        %v1554 = vpop.f32.mrb[0].mxu0
        %v1555 = vpop.f32.mrb[0].mxu0
        %v1556 = vadd.f32 0.0, %v1555
        %v1557 = vpop.f32.mrb[0].mxu0
        %1558 = vdwg.mxu0
        %v1559 = vadd.f32 %v1436, %v1529
        %v1560 = vadd.f32 %v1437, %v1532
        %v1561 = vadd.f32 %v1438, %v1537
        %v1562 = vadd.f32 %v1439, %v1540
        %v1563 = vadd.f32 %v1440, %v1545
        %v1564 = vadd.f32 %v1441, %v1548
        %v1565 = vadd.f32 %v1442, %v1553
        %v1566 = vadd.f32 %v1443, %v1556
        %s1567 = scalar_lea.vmem %s471, 80 [#allocation2]
        %v1568 = vld [vmem:[%s1567] sm:$0xf]
        %v1569 = vld [vmem:[%s1567 + $0x8] sm:$0xf]
        %v1570 = vld [vmem:[%s1567 + $0x10] sm:$0xf]
        %v1571 = vld [vmem:[%s1567 + $0x18] sm:$0xf]
        %v1572 = vld [vmem:[%s1567 + $0x20] sm:$0xf]
        %v1573 = vld [vmem:[%s1567 + $0x28] sm:$0xf]
        %v1574 = vld [vmem:[%s1567 + $0x30] sm:$0xf]
        %v1575 = vld [vmem:[%s1567 + $0x38] sm:$0xf]
        %s1576 = scalar_lea.vmem %s1, 56
        %v1577 = vld [vmem:[%s1576] sm:$0xf]
        %v1578 = vld [vmem:[%s1576 + $0x4] sm:$0xf]
        %v1587 = vunpack.c.l.b16 %v1568
        %v1588 = vunpack.c.l.b16 %v1569
        %v1589 = vunpack.c.l.b16 %v1570
        %v1590 = vunpack.c.l.b16 %v1571
        %v1591 = vunpack.c.l.b16 %v1572
        %v1592 = vunpack.c.l.b16 %v1573
        %v1593 = vunpack.c.l.b16 %v1574
        %v1594 = vunpack.c.l.b16 %v1575
        %v1595 = vpack.c.b16 %v1588, %v1587
        %v1596 = vpack.c.b16 %v1590, %v1589
        %v1597 = vpack.c.b16 %v1592, %v1591
        %v1598 = vpack.c.b16 %v1594, %v1593
        %v1601 = vunpack.c.l.b16 %v1577
        %v1602 = vunpack.c.l.b16 %v1578
        %v1603 = vpack.c.b16 %v1602, %v1601
        %v1606 = vsel %vm546, %v1595, 0
        %v1609 = vsel %vm546, %v1596, 0
        %v1612 = vsel %vm546, %v1597, 0
        %v1615 = vsel %vm546, %v1598, 0
        %1617 = vmatprep.subr.bf16.mxu0 0
        %1618 = vmatpush1.bf16.msra.mxu0 %v1603
        %1619 = vmatprep.subr.bf16.mxu0 0
        %1620 = vmatpush1.bf16.msra.mxu0 0
        %1621 = vmatprep.subr.bf16.mxu0 0
        %1622 = vmatpush1.bf16.msra.mxu0 0
        %1623 = vmatprep.subr.bf16.mxu0 0
        %1624 = vmatpush1.bf16.msra.mxu0 0
        %1625 = vmatprep.subr.bf16.mxu0 0
        %1626 = vmatpush1.bf16.msra.mxu0 0
        %1627 = vmatprep.subr.bf16.mxu0 0
        %1628 = vmatpush1.bf16.msra.mxu0 0
        %1629 = vmatprep.subr.bf16.mxu0 0
        %1630 = vmatpush1.bf16.msra.mxu0 0
        %1631 = vmatprep.subr.bf16.mxu0 0
        %1632 = vmatpush1.bf16.msra.mxu0 0
        %1633 = vmatprep.subr.bf16.mxu0 0
        %1634 = vmatpush1.bf16.msra.mxu0 0
        %1635 = vmatprep.subr.bf16.mxu0 0
        %1636 = vmatpush1.bf16.msra.mxu0 0
        %1637 = vmatprep.subr.bf16.mxu0 0
        %1638 = vmatpush1.bf16.msra.mxu0 0
        %1639 = vmatprep.subr.bf16.mxu0 0
        %1640 = vmatpush1.bf16.msra.mxu0 0
        %1641 = vmatprep.subr.bf16.mxu0 0
        %1642 = vmatpush1.bf16.msra.mxu0 0
        %1643 = vmatprep.subr.bf16.mxu0 0
        %1644 = vmatpush1.bf16.msra.mxu0 0
        %1645 = vmatprep.subr.bf16.mxu0 0
        %1646 = vmatpush1.bf16.msra.mxu0 0
        %1647 = vmatprep.subr.bf16.mxu0 0
        %1648 = vmatpush1.bf16.msra.mxu0 0
        %1649 = vmatprep.mubr.bf16.mxu0 0
        %1650 = vmatmul.mubr.bf16.gmra.mrb[0].mxu0 %v1606
        %v1651 = vpop.f32.mrb[0].mxu0
        %v1652 = vadd.f32 0.0, %v1651
        %v1653 = vpop.f32.mrb[0].mxu0
        %v1654 = vpop.f32.mrb[0].mxu0
        %v1655 = vadd.f32 0.0, %v1654
        %v1656 = vpop.f32.mrb[0].mxu0
        %1657 = vmatprep.mubr.bf16.mxu0 0
        %1658 = vmatmul.mubr.bf16.gmra.mrb[0].mxu0 %v1609
        %v1659 = vpop.f32.mrb[0].mxu0
        %v1660 = vadd.f32 0.0, %v1659
        %v1661 = vpop.f32.mrb[0].mxu0
        %v1662 = vpop.f32.mrb[0].mxu0
        %v1663 = vadd.f32 0.0, %v1662
        %v1664 = vpop.f32.mrb[0].mxu0
        %1665 = vmatprep.mubr.bf16.mxu0 0
        %1666 = vmatmul.mubr.bf16.gmra.mrb[0].mxu0 %v1612
        %v1667 = vpop.f32.mrb[0].mxu0
        %v1668 = vadd.f32 0.0, %v1667
        %v1669 = vpop.f32.mrb[0].mxu0
        %v1670 = vpop.f32.mrb[0].mxu0
        %v1671 = vadd.f32 0.0, %v1670
        %v1672 = vpop.f32.mrb[0].mxu0
        %1673 = vmatprep.mubr.bf16.mxu0 0
        %1674 = vmatmul.mubr.bf16.gmra.mrb[0].mxu0 %v1615
        %v1675 = vpop.f32.mrb[0].mxu0
        %v1676 = vadd.f32 0.0, %v1675
        %v1677 = vpop.f32.mrb[0].mxu0
        %v1678 = vpop.f32.mrb[0].mxu0
        %v1679 = vadd.f32 0.0, %v1678
        %v1680 = vpop.f32.mrb[0].mxu0
        %1681 = vdwg.mxu0
        %v1682 = vadd.f32 %v1559, %v1652
        %v1683 = vadd.f32 %v1560, %v1655
        %v1684 = vadd.f32 %v1561, %v1660
        %v1685 = vadd.f32 %v1562, %v1663
        %v1686 = vadd.f32 %v1563, %v1668
        %v1687 = vadd.f32 %v1564, %v1671
        %v1688 = vadd.f32 %v1565, %v1676
        %v1689 = vadd.f32 %v1566, %v1679
        %v1690 = vld [vmem:[%s1444] sm:$0xf]
        %v1691 = vld [vmem:[%s1444 + $0x4] sm:$0x1]
        %v1692 = vld [vmem:[%s1444 + $0x8] sm:$0xf]
        %v1693 = vld [vmem:[%s1444 + $0xc] sm:$0x1]
        %v1694 = vld [vmem:[%s1444 + $0x10] sm:$0xf]
        %v1695 = vld [vmem:[%s1444 + $0x14] sm:$0x1]
        %v1696 = vld [vmem:[%s1444 + $0x18] sm:$0xf]
        %v1697 = vld [vmem:[%s1444 + $0x1c] sm:$0x1]
        %v1698 = vld [vmem:[%s1444 + $0x20] sm:$0xf]
        %v1699 = vld [vmem:[%s1444 + $0x24] sm:$0x1]
        %v1700 = vld [vmem:[%s1444 + $0x28] sm:$0xf]
        %v1701 = vld [vmem:[%s1444 + $0x2c] sm:$0x1]
        %v1702 = vld [vmem:[%s1444 + $0x30] sm:$0xf]
        %v1703 = vld [vmem:[%s1444 + $0x34] sm:$0x1]
        %v1704 = vld [vmem:[%s1444 + $0x38] sm:$0xf]
        %v1705 = vld [vmem:[%s1444 + $0x3c] sm:$0x1]
        %v1707 = vshrl.u32 %v1690, 16
        %v1709 = vrot.slane %v1707, 4
        %v1710 = vshll.u32 %v1690, 16
        %v1712 = vrot.slane %v1710, 5
        %v1713 = vor.u32 %v1709, %v1712
        %v1714 = vrot.slane %v1713, 4
        %v1716 = vshll.u32 %v1691, 16
        %v1718 = vrot.slane %v1716, 5
        %v1719 = vsel %vm745, %v1714, %v1718
        %v1721 = vshrl.u32 %v1692, 16
        %v1723 = vrot.slane %v1721, 4
        %v1724 = vshll.u32 %v1692, 16
        %v1726 = vrot.slane %v1724, 5
        %v1727 = vor.u32 %v1723, %v1726
        %v1728 = vrot.slane %v1727, 4
        %v1730 = vshll.u32 %v1693, 16
        %v1732 = vrot.slane %v1730, 5
        %v1733 = vsel %vm745, %v1728, %v1732
        %v1735 = vshrl.u32 %v1694, 16
        %v1737 = vrot.slane %v1735, 4
        %v1738 = vshll.u32 %v1694, 16
        %v1740 = vrot.slane %v1738, 5
        %v1741 = vor.u32 %v1737, %v1740
        %v1742 = vrot.slane %v1741, 4
        %v1744 = vshll.u32 %v1695, 16
        %v1746 = vrot.slane %v1744, 5
        %v1747 = vsel %vm745, %v1742, %v1746
        %v1749 = vshrl.u32 %v1696, 16
        %v1751 = vrot.slane %v1749, 4
        %v1752 = vshll.u32 %v1696, 16
        %v1754 = vrot.slane %v1752, 5
        %v1755 = vor.u32 %v1751, %v1754
        %v1756 = vrot.slane %v1755, 4
        %v1758 = vshll.u32 %v1697, 16
        %v1760 = vrot.slane %v1758, 5
        %v1761 = vsel %vm745, %v1756, %v1760
        %v1763 = vshrl.u32 %v1698, 16
        %v1765 = vrot.slane %v1763, 4
        %v1766 = vshll.u32 %v1698, 16
        %v1768 = vrot.slane %v1766, 5
        %v1769 = vor.u32 %v1765, %v1768
        %v1770 = vrot.slane %v1769, 4
        %v1772 = vshll.u32 %v1699, 16
        %v1774 = vrot.slane %v1772, 5
        %v1775 = vsel %vm745, %v1770, %v1774
        %v1777 = vshrl.u32 %v1700, 16
        %v1779 = vrot.slane %v1777, 4
        %v1780 = vshll.u32 %v1700, 16
        %v1782 = vrot.slane %v1780, 5
        %v1783 = vor.u32 %v1779, %v1782
        %v1784 = vrot.slane %v1783, 4
        %v1786 = vshll.u32 %v1701, 16
        %v1788 = vrot.slane %v1786, 5
        %v1789 = vsel %vm745, %v1784, %v1788
        %v1791 = vshrl.u32 %v1702, 16
        %v1793 = vrot.slane %v1791, 4
        %v1794 = vshll.u32 %v1702, 16
        %v1796 = vrot.slane %v1794, 5
        %v1797 = vor.u32 %v1793, %v1796
        %v1798 = vrot.slane %v1797, 4
        %v1800 = vshll.u32 %v1703, 16
        %v1802 = vrot.slane %v1800, 5
        %v1803 = vsel %vm745, %v1798, %v1802
        %v1805 = vshrl.u32 %v1704, 16
        %v1807 = vrot.slane %v1805, 4
        %v1808 = vshll.u32 %v1704, 16
        %v1810 = vrot.slane %v1808, 5
        %v1811 = vor.u32 %v1807, %v1810
        %v1812 = vrot.slane %v1811, 4
        %v1814 = vshll.u32 %v1705, 16
        %v1816 = vrot.slane %v1814, 5
        %v1817 = vsel %vm745, %v1812, %v1816
        %s1818 = scalar_lea.vmem %s1, 64
        %v1819 = vld [vmem:[%s1818] sm:$0xf]
        %v1820 = vld [vmem:[%s1818 + $0x4] sm:$0xf]
        %v1821 = vunpack.c.l.b16 %v1719
        %v1822 = vunpack.c.l.b16 %v1733
        %v1823 = vunpack.c.l.b16 %v1747
        %v1824 = vunpack.c.l.b16 %v1761
        %v1825 = vunpack.c.l.b16 %v1775
        %v1826 = vunpack.c.l.b16 %v1789
        %v1827 = vunpack.c.l.b16 %v1803
        %v1828 = vunpack.c.l.b16 %v1817
        %v1829 = vpack.c.b16 %v1822, %v1821
        %v1830 = vpack.c.b16 %v1824, %v1823
        %v1831 = vpack.c.b16 %v1826, %v1825
        %v1832 = vpack.c.b16 %v1828, %v1827
        %v1835 = vunpack.c.l.b16 %v1819
        %v1836 = vunpack.c.l.b16 %v1820
        %v1837 = vpack.c.b16 %v1836, %v1835
        %v1840 = vsel %vm546, %v1829, 0
        %v1843 = vsel %vm546, %v1830, 0
        %v1846 = vsel %vm546, %v1831, 0
        %v1849 = vsel %vm546, %v1832, 0
        %1851 = vmatprep.subr.bf16.mxu0 0
        %1852 = vmatpush1.bf16.msra.mxu0 %v1837
        %1853 = vmatprep.subr.bf16.mxu0 0
        %1854 = vmatpush1.bf16.msra.mxu0 0
        %1855 = vmatprep.subr.bf16.mxu0 0
        %1856 = vmatpush1.bf16.msra.mxu0 0
        %1857 = vmatprep.subr.bf16.mxu0 0
        %1858 = vmatpush1.bf16.msra.mxu0 0
        %1859 = vmatprep.subr.bf16.mxu0 0
        %1860 = vmatpush1.bf16.msra.mxu0 0
        %1861 = vmatprep.subr.bf16.mxu0 0
        %1862 = vmatpush1.bf16.msra.mxu0 0
        %1863 = vmatprep.subr.bf16.mxu0 0
        %1864 = vmatpush1.bf16.msra.mxu0 0
        %1865 = vmatprep.subr.bf16.mxu0 0
        %1866 = vmatpush1.bf16.msra.mxu0 0
        %1867 = vmatprep.subr.bf16.mxu0 0
        %1868 = vmatpush1.bf16.msra.mxu0 0
        %1869 = vmatprep.subr.bf16.mxu0 0
        %1870 = vmatpush1.bf16.msra.mxu0 0
        %1871 = vmatprep.subr.bf16.mxu0 0
        %1872 = vmatpush1.bf16.msra.mxu0 0
        %1873 = vmatprep.subr.bf16.mxu0 0
        %1874 = vmatpush1.bf16.msra.mxu0 0
        %1875 = vmatprep.subr.bf16.mxu0 0
        %1876 = vmatpush1.bf16.msra.mxu0 0
        %1877 = vmatprep.subr.bf16.mxu0 0
        %1878 = vmatpush1.bf16.msra.mxu0 0
        %1879 = vmatprep.subr.bf16.mxu0 0
        %1880 = vmatpush1.bf16.msra.mxu0 0
        %1881 = vmatprep.subr.bf16.mxu0 0
        %1882 = vmatpush1.bf16.msra.mxu0 0
        %1883 = vmatprep.mubr.bf16.mxu0 0
        %1884 = vmatmul.mubr.bf16.gmra.mrb[0].mxu0 %v1840
        %v1885 = vpop.f32.mrb[0].mxu0
        %v1886 = vadd.f32 0.0, %v1885
        %v1887 = vpop.f32.mrb[0].mxu0
        %v1888 = vpop.f32.mrb[0].mxu0
        %v1889 = vadd.f32 0.0, %v1888
        %v1890 = vpop.f32.mrb[0].mxu0
        %1891 = vmatprep.mubr.bf16.mxu0 0
        %1892 = vmatmul.mubr.bf16.gmra.mrb[0].mxu0 %v1843
        %v1893 = vpop.f32.mrb[0].mxu0
        %v1894 = vadd.f32 0.0, %v1893
        %v1895 = vpop.f32.mrb[0].mxu0
        %v1896 = vpop.f32.mrb[0].mxu0
        %v1897 = vadd.f32 0.0, %v1896
        %v1898 = vpop.f32.mrb[0].mxu0
        %1899 = vmatprep.mubr.bf16.mxu0 0
        %1900 = vmatmul.mubr.bf16.gmra.mrb[0].mxu0 %v1846
        %v1901 = vpop.f32.mrb[0].mxu0
        %v1902 = vadd.f32 0.0, %v1901
        %v1903 = vpop.f32.mrb[0].mxu0
        %v1904 = vpop.f32.mrb[0].mxu0
        %v1905 = vadd.f32 0.0, %v1904
        %v1906 = vpop.f32.mrb[0].mxu0
        %1907 = vmatprep.mubr.bf16.mxu0 0
        %1908 = vmatmul.mubr.bf16.gmra.mrb[0].mxu0 %v1849
        %v1909 = vpop.f32.mrb[0].mxu0
        %v1910 = vadd.f32 0.0, %v1909
        %v1911 = vpop.f32.mrb[0].mxu0
        %v1912 = vpop.f32.mrb[0].mxu0
        %v1913 = vadd.f32 0.0, %v1912
        %v1914 = vpop.f32.mrb[0].mxu0
        %1915 = vdwg.mxu0
        %v1916 = vadd.f32 %v1682, %v1886
        %v1917 = vadd.f32 %v1683, %v1889
        %v1918 = vadd.f32 %v1684, %v1894
        %v1919 = vadd.f32 %v1685, %v1897
        %v1920 = vadd.f32 %v1686, %v1902
        %v1921 = vadd.f32 %v1687, %v1905
        %v1922 = vadd.f32 %v1688, %v1910
        %v1923 = vadd.f32 %v1689, %v1913
        %v1924 = vld [vmem:[%s2] sm:$0x1]
        %v1926 = vlaneseq
        %v1927 = vshrl.u32 %v1926, 7
        %v1928 = vsub.s32 0, %v1927
        %v1929 = vrot.slane %v1924, %v1928
        %v1931 = vadd.f32 %v1916, %v1929
        %v1932 = vadd.f32 %v1917, %v1929
        %v1933 = vadd.f32 %v1918, %v1929
        %v1934 = vadd.f32 %v1919, %v1929
        %v1935 = vadd.f32 %v1920, %v1929
        %v1936 = vadd.f32 %v1921, %v1929
        %v1937 = vadd.f32 %v1922, %v1929
        %v1938 = vadd.f32 %v1923, %v1929
        %v1939 = vmax.f32 %v1931, 0.0
        %v1940 = vmax.f32 %v1932, 0.0
        %v1941 = vmax.f32 %v1933, 0.0
        %v1942 = vmax.f32 %v1934, 0.0
        %v1943 = vmax.f32 %v1935, 0.0
        %v1944 = vmax.f32 %v1936, 0.0
        %v1945 = vmax.f32 %v1937, 0.0
        %v1946 = vmax.f32 %v1938, 0.0
        %v1947 = vpack.c.bf16 %v1939, %v1939
        %v1948 = vpack.c.bf16 %v1940, %v1940
        %v1949 = vpack.c.bf16 %v1941, %v1941
        %v1950 = vpack.c.bf16 %v1942, %v1942
        %v1951 = vpack.c.bf16 %v1943, %v1943
        %v1952 = vpack.c.bf16 %v1944, %v1944
        %v1953 = vpack.c.bf16 %v1945, %v1945
        %v1954 = vpack.c.bf16 %v1946, %v1946
        %vm1955 = vcmask 125952
        %1956 = vst.msk [vmem:[%s496] sm:$0xf] %vm1955, %v1947
        %1957 = vst.msk [vmem:[%s496 + $0x4] sm:$0xf] %vm1955, %v1948
        %1958 = vst.msk [vmem:[%s496 + $0x8] sm:$0xf] %vm1955, %v1949
        %1959 = vst.msk [vmem:[%s496 + $0xc] sm:$0xf] %vm1955, %v1950
        %1960 = vst.msk [vmem:[%s496 + $0x10] sm:$0xf] %vm1955, %v1951
        %1961 = vst.msk [vmem:[%s496 + $0x14] sm:$0xf] %vm1955, %v1952
        %1962 = vst.msk [vmem:[%s496 + $0x18] sm:$0xf] %vm1955, %v1953
        %1963 = vst.msk [vmem:[%s496 + $0x1c] sm:$0xf] %vm1955, %v1954
        %p1964 = scmp.lt.s32.totalorder %s14, 1
        %s1965 = scalar_select %p1964, %s14, 1
        %s1966 = smul.addr %s1965, 8
        %s1967 = smul.addr %s1966, 4
        %s1968 = scalar_lea.vmem %s3, %s1967
        // Predicated region
        $region74: #{bottleneck_forward.9} parent=68 // pred_check
          %p1969 = pneg %p100
        $region75: #{bottleneck_forward.9} parent=68 // pred_check_branch
          %1971 = sbr.rel (%p1969) target = $region77
        $region76: #{bottleneck_forward.9} parent=68 // pred_region
          _
        $region77: #{bottleneck_forward.9} parent=68 // pred_fallthru
          _
      $region69: #{bottleneck_forward.9} parent=5 // pred_fallthru
        _
      %p1972 = scmp.le.s32.totalorder 2, %s9
      // Predicated region
      $region78: #{bottleneck_forward.9} parent=5 // pred_check
        %p1973 = pneg %p1972
      $region79: #{bottleneck_forward.9} parent=5 // pred_check_branch
        %1975 = sbr.rel (%p1973) target = $region81
      $region80: #{bottleneck_forward.9} parent=5 // pred_region
        %s1976 = ssub.s32 %s9, 2
        // Predicated region
        $region82: #{bottleneck_forward.9} parent=80 // pred_check
          %p1977 = pneg %p106
        $region83: #{bottleneck_forward.9} parent=80 // pred_check_branch
          %1979 = sbr.rel (%p1977) target = $region85
        $region84: #{bottleneck_forward.9} parent=80 // pred_region
          %p1980 = scmp.lt.s32.totalorder %s15, 1
          %s1981 = scalar_select %p1980, %s15, 1
          %s1982 = smul.addr %s1981, 8
          %s1983 = smul.addr %s1982, 4
          %s1984 = scalar_lea.vmem %s3, %s1983
        $region85: #{bottleneck_forward.9} parent=80 // pred_fallthru
          _
      $region81: #{bottleneck_forward.9} parent=5 // pred_fallthru
        _
    $region6: #{bottleneck_forward.9} parent=1 // loop_footer
      %s13 = sadd.s32 1, %s9
    $region7: #{bottleneck_forward.9} parent=1 // loop_footer_branch
      %8 = sbr.rel target = $region3
    $region8: #{bottleneck_forward.9} parent=1 // loop_exit
      _

// kernel: bottleneck_forward.11
$region0: #{bottleneck_forward.11}
  #allocation0 [shape = 'u32[]', space=smem, size = 0x4, offset = 0x4, fixed_abs, tag = 'smem constant byte address 0x4 - core index']
  #allocation1 [shape = 'u32[144,128]{1,0:T(1,128)}', space=vmem, size = 0x12000, scoped, tag = 'internal scratch']
  #allocation2 [shape = 'f32[128,16]{1,0:T(8,128)}', space=vmem, size = 0x10000, scoped, tag = 'scratch operand']
  %s0 = inlined_call_operand.vmem [shape: bf16[128,64], index: 0, kind: input, shape index: {}]
  %s1 = inlined_call_operand.vmem [shape: bf16[64,16], index: 1, kind: input, shape index: {}]
  %s2 = inlined_call_operand.vmem [shape: f32[1,16], index: 2, kind: input, shape index: {}]
  %s3 = inlined_call_operand.vmem [shape: bf16[128,16], index: 3, kind: output, shape index: {}]
  %s4 = sld [smem:[#allocation0]]
  $region30: #{bottleneck_forward.11} parent=0
    _
  %s6 = ssub.s32 1, %s4
  %s7 = scalar_select 0, %s6, %s4
  // Predicated region
  $region2: #{bottleneck_forward.11} parent=0 // pred_check
    _
  $region3: #{bottleneck_forward.11} parent=0 // pred_check_branch
    %9 = sbr.rel (0) target = $region5
  $region4: #{bottleneck_forward.11} parent=0 // pred_region
    _
  $region5: #{bottleneck_forward.11} parent=0 // pred_fallthru
    _
  // Predicated region
  $region6: #{bottleneck_forward.11} parent=0 // pred_check
    _
  $region7: #{bottleneck_forward.11} parent=0 // pred_check_branch
    %11 = sbr.rel (0) target = $region9
  $region8: #{bottleneck_forward.11} parent=0 // pred_region
    _
  $region9: #{bottleneck_forward.11} parent=0 // pred_fallthru
    _
  // Predicated region
  $region10: #{bottleneck_forward.11} parent=0 // pred_check
    _
  $region11: #{bottleneck_forward.11} parent=0 // pred_check_branch
    %13 = sbr.rel (0) target = $region13
  $region12: #{bottleneck_forward.11} parent=0 // pred_region
    _
  $region13: #{bottleneck_forward.11} parent=0 // pred_fallthru
    _
  %p15 = scmp.eq.s32.totalorder 0, 0
  // Predicated region
  $region14: #{bottleneck_forward.11} parent=0 // pred_check
    %p16 = pneg %p15
  $region15: #{bottleneck_forward.11} parent=0 // pred_check_branch
    %18 = sbr.rel (%p16) target = $region17
  $region16: #{bottleneck_forward.11} parent=0 // pred_region
    %vm19 = vcmask 130048
    %20 = vst.msk [vmem:[#allocation2] sm:$0xff] %vm19, 0.0
    %21 = vst.msk [vmem:[#allocation2 + $0x8] sm:$0xff] %vm19, 0.0
    %22 = vst.msk [vmem:[#allocation2 + $0x10] sm:$0xff] %vm19, 0.0
    %23 = vst.msk [vmem:[#allocation2 + $0x18] sm:$0xff] %vm19, 0.0
    %24 = vst.msk [vmem:[#allocation2 + $0x20] sm:$0xff] %vm19, 0.0
    %25 = vst.msk [vmem:[#allocation2 + $0x28] sm:$0xff] %vm19, 0.0
    %26 = vst.msk [vmem:[#allocation2 + $0x30] sm:$0xff] %vm19, 0.0
    %27 = vst.msk [vmem:[#allocation2 + $0x38] sm:$0xff] %vm19, 0.0
    %28 = vst.msk [vmem:[#allocation2 + $0x40] sm:$0xff] %vm19, 0.0
    %29 = vst.msk [vmem:[#allocation2 + $0x48] sm:$0xff] %vm19, 0.0
    %30 = vst.msk [vmem:[#allocation2 + $0x50] sm:$0xff] %vm19, 0.0
    %31 = vst.msk [vmem:[#allocation2 + $0x58] sm:$0xff] %vm19, 0.0
    %32 = vst.msk [vmem:[#allocation2 + $0x60] sm:$0xff] %vm19, 0.0
    %33 = vst.msk [vmem:[#allocation2 + $0x68] sm:$0xff] %vm19, 0.0
    %34 = vst.msk [vmem:[#allocation2 + $0x70] sm:$0xff] %vm19, 0.0
    %35 = vst.msk [vmem:[#allocation2 + $0x78] sm:$0xff] %vm19, 0.0
  $region17: #{bottleneck_forward.11} parent=0 // pred_fallthru
    _
  %v36 = vld [vmem:[#allocation2] sm:$0xff]
  %v37 = vld [vmem:[#allocation2 + $0x8] sm:$0xff]
  %v38 = vld [vmem:[#allocation2 + $0x10] sm:$0xff]
  %v39 = vld [vmem:[#allocation2 + $0x18] sm:$0xff]
  %v40 = vld [vmem:[#allocation2 + $0x20] sm:$0xff]
  %v41 = vld [vmem:[#allocation2 + $0x28] sm:$0xff]
  %v42 = vld [vmem:[#allocation2 + $0x30] sm:$0xff]
  %v43 = vld [vmem:[#allocation2 + $0x38] sm:$0xff]
  %v44 = vld [vmem:[#allocation2 + $0x40] sm:$0xff]
  %v45 = vld [vmem:[#allocation2 + $0x48] sm:$0xff]
  %v46 = vld [vmem:[#allocation2 + $0x50] sm:$0xff]
  %v47 = vld [vmem:[#allocation2 + $0x58] sm:$0xff]
  %v48 = vld [vmem:[#allocation2 + $0x60] sm:$0xff]
  %v49 = vld [vmem:[#allocation2 + $0x68] sm:$0xff]
  %v50 = vld [vmem:[#allocation2 + $0x70] sm:$0xff]
  %v51 = vld [vmem:[#allocation2 + $0x78] sm:$0xff]
  %v52 = vld [vmem:[%s0] sm:$0xf]
  %v53 = vld [vmem:[%s0 + $0x4] sm:$0xf]
  %v54 = vld [vmem:[%s0 + $0x8] sm:$0xf]
  %v55 = vld [vmem:[%s0 + $0xc] sm:$0xf]
  %v56 = vld [vmem:[%s0 + $0x10] sm:$0xf]
  %v57 = vld [vmem:[%s0 + $0x14] sm:$0xf]
  %v58 = vld [vmem:[%s0 + $0x18] sm:$0xf]
  %v59 = vld [vmem:[%s0 + $0x1c] sm:$0xf]
  %v60 = vld [vmem:[%s0 + $0x20] sm:$0xf]
  %v61 = vld [vmem:[%s0 + $0x24] sm:$0xf]
  %v62 = vld [vmem:[%s0 + $0x28] sm:$0xf]
  %v63 = vld [vmem:[%s0 + $0x2c] sm:$0xf]
  %v64 = vld [vmem:[%s0 + $0x30] sm:$0xf]
  %v65 = vld [vmem:[%s0 + $0x34] sm:$0xf]
  %v66 = vld [vmem:[%s0 + $0x38] sm:$0xf]
  %v67 = vld [vmem:[%s0 + $0x3c] sm:$0xf]
  %v68 = vld [vmem:[%s1] sm:$0xf]
  %v69 = vld [vmem:[%s1 + $0x4] sm:$0xf]
  %v70 = vld [vmem:[%s1 + $0x8] sm:$0xf]
  %v71 = vld [vmem:[%s1 + $0xc] sm:$0xf]
  %v72 = vld [vmem:[%s1 + $0x10] sm:$0xf]
  %v73 = vld [vmem:[%s1 + $0x14] sm:$0xf]
  %v74 = vld [vmem:[%s1 + $0x18] sm:$0xf]
  %v75 = vld [vmem:[%s1 + $0x1c] sm:$0xf]
  %v92 = vunpack.c.l.b16 %v52
  %v93 = vunpack.c.l.b16 %v53
  %v94 = vunpack.c.l.b16 %v54
  %v95 = vunpack.c.l.b16 %v55
  %v96 = vunpack.c.l.b16 %v56
  %v97 = vunpack.c.l.b16 %v57
  %v98 = vunpack.c.l.b16 %v58
  %v99 = vunpack.c.l.b16 %v59
  %v100 = vunpack.c.l.b16 %v60
  %v101 = vunpack.c.l.b16 %v61
  %v102 = vunpack.c.l.b16 %v62
  %v103 = vunpack.c.l.b16 %v63
  %v104 = vunpack.c.l.b16 %v64
  %v105 = vunpack.c.l.b16 %v65
  %v106 = vunpack.c.l.b16 %v66
  %v107 = vunpack.c.l.b16 %v67
  %v108 = vpack.c.b16 %v93, %v92
  %v109 = vpack.c.b16 %v95, %v94
  %v110 = vpack.c.b16 %v97, %v96
  %v111 = vpack.c.b16 %v99, %v98
  %v112 = vpack.c.b16 %v101, %v100
  %v113 = vpack.c.b16 %v103, %v102
  %v114 = vpack.c.b16 %v105, %v104
  %v115 = vpack.c.b16 %v107, %v106
  %v124 = vunpack.c.l.b16 %v68
  %v125 = vunpack.c.l.b16 %v69
  %v126 = vunpack.c.l.b16 %v70
  %v127 = vunpack.c.l.b16 %v71
  %v128 = vunpack.c.l.b16 %v72
  %v129 = vunpack.c.l.b16 %v73
  %v130 = vunpack.c.l.b16 %v74
  %v131 = vunpack.c.l.b16 %v75
  %v132 = vpack.c.b16 %v125, %v124
  %v133 = vpack.c.b16 %v127, %v126
  %v134 = vpack.c.b16 %v129, %v128
  %v135 = vpack.c.b16 %v131, %v130
  %vm140 = vcmask 523264
  %v142 = vsel %vm140, %v108, 0
  %v145 = vsel %vm140, %v109, 0
  %v148 = vsel %vm140, %v110, 0
  %v151 = vsel %vm140, %v111, 0
  %v154 = vsel %vm140, %v112, 0
  %v157 = vsel %vm140, %v113, 0
  %v160 = vsel %vm140, %v114, 0
  %v163 = vsel %vm140, %v115, 0
  %165 = vmatprep.subr.bf16.mxu0 0
  %166 = vmatpush1.bf16.msra.mxu0 %v132
  %167 = vmatprep.subr.bf16.mxu0 0
  %168 = vmatpush1.bf16.msra.mxu0 %v133
  %169 = vmatprep.subr.bf16.mxu0 0
  %170 = vmatpush1.bf16.msra.mxu0 %v134
  %171 = vmatprep.subr.bf16.mxu0 0
  %172 = vmatpush1.bf16.msra.mxu0 %v135
  %173 = vmatprep.subr.bf16.mxu0 0
  %174 = vmatpush1.bf16.msra.mxu0 0
  %175 = vmatprep.subr.bf16.mxu0 0
  %176 = vmatpush1.bf16.msra.mxu0 0
  %177 = vmatprep.subr.bf16.mxu0 0
  %178 = vmatpush1.bf16.msra.mxu0 0
  %179 = vmatprep.subr.bf16.mxu0 0
  %180 = vmatpush1.bf16.msra.mxu0 0
  %181 = vmatprep.subr.bf16.mxu0 0
  %182 = vmatpush1.bf16.msra.mxu0 0
  %183 = vmatprep.subr.bf16.mxu0 0
  %184 = vmatpush1.bf16.msra.mxu0 0
  %185 = vmatprep.subr.bf16.mxu0 0
  %186 = vmatpush1.bf16.msra.mxu0 0
  %187 = vmatprep.subr.bf16.mxu0 0
  %188 = vmatpush1.bf16.msra.mxu0 0
  %189 = vmatprep.subr.bf16.mxu0 0
  %190 = vmatpush1.bf16.msra.mxu0 0
  %191 = vmatprep.subr.bf16.mxu0 0
  %192 = vmatpush1.bf16.msra.mxu0 0
  %193 = vmatprep.subr.bf16.mxu0 0
  %194 = vmatpush1.bf16.msra.mxu0 0
  %195 = vmatprep.subr.bf16.mxu0 0
  %196 = vmatpush1.bf16.msra.mxu0 0
  %197 = vmatprep.mubr.bf16.mxu0 0
  %198 = vmatmul.mubr.bf16.gmra.mrb[0].mxu0 %v142
  %v199 = vpop.f32.mrb[0].mxu0
  %v200 = vadd.f32 0.0, %v199
  %v201 = vpop.f32.mrb[0].mxu0
  %v202 = vpop.f32.mrb[0].mxu0
  %v203 = vadd.f32 0.0, %v202
  %v204 = vpop.f32.mrb[0].mxu0
  %205 = vmatprep.mubr.bf16.mxu0 0
  %206 = vmatmul.mubr.bf16.gmra.mrb[0].mxu0 %v145
  %v207 = vpop.f32.mrb[0].mxu0
  %v208 = vadd.f32 0.0, %v207
  %v209 = vpop.f32.mrb[0].mxu0
  %v210 = vpop.f32.mrb[0].mxu0
  %v211 = vadd.f32 0.0, %v210
  %v212 = vpop.f32.mrb[0].mxu0
  %213 = vmatprep.mubr.bf16.mxu0 0
  %214 = vmatmul.mubr.bf16.gmra.mrb[0].mxu0 %v148
  %v215 = vpop.f32.mrb[0].mxu0
  %v216 = vadd.f32 0.0, %v215
  %v217 = vpop.f32.mrb[0].mxu0
  %v218 = vpop.f32.mrb[0].mxu0
  %v219 = vadd.f32 0.0, %v218
  %v220 = vpop.f32.mrb[0].mxu0
  %221 = vmatprep.mubr.bf16.mxu0 0
  %222 = vmatmul.mubr.bf16.gmra.mrb[0].mxu0 %v151
  %v223 = vpop.f32.mrb[0].mxu0
  %v224 = vadd.f32 0.0, %v223
  %v225 = vpop.f32.mrb[0].mxu0
  %v226 = vpop.f32.mrb[0].mxu0
  %v227 = vadd.f32 0.0, %v226
  %v228 = vpop.f32.mrb[0].mxu0
  %229 = vmatprep.mubr.bf16.mxu0 0
  %230 = vmatmul.mubr.bf16.gmra.mrb[0].mxu0 %v154
  %v231 = vpop.f32.mrb[0].mxu0
  %v232 = vadd.f32 0.0, %v231
  %v233 = vpop.f32.mrb[0].mxu0
  %v234 = vpop.f32.mrb[0].mxu0
  %v235 = vadd.f32 0.0, %v234
  %v236 = vpop.f32.mrb[0].mxu0
  %237 = vmatprep.mubr.bf16.mxu0 0
  %238 = vmatmul.mubr.bf16.gmra.mrb[0].mxu0 %v157
  %v239 = vpop.f32.mrb[0].mxu0
  %v240 = vadd.f32 0.0, %v239
  %v241 = vpop.f32.mrb[0].mxu0
  %v242 = vpop.f32.mrb[0].mxu0
  %v243 = vadd.f32 0.0, %v242
  %v244 = vpop.f32.mrb[0].mxu0
  %245 = vmatprep.mubr.bf16.mxu0 0
  %246 = vmatmul.mubr.bf16.gmra.mrb[0].mxu0 %v160
  %v247 = vpop.f32.mrb[0].mxu0
  %v248 = vadd.f32 0.0, %v247
  %v249 = vpop.f32.mrb[0].mxu0
  %v250 = vpop.f32.mrb[0].mxu0
  %v251 = vadd.f32 0.0, %v250
  %v252 = vpop.f32.mrb[0].mxu0
  %253 = vmatprep.mubr.bf16.mxu0 0
  %254 = vmatmul.mubr.bf16.gmra.mrb[0].mxu0 %v163
  %v255 = vpop.f32.mrb[0].mxu0
  %v256 = vadd.f32 0.0, %v255
  %v257 = vpop.f32.mrb[0].mxu0
  %v258 = vpop.f32.mrb[0].mxu0
  %v259 = vadd.f32 0.0, %v258
  %v260 = vpop.f32.mrb[0].mxu0
  %261 = vdwg.mxu0
  %v262 = vadd.f32 %v36, %v200
  %v263 = vadd.f32 %v37, %v203
  %v264 = vadd.f32 %v38, %v208
  %v265 = vadd.f32 %v39, %v211
  %v266 = vadd.f32 %v40, %v216
  %v267 = vadd.f32 %v41, %v219
  %v268 = vadd.f32 %v42, %v224
  %v269 = vadd.f32 %v43, %v227
  %v270 = vadd.f32 %v44, %v232
  %v271 = vadd.f32 %v45, %v235
  %v272 = vadd.f32 %v46, %v240
  %v273 = vadd.f32 %v47, %v243
  %v274 = vadd.f32 %v48, %v248
  %v275 = vadd.f32 %v49, %v251
  %v276 = vadd.f32 %v50, %v256
  %v277 = vadd.f32 %v51, %v259
  %vm278 = vcmask 130048
  %279 = vst.msk [vmem:[#allocation2] sm:$0xff] %vm278, %v262
  %280 = vst.msk [vmem:[#allocation2 + $0x8] sm:$0xff] %vm278, %v263
  %281 = vst.msk [vmem:[#allocation2 + $0x10] sm:$0xff] %vm278, %v264
  %282 = vst.msk [vmem:[#allocation2 + $0x18] sm:$0xff] %vm278, %v265
  %283 = vst.msk [vmem:[#allocation2 + $0x20] sm:$0xff] %vm278, %v266
  %284 = vst.msk [vmem:[#allocation2 + $0x28] sm:$0xff] %vm278, %v267
  %285 = vst.msk [vmem:[#allocation2 + $0x30] sm:$0xff] %vm278, %v268
  %286 = vst.msk [vmem:[#allocation2 + $0x38] sm:$0xff] %vm278, %v269
  %287 = vst.msk [vmem:[#allocation2 + $0x40] sm:$0xff] %vm278, %v270
  %288 = vst.msk [vmem:[#allocation2 + $0x48] sm:$0xff] %vm278, %v271
  %289 = vst.msk [vmem:[#allocation2 + $0x50] sm:$0xff] %vm278, %v272
  %290 = vst.msk [vmem:[#allocation2 + $0x58] sm:$0xff] %vm278, %v273
  %291 = vst.msk [vmem:[#allocation2 + $0x60] sm:$0xff] %vm278, %v274
  %292 = vst.msk [vmem:[#allocation2 + $0x68] sm:$0xff] %vm278, %v275
  %293 = vst.msk [vmem:[#allocation2 + $0x70] sm:$0xff] %vm278, %v276
  %294 = vst.msk [vmem:[#allocation2 + $0x78] sm:$0xff] %vm278, %v277
  // Predicated region
  $region18: #{bottleneck_forward.11} parent=0 // pred_check
    %p295 = pneg %p15
  $region19: #{bottleneck_forward.11} parent=0 // pred_check_branch
    %297 = sbr.rel (%p295) target = $region21
  $region20: #{bottleneck_forward.11} parent=0 // pred_region
    %v298 = vld [vmem:[#allocation2] sm:$0xff]
    %v299 = vld [vmem:[#allocation2 + $0x8] sm:$0xff]
    %v300 = vld [vmem:[#allocation2 + $0x10] sm:$0xff]
    %v301 = vld [vmem:[#allocation2 + $0x18] sm:$0xff]
    %v302 = vld [vmem:[#allocation2 + $0x20] sm:$0xff]
    %v303 = vld [vmem:[#allocation2 + $0x28] sm:$0xff]
    %v304 = vld [vmem:[#allocation2 + $0x30] sm:$0xff]
    %v305 = vld [vmem:[#allocation2 + $0x38] sm:$0xff]
    %v306 = vld [vmem:[#allocation2 + $0x40] sm:$0xff]
    %v307 = vld [vmem:[#allocation2 + $0x48] sm:$0xff]
    %v308 = vld [vmem:[#allocation2 + $0x50] sm:$0xff]
    %v309 = vld [vmem:[#allocation2 + $0x58] sm:$0xff]
    %v310 = vld [vmem:[#allocation2 + $0x60] sm:$0xff]
    %v311 = vld [vmem:[#allocation2 + $0x68] sm:$0xff]
    %v312 = vld [vmem:[#allocation2 + $0x70] sm:$0xff]
    %v313 = vld [vmem:[#allocation2 + $0x78] sm:$0xff]
    %v314 = vld [vmem:[%s2] sm:$0x1]
    %v316 = vlaneseq
    %v317 = vshrl.u32 %v316, 7
    %v318 = vsub.s32 0, %v317
    %v319 = vrot.slane %v314, %v318
    %v321 = vadd.f32 %v298, %v319
    %v322 = vadd.f32 %v299, %v319
    %v323 = vadd.f32 %v300, %v319
    %v324 = vadd.f32 %v301, %v319
    %v325 = vadd.f32 %v302, %v319
    %v326 = vadd.f32 %v303, %v319
    %v327 = vadd.f32 %v304, %v319
    %v328 = vadd.f32 %v305, %v319
    %v329 = vadd.f32 %v306, %v319
    %v330 = vadd.f32 %v307, %v319
    %v331 = vadd.f32 %v308, %v319
    %v332 = vadd.f32 %v309, %v319
    %v333 = vadd.f32 %v310, %v319
    %v334 = vadd.f32 %v311, %v319
    %v335 = vadd.f32 %v312, %v319
    %v336 = vadd.f32 %v313, %v319
    %v337 = vmax.f32 %v321, 0.0
    %v338 = vmax.f32 %v322, 0.0
    %v339 = vmax.f32 %v323, 0.0
    %v340 = vmax.f32 %v324, 0.0
    %v341 = vmax.f32 %v325, 0.0
    %v342 = vmax.f32 %v326, 0.0
    %v343 = vmax.f32 %v327, 0.0
    %v344 = vmax.f32 %v328, 0.0
    %v345 = vmax.f32 %v329, 0.0
    %v346 = vmax.f32 %v330, 0.0
    %v347 = vmax.f32 %v331, 0.0
    %v348 = vmax.f32 %v332, 0.0
    %v349 = vmax.f32 %v333, 0.0
    %v350 = vmax.f32 %v334, 0.0
    %v351 = vmax.f32 %v335, 0.0
    %v352 = vmax.f32 %v336, 0.0
    %v353 = vpack.c.bf16 %v338, %v337
    %v354 = vpack.c.bf16 %v340, %v339
    %v355 = vpack.c.bf16 %v342, %v341
    %v356 = vpack.c.bf16 %v344, %v343
    %v357 = vpack.c.bf16 %v346, %v345
    %v358 = vpack.c.bf16 %v348, %v347
    %v359 = vpack.c.bf16 %v350, %v349
    %v360 = vpack.c.bf16 %v352, %v351
    %v369 = vunpack.c.l.b16 %v353
    %v370 = vunpack.c.h.b16 %v353
    %v371 = vunpack.c.l.b16 %v354
    %v372 = vunpack.c.h.b16 %v354
    %v373 = vunpack.c.l.b16 %v355
    %v374 = vunpack.c.h.b16 %v355
    %v375 = vunpack.c.l.b16 %v356
    %v376 = vunpack.c.h.b16 %v356
    %v377 = vunpack.c.l.b16 %v357
    %v378 = vunpack.c.h.b16 %v357
    %v379 = vunpack.c.l.b16 %v358
    %v380 = vunpack.c.h.b16 %v358
    %v381 = vunpack.c.l.b16 %v359
    %v382 = vunpack.c.h.b16 %v359
    %v383 = vunpack.c.l.b16 %v360
    %v384 = vunpack.c.h.b16 %v360
    %v385 = vpack.c.b16 %v369, %v369
    %v386 = vpack.c.b16 %v370, %v370
    %v387 = vpack.c.b16 %v371, %v371
    %v388 = vpack.c.b16 %v372, %v372
    %v389 = vpack.c.b16 %v373, %v373
    %v390 = vpack.c.b16 %v374, %v374
    %v391 = vpack.c.b16 %v375, %v375
    %v392 = vpack.c.b16 %v376, %v376
    %v393 = vpack.c.b16 %v377, %v377
    %v394 = vpack.c.b16 %v378, %v378
    %v395 = vpack.c.b16 %v379, %v379
    %v396 = vpack.c.b16 %v380, %v380
    %v397 = vpack.c.b16 %v381, %v381
    %v398 = vpack.c.b16 %v382, %v382
    %v399 = vpack.c.b16 %v383, %v383
    %v400 = vpack.c.b16 %v384, %v384
    %vm417 = vcmask 125952
    %418 = vst.msk [vmem:[%s3] sm:$0xf] %vm417, %v385
    %419 = vst.msk [vmem:[%s3 + $0x4] sm:$0xf] %vm417, %v386
    %420 = vst.msk [vmem:[%s3 + $0x8] sm:$0xf] %vm417, %v387
    %421 = vst.msk [vmem:[%s3 + $0xc] sm:$0xf] %vm417, %v388
    %422 = vst.msk [vmem:[%s3 + $0x10] sm:$0xf] %vm417, %v389
    %423 = vst.msk [vmem:[%s3 + $0x14] sm:$0xf] %vm417, %v390
    %424 = vst.msk [vmem:[%s3 + $0x18] sm:$0xf] %vm417, %v391
    %425 = vst.msk [vmem:[%s3 + $0x1c] sm:$0xf] %vm417, %v392
    %426 = vst.msk [vmem:[%s3 + $0x20] sm:$0xf] %vm417, %v393
    %427 = vst.msk [vmem:[%s3 + $0x24] sm:$0xf] %vm417, %v394
    %428 = vst.msk [vmem:[%s3 + $0x28] sm:$0xf] %vm417, %v395
    %429 = vst.msk [vmem:[%s3 + $0x2c] sm:$0xf] %vm417, %v396
    %430 = vst.msk [vmem:[%s3 + $0x30] sm:$0xf] %vm417, %v397
    %431 = vst.msk [vmem:[%s3 + $0x34] sm:$0xf] %vm417, %v398
    %432 = vst.msk [vmem:[%s3 + $0x38] sm:$0xf] %vm417, %v399
    %433 = vst.msk [vmem:[%s3 + $0x3c] sm:$0xf] %vm417, %v400
  $region21: #{bottleneck_forward.11} parent=0 // pred_fallthru
    _
  // Predicated region
  $region22: #{bottleneck_forward.11} parent=0 // pred_check
    _
  $region23: #{bottleneck_forward.11} parent=0 // pred_check_branch
    %435 = sbr.rel (0) target = $region25
  $region24: #{bottleneck_forward.11} parent=0 // pred_region
    _
  $region25: #{bottleneck_forward.11} parent=0 // pred_fallthru
    _
  // Predicated region
  $region26: #{bottleneck_forward.11} parent=0 // pred_check
    _
  $region27: #{bottleneck_forward.11} parent=0 // pred_check_branch
    %437 = sbr.rel (0) target = $region29
  $region28: #{bottleneck_forward.11} parent=0 // pred_region
    _
  $region29: #{bottleneck_forward.11} parent=0 // pred_fallthru
    _

// kernel: bottleneck_forward.13
$region0: #{bottleneck_forward.13}
  #allocation0 [shape = 'u32[]', space=smem, size = 0x4, offset = 0x4, fixed_abs, tag = 'smem constant byte address 0x4 - core index']
  #allocation1 [shape = 'u32[144,128]{1,0:T(1,128)}', space=vmem, size = 0x12000, scoped, tag = 'internal scratch']
  #allocation2 [shape = 'f32[128,64]{1,0:T(8,128)}', space=vmem, size = 0x10000, scoped, tag = 'scratch operand']
  %s0 = inlined_call_operand.vmem [shape: bf16[128,16], index: 0, kind: input, shape index: {}]
  %s1 = inlined_call_operand.vmem [shape: bf16[16,64], index: 1, kind: input, shape index: {}]
  %s2 = inlined_call_operand.vmem [shape: f32[1,64], index: 2, kind: input, shape index: {}]
  %s3 = inlined_call_operand.vmem [shape: bf16[128,64], index: 3, kind: input, shape index: {}]
  %s4 = inlined_call_operand.hbm [shape: f32[128,64], index: 4, kind: output, shape index: {}]
  %s5 = sld [smem:[#allocation0]]
  $region34: #{bottleneck_forward.13} parent=0
    _
  %s7 = ssub.s32 1, %s5
  %s8 = scalar_select 0, %s7, %s5
  $region1: #{bottleneck_forward.13} parent=0
    #allocation3 [shape = 'u8[65536]{0}', space=vmem, size = 0x10000, scoped, tag = 'output window, operand 0, single buffered']
    #allocation4 [shape = 's32[1]{0}', space=sflag, size = 0x4, scoped, tag = 'scoped memory for bottleneck_forward.13']
    %9 = vsyncpa [#allocation4], 0
    // Predicated region
    $region2: #{bottleneck_forward.13} parent=1 // pred_check
      _
    $region3: #{bottleneck_forward.13} parent=1 // pred_check_branch
      %11 = sbr.rel (0) target = $region5
    $region4: #{bottleneck_forward.13} parent=1 // pred_region
      _
    $region5: #{bottleneck_forward.13} parent=1 // pred_fallthru
      _
    // Predicated region
    $region6: #{bottleneck_forward.13} parent=1 // pred_check
      _
    $region7: #{bottleneck_forward.13} parent=1 // pred_check_branch
      %13 = sbr.rel (0) target = $region9
    $region8: #{bottleneck_forward.13} parent=1 // pred_region
      _
    $region9: #{bottleneck_forward.13} parent=1 // pred_fallthru
      _
    // Predicated region
    $region10: #{bottleneck_forward.13} parent=1 // pred_check
      _
    $region11: #{bottleneck_forward.13} parent=1 // pred_check_branch
      %15 = sbr.rel (0) target = $region13
    $region12: #{bottleneck_forward.13} parent=1 // pred_region
      _
    $region13: #{bottleneck_forward.13} parent=1 // pred_fallthru
      _
    // Predicated region
    $region14: #{bottleneck_forward.13} parent=1 // pred_check
      _
    $region15: #{bottleneck_forward.13} parent=1 // pred_check_branch
      %17 = sbr.rel (0) target = $region17
    $region16: #{bottleneck_forward.13} parent=1 // pred_region
      _
    $region17: #{bottleneck_forward.13} parent=1 // pred_fallthru
      _
    %p19 = scmp.eq.s32.totalorder 0, 0
    // Predicated region
    $region18: #{bottleneck_forward.13} parent=1 // pred_check
      %p20 = pneg %p19
    $region19: #{bottleneck_forward.13} parent=1 // pred_check_branch
      %22 = sbr.rel (%p20) target = $region21
    $region20: #{bottleneck_forward.13} parent=1 // pred_region
      %vm23 = vcmask 523264
      %24 = vst.msk [vmem:[#allocation2] sm:$0xff] %vm23, 0.0
      %25 = vst.msk [vmem:[#allocation2 + $0x8] sm:$0xff] %vm23, 0.0
      %26 = vst.msk [vmem:[#allocation2 + $0x10] sm:$0xff] %vm23, 0.0
      %27 = vst.msk [vmem:[#allocation2 + $0x18] sm:$0xff] %vm23, 0.0
      %28 = vst.msk [vmem:[#allocation2 + $0x20] sm:$0xff] %vm23, 0.0
      %29 = vst.msk [vmem:[#allocation2 + $0x28] sm:$0xff] %vm23, 0.0
      %30 = vst.msk [vmem:[#allocation2 + $0x30] sm:$0xff] %vm23, 0.0
      %31 = vst.msk [vmem:[#allocation2 + $0x38] sm:$0xff] %vm23, 0.0
      %32 = vst.msk [vmem:[#allocation2 + $0x40] sm:$0xff] %vm23, 0.0
      %33 = vst.msk [vmem:[#allocation2 + $0x48] sm:$0xff] %vm23, 0.0
      %34 = vst.msk [vmem:[#allocation2 + $0x50] sm:$0xff] %vm23, 0.0
      %35 = vst.msk [vmem:[#allocation2 + $0x58] sm:$0xff] %vm23, 0.0
      %36 = vst.msk [vmem:[#allocation2 + $0x60] sm:$0xff] %vm23, 0.0
      %37 = vst.msk [vmem:[#allocation2 + $0x68] sm:$0xff] %vm23, 0.0
      %38 = vst.msk [vmem:[#allocation2 + $0x70] sm:$0xff] %vm23, 0.0
      %39 = vst.msk [vmem:[#allocation2 + $0x78] sm:$0xff] %vm23, 0.0
    $region21: #{bottleneck_forward.13} parent=1 // pred_fallthru
      _
    %v40 = vld [vmem:[#allocation2] sm:$0xff]
    %v41 = vld [vmem:[#allocation2 + $0x8] sm:$0xff]
    %v42 = vld [vmem:[#allocation2 + $0x10] sm:$0xff]
    %v43 = vld [vmem:[#allocation2 + $0x18] sm:$0xff]
    %v44 = vld [vmem:[#allocation2 + $0x20] sm:$0xff]
    %v45 = vld [vmem:[#allocation2 + $0x28] sm:$0xff]
    %v46 = vld [vmem:[#allocation2 + $0x30] sm:$0xff]
    %v47 = vld [vmem:[#allocation2 + $0x38] sm:$0xff]
    %v48 = vld [vmem:[#allocation2 + $0x40] sm:$0xff]
    %v49 = vld [vmem:[#allocation2 + $0x48] sm:$0xff]
    %v50 = vld [vmem:[#allocation2 + $0x50] sm:$0xff]
    %v51 = vld [vmem:[#allocation2 + $0x58] sm:$0xff]
    %v52 = vld [vmem:[#allocation2 + $0x60] sm:$0xff]
    %v53 = vld [vmem:[#allocation2 + $0x68] sm:$0xff]
    %v54 = vld [vmem:[#allocation2 + $0x70] sm:$0xff]
    %v55 = vld [vmem:[#allocation2 + $0x78] sm:$0xff]
    %v56 = vld [vmem:[%s0] sm:$0xf]
    %v57 = vld [vmem:[%s0 + $0x4] sm:$0xf]
    %v58 = vld [vmem:[%s0 + $0x8] sm:$0xf]
    %v59 = vld [vmem:[%s0 + $0xc] sm:$0xf]
    %v60 = vld [vmem:[%s0 + $0x10] sm:$0xf]
    %v61 = vld [vmem:[%s0 + $0x14] sm:$0xf]
    %v62 = vld [vmem:[%s0 + $0x18] sm:$0xf]
    %v63 = vld [vmem:[%s0 + $0x1c] sm:$0xf]
    %v64 = vld [vmem:[%s0 + $0x20] sm:$0xf]
    %v65 = vld [vmem:[%s0 + $0x24] sm:$0xf]
    %v66 = vld [vmem:[%s0 + $0x28] sm:$0xf]
    %v67 = vld [vmem:[%s0 + $0x2c] sm:$0xf]
    %v68 = vld [vmem:[%s0 + $0x30] sm:$0xf]
    %v69 = vld [vmem:[%s0 + $0x34] sm:$0xf]
    %v70 = vld [vmem:[%s0 + $0x38] sm:$0xf]
    %v71 = vld [vmem:[%s0 + $0x3c] sm:$0xf]
    %v72 = vld [vmem:[%s1] sm:$0xf]
    %v73 = vld [vmem:[%s1 + $0x4] sm:$0xf]
    %v90 = vunpack.c.l.b16 %v56
    %v91 = vunpack.c.l.b16 %v57
    %v92 = vunpack.c.l.b16 %v58
    %v93 = vunpack.c.l.b16 %v59
    %v94 = vunpack.c.l.b16 %v60
    %v95 = vunpack.c.l.b16 %v61
    %v96 = vunpack.c.l.b16 %v62
    %v97 = vunpack.c.l.b16 %v63
    %v98 = vunpack.c.l.b16 %v64
    %v99 = vunpack.c.l.b16 %v65
    %v100 = vunpack.c.l.b16 %v66
    %v101 = vunpack.c.l.b16 %v67
    %v102 = vunpack.c.l.b16 %v68
    %v103 = vunpack.c.l.b16 %v69
    %v104 = vunpack.c.l.b16 %v70
    %v105 = vunpack.c.l.b16 %v71
    %v106 = vpack.c.b16 %v91, %v90
    %v107 = vpack.c.b16 %v93, %v92
    %v108 = vpack.c.b16 %v95, %v94
    %v109 = vpack.c.b16 %v97, %v96
    %v110 = vpack.c.b16 %v99, %v98
    %v111 = vpack.c.b16 %v101, %v100
    %v112 = vpack.c.b16 %v103, %v102
    %v113 = vpack.c.b16 %v105, %v104
    %v116 = vunpack.c.l.b16 %v72
    %v117 = vunpack.c.l.b16 %v73
    %v118 = vpack.c.b16 %v117, %v116
    %vm120 = vcmask 130048
    %v122 = vsel %vm120, %v106, 0
    %v125 = vsel %vm120, %v107, 0
    %v128 = vsel %vm120, %v108, 0
    %v131 = vsel %vm120, %v109, 0
    %v134 = vsel %vm120, %v110, 0
    %v137 = vsel %vm120, %v111, 0
    %v140 = vsel %vm120, %v112, 0
    %v143 = vsel %vm120, %v113, 0
    %145 = vmatprep.subr.bf16.mxu0 0
    %146 = vmatpush1.bf16.msra.mxu0 %v118
    %147 = vmatprep.subr.bf16.mxu0 0
    %148 = vmatpush1.bf16.msra.mxu0 0
    %149 = vmatprep.subr.bf16.mxu0 0
    %150 = vmatpush1.bf16.msra.mxu0 0
    %151 = vmatprep.subr.bf16.mxu0 0
    %152 = vmatpush1.bf16.msra.mxu0 0
    %153 = vmatprep.subr.bf16.mxu0 0
    %154 = vmatpush1.bf16.msra.mxu0 0
    %155 = vmatprep.subr.bf16.mxu0 0
    %156 = vmatpush1.bf16.msra.mxu0 0
    %157 = vmatprep.subr.bf16.mxu0 0
    %158 = vmatpush1.bf16.msra.mxu0 0
    %159 = vmatprep.subr.bf16.mxu0 0
    %160 = vmatpush1.bf16.msra.mxu0 0
    %161 = vmatprep.subr.bf16.mxu0 0
    %162 = vmatpush1.bf16.msra.mxu0 0
    %163 = vmatprep.subr.bf16.mxu0 0
    %164 = vmatpush1.bf16.msra.mxu0 0
    %165 = vmatprep.subr.bf16.mxu0 0
    %166 = vmatpush1.bf16.msra.mxu0 0
    %167 = vmatprep.subr.bf16.mxu0 0
    %168 = vmatpush1.bf16.msra.mxu0 0
    %169 = vmatprep.subr.bf16.mxu0 0
    %170 = vmatpush1.bf16.msra.mxu0 0
    %171 = vmatprep.subr.bf16.mxu0 0
    %172 = vmatpush1.bf16.msra.mxu0 0
    %173 = vmatprep.subr.bf16.mxu0 0
    %174 = vmatpush1.bf16.msra.mxu0 0
    %175 = vmatprep.subr.bf16.mxu0 0
    %176 = vmatpush1.bf16.msra.mxu0 0
    %177 = vmatprep.mubr.bf16.mxu0 0
    %178 = vmatmul.mubr.bf16.gmra.mrb[0].mxu0 %v122
    %v179 = vpop.f32.mrb[0].mxu0
    %v180 = vadd.f32 0.0, %v179
    %v181 = vpop.f32.mrb[0].mxu0
    %v182 = vpop.f32.mrb[0].mxu0
    %v183 = vadd.f32 0.0, %v182
    %v184 = vpop.f32.mrb[0].mxu0
    %185 = vmatprep.mubr.bf16.mxu0 0
    %186 = vmatmul.mubr.bf16.gmra.mrb[0].mxu0 %v125
    %v187 = vpop.f32.mrb[0].mxu0
    %v188 = vadd.f32 0.0, %v187
    %v189 = vpop.f32.mrb[0].mxu0
    %v190 = vpop.f32.mrb[0].mxu0
    %v191 = vadd.f32 0.0, %v190
    %v192 = vpop.f32.mrb[0].mxu0
    %193 = vmatprep.mubr.bf16.mxu0 0
    %194 = vmatmul.mubr.bf16.gmra.mrb[0].mxu0 %v128
    %v195 = vpop.f32.mrb[0].mxu0
    %v196 = vadd.f32 0.0, %v195
    %v197 = vpop.f32.mrb[0].mxu0
    %v198 = vpop.f32.mrb[0].mxu0
    %v199 = vadd.f32 0.0, %v198
    %v200 = vpop.f32.mrb[0].mxu0
    %201 = vmatprep.mubr.bf16.mxu0 0
    %202 = vmatmul.mubr.bf16.gmra.mrb[0].mxu0 %v131
    %v203 = vpop.f32.mrb[0].mxu0
    %v204 = vadd.f32 0.0, %v203
    %v205 = vpop.f32.mrb[0].mxu0
    %v206 = vpop.f32.mrb[0].mxu0
    %v207 = vadd.f32 0.0, %v206
    %v208 = vpop.f32.mrb[0].mxu0
    %209 = vmatprep.mubr.bf16.mxu0 0
    %210 = vmatmul.mubr.bf16.gmra.mrb[0].mxu0 %v134
    %v211 = vpop.f32.mrb[0].mxu0
    %v212 = vadd.f32 0.0, %v211
    %v213 = vpop.f32.mrb[0].mxu0
    %v214 = vpop.f32.mrb[0].mxu0
    %v215 = vadd.f32 0.0, %v214
    %v216 = vpop.f32.mrb[0].mxu0
    %217 = vmatprep.mubr.bf16.mxu0 0
    %218 = vmatmul.mubr.bf16.gmra.mrb[0].mxu0 %v137
    %v219 = vpop.f32.mrb[0].mxu0
    %v220 = vadd.f32 0.0, %v219
    %v221 = vpop.f32.mrb[0].mxu0
    %v222 = vpop.f32.mrb[0].mxu0
    %v223 = vadd.f32 0.0, %v222
    %v224 = vpop.f32.mrb[0].mxu0
    %225 = vmatprep.mubr.bf16.mxu0 0
    %226 = vmatmul.mubr.bf16.gmra.mrb[0].mxu0 %v140
    %v227 = vpop.f32.mrb[0].mxu0
    %v228 = vadd.f32 0.0, %v227
    %v229 = vpop.f32.mrb[0].mxu0
    %v230 = vpop.f32.mrb[0].mxu0
    %v231 = vadd.f32 0.0, %v230
    %v232 = vpop.f32.mrb[0].mxu0
    %233 = vmatprep.mubr.bf16.mxu0 0
    %234 = vmatmul.mubr.bf16.gmra.mrb[0].mxu0 %v143
    %v235 = vpop.f32.mrb[0].mxu0
    %v236 = vadd.f32 0.0, %v235
    %v237 = vpop.f32.mrb[0].mxu0
    %v238 = vpop.f32.mrb[0].mxu0
    %v239 = vadd.f32 0.0, %v238
    %v240 = vpop.f32.mrb[0].mxu0
    %241 = vdwg.mxu0
    %v242 = vadd.f32 %v40, %v180
    %v243 = vadd.f32 %v41, %v183
    %v244 = vadd.f32 %v42, %v188
    %v245 = vadd.f32 %v43, %v191
    %v246 = vadd.f32 %v44, %v196
    %v247 = vadd.f32 %v45, %v199
    %v248 = vadd.f32 %v46, %v204
    %v249 = vadd.f32 %v47, %v207
    %v250 = vadd.f32 %v48, %v212
    %v251 = vadd.f32 %v49, %v215
    %v252 = vadd.f32 %v50, %v220
    %v253 = vadd.f32 %v51, %v223
    %v254 = vadd.f32 %v52, %v228
    %v255 = vadd.f32 %v53, %v231
    %v256 = vadd.f32 %v54, %v236
    %v257 = vadd.f32 %v55, %v239
    %vm258 = vcmask 523264
    %259 = vst.msk [vmem:[#allocation2] sm:$0xff] %vm258, %v242
    %260 = vst.msk [vmem:[#allocation2 + $0x8] sm:$0xff] %vm258, %v243
    %261 = vst.msk [vmem:[#allocation2 + $0x10] sm:$0xff] %vm258, %v244
    %262 = vst.msk [vmem:[#allocation2 + $0x18] sm:$0xff] %vm258, %v245
    %263 = vst.msk [vmem:[#allocation2 + $0x20] sm:$0xff] %vm258, %v246
    %264 = vst.msk [vmem:[#allocation2 + $0x28] sm:$0xff] %vm258, %v247
    %265 = vst.msk [vmem:[#allocation2 + $0x30] sm:$0xff] %vm258, %v248
    %266 = vst.msk [vmem:[#allocation2 + $0x38] sm:$0xff] %vm258, %v249
    %267 = vst.msk [vmem:[#allocation2 + $0x40] sm:$0xff] %vm258, %v250
    %268 = vst.msk [vmem:[#allocation2 + $0x48] sm:$0xff] %vm258, %v251
    %269 = vst.msk [vmem:[#allocation2 + $0x50] sm:$0xff] %vm258, %v252
    %270 = vst.msk [vmem:[#allocation2 + $0x58] sm:$0xff] %vm258, %v253
    %271 = vst.msk [vmem:[#allocation2 + $0x60] sm:$0xff] %vm258, %v254
    %272 = vst.msk [vmem:[#allocation2 + $0x68] sm:$0xff] %vm258, %v255
    %273 = vst.msk [vmem:[#allocation2 + $0x70] sm:$0xff] %vm258, %v256
    %274 = vst.msk [vmem:[#allocation2 + $0x78] sm:$0xff] %vm258, %v257
    // Predicated region
    $region22: #{bottleneck_forward.13} parent=1 // pred_check
      %p275 = pneg %p19
    $region23: #{bottleneck_forward.13} parent=1 // pred_check_branch
      %277 = sbr.rel (%p275) target = $region25
    $region24: #{bottleneck_forward.13} parent=1 // pred_region
      %v278 = vld [vmem:[#allocation2] sm:$0xff]
      %v279 = vld [vmem:[#allocation2 + $0x8] sm:$0xff]
      %v280 = vld [vmem:[#allocation2 + $0x10] sm:$0xff]
      %v281 = vld [vmem:[#allocation2 + $0x18] sm:$0xff]
      %v282 = vld [vmem:[#allocation2 + $0x20] sm:$0xff]
      %v283 = vld [vmem:[#allocation2 + $0x28] sm:$0xff]
      %v284 = vld [vmem:[#allocation2 + $0x30] sm:$0xff]
      %v285 = vld [vmem:[#allocation2 + $0x38] sm:$0xff]
      %v286 = vld [vmem:[#allocation2 + $0x40] sm:$0xff]
      %v287 = vld [vmem:[#allocation2 + $0x48] sm:$0xff]
      %v288 = vld [vmem:[#allocation2 + $0x50] sm:$0xff]
      %v289 = vld [vmem:[#allocation2 + $0x58] sm:$0xff]
      %v290 = vld [vmem:[#allocation2 + $0x60] sm:$0xff]
      %v291 = vld [vmem:[#allocation2 + $0x68] sm:$0xff]
      %v292 = vld [vmem:[#allocation2 + $0x70] sm:$0xff]
      %v293 = vld [vmem:[#allocation2 + $0x78] sm:$0xff]
      %v294 = vld [vmem:[%s2] sm:$0x1]
      %v296 = vlaneseq
      %v297 = vshrl.u32 %v296, 7
      %v298 = vsub.s32 0, %v297
      %v299 = vrot.slane %v294, %v298
      %v301 = vadd.f32 %v278, %v299
      %v302 = vadd.f32 %v279, %v299
      %v303 = vadd.f32 %v280, %v299
      %v304 = vadd.f32 %v281, %v299
      %v305 = vadd.f32 %v282, %v299
      %v306 = vadd.f32 %v283, %v299
      %v307 = vadd.f32 %v284, %v299
      %v308 = vadd.f32 %v285, %v299
      %v309 = vadd.f32 %v286, %v299
      %v310 = vadd.f32 %v287, %v299
      %v311 = vadd.f32 %v288, %v299
      %v312 = vadd.f32 %v289, %v299
      %v313 = vadd.f32 %v290, %v299
      %v314 = vadd.f32 %v291, %v299
      %v315 = vadd.f32 %v292, %v299
      %v316 = vadd.f32 %v293, %v299
      %v317 = vld [vmem:[%s3] sm:$0xf]
      %v318 = vld [vmem:[%s3 + $0x4] sm:$0xf]
      %v319 = vld [vmem:[%s3 + $0x8] sm:$0xf]
      %v320 = vld [vmem:[%s3 + $0xc] sm:$0xf]
      %v321 = vld [vmem:[%s3 + $0x10] sm:$0xf]
      %v322 = vld [vmem:[%s3 + $0x14] sm:$0xf]
      %v323 = vld [vmem:[%s3 + $0x18] sm:$0xf]
      %v324 = vld [vmem:[%s3 + $0x1c] sm:$0xf]
      %v325 = vld [vmem:[%s3 + $0x20] sm:$0xf]
      %v326 = vld [vmem:[%s3 + $0x24] sm:$0xf]
      %v327 = vld [vmem:[%s3 + $0x28] sm:$0xf]
      %v328 = vld [vmem:[%s3 + $0x2c] sm:$0xf]
      %v329 = vld [vmem:[%s3 + $0x30] sm:$0xf]
      %v330 = vld [vmem:[%s3 + $0x34] sm:$0xf]
      %v331 = vld [vmem:[%s3 + $0x38] sm:$0xf]
      %v332 = vld [vmem:[%s3 + $0x3c] sm:$0xf]
      %v333 = vunpack.c.l.bf16 %v317
      %v334 = vunpack.c.l.bf16 %v318
      %v335 = vunpack.c.l.bf16 %v319
      %v336 = vunpack.c.l.bf16 %v320
      %v337 = vunpack.c.l.bf16 %v321
      %v338 = vunpack.c.l.bf16 %v322
      %v339 = vunpack.c.l.bf16 %v323
      %v340 = vunpack.c.l.bf16 %v324
      %v341 = vunpack.c.l.bf16 %v325
      %v342 = vunpack.c.l.bf16 %v326
      %v343 = vunpack.c.l.bf16 %v327
      %v344 = vunpack.c.l.bf16 %v328
      %v345 = vunpack.c.l.bf16 %v329
      %v346 = vunpack.c.l.bf16 %v330
      %v347 = vunpack.c.l.bf16 %v331
      %v348 = vunpack.c.l.bf16 %v332
      %v349 = vadd.f32 %v301, %v333
      %v350 = vadd.f32 %v302, %v334
      %v351 = vadd.f32 %v303, %v335
      %v352 = vadd.f32 %v304, %v336
      %v353 = vadd.f32 %v305, %v337
      %v354 = vadd.f32 %v306, %v338
      %v355 = vadd.f32 %v307, %v339
      %v356 = vadd.f32 %v308, %v340
      %v357 = vadd.f32 %v309, %v341
      %v358 = vadd.f32 %v310, %v342
      %v359 = vadd.f32 %v311, %v343
      %v360 = vadd.f32 %v312, %v344
      %v361 = vadd.f32 %v313, %v345
      %v362 = vadd.f32 %v314, %v346
      %v363 = vadd.f32 %v315, %v347
      %v364 = vadd.f32 %v316, %v348
      %v365 = vmax.f32 %v349, 0.0
      %v366 = vmax.f32 %v350, 0.0
      %v367 = vmax.f32 %v351, 0.0
      %v368 = vmax.f32 %v352, 0.0
      %v369 = vmax.f32 %v353, 0.0
      %v370 = vmax.f32 %v354, 0.0
      %v371 = vmax.f32 %v355, 0.0
      %v372 = vmax.f32 %v356, 0.0
      %v373 = vmax.f32 %v357, 0.0
      %v374 = vmax.f32 %v358, 0.0
      %v375 = vmax.f32 %v359, 0.0
      %v376 = vmax.f32 %v360, 0.0
      %v377 = vmax.f32 %v361, 0.0
      %v378 = vmax.f32 %v362, 0.0
      %v379 = vmax.f32 %v363, 0.0
      %v380 = vmax.f32 %v364, 0.0
      %381 = vst.msk [vmem:[#allocation3] sm:$0xff] %vm258, %v365
      %382 = vst.msk [vmem:[#allocation3 + $0x8] sm:$0xff] %vm258, %v366
      %383 = vst.msk [vmem:[#allocation3 + $0x10] sm:$0xff] %vm258, %v367
      %384 = vst.msk [vmem:[#allocation3 + $0x18] sm:$0xff] %vm258, %v368
      %385 = vst.msk [vmem:[#allocation3 + $0x20] sm:$0xff] %vm258, %v369
      %386 = vst.msk [vmem:[#allocation3 + $0x28] sm:$0xff] %vm258, %v370
      %387 = vst.msk [vmem:[#allocation3 + $0x30] sm:$0xff] %vm258, %v371
      %388 = vst.msk [vmem:[#allocation3 + $0x38] sm:$0xff] %vm258, %v372
      %389 = vst.msk [vmem:[#allocation3 + $0x40] sm:$0xff] %vm258, %v373
      %390 = vst.msk [vmem:[#allocation3 + $0x48] sm:$0xff] %vm258, %v374
      %391 = vst.msk [vmem:[#allocation3 + $0x50] sm:$0xff] %vm258, %v375
      %392 = vst.msk [vmem:[#allocation3 + $0x58] sm:$0xff] %vm258, %v376
      %393 = vst.msk [vmem:[#allocation3 + $0x60] sm:$0xff] %vm258, %v377
      %394 = vst.msk [vmem:[#allocation3 + $0x68] sm:$0xff] %vm258, %v378
      %395 = vst.msk [vmem:[#allocation3 + $0x70] sm:$0xff] %vm258, %v379
      %396 = vst.msk [vmem:[#allocation3 + $0x78] sm:$0xff] %vm258, %v380
    $region25: #{bottleneck_forward.13} parent=1 // pred_fallthru
      _
    // Predicated region
    $region26: #{bottleneck_forward.13} parent=1 // pred_check
      _
    $region27: #{bottleneck_forward.13} parent=1 // pred_check_branch
      %398 = sbr.rel (0) target = $region29
    $region28: #{bottleneck_forward.13} parent=1 // pred_region
      %s400 = ssub.s32 2048, 2048
      %401 = vsyncadd [#allocation4], %s400
      %s402 = sshll.u32 [#allocation3], 4
      %s403 = int_to_ptr.vmem [resolvable:$true] %s402
      %408 = dma.vmem_to_hbm [thread:$0]  %s403, 2048, %s4, [#allocation4], 128, 128, 8
    $region29: #{bottleneck_forward.13} parent=1 // pred_fallthru
      _
    // Predicated region
    $region30: #{bottleneck_forward.13} parent=1 // pred_check
      _
    $region31: #{bottleneck_forward.13} parent=1 // pred_check_branch
      %410 = sbr.rel (0) target = $region33
    $region32: #{bottleneck_forward.13} parent=1 // pred_region
      %411 = dma.done [#allocation4], 2048
    $region33: #{bottleneck_forward.13} parent=1 // pred_fallthru
      _
    %412 = vsyncpa [#allocation4], 1

// kernel: bottleneck_forward.12
$region0: #{bottleneck_forward.12}
  #allocation0 [shape = 'u32[]', space=smem, size = 0x4, offset = 0x4, fixed_abs, tag = 'smem constant byte address 0x4 - core index']
  #allocation1 [shape = 'u32[144,128]{1,0:T(1,128)}', space=vmem, size = 0x12000, scoped, tag = 'internal scratch']
  %s0 = inlined_call_operand.vmem [shape: bf16[1,2,10,10,16], index: 0, kind: input, shape index: {}]
  %s1 = inlined_call_operand.vmem [shape: bf16[9,16,16], index: 1, kind: input, shape index: {}]
  %s2 = inlined_call_operand.vmem [shape: f32[1,16], index: 2, kind: input, shape index: {}]
  %s3 = inlined_call_operand.vmem [shape: bf16[2,8,8,16], index: 3, kind: output, shape index: {}]
  %s4 = sld [smem:[#allocation0]]
  $region45: #{bottleneck_forward.12} parent=0
    _
  %s6 = ssub.s32 1, %s4
  %s7 = scalar_select 0, %s6, %s4
  loop: start=0, step=1, limit=4
  $region2: #{bottleneck_forward.12} parent=0 // loop_pre_header
    _
  $region3: #{bottleneck_forward.12} parent=0 // loop_header
    %s9 = sphi 0, %s13
    %p10 = scmp.ge.s32.totalorder %s9, 4
    %s19 = sphi 0, %s21
    %s22 = sphi 0, %s19
    %s23 = sphi 0, %s22
    %s39 = sphi 0, %s23
    %s43 = sphi 0, %s43
    %s45 = sphi 0, %s43
    %s46 = sphi 0, %s45
    %s60 = sphi 0, %s46
    %s64 = sphi 0, %s64
    %s66 = sphi 0, %s64
    %s67 = sphi 0, %s66
    %s81 = sphi 0, %s67
    %s87 = sphi 0, %s89
    %s90 = sphi 0, %s87
    %s91 = sphi 0, %s90
    %s107 = sphi 0, %s91
  $region4: #{bottleneck_forward.12} parent=0 // loop_header_branch
    %12 = sbr.rel (%p10) target = $region8
  $region5: #{bottleneck_forward.12} parent=0 // loop_body
    %s14 = ssub.s32 %s9, 1
    %s15 = ssub.s32 %s9, 2
    %s16 = sadd.s32 %s9, 1
    %s17 = ssub.s32 %s9, %s16
    %p18 = scmp.eq.s32.totalorder %s17, 0
    %s20 = sadd.s32 %s19, 1
    %s21 = scalar_select %p18, %s19, %s20
    %p24 = pneg %p18
    %p25 = scmp.eq.s32.totalorder %s9, 1
    %p26 = por %p24, %p25
    %p27 = scmp.ne.s32.totalorder %s19, %s22
    %p28 = scmp.eq.s32.totalorder %s9, 0
    %p29 = por %p27, %p28
    %p30 = scmp.ne.s32.totalorder %s19, %s22
    %p31 = scmp.eq.s32.totalorder %s14, 1
    %p32 = por %p30, %p31
    %p33 = scmp.ne.s32.totalorder %s22, %s23
    %p34 = scmp.eq.s32.totalorder %s14, 0
    %p35 = por %p33, %p34
    %p36 = scmp.ne.s32.totalorder %s22, %s23
    %p37 = scmp.eq.s32.totalorder %s15, 1
    %p38 = por %p36, %p37
    %p40 = scmp.ne.s32.totalorder %s23, %s39
    %p41 = scmp.eq.s32.totalorder %s15, 0
    %p42 = por %p40, %p41
    %s44 = sadd.s32 %s43, 1
    %p47 = scmp.eq.s32.totalorder %s9, 1
    %p48 = scmp.ne.s32.totalorder %s43, %s45
    %p49 = scmp.eq.s32.totalorder %s9, 0
    %p50 = por %p48, %p49
    %p51 = scmp.ne.s32.totalorder %s43, %s45
    %p52 = scmp.eq.s32.totalorder %s14, 1
    %p53 = por %p51, %p52
    %p54 = scmp.ne.s32.totalorder %s45, %s46
    %p55 = scmp.eq.s32.totalorder %s14, 0
    %p56 = por %p54, %p55
    %p57 = scmp.ne.s32.totalorder %s45, %s46
    %p58 = scmp.eq.s32.totalorder %s15, 1
    %p59 = por %p57, %p58
    %p61 = scmp.ne.s32.totalorder %s46, %s60
    %p62 = scmp.eq.s32.totalorder %s15, 0
    %p63 = por %p61, %p62
    %s65 = sadd.s32 %s64, 1
    %p68 = scmp.eq.s32.totalorder %s9, 1
    %p69 = scmp.ne.s32.totalorder %s64, %s66
    %p70 = scmp.eq.s32.totalorder %s9, 0
    %p71 = por %p69, %p70
    %p72 = scmp.ne.s32.totalorder %s64, %s66
    %p73 = scmp.eq.s32.totalorder %s14, 1
    %p74 = por %p72, %p73
    %p75 = scmp.ne.s32.totalorder %s66, %s67
    %p76 = scmp.eq.s32.totalorder %s14, 0
    %p77 = por %p75, %p76
    %p78 = scmp.ne.s32.totalorder %s66, %s67
    %p79 = scmp.eq.s32.totalorder %s15, 1
    %p80 = por %p78, %p79
    %p82 = scmp.ne.s32.totalorder %s67, %s81
    %p83 = scmp.eq.s32.totalorder %s15, 0
    %p84 = por %p82, %p83
    %s85 = ssub.s32 %s9, %s16
    %p86 = scmp.eq.s32.totalorder %s85, 0
    %s88 = sadd.s32 %s87, 1
    %s89 = scalar_select %p86, %s87, %s88
    %p92 = pneg %p86
    %p93 = scmp.eq.s32.totalorder %s9, 1
    %p94 = por %p92, %p93
    %p95 = scmp.ne.s32.totalorder %s87, %s90
    %p96 = scmp.eq.s32.totalorder %s9, 0
    %p97 = por %p95, %p96
    %p98 = scmp.ne.s32.totalorder %s87, %s90
    %p99 = scmp.eq.s32.totalorder %s14, 1
    %p100 = por %p98, %p99
    %p101 = scmp.ne.s32.totalorder %s90, %s91
    %p102 = scmp.eq.s32.totalorder %s14, 0
    %p103 = por %p101, %p102
    %p104 = scmp.ne.s32.totalorder %s90, %s91
    %p105 = scmp.eq.s32.totalorder %s15, 1
    %p106 = por %p104, %p105
    %p108 = scmp.ne.s32.totalorder %s91, %s107
    %p109 = scmp.eq.s32.totalorder %s15, 0
    %p110 = por %p108, %p109
    %p111 = scmp.le.s32.totalorder 1, %s9
    %p112 = scmp.lt.s32.totalorder %s9, 3
    %p113 = pnand %p111, %p112
    %p114 = pneg %p113
    // Predicated region
    $region9: #{bottleneck_forward.12} parent=5 // pred_check
      _
    $region10: #{bottleneck_forward.12} parent=5 // pred_check_branch
      %116 = sbr.rel (%p113) target = $region12
    $region11: #{bottleneck_forward.12} parent=5 // pred_region
      %s117 = ssub.s32 %s9, 1
      // Predicated region
      $region13: #{bottleneck_forward.12} parent=11 // pred_check
        %p118 = pneg %p56
      $region14: #{bottleneck_forward.12} parent=11 // pred_check_branch
        %120 = sbr.rel (%p118) target = $region16
      $region15: #{bottleneck_forward.12} parent=11 // pred_region
        _
      $region16: #{bottleneck_forward.12} parent=11 // pred_fallthru
        _
      // Predicated region
      $region17: #{bottleneck_forward.12} parent=11 // pred_check
        %p121 = pneg %p77
      $region18: #{bottleneck_forward.12} parent=11 // pred_check_branch
        %123 = sbr.rel (%p121) target = $region20
      $region19: #{bottleneck_forward.12} parent=11 // pred_region
        _
      $region20: #{bottleneck_forward.12} parent=11 // pred_fallthru
        _
    $region12: #{bottleneck_forward.12} parent=5 // pred_fallthru
      _
    %p124 = scmp.lt.s32.totalorder %s9, 2
    // Predicated region
    $region21: #{bottleneck_forward.12} parent=5 // pred_check
      %p125 = pneg %p124
    $region22: #{bottleneck_forward.12} parent=5 // pred_check_branch
      %127 = sbr.rel (%p125) target = $region24
    $region23: #{bottleneck_forward.12} parent=5 // pred_region
      // Predicated region
      $region25: #{bottleneck_forward.12} parent=23 // pred_check
        %p128 = pneg %p29
      $region26: #{bottleneck_forward.12} parent=23 // pred_check_branch
        %130 = sbr.rel (%p128) target = $region28
      $region27: #{bottleneck_forward.12} parent=23 // pred_region
        %p131 = scmp.lt.s32.totalorder %s9, 1
        %s132 = scalar_select %p131, %s9, 1
        %s133 = smul.addr %s132, 20
        %s134 = smul.addr %s133, 4
        %s135 = scalar_lea.vmem %s0, %s134
      $region28: #{bottleneck_forward.12} parent=23 // pred_fallthru
        _
    $region24: #{bottleneck_forward.12} parent=5 // pred_fallthru
      _
    %p136 = scmp.le.s32.totalorder 1, %s9
    %p137 = scmp.lt.s32.totalorder %s9, 3
    %p138 = pnand %p136, %p137
    %p139 = pneg %p138
    // Predicated region
    $region29: #{bottleneck_forward.12} parent=5 // pred_check
      _
    $region30: #{bottleneck_forward.12} parent=5 // pred_check_branch
      %141 = sbr.rel (%p138) target = $region32
    $region31: #{bottleneck_forward.12} parent=5 // pred_region
      %s142 = ssub.s32 %s9, 1
      %p143 = scmp.lt.s32.totalorder %s14, 1
      %s144 = scalar_select %p143, %s14, 1
      %s145 = smul.addr %s144, 20
      %s146 = smul.addr %s145, 4
      %s147 = scalar_lea.vmem %s0, %s146
      %p148 = pneg %p35
      %p149 = pneg %p32
      %p150 = pneg %p56
      %p151 = pneg %p53
      %p152 = pneg %p77
      %p153 = pneg %p74
      %p154 = pneg %p103
      %p155 = pneg %p100
      %p156 = scmp.lt.s32.totalorder %s14, 1
      %s157 = scalar_select %p156, %s14, 1
      %s158 = smul.addr %s157, 8
      %s159 = smul.addr %s158, 4
      %s160 = scalar_lea.vmem %s3, %s159
      %p161 = scmp.lt.s32.totalorder %s14, 1
      %s162 = scalar_select %p161, %s14, 1
      %s163 = smul.addr %s162, 20
      %s164 = smul.addr %s163, 4
      %s165 = scalar_lea.vmem %s0, %s164
      %p166 = scmp.lt.s32.totalorder %s14, 1
      %s167 = scalar_select %p166, %s14, 1
      %s168 = smul.addr %s167, 8
      %s169 = smul.addr %s168, 4
      %s170 = scalar_lea.vmem %s3, %s169
      %v172 = vld [vmem:[%s165] sm:$0xf]
      %v173 = vld [vmem:[%s165 + $0x8] sm:$0xf]
      %v174 = vld [vmem:[%s165 + $0x10] sm:$0xf]
      %v175 = vld [vmem:[%s165 + $0x18] sm:$0xf]
      %v176 = vld [vmem:[%s165 + $0x20] sm:$0xf]
      %v177 = vld [vmem:[%s165 + $0x28] sm:$0xf]
      %v178 = vld [vmem:[%s165 + $0x30] sm:$0xf]
      %v179 = vld [vmem:[%s165 + $0x38] sm:$0xf]
      %v180 = vld [vmem:[%s1] sm:$0xf]
      %v181 = vld [vmem:[%s1 + $0x4] sm:$0xf]
      %v182 = vld [vmem:[%s165 + $0x4] sm:$0x1]
      %v183 = vld [vmem:[%s165 + $0xc] sm:$0x1]
      %v184 = vld [vmem:[%s165 + $0x14] sm:$0x1]
      %v185 = vld [vmem:[%s165 + $0x1c] sm:$0x1]
      %v186 = vld [vmem:[%s165 + $0x24] sm:$0x1]
      %v187 = vld [vmem:[%s165 + $0x2c] sm:$0x1]
      %v188 = vld [vmem:[%s165 + $0x34] sm:$0x1]
      %v189 = vld [vmem:[%s165 + $0x3c] sm:$0x1]
      %vm190 = vsmask.f32 3328
      %vm191 = vsmask.f32 7440
      %vm192 = vmor %vm190, %vm191
      %v194 = vshrl.u32 %v172, 16
      %v196 = vrot.slane %v194, 4
      %v197 = vshll.u32 %v172, 16
      %v199 = vrot.slane %v197, 5
      %v200 = vor.u32 %v196, %v199
      %v201 = vrot.slane %v200, 4
      %v203 = vshll.u32 %v182, 16
      %v205 = vrot.slane %v203, 5
      %v206 = vsel %vm192, %v201, %v205
      %v208 = vshrl.u32 %v173, 16
      %v210 = vrot.slane %v208, 4
      %v211 = vshll.u32 %v173, 16
      %v213 = vrot.slane %v211, 5
      %v214 = vor.u32 %v210, %v213
      %v215 = vrot.slane %v214, 4
      %v217 = vshll.u32 %v183, 16
      %v219 = vrot.slane %v217, 5
      %v220 = vsel %vm192, %v215, %v219
      %v222 = vshrl.u32 %v174, 16
      %v224 = vrot.slane %v222, 4
      %v225 = vshll.u32 %v174, 16
      %v227 = vrot.slane %v225, 5
      %v228 = vor.u32 %v224, %v227
      %v229 = vrot.slane %v228, 4
      %v231 = vshll.u32 %v184, 16
      %v233 = vrot.slane %v231, 5
      %v234 = vsel %vm192, %v229, %v233
      %v236 = vshrl.u32 %v175, 16
      %v238 = vrot.slane %v236, 4
      %v239 = vshll.u32 %v175, 16
      %v241 = vrot.slane %v239, 5
      %v242 = vor.u32 %v238, %v241
      %v243 = vrot.slane %v242, 4
      %v245 = vshll.u32 %v185, 16
      %v247 = vrot.slane %v245, 5
      %v248 = vsel %vm192, %v243, %v247
      %v250 = vshrl.u32 %v176, 16
      %v252 = vrot.slane %v250, 4
      %v253 = vshll.u32 %v176, 16
      %v255 = vrot.slane %v253, 5
      %v256 = vor.u32 %v252, %v255
      %v257 = vrot.slane %v256, 4
      %v259 = vshll.u32 %v186, 16
      %v261 = vrot.slane %v259, 5
      %v262 = vsel %vm192, %v257, %v261
      %v264 = vshrl.u32 %v177, 16
      %v266 = vrot.slane %v264, 4
      %v267 = vshll.u32 %v177, 16
      %v269 = vrot.slane %v267, 5
      %v270 = vor.u32 %v266, %v269
      %v271 = vrot.slane %v270, 4
      %v273 = vshll.u32 %v187, 16
      %v275 = vrot.slane %v273, 5
      %v276 = vsel %vm192, %v271, %v275
      %v278 = vshrl.u32 %v178, 16
      %v280 = vrot.slane %v278, 4
      %v281 = vshll.u32 %v178, 16
      %v283 = vrot.slane %v281, 5
      %v284 = vor.u32 %v280, %v283
      %v285 = vrot.slane %v284, 4
      %v287 = vshll.u32 %v188, 16
      %v289 = vrot.slane %v287, 5
      %v290 = vsel %vm192, %v285, %v289
      %v292 = vshrl.u32 %v179, 16
      %v294 = vrot.slane %v292, 4
      %v295 = vshll.u32 %v179, 16
      %v297 = vrot.slane %v295, 5
      %v298 = vor.u32 %v294, %v297
      %v299 = vrot.slane %v298, 4
      %v301 = vshll.u32 %v189, 16
      %v303 = vrot.slane %v301, 5
      %v304 = vsel %vm192, %v299, %v303
      %s305 = scalar_lea.vmem %s1, 8
      %v306 = vld [vmem:[%s305] sm:$0xf]
      %v307 = vld [vmem:[%s305 + $0x4] sm:$0xf]
      %v308 = vunpack.c.l.b16 %v206
      %v309 = vunpack.c.l.b16 %v220
      %v310 = vunpack.c.l.b16 %v234
      %v311 = vunpack.c.l.b16 %v248
      %v312 = vunpack.c.l.b16 %v262
      %v313 = vunpack.c.l.b16 %v276
      %v314 = vunpack.c.l.b16 %v290
      %v315 = vunpack.c.l.b16 %v304
      %v316 = vpack.c.b16 %v309, %v308
      %v317 = vpack.c.b16 %v311, %v310
      %v318 = vpack.c.b16 %v313, %v312
      %v319 = vpack.c.b16 %v315, %v314
      %v322 = vunpack.c.l.b16 %v306
      %v323 = vunpack.c.l.b16 %v307
      %v324 = vpack.c.b16 %v323, %v322
      %vm326 = vcmask 130048
      %v328 = vsel %vm326, %v316, 0
      %v331 = vsel %vm326, %v317, 0
      %v334 = vsel %vm326, %v318, 0
      %v337 = vsel %vm326, %v319, 0
      %339 = vmatprep.subr.bf16.mxu0 0
      %340 = vmatpush1.bf16.msra.mxu0 %v324
      %341 = vmatprep.subr.bf16.mxu0 0
      %342 = vmatpush1.bf16.msra.mxu0 0
      %343 = vmatprep.subr.bf16.mxu0 0
      %344 = vmatpush1.bf16.msra.mxu0 0
      %345 = vmatprep.subr.bf16.mxu0 0
      %346 = vmatpush1.bf16.msra.mxu0 0
      %347 = vmatprep.subr.bf16.mxu0 0
      %348 = vmatpush1.bf16.msra.mxu0 0
      %349 = vmatprep.subr.bf16.mxu0 0
      %350 = vmatpush1.bf16.msra.mxu0 0
      %351 = vmatprep.subr.bf16.mxu0 0
      %352 = vmatpush1.bf16.msra.mxu0 0
      %353 = vmatprep.subr.bf16.mxu0 0
      %354 = vmatpush1.bf16.msra.mxu0 0
      %355 = vmatprep.subr.bf16.mxu0 0
      %356 = vmatpush1.bf16.msra.mxu0 0
      %357 = vmatprep.subr.bf16.mxu0 0
      %358 = vmatpush1.bf16.msra.mxu0 0
      %359 = vmatprep.subr.bf16.mxu0 0
      %360 = vmatpush1.bf16.msra.mxu0 0
      %361 = vmatprep.subr.bf16.mxu0 0
      %362 = vmatpush1.bf16.msra.mxu0 0
      %363 = vmatprep.subr.bf16.mxu0 0
      %364 = vmatpush1.bf16.msra.mxu0 0
      %365 = vmatprep.subr.bf16.mxu0 0
      %366 = vmatpush1.bf16.msra.mxu0 0
      %367 = vmatprep.subr.bf16.mxu0 0
      %368 = vmatpush1.bf16.msra.mxu0 0
      %369 = vmatprep.subr.bf16.mxu0 0
      %370 = vmatpush1.bf16.msra.mxu0 0
      %371 = vmatprep.mubr.bf16.mxu0 0
      %372 = vmatmul.mubr.bf16.gmra.mrb[0].mxu0 %v328
      %v373 = vpop.f32.mrb[0].mxu0
      %v374 = vadd.f32 0.0, %v373
      %v375 = vpop.f32.mrb[0].mxu0
      %v376 = vpop.f32.mrb[0].mxu0
      %v377 = vadd.f32 0.0, %v376
      %v378 = vpop.f32.mrb[0].mxu0
      %379 = vmatprep.mubr.bf16.mxu0 0
      %380 = vmatmul.mubr.bf16.gmra.mrb[0].mxu0 %v331
      %v381 = vpop.f32.mrb[0].mxu0
      %v382 = vadd.f32 0.0, %v381
      %v383 = vpop.f32.mrb[0].mxu0
      %v384 = vpop.f32.mrb[0].mxu0
      %v385 = vadd.f32 0.0, %v384
      %v386 = vpop.f32.mrb[0].mxu0
      %387 = vmatprep.mubr.bf16.mxu0 0
      %388 = vmatmul.mubr.bf16.gmra.mrb[0].mxu0 %v334
      %v389 = vpop.f32.mrb[0].mxu0
      %v390 = vadd.f32 0.0, %v389
      %v391 = vpop.f32.mrb[0].mxu0
      %v392 = vpop.f32.mrb[0].mxu0
      %v393 = vadd.f32 0.0, %v392
      %v394 = vpop.f32.mrb[0].mxu0
      %395 = vmatprep.mubr.bf16.mxu0 0
      %396 = vmatmul.mubr.bf16.gmra.mrb[0].mxu0 %v337
      %v397 = vpop.f32.mrb[0].mxu0
      %v398 = vadd.f32 0.0, %v397
      %v399 = vpop.f32.mrb[0].mxu0
      %v400 = vpop.f32.mrb[0].mxu0
      %v401 = vadd.f32 0.0, %v400
      %v402 = vpop.f32.mrb[0].mxu0
      %403 = vdwg.mxu0
      %v412 = vunpack.c.l.b16 %v172
      %v413 = vunpack.c.l.b16 %v173
      %v414 = vunpack.c.l.b16 %v174
      %v415 = vunpack.c.l.b16 %v175
      %v416 = vunpack.c.l.b16 %v176
      %v417 = vunpack.c.l.b16 %v177
      %v418 = vunpack.c.l.b16 %v178
      %v419 = vunpack.c.l.b16 %v179
      %v420 = vpack.c.b16 %v413, %v412
      %v421 = vpack.c.b16 %v415, %v414
      %v422 = vpack.c.b16 %v417, %v416
      %v423 = vpack.c.b16 %v419, %v418
      %v426 = vunpack.c.l.b16 %v180
      %v427 = vunpack.c.l.b16 %v181
      %v428 = vpack.c.b16 %v427, %v426
      %v431 = vsel %vm326, %v420, 0
      %v434 = vsel %vm326, %v421, 0
      %v437 = vsel %vm326, %v422, 0
      %v440 = vsel %vm326, %v423, 0
      %442 = vmatprep.subr.bf16.mxu0 0
      %443 = vmatpush1.bf16.msra.mxu0 %v428
      %444 = vmatprep.subr.bf16.mxu0 0
      %445 = vmatpush1.bf16.msra.mxu0 0
      %446 = vmatprep.subr.bf16.mxu0 0
      %447 = vmatpush1.bf16.msra.mxu0 0
      %448 = vmatprep.subr.bf16.mxu0 0
      %449 = vmatpush1.bf16.msra.mxu0 0
      %450 = vmatprep.subr.bf16.mxu0 0
      %451 = vmatpush1.bf16.msra.mxu0 0
      %452 = vmatprep.subr.bf16.mxu0 0
      %453 = vmatpush1.bf16.msra.mxu0 0
      %454 = vmatprep.subr.bf16.mxu0 0
      %455 = vmatpush1.bf16.msra.mxu0 0
      %456 = vmatprep.subr.bf16.mxu0 0
      %457 = vmatpush1.bf16.msra.mxu0 0
      %458 = vmatprep.subr.bf16.mxu0 0
      %459 = vmatpush1.bf16.msra.mxu0 0
      %460 = vmatprep.subr.bf16.mxu0 0
      %461 = vmatpush1.bf16.msra.mxu0 0
      %462 = vmatprep.subr.bf16.mxu0 0
      %463 = vmatpush1.bf16.msra.mxu0 0
      %464 = vmatprep.subr.bf16.mxu0 0
      %465 = vmatpush1.bf16.msra.mxu0 0
      %466 = vmatprep.subr.bf16.mxu0 0
      %467 = vmatpush1.bf16.msra.mxu0 0
      %468 = vmatprep.subr.bf16.mxu0 0
      %469 = vmatpush1.bf16.msra.mxu0 0
      %470 = vmatprep.subr.bf16.mxu0 0
      %471 = vmatpush1.bf16.msra.mxu0 0
      %472 = vmatprep.subr.bf16.mxu0 0
      %473 = vmatpush1.bf16.msra.mxu0 0
      %474 = vmatprep.mubr.bf16.mxu0 0
      %475 = vmatmul.mubr.bf16.gmra.mrb[0].mxu0 %v431
      %v476 = vpop.f32.mrb[0].mxu0
      %v477 = vadd.f32 %v374, %v476
      %v478 = vpop.f32.mrb[0].mxu0
      %v479 = vpop.f32.mrb[0].mxu0
      %v480 = vadd.f32 %v377, %v479
      %v481 = vpop.f32.mrb[0].mxu0
      %482 = vmatprep.mubr.bf16.mxu0 0
      %483 = vmatmul.mubr.bf16.gmra.mrb[0].mxu0 %v434
      %v484 = vpop.f32.mrb[0].mxu0
      %v485 = vadd.f32 %v382, %v484
      %v486 = vpop.f32.mrb[0].mxu0
      %v487 = vpop.f32.mrb[0].mxu0
      %v488 = vadd.f32 %v385, %v487
      %v489 = vpop.f32.mrb[0].mxu0
      %490 = vmatprep.mubr.bf16.mxu0 0
      %491 = vmatmul.mubr.bf16.gmra.mrb[0].mxu0 %v437
      %v492 = vpop.f32.mrb[0].mxu0
      %v493 = vadd.f32 %v390, %v492
      %v494 = vpop.f32.mrb[0].mxu0
      %v495 = vpop.f32.mrb[0].mxu0
      %v496 = vadd.f32 %v393, %v495
      %v497 = vpop.f32.mrb[0].mxu0
      %498 = vmatprep.mubr.bf16.mxu0 0
      %499 = vmatmul.mubr.bf16.gmra.mrb[0].mxu0 %v440
      %v500 = vpop.f32.mrb[0].mxu0
      %v501 = vadd.f32 %v398, %v500
      %v502 = vpop.f32.mrb[0].mxu0
      %v503 = vpop.f32.mrb[0].mxu0
      %v504 = vadd.f32 %v401, %v503
      %v505 = vpop.f32.mrb[0].mxu0
      %506 = vdwg.mxu0
      %v507 = vld [vmem:[%s165] sm:$0xe]
      %v508 = vld [vmem:[%s165 + $0x8] sm:$0xe]
      %v509 = vld [vmem:[%s165 + $0x10] sm:$0xe]
      %v510 = vld [vmem:[%s165 + $0x18] sm:$0xe]
      %v511 = vld [vmem:[%s165 + $0x20] sm:$0xe]
      %v512 = vld [vmem:[%s165 + $0x28] sm:$0xe]
      %v513 = vld [vmem:[%s165 + $0x30] sm:$0xe]
      %v514 = vld [vmem:[%s165 + $0x38] sm:$0xe]
      %vm531 = vcmask 1042432
      %vm532 = vcmask 1046532
      %vm533 = vmor %vm531, %vm532
      %v534 = vrot.slane %v507, 5
      %v535 = vrot.slane %v534, 4
      %v536 = vrot.slane %v182, 5
      %v537 = vsel %vm533, %v535, %v536
      %v538 = vrot.slane %v508, 5
      %v539 = vrot.slane %v538, 4
      %v540 = vrot.slane %v183, 5
      %v541 = vsel %vm533, %v539, %v540
      %v542 = vrot.slane %v509, 5
      %v543 = vrot.slane %v542, 4
      %v544 = vrot.slane %v184, 5
      %v545 = vsel %vm533, %v543, %v544
      %v546 = vrot.slane %v510, 5
      %v547 = vrot.slane %v546, 4
      %v548 = vrot.slane %v185, 5
      %v549 = vsel %vm533, %v547, %v548
      %v550 = vrot.slane %v511, 5
      %v551 = vrot.slane %v550, 4
      %v552 = vrot.slane %v186, 5
      %v553 = vsel %vm533, %v551, %v552
      %v554 = vrot.slane %v512, 5
      %v555 = vrot.slane %v554, 4
      %v556 = vrot.slane %v187, 5
      %v557 = vsel %vm533, %v555, %v556
      %v558 = vrot.slane %v513, 5
      %v559 = vrot.slane %v558, 4
      %v560 = vrot.slane %v188, 5
      %v561 = vsel %vm533, %v559, %v560
      %v562 = vrot.slane %v514, 5
      %v563 = vrot.slane %v562, 4
      %v564 = vrot.slane %v189, 5
      %v565 = vsel %vm533, %v563, %v564
      %s566 = scalar_lea.vmem %s1, 16
      %v567 = vld [vmem:[%s566] sm:$0xf]
      %v568 = vld [vmem:[%s566 + $0x4] sm:$0xf]
      %v569 = vunpack.c.l.b16 %v537
      %v570 = vunpack.c.l.b16 %v541
      %v571 = vunpack.c.l.b16 %v545
      %v572 = vunpack.c.l.b16 %v549
      %v573 = vunpack.c.l.b16 %v553
      %v574 = vunpack.c.l.b16 %v557
      %v575 = vunpack.c.l.b16 %v561
      %v576 = vunpack.c.l.b16 %v565
      %v577 = vpack.c.b16 %v570, %v569
      %v578 = vpack.c.b16 %v572, %v571
      %v579 = vpack.c.b16 %v574, %v573
      %v580 = vpack.c.b16 %v576, %v575
      %v583 = vunpack.c.l.b16 %v567
      %v584 = vunpack.c.l.b16 %v568
      %v585 = vpack.c.b16 %v584, %v583
      %v588 = vsel %vm326, %v577, 0
      %v591 = vsel %vm326, %v578, 0
      %v594 = vsel %vm326, %v579, 0
      %v597 = vsel %vm326, %v580, 0
      %599 = vmatprep.subr.bf16.mxu0 0
      %600 = vmatpush1.bf16.msra.mxu0 %v585
      %601 = vmatprep.subr.bf16.mxu0 0
      %602 = vmatpush1.bf16.msra.mxu0 0
      %603 = vmatprep.subr.bf16.mxu0 0
      %604 = vmatpush1.bf16.msra.mxu0 0
      %605 = vmatprep.subr.bf16.mxu0 0
      %606 = vmatpush1.bf16.msra.mxu0 0
      %607 = vmatprep.subr.bf16.mxu0 0
      %608 = vmatpush1.bf16.msra.mxu0 0
      %609 = vmatprep.subr.bf16.mxu0 0
      %610 = vmatpush1.bf16.msra.mxu0 0
      %611 = vmatprep.subr.bf16.mxu0 0
      %612 = vmatpush1.bf16.msra.mxu0 0
      %613 = vmatprep.subr.bf16.mxu0 0
      %614 = vmatpush1.bf16.msra.mxu0 0
      %615 = vmatprep.subr.bf16.mxu0 0
      %616 = vmatpush1.bf16.msra.mxu0 0
      %617 = vmatprep.subr.bf16.mxu0 0
      %618 = vmatpush1.bf16.msra.mxu0 0
      %619 = vmatprep.subr.bf16.mxu0 0
      %620 = vmatpush1.bf16.msra.mxu0 0
      %621 = vmatprep.subr.bf16.mxu0 0
      %622 = vmatpush1.bf16.msra.mxu0 0
      %623 = vmatprep.subr.bf16.mxu0 0
      %624 = vmatpush1.bf16.msra.mxu0 0
      %625 = vmatprep.subr.bf16.mxu0 0
      %626 = vmatpush1.bf16.msra.mxu0 0
      %627 = vmatprep.subr.bf16.mxu0 0
      %628 = vmatpush1.bf16.msra.mxu0 0
      %629 = vmatprep.subr.bf16.mxu0 0
      %630 = vmatpush1.bf16.msra.mxu0 0
      %631 = vmatprep.mubr.bf16.mxu0 0
      %632 = vmatmul.mubr.bf16.gmra.mrb[0].mxu0 %v588
      %v633 = vpop.f32.mrb[0].mxu0
      %v634 = vadd.f32 0.0, %v633
      %v635 = vpop.f32.mrb[0].mxu0
      %v636 = vpop.f32.mrb[0].mxu0
      %v637 = vadd.f32 0.0, %v636
      %v638 = vpop.f32.mrb[0].mxu0
      %639 = vmatprep.mubr.bf16.mxu0 0
      %640 = vmatmul.mubr.bf16.gmra.mrb[0].mxu0 %v591
      %v641 = vpop.f32.mrb[0].mxu0
      %v642 = vadd.f32 0.0, %v641
      %v643 = vpop.f32.mrb[0].mxu0
      %v644 = vpop.f32.mrb[0].mxu0
      %v645 = vadd.f32 0.0, %v644
      %v646 = vpop.f32.mrb[0].mxu0
      %647 = vmatprep.mubr.bf16.mxu0 0
      %648 = vmatmul.mubr.bf16.gmra.mrb[0].mxu0 %v594
      %v649 = vpop.f32.mrb[0].mxu0
      %v650 = vadd.f32 0.0, %v649
      %v651 = vpop.f32.mrb[0].mxu0
      %v652 = vpop.f32.mrb[0].mxu0
      %v653 = vadd.f32 0.0, %v652
      %v654 = vpop.f32.mrb[0].mxu0
      %655 = vmatprep.mubr.bf16.mxu0 0
      %656 = vmatmul.mubr.bf16.gmra.mrb[0].mxu0 %v597
      %v657 = vpop.f32.mrb[0].mxu0
      %v658 = vadd.f32 0.0, %v657
      %v659 = vpop.f32.mrb[0].mxu0
      %v660 = vpop.f32.mrb[0].mxu0
      %v661 = vadd.f32 0.0, %v660
      %v662 = vpop.f32.mrb[0].mxu0
      %663 = vdwg.mxu0
      %v664 = vadd.f32 %v477, %v634
      %v665 = vadd.f32 %v480, %v637
      %v666 = vadd.f32 %v485, %v642
      %v667 = vadd.f32 %v488, %v645
      %v668 = vadd.f32 %v493, %v650
      %v669 = vadd.f32 %v496, %v653
      %v670 = vadd.f32 %v501, %v658
      %v671 = vadd.f32 %v504, %v661
      %s672 = scalar_lea.vmem %s165, 8
      %v673 = vld [vmem:[%s672] sm:$0xf]
      %v674 = vld [vmem:[%s672 + $0x8] sm:$0xf]
      %v675 = vld [vmem:[%s672 + $0x10] sm:$0xf]
      %v676 = vld [vmem:[%s672 + $0x18] sm:$0xf]
      %v677 = vld [vmem:[%s672 + $0x20] sm:$0xf]
      %v678 = vld [vmem:[%s672 + $0x28] sm:$0xf]
      %v679 = vld [vmem:[%s672 + $0x30] sm:$0xf]
      %v680 = vld [vmem:[%s672 + $0x38] sm:$0xf]
      %s681 = scalar_lea.vmem %s1, 24
      %v682 = vld [vmem:[%s681] sm:$0xf]
      %v683 = vld [vmem:[%s681 + $0x4] sm:$0xf]
      %v692 = vunpack.c.l.b16 %v673
      %v693 = vunpack.c.l.b16 %v674
      %v694 = vunpack.c.l.b16 %v675
      %v695 = vunpack.c.l.b16 %v676
      %v696 = vunpack.c.l.b16 %v677
      %v697 = vunpack.c.l.b16 %v678
      %v698 = vunpack.c.l.b16 %v679
      %v699 = vunpack.c.l.b16 %v680
      %v700 = vpack.c.b16 %v693, %v692
      %v701 = vpack.c.b16 %v695, %v694
      %v702 = vpack.c.b16 %v697, %v696
      %v703 = vpack.c.b16 %v699, %v698
      %v706 = vunpack.c.l.b16 %v682
      %v707 = vunpack.c.l.b16 %v683
      %v708 = vpack.c.b16 %v707, %v706
      %v711 = vsel %vm326, %v700, 0
      %v714 = vsel %vm326, %v701, 0
      %v717 = vsel %vm326, %v702, 0
      %v720 = vsel %vm326, %v703, 0
      %722 = vmatprep.subr.bf16.mxu0 0
      %723 = vmatpush1.bf16.msra.mxu0 %v708
      %724 = vmatprep.subr.bf16.mxu0 0
      %725 = vmatpush1.bf16.msra.mxu0 0
      %726 = vmatprep.subr.bf16.mxu0 0
      %727 = vmatpush1.bf16.msra.mxu0 0
      %728 = vmatprep.subr.bf16.mxu0 0
      %729 = vmatpush1.bf16.msra.mxu0 0
      %730 = vmatprep.subr.bf16.mxu0 0
      %731 = vmatpush1.bf16.msra.mxu0 0
      %732 = vmatprep.subr.bf16.mxu0 0
      %733 = vmatpush1.bf16.msra.mxu0 0
      %734 = vmatprep.subr.bf16.mxu0 0
      %735 = vmatpush1.bf16.msra.mxu0 0
      %736 = vmatprep.subr.bf16.mxu0 0
      %737 = vmatpush1.bf16.msra.mxu0 0
      %738 = vmatprep.subr.bf16.mxu0 0
      %739 = vmatpush1.bf16.msra.mxu0 0
      %740 = vmatprep.subr.bf16.mxu0 0
      %741 = vmatpush1.bf16.msra.mxu0 0
      %742 = vmatprep.subr.bf16.mxu0 0
      %743 = vmatpush1.bf16.msra.mxu0 0
      %744 = vmatprep.subr.bf16.mxu0 0
      %745 = vmatpush1.bf16.msra.mxu0 0
      %746 = vmatprep.subr.bf16.mxu0 0
      %747 = vmatpush1.bf16.msra.mxu0 0
      %748 = vmatprep.subr.bf16.mxu0 0
      %749 = vmatpush1.bf16.msra.mxu0 0
      %750 = vmatprep.subr.bf16.mxu0 0
      %751 = vmatpush1.bf16.msra.mxu0 0
      %752 = vmatprep.subr.bf16.mxu0 0
      %753 = vmatpush1.bf16.msra.mxu0 0
      %754 = vmatprep.mubr.bf16.mxu0 0
      %755 = vmatmul.mubr.bf16.gmra.mrb[0].mxu0 %v711
      %v756 = vpop.f32.mrb[0].mxu0
      %v757 = vadd.f32 0.0, %v756
      %v758 = vpop.f32.mrb[0].mxu0
      %v759 = vpop.f32.mrb[0].mxu0
      %v760 = vadd.f32 0.0, %v759
      %v761 = vpop.f32.mrb[0].mxu0
      %762 = vmatprep.mubr.bf16.mxu0 0
      %763 = vmatmul.mubr.bf16.gmra.mrb[0].mxu0 %v714
      %v764 = vpop.f32.mrb[0].mxu0
      %v765 = vadd.f32 0.0, %v764
      %v766 = vpop.f32.mrb[0].mxu0
      %v767 = vpop.f32.mrb[0].mxu0
      %v768 = vadd.f32 0.0, %v767
      %v769 = vpop.f32.mrb[0].mxu0
      %770 = vmatprep.mubr.bf16.mxu0 0
      %771 = vmatmul.mubr.bf16.gmra.mrb[0].mxu0 %v717
      %v772 = vpop.f32.mrb[0].mxu0
      %v773 = vadd.f32 0.0, %v772
      %v774 = vpop.f32.mrb[0].mxu0
      %v775 = vpop.f32.mrb[0].mxu0
      %v776 = vadd.f32 0.0, %v775
      %v777 = vpop.f32.mrb[0].mxu0
      %778 = vmatprep.mubr.bf16.mxu0 0
      %779 = vmatmul.mubr.bf16.gmra.mrb[0].mxu0 %v720
      %v780 = vpop.f32.mrb[0].mxu0
      %v781 = vadd.f32 0.0, %v780
      %v782 = vpop.f32.mrb[0].mxu0
      %v783 = vpop.f32.mrb[0].mxu0
      %v784 = vadd.f32 0.0, %v783
      %v785 = vpop.f32.mrb[0].mxu0
      %786 = vdwg.mxu0
      %v787 = vadd.f32 %v664, %v757
      %v788 = vadd.f32 %v665, %v760
      %v789 = vadd.f32 %v666, %v765
      %v790 = vadd.f32 %v667, %v768
      %v791 = vadd.f32 %v668, %v773
      %v792 = vadd.f32 %v669, %v776
      %v793 = vadd.f32 %v670, %v781
      %v794 = vadd.f32 %v671, %v784
      %v795 = vld [vmem:[%s672] sm:$0xf]
      %v796 = vld [vmem:[%s672 + $0x4] sm:$0x1]
      %v797 = vld [vmem:[%s672 + $0x8] sm:$0xf]
      %v798 = vld [vmem:[%s672 + $0xc] sm:$0x1]
      %v799 = vld [vmem:[%s672 + $0x10] sm:$0xf]
      %v800 = vld [vmem:[%s672 + $0x14] sm:$0x1]
      %v801 = vld [vmem:[%s672 + $0x18] sm:$0xf]
      %v802 = vld [vmem:[%s672 + $0x1c] sm:$0x1]
      %v803 = vld [vmem:[%s672 + $0x20] sm:$0xf]
      %v804 = vld [vmem:[%s672 + $0x24] sm:$0x1]
      %v805 = vld [vmem:[%s672 + $0x28] sm:$0xf]
      %v806 = vld [vmem:[%s672 + $0x2c] sm:$0x1]
      %v807 = vld [vmem:[%s672 + $0x30] sm:$0xf]
      %v808 = vld [vmem:[%s672 + $0x34] sm:$0x1]
      %v809 = vld [vmem:[%s672 + $0x38] sm:$0xf]
      %v810 = vld [vmem:[%s672 + $0x3c] sm:$0x1]
      %v812 = vshrl.u32 %v795, 16
      %v814 = vrot.slane %v812, 4
      %v815 = vshll.u32 %v795, 16
      %v817 = vrot.slane %v815, 5
      %v818 = vor.u32 %v814, %v817
      %v819 = vrot.slane %v818, 4
      %v821 = vshll.u32 %v796, 16
      %v823 = vrot.slane %v821, 5
      %v824 = vsel %vm192, %v819, %v823
      %v826 = vshrl.u32 %v797, 16
      %v828 = vrot.slane %v826, 4
      %v829 = vshll.u32 %v797, 16
      %v831 = vrot.slane %v829, 5
      %v832 = vor.u32 %v828, %v831
      %v833 = vrot.slane %v832, 4
      %v835 = vshll.u32 %v798, 16
      %v837 = vrot.slane %v835, 5
      %v838 = vsel %vm192, %v833, %v837
      %v840 = vshrl.u32 %v799, 16
      %v842 = vrot.slane %v840, 4
      %v843 = vshll.u32 %v799, 16
      %v845 = vrot.slane %v843, 5
      %v846 = vor.u32 %v842, %v845
      %v847 = vrot.slane %v846, 4
      %v849 = vshll.u32 %v800, 16
      %v851 = vrot.slane %v849, 5
      %v852 = vsel %vm192, %v847, %v851
      %v854 = vshrl.u32 %v801, 16
      %v856 = vrot.slane %v854, 4
      %v857 = vshll.u32 %v801, 16
      %v859 = vrot.slane %v857, 5
      %v860 = vor.u32 %v856, %v859
      %v861 = vrot.slane %v860, 4
      %v863 = vshll.u32 %v802, 16
      %v865 = vrot.slane %v863, 5
      %v866 = vsel %vm192, %v861, %v865
      %v868 = vshrl.u32 %v803, 16
      %v870 = vrot.slane %v868, 4
      %v871 = vshll.u32 %v803, 16
      %v873 = vrot.slane %v871, 5
      %v874 = vor.u32 %v870, %v873
      %v875 = vrot.slane %v874, 4
      %v877 = vshll.u32 %v804, 16
      %v879 = vrot.slane %v877, 5
      %v880 = vsel %vm192, %v875, %v879
      %v882 = vshrl.u32 %v805, 16
      %v884 = vrot.slane %v882, 4
      %v885 = vshll.u32 %v805, 16
      %v887 = vrot.slane %v885, 5
      %v888 = vor.u32 %v884, %v887
      %v889 = vrot.slane %v888, 4
      %v891 = vshll.u32 %v806, 16
      %v893 = vrot.slane %v891, 5
      %v894 = vsel %vm192, %v889, %v893
      %v896 = vshrl.u32 %v807, 16
      %v898 = vrot.slane %v896, 4
      %v899 = vshll.u32 %v807, 16
      %v901 = vrot.slane %v899, 5
      %v902 = vor.u32 %v898, %v901
      %v903 = vrot.slane %v902, 4
      %v905 = vshll.u32 %v808, 16
      %v907 = vrot.slane %v905, 5
      %v908 = vsel %vm192, %v903, %v907
      %v910 = vshrl.u32 %v809, 16
      %v912 = vrot.slane %v910, 4
      %v913 = vshll.u32 %v809, 16
      %v915 = vrot.slane %v913, 5
      %v916 = vor.u32 %v912, %v915
      %v917 = vrot.slane %v916, 4
      %v919 = vshll.u32 %v810, 16
      %v921 = vrot.slane %v919, 5
      %v922 = vsel %vm192, %v917, %v921
      %s923 = scalar_lea.vmem %s1, 32
      %v924 = vld [vmem:[%s923] sm:$0xf]
      %v925 = vld [vmem:[%s923 + $0x4] sm:$0xf]
      %v926 = vunpack.c.l.b16 %v824
      %v927 = vunpack.c.l.b16 %v838
      %v928 = vunpack.c.l.b16 %v852
      %v929 = vunpack.c.l.b16 %v866
      %v930 = vunpack.c.l.b16 %v880
      %v931 = vunpack.c.l.b16 %v894
      %v932 = vunpack.c.l.b16 %v908
      %v933 = vunpack.c.l.b16 %v922
      %v934 = vpack.c.b16 %v927, %v926
      %v935 = vpack.c.b16 %v929, %v928
      %v936 = vpack.c.b16 %v931, %v930
      %v937 = vpack.c.b16 %v933, %v932
      %v940 = vunpack.c.l.b16 %v924
      %v941 = vunpack.c.l.b16 %v925
      %v942 = vpack.c.b16 %v941, %v940
      %v945 = vsel %vm326, %v934, 0
      %v948 = vsel %vm326, %v935, 0
      %v951 = vsel %vm326, %v936, 0
      %v954 = vsel %vm326, %v937, 0
      %956 = vmatprep.subr.bf16.mxu0 0
      %957 = vmatpush1.bf16.msra.mxu0 %v942
      %958 = vmatprep.subr.bf16.mxu0 0
      %959 = vmatpush1.bf16.msra.mxu0 0
      %960 = vmatprep.subr.bf16.mxu0 0
      %961 = vmatpush1.bf16.msra.mxu0 0
      %962 = vmatprep.subr.bf16.mxu0 0
      %963 = vmatpush1.bf16.msra.mxu0 0
      %964 = vmatprep.subr.bf16.mxu0 0
      %965 = vmatpush1.bf16.msra.mxu0 0
      %966 = vmatprep.subr.bf16.mxu0 0
      %967 = vmatpush1.bf16.msra.mxu0 0
      %968 = vmatprep.subr.bf16.mxu0 0
      %969 = vmatpush1.bf16.msra.mxu0 0
      %970 = vmatprep.subr.bf16.mxu0 0
      %971 = vmatpush1.bf16.msra.mxu0 0
      %972 = vmatprep.subr.bf16.mxu0 0
      %973 = vmatpush1.bf16.msra.mxu0 0
      %974 = vmatprep.subr.bf16.mxu0 0
      %975 = vmatpush1.bf16.msra.mxu0 0
      %976 = vmatprep.subr.bf16.mxu0 0
      %977 = vmatpush1.bf16.msra.mxu0 0
      %978 = vmatprep.subr.bf16.mxu0 0
      %979 = vmatpush1.bf16.msra.mxu0 0
      %980 = vmatprep.subr.bf16.mxu0 0
      %981 = vmatpush1.bf16.msra.mxu0 0
      %982 = vmatprep.subr.bf16.mxu0 0
      %983 = vmatpush1.bf16.msra.mxu0 0
      %984 = vmatprep.subr.bf16.mxu0 0
      %985 = vmatpush1.bf16.msra.mxu0 0
      %986 = vmatprep.subr.bf16.mxu0 0
      %987 = vmatpush1.bf16.msra.mxu0 0
      %988 = vmatprep.mubr.bf16.mxu0 0
      %989 = vmatmul.mubr.bf16.gmra.mrb[0].mxu0 %v945
      %v990 = vpop.f32.mrb[0].mxu0
      %v991 = vadd.f32 0.0, %v990
      %v992 = vpop.f32.mrb[0].mxu0
      %v993 = vpop.f32.mrb[0].mxu0
      %v994 = vadd.f32 0.0, %v993
      %v995 = vpop.f32.mrb[0].mxu0
      %996 = vmatprep.mubr.bf16.mxu0 0
      %997 = vmatmul.mubr.bf16.gmra.mrb[0].mxu0 %v948
      %v998 = vpop.f32.mrb[0].mxu0
      %v999 = vadd.f32 0.0, %v998
      %v1000 = vpop.f32.mrb[0].mxu0
      %v1001 = vpop.f32.mrb[0].mxu0
      %v1002 = vadd.f32 0.0, %v1001
      %v1003 = vpop.f32.mrb[0].mxu0
      %1004 = vmatprep.mubr.bf16.mxu0 0
      %1005 = vmatmul.mubr.bf16.gmra.mrb[0].mxu0 %v951
      %v1006 = vpop.f32.mrb[0].mxu0
      %v1007 = vadd.f32 0.0, %v1006
      %v1008 = vpop.f32.mrb[0].mxu0
      %v1009 = vpop.f32.mrb[0].mxu0
      %v1010 = vadd.f32 0.0, %v1009
      %v1011 = vpop.f32.mrb[0].mxu0
      %1012 = vmatprep.mubr.bf16.mxu0 0
      %1013 = vmatmul.mubr.bf16.gmra.mrb[0].mxu0 %v954
      %v1014 = vpop.f32.mrb[0].mxu0
      %v1015 = vadd.f32 0.0, %v1014
      %v1016 = vpop.f32.mrb[0].mxu0
      %v1017 = vpop.f32.mrb[0].mxu0
      %v1018 = vadd.f32 0.0, %v1017
      %v1019 = vpop.f32.mrb[0].mxu0
      %1020 = vdwg.mxu0
      %v1021 = vadd.f32 %v787, %v991
      %v1022 = vadd.f32 %v788, %v994
      %v1023 = vadd.f32 %v789, %v999
      %v1024 = vadd.f32 %v790, %v1002
      %v1025 = vadd.f32 %v791, %v1007
      %v1026 = vadd.f32 %v792, %v1010
      %v1027 = vadd.f32 %v793, %v1015
      %v1028 = vadd.f32 %v794, %v1018
      %v1029 = vld [vmem:[%s672] sm:$0xe]
      %v1030 = vld [vmem:[%s672 + $0x8] sm:$0xe]
      %v1031 = vld [vmem:[%s672 + $0x10] sm:$0xe]
      %v1032 = vld [vmem:[%s672 + $0x18] sm:$0xe]
      %v1033 = vld [vmem:[%s672 + $0x20] sm:$0xe]
      %v1034 = vld [vmem:[%s672 + $0x28] sm:$0xe]
      %v1035 = vld [vmem:[%s672 + $0x30] sm:$0xe]
      %v1036 = vld [vmem:[%s672 + $0x38] sm:$0xe]
      %v1053 = vrot.slane %v1029, 5
      %v1054 = vrot.slane %v1053, 4
      %v1055 = vrot.slane %v796, 5
      %v1056 = vsel %vm533, %v1054, %v1055
      %v1057 = vrot.slane %v1030, 5
      %v1058 = vrot.slane %v1057, 4
      %v1059 = vrot.slane %v798, 5
      %v1060 = vsel %vm533, %v1058, %v1059
      %v1061 = vrot.slane %v1031, 5
      %v1062 = vrot.slane %v1061, 4
      %v1063 = vrot.slane %v800, 5
      %v1064 = vsel %vm533, %v1062, %v1063
      %v1065 = vrot.slane %v1032, 5
      %v1066 = vrot.slane %v1065, 4
      %v1067 = vrot.slane %v802, 5
      %v1068 = vsel %vm533, %v1066, %v1067
      %v1069 = vrot.slane %v1033, 5
      %v1070 = vrot.slane %v1069, 4
      %v1071 = vrot.slane %v804, 5
      %v1072 = vsel %vm533, %v1070, %v1071
      %v1073 = vrot.slane %v1034, 5
      %v1074 = vrot.slane %v1073, 4
      %v1075 = vrot.slane %v806, 5
      %v1076 = vsel %vm533, %v1074, %v1075
      %v1077 = vrot.slane %v1035, 5
      %v1078 = vrot.slane %v1077, 4
      %v1079 = vrot.slane %v808, 5
      %v1080 = vsel %vm533, %v1078, %v1079
      %v1081 = vrot.slane %v1036, 5
      %v1082 = vrot.slane %v1081, 4
      %v1083 = vrot.slane %v810, 5
      %v1084 = vsel %vm533, %v1082, %v1083
      %s1085 = scalar_lea.vmem %s1, 40
      %v1086 = vld [vmem:[%s1085] sm:$0xf]
      %v1087 = vld [vmem:[%s1085 + $0x4] sm:$0xf]
      %v1088 = vunpack.c.l.b16 %v1056
      %v1089 = vunpack.c.l.b16 %v1060
      %v1090 = vunpack.c.l.b16 %v1064
      %v1091 = vunpack.c.l.b16 %v1068
      %v1092 = vunpack.c.l.b16 %v1072
      %v1093 = vunpack.c.l.b16 %v1076
      %v1094 = vunpack.c.l.b16 %v1080
      %v1095 = vunpack.c.l.b16 %v1084
      %v1096 = vpack.c.b16 %v1089, %v1088
      %v1097 = vpack.c.b16 %v1091, %v1090
      %v1098 = vpack.c.b16 %v1093, %v1092
      %v1099 = vpack.c.b16 %v1095, %v1094
      %v1102 = vunpack.c.l.b16 %v1086
      %v1103 = vunpack.c.l.b16 %v1087
      %v1104 = vpack.c.b16 %v1103, %v1102
      %v1107 = vsel %vm326, %v1096, 0
      %v1110 = vsel %vm326, %v1097, 0
      %v1113 = vsel %vm326, %v1098, 0
      %v1116 = vsel %vm326, %v1099, 0
      %1118 = vmatprep.subr.bf16.mxu0 0
      %1119 = vmatpush1.bf16.msra.mxu0 %v1104
      %1120 = vmatprep.subr.bf16.mxu0 0
      %1121 = vmatpush1.bf16.msra.mxu0 0
      %1122 = vmatprep.subr.bf16.mxu0 0
      %1123 = vmatpush1.bf16.msra.mxu0 0
      %1124 = vmatprep.subr.bf16.mxu0 0
      %1125 = vmatpush1.bf16.msra.mxu0 0
      %1126 = vmatprep.subr.bf16.mxu0 0
      %1127 = vmatpush1.bf16.msra.mxu0 0
      %1128 = vmatprep.subr.bf16.mxu0 0
      %1129 = vmatpush1.bf16.msra.mxu0 0
      %1130 = vmatprep.subr.bf16.mxu0 0
      %1131 = vmatpush1.bf16.msra.mxu0 0
      %1132 = vmatprep.subr.bf16.mxu0 0
      %1133 = vmatpush1.bf16.msra.mxu0 0
      %1134 = vmatprep.subr.bf16.mxu0 0
      %1135 = vmatpush1.bf16.msra.mxu0 0
      %1136 = vmatprep.subr.bf16.mxu0 0
      %1137 = vmatpush1.bf16.msra.mxu0 0
      %1138 = vmatprep.subr.bf16.mxu0 0
      %1139 = vmatpush1.bf16.msra.mxu0 0
      %1140 = vmatprep.subr.bf16.mxu0 0
      %1141 = vmatpush1.bf16.msra.mxu0 0
      %1142 = vmatprep.subr.bf16.mxu0 0
      %1143 = vmatpush1.bf16.msra.mxu0 0
      %1144 = vmatprep.subr.bf16.mxu0 0
      %1145 = vmatpush1.bf16.msra.mxu0 0
      %1146 = vmatprep.subr.bf16.mxu0 0
      %1147 = vmatpush1.bf16.msra.mxu0 0
      %1148 = vmatprep.subr.bf16.mxu0 0
      %1149 = vmatpush1.bf16.msra.mxu0 0
      %1150 = vmatprep.mubr.bf16.mxu0 0
      %1151 = vmatmul.mubr.bf16.gmra.mrb[0].mxu0 %v1107
      %v1152 = vpop.f32.mrb[0].mxu0
      %v1153 = vadd.f32 0.0, %v1152
      %v1154 = vpop.f32.mrb[0].mxu0
      %v1155 = vpop.f32.mrb[0].mxu0
      %v1156 = vadd.f32 0.0, %v1155
      %v1157 = vpop.f32.mrb[0].mxu0
      %1158 = vmatprep.mubr.bf16.mxu0 0
      %1159 = vmatmul.mubr.bf16.gmra.mrb[0].mxu0 %v1110
      %v1160 = vpop.f32.mrb[0].mxu0
      %v1161 = vadd.f32 0.0, %v1160
      %v1162 = vpop.f32.mrb[0].mxu0
      %v1163 = vpop.f32.mrb[0].mxu0
      %v1164 = vadd.f32 0.0, %v1163
      %v1165 = vpop.f32.mrb[0].mxu0
      %1166 = vmatprep.mubr.bf16.mxu0 0
      %1167 = vmatmul.mubr.bf16.gmra.mrb[0].mxu0 %v1113
      %v1168 = vpop.f32.mrb[0].mxu0
      %v1169 = vadd.f32 0.0, %v1168
      %v1170 = vpop.f32.mrb[0].mxu0
      %v1171 = vpop.f32.mrb[0].mxu0
      %v1172 = vadd.f32 0.0, %v1171
      %v1173 = vpop.f32.mrb[0].mxu0
      %1174 = vmatprep.mubr.bf16.mxu0 0
      %1175 = vmatmul.mubr.bf16.gmra.mrb[0].mxu0 %v1116
      %v1176 = vpop.f32.mrb[0].mxu0
      %v1177 = vadd.f32 0.0, %v1176
      %v1178 = vpop.f32.mrb[0].mxu0
      %v1179 = vpop.f32.mrb[0].mxu0
      %v1180 = vadd.f32 0.0, %v1179
      %v1181 = vpop.f32.mrb[0].mxu0
      %1182 = vdwg.mxu0
      %v1183 = vadd.f32 %v1021, %v1153
      %v1184 = vadd.f32 %v1022, %v1156
      %v1185 = vadd.f32 %v1023, %v1161
      %v1186 = vadd.f32 %v1024, %v1164
      %v1187 = vadd.f32 %v1025, %v1169
      %v1188 = vadd.f32 %v1026, %v1172
      %v1189 = vadd.f32 %v1027, %v1177
      %v1190 = vadd.f32 %v1028, %v1180
      %s1191 = scalar_lea.vmem %s165, 16
      %v1192 = vld [vmem:[%s1191] sm:$0xf]
      %v1193 = vld [vmem:[%s1191 + $0x8] sm:$0xf]
      %v1194 = vld [vmem:[%s1191 + $0x10] sm:$0xf]
      %v1195 = vld [vmem:[%s1191 + $0x18] sm:$0xf]
      %v1196 = vld [vmem:[%s1191 + $0x20] sm:$0xf]
      %v1197 = vld [vmem:[%s1191 + $0x28] sm:$0xf]
      %v1198 = vld [vmem:[%s1191 + $0x30] sm:$0xf]
      %v1199 = vld [vmem:[%s1191 + $0x38] sm:$0xf]
      %s1200 = scalar_lea.vmem %s1, 48
      %v1201 = vld [vmem:[%s1200] sm:$0xf]
      %v1202 = vld [vmem:[%s1200 + $0x4] sm:$0xf]
      %v1211 = vunpack.c.l.b16 %v1192
      %v1212 = vunpack.c.l.b16 %v1193
      %v1213 = vunpack.c.l.b16 %v1194
      %v1214 = vunpack.c.l.b16 %v1195
      %v1215 = vunpack.c.l.b16 %v1196
      %v1216 = vunpack.c.l.b16 %v1197
      %v1217 = vunpack.c.l.b16 %v1198
      %v1218 = vunpack.c.l.b16 %v1199
      %v1219 = vpack.c.b16 %v1212, %v1211
      %v1220 = vpack.c.b16 %v1214, %v1213
      %v1221 = vpack.c.b16 %v1216, %v1215
      %v1222 = vpack.c.b16 %v1218, %v1217
      %v1225 = vunpack.c.l.b16 %v1201
      %v1226 = vunpack.c.l.b16 %v1202
      %v1227 = vpack.c.b16 %v1226, %v1225
      %v1230 = vsel %vm326, %v1219, 0
      %v1233 = vsel %vm326, %v1220, 0
      %v1236 = vsel %vm326, %v1221, 0
      %v1239 = vsel %vm326, %v1222, 0
      %1241 = vmatprep.subr.bf16.mxu0 0
      %1242 = vmatpush1.bf16.msra.mxu0 %v1227
      %1243 = vmatprep.subr.bf16.mxu0 0
      %1244 = vmatpush1.bf16.msra.mxu0 0
      %1245 = vmatprep.subr.bf16.mxu0 0
      %1246 = vmatpush1.bf16.msra.mxu0 0
      %1247 = vmatprep.subr.bf16.mxu0 0
      %1248 = vmatpush1.bf16.msra.mxu0 0
      %1249 = vmatprep.subr.bf16.mxu0 0
      %1250 = vmatpush1.bf16.msra.mxu0 0
      %1251 = vmatprep.subr.bf16.mxu0 0
      %1252 = vmatpush1.bf16.msra.mxu0 0
      %1253 = vmatprep.subr.bf16.mxu0 0
      %1254 = vmatpush1.bf16.msra.mxu0 0
      %1255 = vmatprep.subr.bf16.mxu0 0
      %1256 = vmatpush1.bf16.msra.mxu0 0
      %1257 = vmatprep.subr.bf16.mxu0 0
      %1258 = vmatpush1.bf16.msra.mxu0 0
      %1259 = vmatprep.subr.bf16.mxu0 0
      %1260 = vmatpush1.bf16.msra.mxu0 0
      %1261 = vmatprep.subr.bf16.mxu0 0
      %1262 = vmatpush1.bf16.msra.mxu0 0
      %1263 = vmatprep.subr.bf16.mxu0 0
      %1264 = vmatpush1.bf16.msra.mxu0 0
      %1265 = vmatprep.subr.bf16.mxu0 0
      %1266 = vmatpush1.bf16.msra.mxu0 0
      %1267 = vmatprep.subr.bf16.mxu0 0
      %1268 = vmatpush1.bf16.msra.mxu0 0
      %1269 = vmatprep.subr.bf16.mxu0 0
      %1270 = vmatpush1.bf16.msra.mxu0 0
      %1271 = vmatprep.subr.bf16.mxu0 0
      %1272 = vmatpush1.bf16.msra.mxu0 0
      %1273 = vmatprep.mubr.bf16.mxu0 0
      %1274 = vmatmul.mubr.bf16.gmra.mrb[0].mxu0 %v1230
      %v1275 = vpop.f32.mrb[0].mxu0
      %v1276 = vadd.f32 0.0, %v1275
      %v1277 = vpop.f32.mrb[0].mxu0
      %v1278 = vpop.f32.mrb[0].mxu0
      %v1279 = vadd.f32 0.0, %v1278
      %v1280 = vpop.f32.mrb[0].mxu0
      %1281 = vmatprep.mubr.bf16.mxu0 0
      %1282 = vmatmul.mubr.bf16.gmra.mrb[0].mxu0 %v1233
      %v1283 = vpop.f32.mrb[0].mxu0
      %v1284 = vadd.f32 0.0, %v1283
      %v1285 = vpop.f32.mrb[0].mxu0
      %v1286 = vpop.f32.mrb[0].mxu0
      %v1287 = vadd.f32 0.0, %v1286
      %v1288 = vpop.f32.mrb[0].mxu0
      %1289 = vmatprep.mubr.bf16.mxu0 0
      %1290 = vmatmul.mubr.bf16.gmra.mrb[0].mxu0 %v1236
      %v1291 = vpop.f32.mrb[0].mxu0
      %v1292 = vadd.f32 0.0, %v1291
      %v1293 = vpop.f32.mrb[0].mxu0
      %v1294 = vpop.f32.mrb[0].mxu0
      %v1295 = vadd.f32 0.0, %v1294
      %v1296 = vpop.f32.mrb[0].mxu0
      %1297 = vmatprep.mubr.bf16.mxu0 0
      %1298 = vmatmul.mubr.bf16.gmra.mrb[0].mxu0 %v1239
      %v1299 = vpop.f32.mrb[0].mxu0
      %v1300 = vadd.f32 0.0, %v1299
      %v1301 = vpop.f32.mrb[0].mxu0
      %v1302 = vpop.f32.mrb[0].mxu0
      %v1303 = vadd.f32 0.0, %v1302
      %v1304 = vpop.f32.mrb[0].mxu0
      %1305 = vdwg.mxu0
      %v1306 = vadd.f32 %v1183, %v1276
      %v1307 = vadd.f32 %v1184, %v1279
      %v1308 = vadd.f32 %v1185, %v1284
      %v1309 = vadd.f32 %v1186, %v1287
      %v1310 = vadd.f32 %v1187, %v1292
      %v1311 = vadd.f32 %v1188, %v1295
      %v1312 = vadd.f32 %v1189, %v1300
      %v1313 = vadd.f32 %v1190, %v1303
      %v1314 = vld [vmem:[%s1191] sm:$0xf]
      %v1315 = vld [vmem:[%s1191 + $0x4] sm:$0x1]
      %v1316 = vld [vmem:[%s1191 + $0x8] sm:$0xf]
      %v1317 = vld [vmem:[%s1191 + $0xc] sm:$0x1]
      %v1318 = vld [vmem:[%s1191 + $0x10] sm:$0xf]
      %v1319 = vld [vmem:[%s1191 + $0x14] sm:$0x1]
      %v1320 = vld [vmem:[%s1191 + $0x18] sm:$0xf]
      %v1321 = vld [vmem:[%s1191 + $0x1c] sm:$0x1]
      %v1322 = vld [vmem:[%s1191 + $0x20] sm:$0xf]
      %v1323 = vld [vmem:[%s1191 + $0x24] sm:$0x1]
      %v1324 = vld [vmem:[%s1191 + $0x28] sm:$0xf]
      %v1325 = vld [vmem:[%s1191 + $0x2c] sm:$0x1]
      %v1326 = vld [vmem:[%s1191 + $0x30] sm:$0xf]
      %v1327 = vld [vmem:[%s1191 + $0x34] sm:$0x1]
      %v1328 = vld [vmem:[%s1191 + $0x38] sm:$0xf]
      %v1329 = vld [vmem:[%s1191 + $0x3c] sm:$0x1]
      %v1331 = vshrl.u32 %v1314, 16
      %v1333 = vrot.slane %v1331, 4
      %v1334 = vshll.u32 %v1314, 16
      %v1336 = vrot.slane %v1334, 5
      %v1337 = vor.u32 %v1333, %v1336
      %v1338 = vrot.slane %v1337, 4
      %v1340 = vshll.u32 %v1315, 16
      %v1342 = vrot.slane %v1340, 5
      %v1343 = vsel %vm192, %v1338, %v1342
      %v1345 = vshrl.u32 %v1316, 16
      %v1347 = vrot.slane %v1345, 4
      %v1348 = vshll.u32 %v1316, 16
      %v1350 = vrot.slane %v1348, 5
      %v1351 = vor.u32 %v1347, %v1350
      %v1352 = vrot.slane %v1351, 4
      %v1354 = vshll.u32 %v1317, 16
      %v1356 = vrot.slane %v1354, 5
      %v1357 = vsel %vm192, %v1352, %v1356
      %v1359 = vshrl.u32 %v1318, 16
      %v1361 = vrot.slane %v1359, 4
      %v1362 = vshll.u32 %v1318, 16
      %v1364 = vrot.slane %v1362, 5
      %v1365 = vor.u32 %v1361, %v1364
      %v1366 = vrot.slane %v1365, 4
      %v1368 = vshll.u32 %v1319, 16
      %v1370 = vrot.slane %v1368, 5
      %v1371 = vsel %vm192, %v1366, %v1370
      %v1373 = vshrl.u32 %v1320, 16
      %v1375 = vrot.slane %v1373, 4
      %v1376 = vshll.u32 %v1320, 16
      %v1378 = vrot.slane %v1376, 5
      %v1379 = vor.u32 %v1375, %v1378
      %v1380 = vrot.slane %v1379, 4
      %v1382 = vshll.u32 %v1321, 16
      %v1384 = vrot.slane %v1382, 5
      %v1385 = vsel %vm192, %v1380, %v1384
      %v1387 = vshrl.u32 %v1322, 16
      %v1389 = vrot.slane %v1387, 4
      %v1390 = vshll.u32 %v1322, 16
      %v1392 = vrot.slane %v1390, 5
      %v1393 = vor.u32 %v1389, %v1392
      %v1394 = vrot.slane %v1393, 4
      %v1396 = vshll.u32 %v1323, 16
      %v1398 = vrot.slane %v1396, 5
      %v1399 = vsel %vm192, %v1394, %v1398
      %v1401 = vshrl.u32 %v1324, 16
      %v1403 = vrot.slane %v1401, 4
      %v1404 = vshll.u32 %v1324, 16
      %v1406 = vrot.slane %v1404, 5
      %v1407 = vor.u32 %v1403, %v1406
      %v1408 = vrot.slane %v1407, 4
      %v1410 = vshll.u32 %v1325, 16
      %v1412 = vrot.slane %v1410, 5
      %v1413 = vsel %vm192, %v1408, %v1412
      %v1415 = vshrl.u32 %v1326, 16
      %v1417 = vrot.slane %v1415, 4
      %v1418 = vshll.u32 %v1326, 16
      %v1420 = vrot.slane %v1418, 5
      %v1421 = vor.u32 %v1417, %v1420
      %v1422 = vrot.slane %v1421, 4
      %v1424 = vshll.u32 %v1327, 16
      %v1426 = vrot.slane %v1424, 5
      %v1427 = vsel %vm192, %v1422, %v1426
      %v1429 = vshrl.u32 %v1328, 16
      %v1431 = vrot.slane %v1429, 4
      %v1432 = vshll.u32 %v1328, 16
      %v1434 = vrot.slane %v1432, 5
      %v1435 = vor.u32 %v1431, %v1434
      %v1436 = vrot.slane %v1435, 4
      %v1438 = vshll.u32 %v1329, 16
      %v1440 = vrot.slane %v1438, 5
      %v1441 = vsel %vm192, %v1436, %v1440
      %s1442 = scalar_lea.vmem %s1, 56
      %v1443 = vld [vmem:[%s1442] sm:$0xf]
      %v1444 = vld [vmem:[%s1442 + $0x4] sm:$0xf]
      %v1445 = vunpack.c.l.b16 %v1343
      %v1446 = vunpack.c.l.b16 %v1357
      %v1447 = vunpack.c.l.b16 %v1371
      %v1448 = vunpack.c.l.b16 %v1385
      %v1449 = vunpack.c.l.b16 %v1399
      %v1450 = vunpack.c.l.b16 %v1413
      %v1451 = vunpack.c.l.b16 %v1427
      %v1452 = vunpack.c.l.b16 %v1441
      %v1453 = vpack.c.b16 %v1446, %v1445
      %v1454 = vpack.c.b16 %v1448, %v1447
      %v1455 = vpack.c.b16 %v1450, %v1449
      %v1456 = vpack.c.b16 %v1452, %v1451
      %v1459 = vunpack.c.l.b16 %v1443
      %v1460 = vunpack.c.l.b16 %v1444
      %v1461 = vpack.c.b16 %v1460, %v1459
      %v1464 = vsel %vm326, %v1453, 0
      %v1467 = vsel %vm326, %v1454, 0
      %v1470 = vsel %vm326, %v1455, 0
      %v1473 = vsel %vm326, %v1456, 0
      %1475 = vmatprep.subr.bf16.mxu0 0
      %1476 = vmatpush1.bf16.msra.mxu0 %v1461
      %1477 = vmatprep.subr.bf16.mxu0 0
      %1478 = vmatpush1.bf16.msra.mxu0 0
      %1479 = vmatprep.subr.bf16.mxu0 0
      %1480 = vmatpush1.bf16.msra.mxu0 0
      %1481 = vmatprep.subr.bf16.mxu0 0
      %1482 = vmatpush1.bf16.msra.mxu0 0
      %1483 = vmatprep.subr.bf16.mxu0 0
      %1484 = vmatpush1.bf16.msra.mxu0 0
      %1485 = vmatprep.subr.bf16.mxu0 0
      %1486 = vmatpush1.bf16.msra.mxu0 0
      %1487 = vmatprep.subr.bf16.mxu0 0
      %1488 = vmatpush1.bf16.msra.mxu0 0
      %1489 = vmatprep.subr.bf16.mxu0 0
      %1490 = vmatpush1.bf16.msra.mxu0 0
      %1491 = vmatprep.subr.bf16.mxu0 0
      %1492 = vmatpush1.bf16.msra.mxu0 0
      %1493 = vmatprep.subr.bf16.mxu0 0
      %1494 = vmatpush1.bf16.msra.mxu0 0
      %1495 = vmatprep.subr.bf16.mxu0 0
      %1496 = vmatpush1.bf16.msra.mxu0 0
      %1497 = vmatprep.subr.bf16.mxu0 0
      %1498 = vmatpush1.bf16.msra.mxu0 0
      %1499 = vmatprep.subr.bf16.mxu0 0
      %1500 = vmatpush1.bf16.msra.mxu0 0
      %1501 = vmatprep.subr.bf16.mxu0 0
      %1502 = vmatpush1.bf16.msra.mxu0 0
      %1503 = vmatprep.subr.bf16.mxu0 0
      %1504 = vmatpush1.bf16.msra.mxu0 0
      %1505 = vmatprep.subr.bf16.mxu0 0
      %1506 = vmatpush1.bf16.msra.mxu0 0
      %1507 = vmatprep.mubr.bf16.mxu0 0
      %1508 = vmatmul.mubr.bf16.gmra.mrb[0].mxu0 %v1464
      %v1509 = vpop.f32.mrb[0].mxu0
      %v1510 = vadd.f32 0.0, %v1509
      %v1511 = vpop.f32.mrb[0].mxu0
      %v1512 = vpop.f32.mrb[0].mxu0
      %v1513 = vadd.f32 0.0, %v1512
      %v1514 = vpop.f32.mrb[0].mxu0
      %1515 = vmatprep.mubr.bf16.mxu0 0
      %1516 = vmatmul.mubr.bf16.gmra.mrb[0].mxu0 %v1467
      %v1517 = vpop.f32.mrb[0].mxu0
      %v1518 = vadd.f32 0.0, %v1517
      %v1519 = vpop.f32.mrb[0].mxu0
      %v1520 = vpop.f32.mrb[0].mxu0
      %v1521 = vadd.f32 0.0, %v1520
      %v1522 = vpop.f32.mrb[0].mxu0
      %1523 = vmatprep.mubr.bf16.mxu0 0
      %1524 = vmatmul.mubr.bf16.gmra.mrb[0].mxu0 %v1470
      %v1525 = vpop.f32.mrb[0].mxu0
      %v1526 = vadd.f32 0.0, %v1525
      %v1527 = vpop.f32.mrb[0].mxu0
      %v1528 = vpop.f32.mrb[0].mxu0
      %v1529 = vadd.f32 0.0, %v1528
      %v1530 = vpop.f32.mrb[0].mxu0
      %1531 = vmatprep.mubr.bf16.mxu0 0
      %1532 = vmatmul.mubr.bf16.gmra.mrb[0].mxu0 %v1473
      %v1533 = vpop.f32.mrb[0].mxu0
      %v1534 = vadd.f32 0.0, %v1533
      %v1535 = vpop.f32.mrb[0].mxu0
      %v1536 = vpop.f32.mrb[0].mxu0
      %v1537 = vadd.f32 0.0, %v1536
      %v1538 = vpop.f32.mrb[0].mxu0
      %1539 = vdwg.mxu0
      %v1540 = vadd.f32 %v1306, %v1510
      %v1541 = vadd.f32 %v1307, %v1513
      %v1542 = vadd.f32 %v1308, %v1518
      %v1543 = vadd.f32 %v1309, %v1521
      %v1544 = vadd.f32 %v1310, %v1526
      %v1545 = vadd.f32 %v1311, %v1529
      %v1546 = vadd.f32 %v1312, %v1534
      %v1547 = vadd.f32 %v1313, %v1537
      %v1548 = vld [vmem:[%s1191] sm:$0xe]
      %v1549 = vld [vmem:[%s1191 + $0x8] sm:$0xe]
      %v1550 = vld [vmem:[%s1191 + $0x10] sm:$0xe]
      %v1551 = vld [vmem:[%s1191 + $0x18] sm:$0xe]
      %v1552 = vld [vmem:[%s1191 + $0x20] sm:$0xe]
      %v1553 = vld [vmem:[%s1191 + $0x28] sm:$0xe]
      %v1554 = vld [vmem:[%s1191 + $0x30] sm:$0xe]
      %v1555 = vld [vmem:[%s1191 + $0x38] sm:$0xe]
      %v1572 = vrot.slane %v1548, 5
      %v1573 = vrot.slane %v1572, 4
      %v1574 = vrot.slane %v1315, 5
      %v1575 = vsel %vm533, %v1573, %v1574
      %v1576 = vrot.slane %v1549, 5
      %v1577 = vrot.slane %v1576, 4
      %v1578 = vrot.slane %v1317, 5
      %v1579 = vsel %vm533, %v1577, %v1578
      %v1580 = vrot.slane %v1550, 5
      %v1581 = vrot.slane %v1580, 4
      %v1582 = vrot.slane %v1319, 5
      %v1583 = vsel %vm533, %v1581, %v1582
      %v1584 = vrot.slane %v1551, 5
      %v1585 = vrot.slane %v1584, 4
      %v1586 = vrot.slane %v1321, 5
      %v1587 = vsel %vm533, %v1585, %v1586
      %v1588 = vrot.slane %v1552, 5
      %v1589 = vrot.slane %v1588, 4
      %v1590 = vrot.slane %v1323, 5
      %v1591 = vsel %vm533, %v1589, %v1590
      %v1592 = vrot.slane %v1553, 5
      %v1593 = vrot.slane %v1592, 4
      %v1594 = vrot.slane %v1325, 5
      %v1595 = vsel %vm533, %v1593, %v1594
      %v1596 = vrot.slane %v1554, 5
      %v1597 = vrot.slane %v1596, 4
      %v1598 = vrot.slane %v1327, 5
      %v1599 = vsel %vm533, %v1597, %v1598
      %v1600 = vrot.slane %v1555, 5
      %v1601 = vrot.slane %v1600, 4
      %v1602 = vrot.slane %v1329, 5
      %v1603 = vsel %vm533, %v1601, %v1602
      %s1604 = scalar_lea.vmem %s1, 64
      %v1605 = vld [vmem:[%s1604] sm:$0xf]
      %v1606 = vld [vmem:[%s1604 + $0x4] sm:$0xf]
      %v1607 = vunpack.c.l.b16 %v1575
      %v1608 = vunpack.c.l.b16 %v1579
      %v1609 = vunpack.c.l.b16 %v1583
      %v1610 = vunpack.c.l.b16 %v1587
      %v1611 = vunpack.c.l.b16 %v1591
      %v1612 = vunpack.c.l.b16 %v1595
      %v1613 = vunpack.c.l.b16 %v1599
      %v1614 = vunpack.c.l.b16 %v1603
      %v1615 = vpack.c.b16 %v1608, %v1607
      %v1616 = vpack.c.b16 %v1610, %v1609
      %v1617 = vpack.c.b16 %v1612, %v1611
      %v1618 = vpack.c.b16 %v1614, %v1613
      %v1621 = vunpack.c.l.b16 %v1605
      %v1622 = vunpack.c.l.b16 %v1606
      %v1623 = vpack.c.b16 %v1622, %v1621
      %v1626 = vsel %vm326, %v1615, 0
      %v1629 = vsel %vm326, %v1616, 0
      %v1632 = vsel %vm326, %v1617, 0
      %v1635 = vsel %vm326, %v1618, 0
      %1637 = vmatprep.subr.bf16.mxu0 0
      %1638 = vmatpush1.bf16.msra.mxu0 %v1623
      %1639 = vmatprep.subr.bf16.mxu0 0
      %1640 = vmatpush1.bf16.msra.mxu0 0
      %1641 = vmatprep.subr.bf16.mxu0 0
      %1642 = vmatpush1.bf16.msra.mxu0 0
      %1643 = vmatprep.subr.bf16.mxu0 0
      %1644 = vmatpush1.bf16.msra.mxu0 0
      %1645 = vmatprep.subr.bf16.mxu0 0
      %1646 = vmatpush1.bf16.msra.mxu0 0
      %1647 = vmatprep.subr.bf16.mxu0 0
      %1648 = vmatpush1.bf16.msra.mxu0 0
      %1649 = vmatprep.subr.bf16.mxu0 0
      %1650 = vmatpush1.bf16.msra.mxu0 0
      %1651 = vmatprep.subr.bf16.mxu0 0
      %1652 = vmatpush1.bf16.msra.mxu0 0
      %1653 = vmatprep.subr.bf16.mxu0 0
      %1654 = vmatpush1.bf16.msra.mxu0 0
      %1655 = vmatprep.subr.bf16.mxu0 0
      %1656 = vmatpush1.bf16.msra.mxu0 0
      %1657 = vmatprep.subr.bf16.mxu0 0
      %1658 = vmatpush1.bf16.msra.mxu0 0
      %1659 = vmatprep.subr.bf16.mxu0 0
      %1660 = vmatpush1.bf16.msra.mxu0 0
      %1661 = vmatprep.subr.bf16.mxu0 0
      %1662 = vmatpush1.bf16.msra.mxu0 0
      %1663 = vmatprep.subr.bf16.mxu0 0
      %1664 = vmatpush1.bf16.msra.mxu0 0
      %1665 = vmatprep.subr.bf16.mxu0 0
      %1666 = vmatpush1.bf16.msra.mxu0 0
      %1667 = vmatprep.subr.bf16.mxu0 0
      %1668 = vmatpush1.bf16.msra.mxu0 0
      %1669 = vmatprep.mubr.bf16.mxu0 0
      %1670 = vmatmul.mubr.bf16.gmra.mrb[0].mxu0 %v1626
      %v1671 = vpop.f32.mrb[0].mxu0
      %v1672 = vadd.f32 0.0, %v1671
      %v1673 = vpop.f32.mrb[0].mxu0
      %v1674 = vpop.f32.mrb[0].mxu0
      %v1675 = vadd.f32 0.0, %v1674
      %v1676 = vpop.f32.mrb[0].mxu0
      %1677 = vmatprep.mubr.bf16.mxu0 0
      %1678 = vmatmul.mubr.bf16.gmra.mrb[0].mxu0 %v1629
      %v1679 = vpop.f32.mrb[0].mxu0
      %v1680 = vadd.f32 0.0, %v1679
      %v1681 = vpop.f32.mrb[0].mxu0
      %v1682 = vpop.f32.mrb[0].mxu0
      %v1683 = vadd.f32 0.0, %v1682
      %v1684 = vpop.f32.mrb[0].mxu0
      %1685 = vmatprep.mubr.bf16.mxu0 0
      %1686 = vmatmul.mubr.bf16.gmra.mrb[0].mxu0 %v1632
      %v1687 = vpop.f32.mrb[0].mxu0
      %v1688 = vadd.f32 0.0, %v1687
      %v1689 = vpop.f32.mrb[0].mxu0
      %v1690 = vpop.f32.mrb[0].mxu0
      %v1691 = vadd.f32 0.0, %v1690
      %v1692 = vpop.f32.mrb[0].mxu0
      %1693 = vmatprep.mubr.bf16.mxu0 0
      %1694 = vmatmul.mubr.bf16.gmra.mrb[0].mxu0 %v1635
      %v1695 = vpop.f32.mrb[0].mxu0
      %v1696 = vadd.f32 0.0, %v1695
      %v1697 = vpop.f32.mrb[0].mxu0
      %v1698 = vpop.f32.mrb[0].mxu0
      %v1699 = vadd.f32 0.0, %v1698
      %v1700 = vpop.f32.mrb[0].mxu0
      %1701 = vdwg.mxu0
      %v1702 = vadd.f32 %v1540, %v1672
      %v1703 = vadd.f32 %v1541, %v1675
      %v1704 = vadd.f32 %v1542, %v1680
      %v1705 = vadd.f32 %v1543, %v1683
      %v1706 = vadd.f32 %v1544, %v1688
      %v1707 = vadd.f32 %v1545, %v1691
      %v1708 = vadd.f32 %v1546, %v1696
      %v1709 = vadd.f32 %v1547, %v1699
      %v1710 = vld [vmem:[%s2] sm:$0x1]
      %v1712 = vlaneseq
      %v1713 = vshrl.u32 %v1712, 7
      %v1714 = vsub.s32 0, %v1713
      %v1715 = vrot.slane %v1710, %v1714
      %v1717 = vadd.f32 %v1702, %v1715
      %v1718 = vadd.f32 %v1703, %v1715
      %v1719 = vadd.f32 %v1704, %v1715
      %v1720 = vadd.f32 %v1705, %v1715
      %v1721 = vadd.f32 %v1706, %v1715
      %v1722 = vadd.f32 %v1707, %v1715
      %v1723 = vadd.f32 %v1708, %v1715
      %v1724 = vadd.f32 %v1709, %v1715
      %v1725 = vmax.f32 %v1717, 0.0
      %v1726 = vmax.f32 %v1718, 0.0
      %v1727 = vmax.f32 %v1719, 0.0
      %v1728 = vmax.f32 %v1720, 0.0
      %v1729 = vmax.f32 %v1721, 0.0
      %v1730 = vmax.f32 %v1722, 0.0
      %v1731 = vmax.f32 %v1723, 0.0
      %v1732 = vmax.f32 %v1724, 0.0
      %v1733 = vpack.c.bf16 %v1725, %v1725
      %v1734 = vpack.c.bf16 %v1726, %v1726
      %v1735 = vpack.c.bf16 %v1727, %v1727
      %v1736 = vpack.c.bf16 %v1728, %v1728
      %v1737 = vpack.c.bf16 %v1729, %v1729
      %v1738 = vpack.c.bf16 %v1730, %v1730
      %v1739 = vpack.c.bf16 %v1731, %v1731
      %v1740 = vpack.c.bf16 %v1732, %v1732
      %vm1741 = vcmask 125952
      %1742 = vst.msk [vmem:[%s170] sm:$0xf] %vm1741, %v1733
      %1743 = vst.msk [vmem:[%s170 + $0x4] sm:$0xf] %vm1741, %v1734
      %1744 = vst.msk [vmem:[%s170 + $0x8] sm:$0xf] %vm1741, %v1735
      %1745 = vst.msk [vmem:[%s170 + $0xc] sm:$0xf] %vm1741, %v1736
      %1746 = vst.msk [vmem:[%s170 + $0x10] sm:$0xf] %vm1741, %v1737
      %1747 = vst.msk [vmem:[%s170 + $0x14] sm:$0xf] %vm1741, %v1738
      %1748 = vst.msk [vmem:[%s170 + $0x18] sm:$0xf] %vm1741, %v1739
      %1749 = vst.msk [vmem:[%s170 + $0x1c] sm:$0xf] %vm1741, %v1740
      %p1750 = scmp.lt.s32.totalorder %s14, 1
      %s1751 = scalar_select %p1750, %s14, 1
      %s1752 = smul.addr %s1751, 8
      %s1753 = smul.addr %s1752, 4
      %s1754 = scalar_lea.vmem %s3, %s1753
      // Predicated region
      $region33: #{bottleneck_forward.12} parent=31 // pred_check
        %p1755 = pneg %p100
      $region34: #{bottleneck_forward.12} parent=31 // pred_check_branch
        %1757 = sbr.rel (%p1755) target = $region36
      $region35: #{bottleneck_forward.12} parent=31 // pred_region
        _
      $region36: #{bottleneck_forward.12} parent=31 // pred_fallthru
        _
    $region32: #{bottleneck_forward.12} parent=5 // pred_fallthru
      _
    %p1758 = scmp.le.s32.totalorder 2, %s9
    // Predicated region
    $region37: #{bottleneck_forward.12} parent=5 // pred_check
      %p1759 = pneg %p1758
    $region38: #{bottleneck_forward.12} parent=5 // pred_check_branch
      %1761 = sbr.rel (%p1759) target = $region40
    $region39: #{bottleneck_forward.12} parent=5 // pred_region
      %s1762 = ssub.s32 %s9, 2
      // Predicated region
      $region41: #{bottleneck_forward.12} parent=39 // pred_check
        %p1763 = pneg %p106
      $region42: #{bottleneck_forward.12} parent=39 // pred_check_branch
        %1765 = sbr.rel (%p1763) target = $region44
      $region43: #{bottleneck_forward.12} parent=39 // pred_region
        %p1766 = scmp.lt.s32.totalorder %s15, 1
        %s1767 = scalar_select %p1766, %s15, 1
        %s1768 = smul.addr %s1767, 8
        %s1769 = smul.addr %s1768, 4
        %s1770 = scalar_lea.vmem %s3, %s1769
      $region44: #{bottleneck_forward.12} parent=39 // pred_fallthru
        _
    $region40: #{bottleneck_forward.12} parent=5 // pred_fallthru
      _
  $region6: #{bottleneck_forward.12} parent=0 // loop_footer
    %s13 = sadd.s32 1, %s9
  $region7: #{bottleneck_forward.12} parent=0 // loop_footer_branch
    %8 = sbr.rel target = $region3
  $region8: #{bottleneck_forward.12} parent=0 // loop_exit
    _

</llo_original>
